<compile_context>
chip_gen: v6e
topology: v6e:2x2x1
jax: 0.10.0
libtpu: 0.0.40
codegen_flags: <defaults>
</compile_context>

<pallas_src>
import functools

import jax
import jax.numpy as jnp
from jax.experimental import pallas as pl
from jax.experimental.pallas import tpu as pltpu


def _vmem_limit_bytes():
    """Generation-aware scoped-VMEM limit (v7x: 64 MiB/TC, v5e/v6e: 128 MiB)."""
    try:
        kind = jax.devices()[0].device_kind.lower()
    except Exception:  # defensive: unknown backend string
        kind = ""
    if "v7" in kind or "7x" in kind:
        return 48 * 1024 * 1024
    return 64 * 1024 * 1024


def _pick_channel_tile(hid, max_tc=256):
    """Largest hid-divisor channel tile that keeps lane-dim divisibility."""
    if hid <= max_tc:
        return hid
    for tc in (max_tc, 128):
        if tc % 128 == 0 and hid % tc == 0:
            return tc
    return hid  # fallback: no channel tiling


# ----------------------------------------------------------------------------
# Kernel 1: fused 1x1 conv (channel contraction) + folded BatchNorm + SiLU.
# Reads NCHW blocks (Cin, T) and contracts the channel axis (transposed lhs),
# writing channels-last (T, hid) tiles.  No boundary transpose of x needed.
# ----------------------------------------------------------------------------
def _conv1_kernel(x_ref, w_ref, s_ref, b_ref, o_ref):
    # x_ref: (1, Cin, T)  w_ref: (Cin, hid)  s_ref/b_ref: (1, hid)  o_ref: (1, T, hid)
    y = jax.lax.dot_general(
        x_ref[0], w_ref[...],
        (((0,), (0,)), ((), ())),             # contract the channel axis
        preferred_element_type=jnp.float32)
    y = y * s_ref[...] + b_ref[...]
    o_ref[0] = (y * jax.nn.sigmoid(y)).astype(o_ref.dtype)  # SiLU


def conv1x1_bn_silu_nchw(x3, w, scale, bias, spatial_tile=1024):
    """x3: (N, Cin, H*W) flattened NCHW input -> (N, H*W, hid) channels-last."""
    N, Cin, HW = x3.shape
    hid = w.shape[1]
    if HW <= spatial_tile:
        t = HW                                  # block == full spatial extent
    else:
        t = (spatial_tile // 128) * 128         # keep lane-dim divisibility
    return pl.pallas_call(
        _conv1_kernel,
        out_shape=jax.ShapeDtypeStruct((N, HW, hid), x3.dtype),
        grid=(N, pl.cdiv(HW, t)),
        in_specs=[
            pl.BlockSpec((1, Cin, t), lambda n, s: (n, 0, s)),
            pl.BlockSpec((Cin, hid), lambda n, s: (0, 0)),
            pl.BlockSpec((1, hid), lambda n, s: (0, 0)),
            pl.BlockSpec((1, hid), lambda n, s: (0, 0)),
        ],
        out_specs=pl.BlockSpec((1, t, hid), lambda n, s: (n, s, 0)),
        compiler_params=pltpu.CompilerParams(
            dimension_semantics=("parallel", "parallel"),
            vmem_limit_bytes=_vmem_limit_bytes(),
        ),
    )(x3, w, scale.reshape(1, hid), bias.reshape(1, hid))


# ----------------------------------------------------------------------------
# Kernel 2: fused SPPF cascade (stride-1 "same" max pools) + concat-fused
# 1x1 conv2 + folded BN + SiLU, tiled over (batch, hid channel chunks).
# Channels ride in the lane dimension; pooling is single-write shifted maxes.
# ----------------------------------------------------------------------------
def _spp_conv2_kernel(H, W, k0, n_stages,
                      y_ref, w2_ref, s_ref, b_ref, o_ref,
                      sa_ref, sb_ref, acc_ref):
    # y_ref : (1, H, W, tc)          channel slab of conv1's output
    # w2_ref: (n_stages+1, tc, Cout) conv2 rows for this channel slab
    # s_ref, b_ref: (1, Cout)        folded-BN scale / bias
    # o_ref : (1, H*W, Cout)         output block (resident across chunk axis)
    # sa_ref, sb_ref: (H, W, tc) f32 pooling ping-pong scratch
    # acc_ref: (H*W, Cout) f32       conv2 accumulator (resident across chunks)
    p = k0 // 2
    HW = H * W
    c = pl.program_id(1)

    @pl.when(c == 0)
    def _():
        acc_ref[...] = jnp.zeros_like(acc_ref)

    def pool_axis0(src, dst):
        # dst[r] = max(src[max(0, r-p) : min(H, r+p+1)]) along axis 0, each
        # output region written exactly once.
        n = H
        for r in range(min(p, n)):                       # top border rows
            hi = min(n, r + p + 1)
            dst[r] = jnp.max(src[pl.ds(0, hi)], axis=0)
        if n > 2 * p:                                    # interior rows
            m = n - 2 * p
            v = src[pl.ds(0, m)]
            for d in range(1, 2 * p + 1):
                v = jnp.maximum(v, src[pl.ds(d, m)])
            dst[pl.ds(p, m)] = v
        for r in range(max(p, n - p), n):                # bottom border rows
            lo = max(0, r - p)
            dst[r] = jnp.max(src[pl.ds(lo, n - lo)], axis=0)

    def pool_axis1(src, dst):
        n = W
        for r in range(min(p, n)):                       # left border cols
            hi = min(n, r + p + 1)
            dst[:, r] = jnp.max(src[:, pl.ds(0, hi)], axis=1)
        if n > 2 * p:                                    # interior cols
            m = n - 2 * p
            v = src[:, pl.ds(0, m)]
            for d in range(1, 2 * p + 1):
                v = jnp.maximum(v, src[:, pl.ds(d, m)])
            dst[:, pl.ds(p, m)] = v
        for r in range(max(p, n - p), n):                # right border cols
            lo = max(0, r - p)
            dst[:, r] = jnp.max(src[:, pl.ds(lo, n - lo)], axis=1)

    # un-pooled branch
    y0 = y_ref[0].astype(jnp.float32)
    sa_ref[...] = y0
    acc_ref[...] += jnp.dot(y0.reshape(HW, -1), w2_ref[0],
                            preferred_element_type=jnp.float32)

    # cascaded pools: stage s yields pool_{k0 + s*(k0-1)}(y)
    for stage in range(n_stages):
        pool_axis0(sa_ref, sb_ref)       # max over the H window
        pool_axis1(sb_ref, sa_ref)       # max over the W window
        acc_ref[...] += jnp.dot(sa_ref[...].reshape(HW, -1), w2_ref[stage + 1],
                                preferred_element_type=jnp.float32)

    @pl.when(c == pl.num_programs(1) - 1)
    def _():
        z = acc_ref[...] * s_ref[...] + b_ref[...]
        o_ref[0] = (z * jax.nn.sigmoid(z)).astype(o_ref.dtype)  # SiLU


def spp_pool_conv2(y4, w2_3d, scale, bias, k0, n_stages, max_tc=256):
    """y4: (N, H, W, hid); w2_3d: (n_stages+1, hid, Cout) -> (N, H*W, Cout)."""
    N, H, W, hid = y4.shape
    n_w2, _, Cout = w2_3d.shape
    assert n_w2 == n_stages + 1
    tc = _pick_channel_tile(hid, max_tc)
    n_chunks = hid // tc
    HW = H * W
    kern = functools.partial(_spp_conv2_kernel, H, W, k0, n_stages)
    return pl.pallas_call(
        kern,
        out_shape=jax.ShapeDtypeStruct((N, HW, Cout), y4.dtype),
        grid=(N, n_chunks),
        in_specs=[
            pl.BlockSpec((1, H, W, tc), lambda n, c: (n, 0, 0, c)),
            pl.BlockSpec((n_stages + 1, tc, Cout), lambda n, c: (0, c, 0)),
            pl.BlockSpec((1, Cout), lambda n, c: (0, 0)),
            pl.BlockSpec((1, Cout), lambda n, c: (0, 0)),
        ],
        out_specs=pl.BlockSpec((1, HW, Cout), lambda n, c: (n, 0, 0)),
        scratch_shapes=[
            pltpu.VMEM((H, W, tc), jnp.float32),
            pltpu.VMEM((H, W, tc), jnp.float32),
            pltpu.VMEM((HW, Cout), jnp.float32),
        ],
        compiler_params=pltpu.CompilerParams(
            dimension_semantics=("parallel", "arbitrary"),
            vmem_limit_bytes=_vmem_limit_bytes(),
        ),
    )(y4, w2_3d, scale.reshape(1, Cout), bias.reshape(1, Cout))


# ----------------------------------------------------------------------------
# SPPBottleneck forward (NCHW in / NCHW out, like the PyTorch module)
# ----------------------------------------------------------------------------
def spp_bottleneck(x_nchw, params, kernel_sizes=(5, 9, 13)):
    # Cascaded pooling requires kernel sizes (k, 2k-1, 3k-2, ...).
    k0 = kernel_sizes[0]
    assert k0 % 2 == 1
    for i, ks in enumerate(kernel_sizes):
        assert ks == k0 + i * (k0 - 1), "kernel_sizes must form a pool cascade"
    n_stages = len(kernel_sizes)

    N, Cin, H, W = x_nchw.shape
    hid = params["w1"].shape[1]
    Cout = params["w2"].shape[1]
    assert params["w2"].shape[0] == (n_stages + 1) * hid
    HW = H * W

    # conv1: 1x1 conv + BN + SiLU straight from NCHW (free reshape, no transpose)
    y = conv1x1_bn_silu_nchw(x_nchw.reshape(N, Cin, HW),
                             params["w1"], params["s1"], params["b1"])

    # fused: cascaded max pools + (concat-fused) conv2 + BN + SiLU
    y4 = y.reshape(N, H, W, hid)                       # free reshape (hid last)
    w2_3d = params["w2"].reshape(n_stages + 1, hid, Cout)
    out = spp_pool_conv2(y4, w2_3d, params["s2"], params["b2"], k0, n_stages)

    # single remaining layout op at the module boundary
    return jnp.transpose(out, (0, 2, 1)).reshape(N, Cout, H, W)


# ----------------------------------------------------------------------------
# Deterministic parameter construction (eval-mode BatchNorm folded to scale/bias)
# ----------------------------------------------------------------------------
def make_params(key, in_channels, out_channels, kernel_sizes=(5, 9, 13)):
    hid = in_channels // 2
    c2in = hid * (len(kernel_sizes) + 1)
    eps = 1e-3
    ks = jax.random.split(key, 10)

    def bn_fold(kg, kb, km, kv, c):
        gamma = 1.0 + 0.1 * jax.random.normal(kg, (c,), jnp.float32)
        beta = 0.1 * jax.random.normal(kb, (c,), jnp.float32)
        mean = 0.1 * jax.random.normal(km, (c,), jnp.float32)
        var = jnp.abs(jax.random.normal(kv, (c,), jnp.float32)) + 0.5
        s = gamma / jnp.sqrt(var + eps)
        b = beta - mean * s
        return s, b

    # PyTorch conv weight is (Cout, Cin, 1, 1); we store (Cin, Cout).
    w1 = 0.1 * jax.random.normal(ks[0], (in_channels, hid), jnp.float32)
    s1, b1 = bn_fold(ks[1], ks[2], ks[3], ks[4], hid)
    w2 = 0.1 * jax.random.normal(ks[5], (c2in, out_channels), jnp.float32)
    s2, b2 = bn_fold(ks[6], ks[7], ks[8], ks[9], out_channels)
    return dict(w1=w1, s1=s1, b1=b1, w2=w2, s2=s2, b2=b2)


# ----------------------------------------------------------------------------
# Pure-JAX reference (independent 5/9/13 pools, NOT cascaded) for sanity check
# ----------------------------------------------------------------------------
def _ref_pool(y, k):  # y: (N, C, H, W)
    p = k // 2
    neg = jnp.finfo(y.dtype).min
    yp = jnp.pad(y, ((0, 0), (0, 0), (p, p), (p, p)), constant_values=neg)
    H, W = y.shape[2], y.shape[3]
    out = jnp.full_like(y, neg)
    for di in range(k):
        for dj in range(k):
            out = jnp.maximum(out, yp[:, :, di:di + H, dj:dj + W])
    return out


def spp_reference(x, params, kernel_sizes=(5, 9, 13)):
    def conv(x2, w, s, b):
        y = jnp.dot(x2, w, precision=jax.lax.Precision.HIGHEST) * s + b
        return y * jax.nn.sigmoid(y)

    N, Cin, H, W = x.shape
    hid = params["w1"].shape[1]
    cout = params["w2"].shape[1]
    x2d = jnp.transpose(x, (0, 2, 3, 1)).reshape(-1, Cin)
    y = conv(x2d, params["w1"], params["s1"], params["b1"])
    y = jnp.transpose(y.reshape(N, H, W, hid), (0, 3, 1, 2))
    cat = jnp.concatenate([y] + [_ref_pool(y, k) for k in kernel_sizes], axis=1)
    c2 = jnp.transpose(cat, (0, 2, 3, 1)).reshape(-1, cat.shape[1])
    o = conv(c2, params["s2"] * 0 + 1.0, 1.0, 0.0) if False else conv(
        c2, params["w2"], params["s2"], params["b2"])
    return jnp.transpose(o.reshape(N, H, W, cout), (0, 3, 1, 2))


if __name__ == "__main__":
    key = jax.random.PRNGKey(0)
    kx, kp = jax.random.split(key)

    N, Cin, H, W = 2, 4, 16, 16
    Cout = 8
    x = jax.random.normal(kx, (N, Cin, H, W), jnp.float32)
    params = make_params(kp, Cin, Cout)

    out = jax.jit(spp_bottleneck)(x, params)
    out = jax.block_until_ready(out)

    ref = spp_reference(x, params)
    assert out.shape == (N, Cout, H, W), out.shape
    assert jnp.allclose(out, ref, rtol=1e-3, atol=1e-3), (
        float(jnp.max(jnp.abs(out - ref)))
    )
    print("KERNEL_OK")
</pallas_src>

<mosaic_0001>
module attributes {stable_mosaic.version = 11 : i64} {
  func.func @_conv1_kernel(%arg0: i32, %arg1: i32, %arg2: memref<1x4x256xf32, #tpu.memory_space<vmem>>, %arg3: memref<4x2xf32, #tpu.memory_space<vmem>>, %arg4: memref<1x2xf32, #tpu.memory_space<vmem>>, %arg5: memref<1x2xf32, #tpu.memory_space<vmem>>, %arg6: memref<1x256x2xf32, #tpu.memory_space<vmem>>) attributes {dimension_semantics = [#tpu.dimension_semantics<parallel>, #tpu.dimension_semantics<parallel>], iteration_bounds = array<i64: 2, 1>, scalar_prefetch = 0 : i64, scratch_operands = 0 : i64, tpu.core_type = #tpu.core_type<tc>, window_params = [{transform_indices = @transform_0, window_bounds = array<i64: 1, 4, 256>}, {pipeline_mode = #tpu.pipeline_mode<synchronous>, transform_indices = @transform_1, window_bounds = array<i64: 4, 2>}, {pipeline_mode = #tpu.pipeline_mode<synchronous>, transform_indices = @transform_2, window_bounds = array<i64: 1, 2>}, {pipeline_mode = #tpu.pipeline_mode<synchronous>, transform_indices = @transform_3, window_bounds = array<i64: 1, 2>}, {transform_indices = @transform_4, window_bounds = array<i64: 1, 256, 2>}]} {
    %c0 = arith.constant 0 : index
    %c0_0 = arith.constant 0 : index
    %c0_1 = arith.constant 0 : index
    %0 = vector.load %arg2[%c0, %c0_0, %c0_1] : memref<1x4x256xf32, #tpu.memory_space<vmem>>, vector<1x4x256xf32>
    %1 = vector.shape_cast %0 : vector<1x4x256xf32> to vector<4x256xf32>
    %c0_2 = arith.constant 0 : index
    %c0_3 = arith.constant 0 : index
    %2 = vector.load %arg3[%c0_2, %c0_3] : memref<4x2xf32, #tpu.memory_space<vmem>>, vector<4x2xf32>
    %cst = arith.constant dense<0.000000e+00> : vector<256x2xf32>
    %3 = tpu.matmul %1, %2, %cst {dimension_numbers = #tpu.dot_dimension_numbers<[0], [0], [1], [1], [0, 1, 1, 1], [], []>} : vector<4x256xf32>, vector<4x2xf32>, vector<256x2xf32> -> vector<256x2xf32>
    %c0_4 = arith.constant 0 : index
    %c0_5 = arith.constant 0 : index
    %4 = vector.load %arg4[%c0_4, %c0_5] : memref<1x2xf32, #tpu.memory_space<vmem>>, vector<1x2xf32>
    %5 = vector.broadcast %4 : vector<1x2xf32> to vector<256x2xf32>
    %6 = arith.mulf %3, %5 : vector<256x2xf32>
    %c0_6 = arith.constant 0 : index
    %c0_7 = arith.constant 0 : index
    %7 = vector.load %arg5[%c0_6, %c0_7] : memref<1x2xf32, #tpu.memory_space<vmem>>, vector<1x2xf32>
    %8 = vector.broadcast %7 : vector<1x2xf32> to vector<256x2xf32>
    %9 = arith.addf %6, %8 : vector<256x2xf32>
    %10 = arith.negf %9 : vector<256x2xf32>
    %11 = math.exp %10 : vector<256x2xf32>
    %cst_8 = arith.constant 1.000000e+00 : f32
    %12 = vector.broadcast %cst_8 : f32 to vector<256x2xf32>
    %13 = arith.addf %12, %11 : vector<256x2xf32>
    %14 = arith.divf %12, %13 : vector<256x2xf32>
    %15 = arith.mulf %9, %14 : vector<256x2xf32>
    %c0_9 = arith.constant 0 : index
    %c0_10 = arith.constant 0 : index
    %c0_11 = arith.constant 0 : index
    %16 = vector.load %arg6[%c0_9, %c0_10, %c0_11] : memref<1x256x2xf32, #tpu.memory_space<vmem>>, vector<1x256x2xf32>
    %17 = vector.shape_cast %16 : vector<1x256x2xf32> to vector<256x2xf32>
    %18 = vector.shape_cast %15 : vector<256x2xf32> to vector<1x256x2xf32>
    tpu.vector_store %arg6[%c0_9, %c0_10, %c0_11], %18 {strides = array<i32>} : memref<1x256x2xf32, #tpu.memory_space<vmem>>, vector<1x256x2xf32>,
    return
  }
  func.func @transform_0(%arg0: i32, %arg1: i32) -> (i32, i32, i32) {
    %c0_i32 = arith.constant 0 : i32
    %c0_i32_0 = arith.constant 0 : i32
    return %arg0, %c0_i32, %arg1 : i32, i32, i32
  }
  func.func @transform_1(%arg0: i32, %arg1: i32) -> (i32, i32) {
    %c0_i32 = arith.constant 0 : i32
    %c0_i32_0 = arith.constant 0 : i32
    %c0_i32_1 = arith.constant 0 : i32
    return %c0_i32, %c0_i32_0 : i32, i32
  }
  func.func @transform_2(%arg0: i32, %arg1: i32) -> (i32, i32) {
    %c0_i32 = arith.constant 0 : i32
    %c0_i32_0 = arith.constant 0 : i32
    %c0_i32_1 = arith.constant 0 : i32
    return %c0_i32, %c0_i32_0 : i32, i32
  }
  func.func @transform_3(%arg0: i32, %arg1: i32) -> (i32, i32) {
    %c0_i32 = arith.constant 0 : i32
    %c0_i32_0 = arith.constant 0 : i32
    %c0_i32_1 = arith.constant 0 : i32
    return %c0_i32, %c0_i32_0 : i32, i32
  }
  func.func @transform_4(%arg0: i32, %arg1: i32) -> (i32, i32, i32) {
    %c0_i32 = arith.constant 0 : i32
    %c0_i32_0 = arith.constant 0 : i32
    return %arg0, %arg1, %c0_i32 : i32, i32, i32
  }
}

module attributes {stable_mosaic.version = 11 : i64} {
  func.func @_spp_conv2_kernel(%arg0: i32, %arg1: i32, %arg2: memref<1x16x16x2xf32, #tpu.memory_space<vmem>>, %arg3: memref<4x2x8xf32, #tpu.memory_space<vmem>>, %arg4: memref<1x8xf32, #tpu.memory_space<vmem>>, %arg5: memref<1x8xf32, #tpu.memory_space<vmem>>, %arg6: memref<1x256x8xf32, #tpu.memory_space<vmem>>, %arg7: memref<16x16x2xf32, #tpu.memory_space<vmem>>, %arg8: memref<16x16x2xf32, #tpu.memory_space<vmem>>, %arg9: memref<256x8xf32, #tpu.memory_space<vmem>>) attributes {dimension_semantics = [#tpu.dimension_semantics<parallel>, #tpu.dimension_semantics<arbitrary>], iteration_bounds = array<i64: 2, 1>, scalar_prefetch = 0 : i64, scratch_operands = 3 : i64, tpu.core_type = #tpu.core_type<tc>, window_params = [{transform_indices = @transform_0, window_bounds = array<i64: 1, 16, 16, 2>}, {transform_indices = @transform_1, window_bounds = array<i64: 4, 2, 8>}, {pipeline_mode = #tpu.pipeline_mode<synchronous>, transform_indices = @transform_2, window_bounds = array<i64: 1, 8>}, {pipeline_mode = #tpu.pipeline_mode<synchronous>, transform_indices = @transform_3, window_bounds = array<i64: 1, 8>}, {transform_indices = @transform_4, window_bounds = array<i64: 1, 256, 8>}]} {
    %c0_i32 = arith.constant 0 : i32
    %0 = arith.cmpi eq, %arg1, %c0_i32 : i32
    %1 = arith.extui %0 : i1 to i32
    %c0_i32_0 = arith.constant 0 : i32
    %2 = arith.cmpi ne, %1, %c0_i32_0 : i32
    scf.if %2 {
      %cst_317 = arith.constant 0.000000e+00 : f32
      %220 = vector.broadcast %cst_317 : f32 to vector<256x8xf32>
      %c0_318 = arith.constant 0 : index
      %c0_319 = arith.constant 0 : index
      %221 = vector.load %arg9[%c0_318, %c0_319] : memref<256x8xf32, #tpu.memory_space<vmem>>, vector<256x8xf32>
      tpu.vector_store %arg9[%c0_318, %c0_319], %220 {strides = array<i32>} : memref<256x8xf32, #tpu.memory_space<vmem>>, vector<256x8xf32>,
    } else {
    }
    %c0 = arith.constant 0 : index
    %c0_1 = arith.constant 0 : index
    %c0_2 = arith.constant 0 : index
    %c0_3 = arith.constant 0 : index
    %3 = vector.load %arg2[%c0, %c0_1, %c0_2, %c0_3] : memref<1x16x16x2xf32, #tpu.memory_space<vmem>>, vector<1x16x16x2xf32>
    %4 = vector.shape_cast %3 : vector<1x16x16x2xf32> to vector<16x16x2xf32>
    %c0_4 = arith.constant 0 : index
    %c0_5 = arith.constant 0 : index
    %c0_6 = arith.constant 0 : index
    %5 = vector.load %arg7[%c0_4, %c0_5, %c0_6] : memref<16x16x2xf32, #tpu.memory_space<vmem>>, vector<16x16x2xf32>
    tpu.vector_store %arg7[%c0_4, %c0_5, %c0_6], %4 {strides = array<i32>} : memref<16x16x2xf32, #tpu.memory_space<vmem>>, vector<16x16x2xf32>,
    %c0_7 = arith.constant 0 : index
    %c0_8 = arith.constant 0 : index
    %6 = vector.load %arg9[%c0_7, %c0_8] : memref<256x8xf32, #tpu.memory_space<vmem>>, vector<256x8xf32>
    %7 = vector.shape_cast %4 : vector<16x16x2xf32> to vector<256x2xf32>
    %c0_9 = arith.constant 0 : index
    %c0_10 = arith.constant 0 : index
    %c0_11 = arith.constant 0 : index
    %8 = vector.load %arg3[%c0_9, %c0_10, %c0_11] : memref<4x2x8xf32, #tpu.memory_space<vmem>>, vector<1x2x8xf32>
    %9 = vector.shape_cast %8 : vector<1x2x8xf32> to vector<2x8xf32>
    %cst = arith.constant dense<0.000000e+00> : vector<256x8xf32>
    %10 = tpu.matmul %7, %9, %cst {dimension_numbers = #tpu.dot_dimension_numbers<[1], [0], [0], [1], [0, 0, 1, 1], [], []>} : vector<256x2xf32>, vector<2x8xf32>, vector<256x8xf32> -> vector<256x8xf32>
    %11 = arith.addf %6, %10 : vector<256x8xf32>
    %c0_12 = arith.constant 0 : index
    %c0_13 = arith.constant 0 : index
    %12 = vector.load %arg9[%c0_12, %c0_13] : memref<256x8xf32, #tpu.memory_space<vmem>>, vector<256x8xf32>
    tpu.vector_store %arg9[%c0_12, %c0_13], %11 {strides = array<i32>} : memref<256x8xf32, #tpu.memory_space<vmem>>, vector<256x8xf32>,
    %c0_14 = arith.constant 0 : index
    %c0_15 = arith.constant 0 : index
    %c0_16 = arith.constant 0 : index
    %13 = vector.load %arg7[%c0_14, %c0_15, %c0_16] : memref<16x16x2xf32, #tpu.memory_space<vmem>>, vector<3x16x2xf32>
    %cst_17 = arith.constant dense<0xFF800000> : vector<16x2xf32>
    %14 = vector.multi_reduction <maximumf>, %13, %cst_17 [0] : vector<3x16x2xf32> to vector<16x2xf32>
    %c0_18 = arith.constant 0 : index
    %c0_19 = arith.constant 0 : index
    %c0_20 = arith.constant 0 : index
    %15 = vector.load %arg8[%c0_18, %c0_19, %c0_20] : memref<16x16x2xf32, #tpu.memory_space<vmem>>, vector<1x16x2xf32>
    %16 = vector.shape_cast %15 : vector<1x16x2xf32> to vector<16x2xf32>
    %17 = vector.shape_cast %14 : vector<16x2xf32> to vector<1x16x2xf32>
    tpu.vector_store %arg8[%c0_18, %c0_19, %c0_20], %17 {strides = array<i32>} : memref<16x16x2xf32, #tpu.memory_space<vmem>>, vector<1x16x2xf32>,
    %c0_21 = arith.constant 0 : index
    %c0_22 = arith.constant 0 : index
    %c0_23 = arith.constant 0 : index
    %18 = vector.load %arg7[%c0_21, %c0_22, %c0_23] : memref<16x16x2xf32, #tpu.memory_space<vmem>>, vector<4x16x2xf32>
    %cst_24 = arith.constant dense<0xFF800000> : vector<16x2xf32>
    %19 = vector.multi_reduction <maximumf>, %18, %cst_24 [0] : vector<4x16x2xf32> to vector<16x2xf32>
    %c1 = arith.constant 1 : index
    %c0_25 = arith.constant 0 : index
    %c0_26 = arith.constant 0 : index
    %20 = vector.load %arg8[%c1, %c0_25, %c0_26] : memref<16x16x2xf32, #tpu.memory_space<vmem>>, vector<1x16x2xf32>
    %21 = vector.shape_cast %20 : vector<1x16x2xf32> to vector<16x2xf32>
    %22 = vector.shape_cast %19 : vector<16x2xf32> to vector<1x16x2xf32>
    tpu.vector_store %arg8[%c1, %c0_25, %c0_26], %22 {strides = array<i32>} : memref<16x16x2xf32, #tpu.memory_space<vmem>>, vector<1x16x2xf32>,
    %c0_27 = arith.constant 0 : index
    %c0_28 = arith.constant 0 : index
    %c0_29 = arith.constant 0 : index
    %23 = vector.load %arg7[%c0_27, %c0_28, %c0_29] : memref<16x16x2xf32, #tpu.memory_space<vmem>>, vector<12x16x2xf32>
    %c1_30 = arith.constant 1 : index
    %c0_31 = arith.constant 0 : index
    %c0_32 = arith.constant 0 : index
    %24 = vector.load %arg7[%c1_30, %c0_31, %c0_32] : memref<16x16x2xf32, #tpu.memory_space<vmem>>, vector<12x16x2xf32>
    %25 = arith.maximumf %23, %24 : vector<12x16x2xf32>
    %c2 = arith.constant 2 : index
    %c0_33 = arith.constant 0 : index
    %c0_34 = arith.constant 0 : index
    %26 = vector.load %arg7[%c2, %c0_33, %c0_34] : memref<16x16x2xf32, #tpu.memory_space<vmem>>, vector<12x16x2xf32>
    %27 = arith.maximumf %25, %26 : vector<12x16x2xf32>
    %c3 = arith.constant 3 : index
    %c0_35 = arith.constant 0 : index
    %c0_36 = arith.constant 0 : index
    %28 = vector.load %arg7[%c3, %c0_35, %c0_36] : memref<16x16x2xf32, #tpu.memory_space<vmem>>, vector<12x16x2xf32>
    %29 = arith.maximumf %27, %28 : vector<12x16x2xf32>
    %c4 = arith.constant 4 : index
    %c0_37 = arith.constant 0 : index
    %c0_38 = arith.constant 0 : index
    %30 = vector.load %arg7[%c4, %c0_37, %c0_38] : memref<16x16x2xf32, #tpu.memory_space<vmem>>, vector<12x16x2xf32>
    %31 = arith.maximumf %29, %30 : vector<12x16x2xf32>
    %c2_39 = arith.constant 2 : index
    %c0_40 = arith.constant 0 : index
    %c0_41 = arith.constant 0 : index
    %32 = vector.load %arg8[%c2_39, %c0_40, %c0_41] : memref<16x16x2xf32, #tpu.memory_space<vmem>>, vector<12x16x2xf32>
    tpu.vector_store %arg8[%c2_39, %c0_40, %c0_41], %31 {strides = array<i32>} : memref<16x16x2xf32, #tpu.memory_space<vmem>>, vector<12x16x2xf32>,
    %c12 = arith.constant 12 : index
    %c0_42 = arith.constant 0 : index
    %c0_43 = arith.constant 0 : index
    %33 = vector.load %arg7[%c12, %c0_42, %c0_43] : memref<16x16x2xf32, #tpu.memory_space<vmem>>, vector<4x16x2xf32>
    %cst_44 = arith.constant dense<0xFF800000> : vector<16x2xf32>
    %34 = vector.multi_reduction <maximumf>, %33, %cst_44 [0] : vector<4x16x2xf32> to vector<16x2xf32>
    %c14 = arith.constant 14 : index
    %c0_45 = arith.constant 0 : index
    %c0_46 = arith.constant 0 : index
    %35 = vector.load %arg8[%c14, %c0_45, %c0_46] : memref<16x16x2xf32, #tpu.memory_space<vmem>>, vector<1x16x2xf32>
    %36 = vector.shape_cast %35 : vector<1x16x2xf32> to vector<16x2xf32>
    %37 = vector.shape_cast %34 : vector<16x2xf32> to vector<1x16x2xf32>
    tpu.vector_store %arg8[%c14, %c0_45, %c0_46], %37 {strides = array<i32>} : memref<16x16x2xf32, #tpu.memory_space<vmem>>, vector<1x16x2xf32>,
    %c13 = arith.constant 13 : index
    %c0_47 = arith.constant 0 : index
    %c0_48 = arith.constant 0 : index
    %38 = vector.load %arg7[%c13, %c0_47, %c0_48] : memref<16x16x2xf32, #tpu.memory_space<vmem>>, vector<3x16x2xf32>
    %cst_49 = arith.constant dense<0xFF800000> : vector<16x2xf32>
    %39 = vector.multi_reduction <maximumf>, %38, %cst_49 [0] : vector<3x16x2xf32> to vector<16x2xf32>
    %c15 = arith.constant 15 : index
    %c0_50 = arith.constant 0 : index
    %c0_51 = arith.constant 0 : index
    %40 = vector.load %arg8[%c15, %c0_50, %c0_51] : memref<16x16x2xf32, #tpu.memory_space<vmem>>, vector<1x16x2xf32>
    %41 = vector.shape_cast %40 : vector<1x16x2xf32> to vector<16x2xf32>
    %42 = vector.shape_cast %39 : vector<16x2xf32> to vector<1x16x2xf32>
    tpu.vector_store %arg8[%c15, %c0_50, %c0_51], %42 {strides = array<i32>} : memref<16x16x2xf32, #tpu.memory_space<vmem>>, vector<1x16x2xf32>,
    %c0_52 = arith.constant 0 : index
    %c0_53 = arith.constant 0 : index
    %c0_54 = arith.constant 0 : index
    %43 = vector.load %arg8[%c0_52, %c0_53, %c0_54] : memref<16x16x2xf32, #tpu.memory_space<vmem>>, vector<16x3x2xf32>
    %cst_55 = arith.constant dense<0xFF800000> : vector<16x2xf32>
    %44 = vector.multi_reduction <maximumf>, %43, %cst_55 [1] : vector<16x3x2xf32> to vector<16x2xf32>
    %c0_56 = arith.constant 0 : index
    %c0_57 = arith.constant 0 : index
    %c0_58 = arith.constant 0 : index
    %45 = vector.load %arg7[%c0_56, %c0_57, %c0_58] : memref<16x16x2xf32, #tpu.memory_space<vmem>>, vector<16x1x2xf32>
    %46 = vector.shape_cast %45 : vector<16x1x2xf32> to vector<16x2xf32>
    %47 = vector.shape_cast %44 : vector<16x2xf32> to vector<16x1x2xf32>
    tpu.vector_store %arg7[%c0_56, %c0_57, %c0_58], %47 {strides = array<i32>} : memref<16x16x2xf32, #tpu.memory_space<vmem>>, vector<16x1x2xf32>,
    %c0_59 = arith.constant 0 : index
    %c0_60 = arith.constant 0 : index
    %c0_61 = arith.constant 0 : index
    %48 = vector.load %arg8[%c0_59, %c0_60, %c0_61] : memref<16x16x2xf32, #tpu.memory_space<vmem>>, vector<16x4x2xf32>
    %cst_62 = arith.constant dense<0xFF800000> : vector<16x2xf32>
    %49 = vector.multi_reduction <maximumf>, %48, %cst_62 [1] : vector<16x4x2xf32> to vector<16x2xf32>
    %c0_63 = arith.constant 0 : index
    %c1_64 = arith.constant 1 : index
    %c0_65 = arith.constant 0 : index
    %50 = vector.load %arg7[%c0_63, %c1_64, %c0_65] : memref<16x16x2xf32, #tpu.memory_space<vmem>>, vector<16x1x2xf32>
    %51 = vector.shape_cast %50 : vector<16x1x2xf32> to vector<16x2xf32>
    %52 = vector.shape_cast %49 : vector<16x2xf32> to vector<16x1x2xf32>
    tpu.vector_store %arg7[%c0_63, %c1_64, %c0_65], %52 {strides = array<i32>} : memref<16x16x2xf32, #tpu.memory_space<vmem>>, vector<16x1x2xf32>,
    %c0_66 = arith.constant 0 : index
    %c0_67 = arith.constant 0 : index
    %c0_68 = arith.constant 0 : index
    %53 = vector.load %arg8[%c0_66, %c0_67, %c0_68] : memref<16x16x2xf32, #tpu.memory_space<vmem>>, vector<16x12x2xf32>
    %c0_69 = arith.constant 0 : index
    %c1_70 = arith.constant 1 : index
    %c0_71 = arith.constant 0 : index
    %54 = vector.load %arg8[%c0_69, %c1_70, %c0_71] : memref<16x16x2xf32, #tpu.memory_space<vmem>>, vector<16x12x2xf32>
    %55 = arith.maximumf %53, %54 : vector<16x12x2xf32>
    %c0_72 = arith.constant 0 : index
    %c2_73 = arith.constant 2 : index
    %c0_74 = arith.constant 0 : index
    %56 = vector.load %arg8[%c0_72, %c2_73, %c0_74] : memref<16x16x2xf32, #tpu.memory_space<vmem>>, vector<16x12x2xf32>
    %57 = arith.maximumf %55, %56 : vector<16x12x2xf32>
    %c0_75 = arith.constant 0 : index
    %c3_76 = arith.constant 3 : index
    %c0_77 = arith.constant 0 : index
    %58 = vector.load %arg8[%c0_75, %c3_76, %c0_77] : memref<16x16x2xf32, #tpu.memory_space<vmem>>, vector<16x12x2xf32>
    %59 = arith.maximumf %57, %58 : vector<16x12x2xf32>
    %c0_78 = arith.constant 0 : index
    %c4_79 = arith.constant 4 : index
    %c0_80 = arith.constant 0 : index
    %60 = vector.load %arg8[%c0_78, %c4_79, %c0_80] : memref<16x16x2xf32, #tpu.memory_space<vmem>>, vector<16x12x2xf32>
    %61 = arith.maximumf %59, %60 : vector<16x12x2xf32>
    %c0_81 = arith.constant 0 : index
    %c2_82 = arith.constant 2 : index
    %c0_83 = arith.constant 0 : index
    %62 = vector.load %arg7[%c0_81, %c2_82, %c0_83] : memref<16x16x2xf32, #tpu.memory_space<vmem>>, vector<16x12x2xf32>
    tpu.vector_store %arg7[%c0_81, %c2_82, %c0_83], %61 {strides = array<i32>} : memref<16x16x2xf32, #tpu.memory_space<vmem>>, vector<16x12x2xf32>,
    %c0_84 = arith.constant 0 : index
    %c12_85 = arith.constant 12 : index
    %c0_86 = arith.constant 0 : index
    %63 = vector.load %arg8[%c0_84, %c12_85, %c0_86] : memref<16x16x2xf32, #tpu.memory_space<vmem>>, vector<16x4x2xf32>
    %cst_87 = arith.constant dense<0xFF800000> : vector<16x2xf32>
    %64 = vector.multi_reduction <maximumf>, %63, %cst_87 [1] : vector<16x4x2xf32> to vector<16x2xf32>
    %c0_88 = arith.constant 0 : index
    %c14_89 = arith.constant 14 : index
    %c0_90 = arith.constant 0 : index
    %65 = vector.load %arg7[%c0_88, %c14_89, %c0_90] : memref<16x16x2xf32, #tpu.memory_space<vmem>>, vector<16x1x2xf32>
    %66 = vector.shape_cast %65 : vector<16x1x2xf32> to vector<16x2xf32>
    %67 = vector.shape_cast %64 : vector<16x2xf32> to vector<16x1x2xf32>
    tpu.vector_store %arg7[%c0_88, %c14_89, %c0_90], %67 {strides = array<i32>} : memref<16x16x2xf32, #tpu.memory_space<vmem>>, vector<16x1x2xf32>,
    %c0_91 = arith.constant 0 : index
    %c13_92 = arith.constant 13 : index
    %c0_93 = arith.constant 0 : index
    %68 = vector.load %arg8[%c0_91, %c13_92, %c0_93] : memref<16x16x2xf32, #tpu.memory_space<vmem>>, vector<16x3x2xf32>
    %cst_94 = arith.constant dense<0xFF800000> : vector<16x2xf32>
    %69 = vector.multi_reduction <maximumf>, %68, %cst_94 [1] : vector<16x3x2xf32> to vector<16x2xf32>
    %c0_95 = arith.constant 0 : index
    %c15_96 = arith.constant 15 : index
    %c0_97 = arith.constant 0 : index
    %70 = vector.load %arg7[%c0_95, %c15_96, %c0_97] : memref<16x16x2xf32, #tpu.memory_space<vmem>>, vector<16x1x2xf32>
    %71 = vector.shape_cast %70 : vector<16x1x2xf32> to vector<16x2xf32>
    %72 = vector.shape_cast %69 : vector<16x2xf32> to vector<16x1x2xf32>
    tpu.vector_store %arg7[%c0_95, %c15_96, %c0_97], %72 {strides = array<i32>} : memref<16x16x2xf32, #tpu.memory_space<vmem>>, vector<16x1x2xf32>,
    %c0_98 = arith.constant 0 : index
    %c0_99 = arith.constant 0 : index
    %73 = vector.load %arg9[%c0_98, %c0_99] : memref<256x8xf32, #tpu.memory_space<vmem>>, vector<256x8xf32>
    %c0_100 = arith.constant 0 : index
    %c0_101 = arith.constant 0 : index
    %c0_102 = arith.constant 0 : index
    %74 = vector.load %arg7[%c0_100, %c0_101, %c0_102] : memref<16x16x2xf32, #tpu.memory_space<vmem>>, vector<16x16x2xf32>
    %75 = vector.shape_cast %74 : vector<16x16x2xf32> to vector<256x2xf32>
    %c1_103 = arith.constant 1 : index
    %c0_104 = arith.constant 0 : index
    %c0_105 = arith.constant 0 : index
    %76 = vector.load %arg3[%c1_103, %c0_104, %c0_105] : memref<4x2x8xf32, #tpu.memory_space<vmem>>, vector<1x2x8xf32>
    %77 = vector.shape_cast %76 : vector<1x2x8xf32> to vector<2x8xf32>
    %cst_106 = arith.constant dense<0.000000e+00> : vector<256x8xf32>
    %78 = tpu.matmul %75, %77, %cst_106 {dimension_numbers = #tpu.dot_dimension_numbers<[1], [0], [0], [1], [0, 0, 1, 1], [], []>} : vector<256x2xf32>, vector<2x8xf32>, vector<256x8xf32> -> vector<256x8xf32>
    %79 = arith.addf %73, %78 : vector<256x8xf32>
    %c0_107 = arith.constant 0 : index
    %c0_108 = arith.constant 0 : index
    %80 = vector.load %arg9[%c0_107, %c0_108] : memref<256x8xf32, #tpu.memory_space<vmem>>, vector<256x8xf32>
    tpu.vector_store %arg9[%c0_107, %c0_108], %79 {strides = array<i32>} : memref<256x8xf32, #tpu.memory_space<vmem>>, vector<256x8xf32>,
    %c0_109 = arith.constant 0 : index
    %c0_110 = arith.constant 0 : index
    %c0_111 = arith.constant 0 : index
    %81 = vector.load %arg7[%c0_109, %c0_110, %c0_111] : memref<16x16x2xf32, #tpu.memory_space<vmem>>, vector<3x16x2xf32>
    %cst_112 = arith.constant dense<0xFF800000> : vector<16x2xf32>
    %82 = vector.multi_reduction <maximumf>, %81, %cst_112 [0] : vector<3x16x2xf32> to vector<16x2xf32>
    %c0_113 = arith.constant 0 : index
    %c0_114 = arith.constant 0 : index
    %c0_115 = arith.constant 0 : index
    %83 = vector.load %arg8[%c0_113, %c0_114, %c0_115] : memref<16x16x2xf32, #tpu.memory_space<vmem>>, vector<1x16x2xf32>
    %84 = vector.shape_cast %83 : vector<1x16x2xf32> to vector<16x2xf32>
    %85 = vector.shape_cast %82 : vector<16x2xf32> to vector<1x16x2xf32>
    tpu.vector_store %arg8[%c0_113, %c0_114, %c0_115], %85 {strides = array<i32>} : memref<16x16x2xf32, #tpu.memory_space<vmem>>, vector<1x16x2xf32>,
    %c0_116 = arith.constant 0 : index
    %c0_117 = arith.constant 0 : index
    %c0_118 = arith.constant 0 : index
    %86 = vector.load %arg7[%c0_116, %c0_117, %c0_118] : memref<16x16x2xf32, #tpu.memory_space<vmem>>, vector<4x16x2xf32>
    %cst_119 = arith.constant dense<0xFF800000> : vector<16x2xf32>
    %87 = vector.multi_reduction <maximumf>, %86, %cst_119 [0] : vector<4x16x2xf32> to vector<16x2xf32>
    %c1_120 = arith.constant 1 : index
    %c0_121 = arith.constant 0 : index
    %c0_122 = arith.constant 0 : index
    %88 = vector.load %arg8[%c1_120, %c0_121, %c0_122] : memref<16x16x2xf32, #tpu.memory_space<vmem>>, vector<1x16x2xf32>
    %89 = vector.shape_cast %88 : vector<1x16x2xf32> to vector<16x2xf32>
    %90 = vector.shape_cast %87 : vector<16x2xf32> to vector<1x16x2xf32>
    tpu.vector_store %arg8[%c1_120, %c0_121, %c0_122], %90 {strides = array<i32>} : memref<16x16x2xf32, #tpu.memory_space<vmem>>, vector<1x16x2xf32>,
    %c0_123 = arith.constant 0 : index
    %c0_124 = arith.constant 0 : index
    %c0_125 = arith.constant 0 : index
    %91 = vector.load %arg7[%c0_123, %c0_124, %c0_125] : memref<16x16x2xf32, #tpu.memory_space<vmem>>, vector<12x16x2xf32>
    %c1_126 = arith.constant 1 : index
    %c0_127 = arith.constant 0 : index
    %c0_128 = arith.constant 0 : index
    %92 = vector.load %arg7[%c1_126, %c0_127, %c0_128] : memref<16x16x2xf32, #tpu.memory_space<vmem>>, vector<12x16x2xf32>
    %93 = arith.maximumf %91, %92 : vector<12x16x2xf32>
    %c2_129 = arith.constant 2 : index
    %c0_130 = arith.constant 0 : index
    %c0_131 = arith.constant 0 : index
    %94 = vector.load %arg7[%c2_129, %c0_130, %c0_131] : memref<16x16x2xf32, #tpu.memory_space<vmem>>, vector<12x16x2xf32>
    %95 = arith.maximumf %93, %94 : vector<12x16x2xf32>
    %c3_132 = arith.constant 3 : index
    %c0_133 = arith.constant 0 : index
    %c0_134 = arith.constant 0 : index
    %96 = vector.load %arg7[%c3_132, %c0_133, %c0_134] : memref<16x16x2xf32, #tpu.memory_space<vmem>>, vector<12x16x2xf32>
    %97 = arith.maximumf %95, %96 : vector<12x16x2xf32>
    %c4_135 = arith.constant 4 : index
    %c0_136 = arith.constant 0 : index
    %c0_137 = arith.constant 0 : index
    %98 = vector.load %arg7[%c4_135, %c0_136, %c0_137] : memref<16x16x2xf32, #tpu.memory_space<vmem>>, vector<12x16x2xf32>
    %99 = arith.maximumf %97, %98 : vector<12x16x2xf32>
    %c2_138 = arith.constant 2 : index
    %c0_139 = arith.constant 0 : index
    %c0_140 = arith.constant 0 : index
    %100 = vector.load %arg8[%c2_138, %c0_139, %c0_140] : memref<16x16x2xf32, #tpu.memory_space<vmem>>, vector<12x16x2xf32>
    tpu.vector_store %arg8[%c2_138, %c0_139, %c0_140], %99 {strides = array<i32>} : memref<16x16x2xf32, #tpu.memory_space<vmem>>, vector<12x16x2xf32>,
    %c12_141 = arith.constant 12 : index
    %c0_142 = arith.constant 0 : index
    %c0_143 = arith.constant 0 : index
    %101 = vector.load %arg7[%c12_141, %c0_142, %c0_143] : memref<16x16x2xf32, #tpu.memory_space<vmem>>, vector<4x16x2xf32>
    %cst_144 = arith.constant dense<0xFF800000> : vector<16x2xf32>
    %102 = vector.multi_reduction <maximumf>, %101, %cst_144 [0] : vector<4x16x2xf32> to vector<16x2xf32>
    %c14_145 = arith.constant 14 : index
    %c0_146 = arith.constant 0 : index
    %c0_147 = arith.constant 0 : index
    %103 = vector.load %arg8[%c14_145, %c0_146, %c0_147] : memref<16x16x2xf32, #tpu.memory_space<vmem>>, vector<1x16x2xf32>
    %104 = vector.shape_cast %103 : vector<1x16x2xf32> to vector<16x2xf32>
    %105 = vector.shape_cast %102 : vector<16x2xf32> to vector<1x16x2xf32>
    tpu.vector_store %arg8[%c14_145, %c0_146, %c0_147], %105 {strides = array<i32>} : memref<16x16x2xf32, #tpu.memory_space<vmem>>, vector<1x16x2xf32>,
    %c13_148 = arith.constant 13 : index
    %c0_149 = arith.constant 0 : index
    %c0_150 = arith.constant 0 : index
    %106 = vector.load %arg7[%c13_148, %c0_149, %c0_150] : memref<16x16x2xf32, #tpu.memory_space<vmem>>, vector<3x16x2xf32>
    %cst_151 = arith.constant dense<0xFF800000> : vector<16x2xf32>
    %107 = vector.multi_reduction <maximumf>, %106, %cst_151 [0] : vector<3x16x2xf32> to vector<16x2xf32>
    %c15_152 = arith.constant 15 : index
    %c0_153 = arith.constant 0 : index
    %c0_154 = arith.constant 0 : index
    %108 = vector.load %arg8[%c15_152, %c0_153, %c0_154] : memref<16x16x2xf32, #tpu.memory_space<vmem>>, vector<1x16x2xf32>
    %109 = vector.shape_cast %108 : vector<1x16x2xf32> to vector<16x2xf32>
    %110 = vector.shape_cast %107 : vector<16x2xf32> to vector<1x16x2xf32>
    tpu.vector_store %arg8[%c15_152, %c0_153, %c0_154], %110 {strides = array<i32>} : memref<16x16x2xf32, #tpu.memory_space<vmem>>, vector<1x16x2xf32>,
    %c0_155 = arith.constant 0 : index
    %c0_156 = arith.constant 0 : index
    %c0_157 = arith.constant 0 : index
    %111 = vector.load %arg8[%c0_155, %c0_156, %c0_157] : memref<16x16x2xf32, #tpu.memory_space<vmem>>, vector<16x3x2xf32>
    %cst_158 = arith.constant dense<0xFF800000> : vector<16x2xf32>
    %112 = vector.multi_reduction <maximumf>, %111, %cst_158 [1] : vector<16x3x2xf32> to vector<16x2xf32>
    %c0_159 = arith.constant 0 : index
    %c0_160 = arith.constant 0 : index
    %c0_161 = arith.constant 0 : index
    %113 = vector.load %arg7[%c0_159, %c0_160, %c0_161] : memref<16x16x2xf32, #tpu.memory_space<vmem>>, vector<16x1x2xf32>
    %114 = vector.shape_cast %113 : vector<16x1x2xf32> to vector<16x2xf32>
    %115 = vector.shape_cast %112 : vector<16x2xf32> to vector<16x1x2xf32>
    tpu.vector_store %arg7[%c0_159, %c0_160, %c0_161], %115 {strides = array<i32>} : memref<16x16x2xf32, #tpu.memory_space<vmem>>, vector<16x1x2xf32>,
    %c0_162 = arith.constant 0 : index
    %c0_163 = arith.constant 0 : index
    %c0_164 = arith.constant 0 : index
    %116 = vector.load %arg8[%c0_162, %c0_163, %c0_164] : memref<16x16x2xf32, #tpu.memory_space<vmem>>, vector<16x4x2xf32>
    %cst_165 = arith.constant dense<0xFF800000> : vector<16x2xf32>
    %117 = vector.multi_reduction <maximumf>, %116, %cst_165 [1] : vector<16x4x2xf32> to vector<16x2xf32>
    %c0_166 = arith.constant 0 : index
    %c1_167 = arith.constant 1 : index
    %c0_168 = arith.constant 0 : index
    %118 = vector.load %arg7[%c0_166, %c1_167, %c0_168] : memref<16x16x2xf32, #tpu.memory_space<vmem>>, vector<16x1x2xf32>
    %119 = vector.shape_cast %118 : vector<16x1x2xf32> to vector<16x2xf32>
    %120 = vector.shape_cast %117 : vector<16x2xf32> to vector<16x1x2xf32>
    tpu.vector_store %arg7[%c0_166, %c1_167, %c0_168], %120 {strides = array<i32>} : memref<16x16x2xf32, #tpu.memory_space<vmem>>, vector<16x1x2xf32>,
    %c0_169 = arith.constant 0 : index
    %c0_170 = arith.constant 0 : index
    %c0_171 = arith.constant 0 : index
    %121 = vector.load %arg8[%c0_169, %c0_170, %c0_171] : memref<16x16x2xf32, #tpu.memory_space<vmem>>, vector<16x12x2xf32>
    %c0_172 = arith.constant 0 : index
    %c1_173 = arith.constant 1 : index
    %c0_174 = arith.constant 0 : index
    %122 = vector.load %arg8[%c0_172, %c1_173, %c0_174] : memref<16x16x2xf32, #tpu.memory_space<vmem>>, vector<16x12x2xf32>
    %123 = arith.maximumf %121, %122 : vector<16x12x2xf32>
    %c0_175 = arith.constant 0 : index
    %c2_176 = arith.constant 2 : index
    %c0_177 = arith.constant 0 : index
    %124 = vector.load %arg8[%c0_175, %c2_176, %c0_177] : memref<16x16x2xf32, #tpu.memory_space<vmem>>, vector<16x12x2xf32>
    %125 = arith.maximumf %123, %124 : vector<16x12x2xf32>
    %c0_178 = arith.constant 0 : index
    %c3_179 = arith.constant 3 : index
    %c0_180 = arith.constant 0 : index
    %126 = vector.load %arg8[%c0_178, %c3_179, %c0_180] : memref<16x16x2xf32, #tpu.memory_space<vmem>>, vector<16x12x2xf32>
    %127 = arith.maximumf %125, %126 : vector<16x12x2xf32>
    %c0_181 = arith.constant 0 : index
    %c4_182 = arith.constant 4 : index
    %c0_183 = arith.constant 0 : index
    %128 = vector.load %arg8[%c0_181, %c4_182, %c0_183] : memref<16x16x2xf32, #tpu.memory_space<vmem>>, vector<16x12x2xf32>
    %129 = arith.maximumf %127, %128 : vector<16x12x2xf32>
    %c0_184 = arith.constant 0 : index
    %c2_185 = arith.constant 2 : index
    %c0_186 = arith.constant 0 : index
    %130 = vector.load %arg7[%c0_184, %c2_185, %c0_186] : memref<16x16x2xf32, #tpu.memory_space<vmem>>, vector<16x12x2xf32>
    tpu.vector_store %arg7[%c0_184, %c2_185, %c0_186], %129 {strides = array<i32>} : memref<16x16x2xf32, #tpu.memory_space<vmem>>, vector<16x12x2xf32>,
    %c0_187 = arith.constant 0 : index
    %c12_188 = arith.constant 12 : index
    %c0_189 = arith.constant 0 : index
    %131 = vector.load %arg8[%c0_187, %c12_188, %c0_189] : memref<16x16x2xf32, #tpu.memory_space<vmem>>, vector<16x4x2xf32>
    %cst_190 = arith.constant dense<0xFF800000> : vector<16x2xf32>
    %132 = vector.multi_reduction <maximumf>, %131, %cst_190 [1] : vector<16x4x2xf32> to vector<16x2xf32>
    %c0_191 = arith.constant 0 : index
    %c14_192 = arith.constant 14 : index
    %c0_193 = arith.constant 0 : index
    %133 = vector.load %arg7[%c0_191, %c14_192, %c0_193] : memref<16x16x2xf32, #tpu.memory_space<vmem>>, vector<16x1x2xf32>
    %134 = vector.shape_cast %133 : vector<16x1x2xf32> to vector<16x2xf32>
    %135 = vector.shape_cast %132 : vector<16x2xf32> to vector<16x1x2xf32>
    tpu.vector_store %arg7[%c0_191, %c14_192, %c0_193], %135 {strides = array<i32>} : memref<16x16x2xf32, #tpu.memory_space<vmem>>, vector<16x1x2xf32>,
    %c0_194 = arith.constant 0 : index
    %c13_195 = arith.constant 13 : index
    %c0_196 = arith.constant 0 : index
    %136 = vector.load %arg8[%c0_194, %c13_195, %c0_196] : memref<16x16x2xf32, #tpu.memory_space<vmem>>, vector<16x3x2xf32>
    %cst_197 = arith.constant dense<0xFF800000> : vector<16x2xf32>
    %137 = vector.multi_reduction <maximumf>, %136, %cst_197 [1] : vector<16x3x2xf32> to vector<16x2xf32>
    %c0_198 = arith.constant 0 : index
    %c15_199 = arith.constant 15 : index
    %c0_200 = arith.constant 0 : index
    %138 = vector.load %arg7[%c0_198, %c15_199, %c0_200] : memref<16x16x2xf32, #tpu.memory_space<vmem>>, vector<16x1x2xf32>
    %139 = vector.shape_cast %138 : vector<16x1x2xf32> to vector<16x2xf32>
    %140 = vector.shape_cast %137 : vector<16x2xf32> to vector<16x1x2xf32>
    tpu.vector_store %arg7[%c0_198, %c15_199, %c0_200], %140 {strides = array<i32>} : memref<16x16x2xf32, #tpu.memory_space<vmem>>, vector<16x1x2xf32>,
    %c0_201 = arith.constant 0 : index
    %c0_202 = arith.constant 0 : index
    %141 = vector.load %arg9[%c0_201, %c0_202] : memref<256x8xf32, #tpu.memory_space<vmem>>, vector<256x8xf32>
    %c0_203 = arith.constant 0 : index
    %c0_204 = arith.constant 0 : index
    %c0_205 = arith.constant 0 : index
    %142 = vector.load %arg7[%c0_203, %c0_204, %c0_205] : memref<16x16x2xf32, #tpu.memory_space<vmem>>, vector<16x16x2xf32>
    %143 = vector.shape_cast %142 : vector<16x16x2xf32> to vector<256x2xf32>
    %c2_206 = arith.constant 2 : index
    %c0_207 = arith.constant 0 : index
    %c0_208 = arith.constant 0 : index
    %144 = vector.load %arg3[%c2_206, %c0_207, %c0_208] : memref<4x2x8xf32, #tpu.memory_space<vmem>>, vector<1x2x8xf32>
    %145 = vector.shape_cast %144 : vector<1x2x8xf32> to vector<2x8xf32>
    %cst_209 = arith.constant dense<0.000000e+00> : vector<256x8xf32>
    %146 = tpu.matmul %143, %145, %cst_209 {dimension_numbers = #tpu.dot_dimension_numbers<[1], [0], [0], [1], [0, 0, 1, 1], [], []>} : vector<256x2xf32>, vector<2x8xf32>, vector<256x8xf32> -> vector<256x8xf32>
    %147 = arith.addf %141, %146 : vector<256x8xf32>
    %c0_210 = arith.constant 0 : index
    %c0_211 = arith.constant 0 : index
    %148 = vector.load %arg9[%c0_210, %c0_211] : memref<256x8xf32, #tpu.memory_space<vmem>>, vector<256x8xf32>
    tpu.vector_store %arg9[%c0_210, %c0_211], %147 {strides = array<i32>} : memref<256x8xf32, #tpu.memory_space<vmem>>, vector<256x8xf32>,
    %c0_212 = arith.constant 0 : index
    %c0_213 = arith.constant 0 : index
    %c0_214 = arith.constant 0 : index
    %149 = vector.load %arg7[%c0_212, %c0_213, %c0_214] : memref<16x16x2xf32, #tpu.memory_space<vmem>>, vector<3x16x2xf32>
    %cst_215 = arith.constant dense<0xFF800000> : vector<16x2xf32>
    %150 = vector.multi_reduction <maximumf>, %149, %cst_215 [0] : vector<3x16x2xf32> to vector<16x2xf32>
    %c0_216 = arith.constant 0 : index
    %c0_217 = arith.constant 0 : index
    %c0_218 = arith.constant 0 : index
    %151 = vector.load %arg8[%c0_216, %c0_217, %c0_218] : memref<16x16x2xf32, #tpu.memory_space<vmem>>, vector<1x16x2xf32>
    %152 = vector.shape_cast %151 : vector<1x16x2xf32> to vector<16x2xf32>
    %153 = vector.shape_cast %150 : vector<16x2xf32> to vector<1x16x2xf32>
    tpu.vector_store %arg8[%c0_216, %c0_217, %c0_218], %153 {strides = array<i32>} : memref<16x16x2xf32, #tpu.memory_space<vmem>>, vector<1x16x2xf32>,
    %c0_219 = arith.constant 0 : index
    %c0_220 = arith.constant 0 : index
    %c0_221 = arith.constant 0 : index
    %154 = vector.load %arg7[%c0_219, %c0_220, %c0_221] : memref<16x16x2xf32, #tpu.memory_space<vmem>>, vector<4x16x2xf32>
    %cst_222 = arith.constant dense<0xFF800000> : vector<16x2xf32>
    %155 = vector.multi_reduction <maximumf>, %154, %cst_222 [0] : vector<4x16x2xf32> to vector<16x2xf32>
    %c1_223 = arith.constant 1 : index
    %c0_224 = arith.constant 0 : index
    %c0_225 = arith.constant 0 : index
    %156 = vector.load %arg8[%c1_223, %c0_224, %c0_225] : memref<16x16x2xf32, #tpu.memory_space<vmem>>, vector<1x16x2xf32>
    %157 = vector.shape_cast %156 : vector<1x16x2xf32> to vector<16x2xf32>
    %158 = vector.shape_cast %155 : vector<16x2xf32> to vector<1x16x2xf32>
    tpu.vector_store %arg8[%c1_223, %c0_224, %c0_225], %158 {strides = array<i32>} : memref<16x16x2xf32, #tpu.memory_space<vmem>>, vector<1x16x2xf32>,
    %c0_226 = arith.constant 0 : index
    %c0_227 = arith.constant 0 : index
    %c0_228 = arith.constant 0 : index
    %159 = vector.load %arg7[%c0_226, %c0_227, %c0_228] : memref<16x16x2xf32, #tpu.memory_space<vmem>>, vector<12x16x2xf32>
    %c1_229 = arith.constant 1 : index
    %c0_230 = arith.constant 0 : index
    %c0_231 = arith.constant 0 : index
    %160 = vector.load %arg7[%c1_229, %c0_230, %c0_231] : memref<16x16x2xf32, #tpu.memory_space<vmem>>, vector<12x16x2xf32>
    %161 = arith.maximumf %159, %160 : vector<12x16x2xf32>
    %c2_232 = arith.constant 2 : index
    %c0_233 = arith.constant 0 : index
    %c0_234 = arith.constant 0 : index
    %162 = vector.load %arg7[%c2_232, %c0_233, %c0_234] : memref<16x16x2xf32, #tpu.memory_space<vmem>>, vector<12x16x2xf32>
    %163 = arith.maximumf %161, %162 : vector<12x16x2xf32>
    %c3_235 = arith.constant 3 : index
    %c0_236 = arith.constant 0 : index
    %c0_237 = arith.constant 0 : index
    %164 = vector.load %arg7[%c3_235, %c0_236, %c0_237] : memref<16x16x2xf32, #tpu.memory_space<vmem>>, vector<12x16x2xf32>
    %165 = arith.maximumf %163, %164 : vector<12x16x2xf32>
    %c4_238 = arith.constant 4 : index
    %c0_239 = arith.constant 0 : index
    %c0_240 = arith.constant 0 : index
    %166 = vector.load %arg7[%c4_238, %c0_239, %c0_240] : memref<16x16x2xf32, #tpu.memory_space<vmem>>, vector<12x16x2xf32>
    %167 = arith.maximumf %165, %166 : vector<12x16x2xf32>
    %c2_241 = arith.constant 2 : index
    %c0_242 = arith.constant 0 : index
    %c0_243 = arith.constant 0 : index
    %168 = vector.load %arg8[%c2_241, %c0_242, %c0_243] : memref<16x16x2xf32, #tpu.memory_space<vmem>>, vector<12x16x2xf32>
    tpu.vector_store %arg8[%c2_241, %c0_242, %c0_243], %167 {strides = array<i32>} : memref<16x16x2xf32, #tpu.memory_space<vmem>>, vector<12x16x2xf32>,
    %c12_244 = arith.constant 12 : index
    %c0_245 = arith.constant 0 : index
    %c0_246 = arith.constant 0 : index
    %169 = vector.load %arg7[%c12_244, %c0_245, %c0_246] : memref<16x16x2xf32, #tpu.memory_space<vmem>>, vector<4x16x2xf32>
    %cst_247 = arith.constant dense<0xFF800000> : vector<16x2xf32>
    %170 = vector.multi_reduction <maximumf>, %169, %cst_247 [0] : vector<4x16x2xf32> to vector<16x2xf32>
    %c14_248 = arith.constant 14 : index
    %c0_249 = arith.constant 0 : index
    %c0_250 = arith.constant 0 : index
    %171 = vector.load %arg8[%c14_248, %c0_249, %c0_250] : memref<16x16x2xf32, #tpu.memory_space<vmem>>, vector<1x16x2xf32>
    %172 = vector.shape_cast %171 : vector<1x16x2xf32> to vector<16x2xf32>
    %173 = vector.shape_cast %170 : vector<16x2xf32> to vector<1x16x2xf32>
    tpu.vector_store %arg8[%c14_248, %c0_249, %c0_250], %173 {strides = array<i32>} : memref<16x16x2xf32, #tpu.memory_space<vmem>>, vector<1x16x2xf32>,
    %c13_251 = arith.constant 13 : index
    %c0_252 = arith.constant 0 : index
    %c0_253 = arith.constant 0 : index
    %174 = vector.load %arg7[%c13_251, %c0_252, %c0_253] : memref<16x16x2xf32, #tpu.memory_space<vmem>>, vector<3x16x2xf32>
    %cst_254 = arith.constant dense<0xFF800000> : vector<16x2xf32>
    %175 = vector.multi_reduction <maximumf>, %174, %cst_254 [0] : vector<3x16x2xf32> to vector<16x2xf32>
    %c15_255 = arith.constant 15 : index
    %c0_256 = arith.constant 0 : index
    %c0_257 = arith.constant 0 : index
    %176 = vector.load %arg8[%c15_255, %c0_256, %c0_257] : memref<16x16x2xf32, #tpu.memory_space<vmem>>, vector<1x16x2xf32>
    %177 = vector.shape_cast %176 : vector<1x16x2xf32> to vector<16x2xf32>
    %178 = vector.shape_cast %175 : vector<16x2xf32> to vector<1x16x2xf32>
    tpu.vector_store %arg8[%c15_255, %c0_256, %c0_257], %178 {strides = array<i32>} : memref<16x16x2xf32, #tpu.memory_space<vmem>>, vector<1x16x2xf32>,
    %c0_258 = arith.constant 0 : index
    %c0_259 = arith.constant 0 : index
    %c0_260 = arith.constant 0 : index
    %179 = vector.load %arg8[%c0_258, %c0_259, %c0_260] : memref<16x16x2xf32, #tpu.memory_space<vmem>>, vector<16x3x2xf32>
    %cst_261 = arith.constant dense<0xFF800000> : vector<16x2xf32>
    %180 = vector.multi_reduction <maximumf>, %179, %cst_261 [1] : vector<16x3x2xf32> to vector<16x2xf32>
    %c0_262 = arith.constant 0 : index
    %c0_263 = arith.constant 0 : index
    %c0_264 = arith.constant 0 : index
    %181 = vector.load %arg7[%c0_262, %c0_263, %c0_264] : memref<16x16x2xf32, #tpu.memory_space<vmem>>, vector<16x1x2xf32>
    %182 = vector.shape_cast %181 : vector<16x1x2xf32> to vector<16x2xf32>
    %183 = vector.shape_cast %180 : vector<16x2xf32> to vector<16x1x2xf32>
    tpu.vector_store %arg7[%c0_262, %c0_263, %c0_264], %183 {strides = array<i32>} : memref<16x16x2xf32, #tpu.memory_space<vmem>>, vector<16x1x2xf32>,
    %c0_265 = arith.constant 0 : index
    %c0_266 = arith.constant 0 : index
    %c0_267 = arith.constant 0 : index
    %184 = vector.load %arg8[%c0_265, %c0_266, %c0_267] : memref<16x16x2xf32, #tpu.memory_space<vmem>>, vector<16x4x2xf32>
    %cst_268 = arith.constant dense<0xFF800000> : vector<16x2xf32>
    %185 = vector.multi_reduction <maximumf>, %184, %cst_268 [1] : vector<16x4x2xf32> to vector<16x2xf32>
    %c0_269 = arith.constant 0 : index
    %c1_270 = arith.constant 1 : index
    %c0_271 = arith.constant 0 : index
    %186 = vector.load %arg7[%c0_269, %c1_270, %c0_271] : memref<16x16x2xf32, #tpu.memory_space<vmem>>, vector<16x1x2xf32>
    %187 = vector.shape_cast %186 : vector<16x1x2xf32> to vector<16x2xf32>
    %188 = vector.shape_cast %185 : vector<16x2xf32> to vector<16x1x2xf32>
    tpu.vector_store %arg7[%c0_269, %c1_270, %c0_271], %188 {strides = array<i32>} : memref<16x16x2xf32, #tpu.memory_space<vmem>>, vector<16x1x2xf32>,
    %c0_272 = arith.constant 0 : index
    %c0_273 = arith.constant 0 : index
    %c0_274 = arith.constant 0 : index
    %189 = vector.load %arg8[%c0_272, %c0_273, %c0_274] : memref<16x16x2xf32, #tpu.memory_space<vmem>>, vector<16x12x2xf32>
    %c0_275 = arith.constant 0 : index
    %c1_276 = arith.constant 1 : index
    %c0_277 = arith.constant 0 : index
    %190 = vector.load %arg8[%c0_275, %c1_276, %c0_277] : memref<16x16x2xf32, #tpu.memory_space<vmem>>, vector<16x12x2xf32>
    %191 = arith.maximumf %189, %190 : vector<16x12x2xf32>
    %c0_278 = arith.constant 0 : index
    %c2_279 = arith.constant 2 : index
    %c0_280 = arith.constant 0 : index
    %192 = vector.load %arg8[%c0_278, %c2_279, %c0_280] : memref<16x16x2xf32, #tpu.memory_space<vmem>>, vector<16x12x2xf32>
    %193 = arith.maximumf %191, %192 : vector<16x12x2xf32>
    %c0_281 = arith.constant 0 : index
    %c3_282 = arith.constant 3 : index
    %c0_283 = arith.constant 0 : index
    %194 = vector.load %arg8[%c0_281, %c3_282, %c0_283] : memref<16x16x2xf32, #tpu.memory_space<vmem>>, vector<16x12x2xf32>
    %195 = arith.maximumf %193, %194 : vector<16x12x2xf32>
    %c0_284 = arith.constant 0 : index
    %c4_285 = arith.constant 4 : index
    %c0_286 = arith.constant 0 : index
    %196 = vector.load %arg8[%c0_284, %c4_285, %c0_286] : memref<16x16x2xf32, #tpu.memory_space<vmem>>, vector<16x12x2xf32>
    %197 = arith.maximumf %195, %196 : vector<16x12x2xf32>
    %c0_287 = arith.constant 0 : index
    %c2_288 = arith.constant 2 : index
    %c0_289 = arith.constant 0 : index
    %198 = vector.load %arg7[%c0_287, %c2_288, %c0_289] : memref<16x16x2xf32, #tpu.memory_space<vmem>>, vector<16x12x2xf32>
    tpu.vector_store %arg7[%c0_287, %c2_288, %c0_289], %197 {strides = array<i32>} : memref<16x16x2xf32, #tpu.memory_space<vmem>>, vector<16x12x2xf32>,
    %c0_290 = arith.constant 0 : index
    %c12_291 = arith.constant 12 : index
    %c0_292 = arith.constant 0 : index
    %199 = vector.load %arg8[%c0_290, %c12_291, %c0_292] : memref<16x16x2xf32, #tpu.memory_space<vmem>>, vector<16x4x2xf32>
    %cst_293 = arith.constant dense<0xFF800000> : vector<16x2xf32>
    %200 = vector.multi_reduction <maximumf>, %199, %cst_293 [1] : vector<16x4x2xf32> to vector<16x2xf32>
    %c0_294 = arith.constant 0 : index
    %c14_295 = arith.constant 14 : index
    %c0_296 = arith.constant 0 : index
    %201 = vector.load %arg7[%c0_294, %c14_295, %c0_296] : memref<16x16x2xf32, #tpu.memory_space<vmem>>, vector<16x1x2xf32>
    %202 = vector.shape_cast %201 : vector<16x1x2xf32> to vector<16x2xf32>
    %203 = vector.shape_cast %200 : vector<16x2xf32> to vector<16x1x2xf32>
    tpu.vector_store %arg7[%c0_294, %c14_295, %c0_296], %203 {strides = array<i32>} : memref<16x16x2xf32, #tpu.memory_space<vmem>>, vector<16x1x2xf32>,
    %c0_297 = arith.constant 0 : index
    %c13_298 = arith.constant 13 : index
    %c0_299 = arith.constant 0 : index
    %204 = vector.load %arg8[%c0_297, %c13_298, %c0_299] : memref<16x16x2xf32, #tpu.memory_space<vmem>>, vector<16x3x2xf32>
    %cst_300 = arith.constant dense<0xFF800000> : vector<16x2xf32>
    %205 = vector.multi_reduction <maximumf>, %204, %cst_300 [1] : vector<16x3x2xf32> to vector<16x2xf32>
    %c0_301 = arith.constant 0 : index
    %c15_302 = arith.constant 15 : index
    %c0_303 = arith.constant 0 : index
    %206 = vector.load %arg7[%c0_301, %c15_302, %c0_303] : memref<16x16x2xf32, #tpu.memory_space<vmem>>, vector<16x1x2xf32>
    %207 = vector.shape_cast %206 : vector<16x1x2xf32> to vector<16x2xf32>
    %208 = vector.shape_cast %205 : vector<16x2xf32> to vector<16x1x2xf32>
    tpu.vector_store %arg7[%c0_301, %c15_302, %c0_303], %208 {strides = array<i32>} : memref<16x16x2xf32, #tpu.memory_space<vmem>>, vector<16x1x2xf32>,
    %c0_304 = arith.constant 0 : index
    %c0_305 = arith.constant 0 : index
    %209 = vector.load %arg9[%c0_304, %c0_305] : memref<256x8xf32, #tpu.memory_space<vmem>>, vector<256x8xf32>
    %c0_306 = arith.constant 0 : index
    %c0_307 = arith.constant 0 : index
    %c0_308 = arith.constant 0 : index
    %210 = vector.load %arg7[%c0_306, %c0_307, %c0_308] : memref<16x16x2xf32, #tpu.memory_space<vmem>>, vector<16x16x2xf32>
    %211 = vector.shape_cast %210 : vector<16x16x2xf32> to vector<256x2xf32>
    %c3_309 = arith.constant 3 : index
    %c0_310 = arith.constant 0 : index
    %c0_311 = arith.constant 0 : index
    %212 = vector.load %arg3[%c3_309, %c0_310, %c0_311] : memref<4x2x8xf32, #tpu.memory_space<vmem>>, vector<1x2x8xf32>
    %213 = vector.shape_cast %212 : vector<1x2x8xf32> to vector<2x8xf32>
    %cst_312 = arith.constant dense<0.000000e+00> : vector<256x8xf32>
    %214 = tpu.matmul %211, %213, %cst_312 {dimension_numbers = #tpu.dot_dimension_numbers<[1], [0], [0], [1], [0, 0, 1, 1], [], []>} : vector<256x2xf32>, vector<2x8xf32>, vector<256x8xf32> -> vector<256x8xf32>
    %215 = arith.addf %209, %214 : vector<256x8xf32>
    %c0_313 = arith.constant 0 : index
    %c0_314 = arith.constant 0 : index
    %216 = vector.load %arg9[%c0_313, %c0_314] : memref<256x8xf32, #tpu.memory_space<vmem>>, vector<256x8xf32>
    tpu.vector_store %arg9[%c0_313, %c0_314], %215 {strides = array<i32>} : memref<256x8xf32, #tpu.memory_space<vmem>>, vector<256x8xf32>,
    %c0_i32_315 = arith.constant 0 : i32
    %217 = arith.cmpi eq, %arg1, %c0_i32_315 : i32
    %218 = arith.extui %217 : i1 to i32
    %c0_i32_316 = arith.constant 0 : i32
    %219 = arith.cmpi ne, %218, %c0_i32_316 : i32
    scf.if %219 {
      %c0_317 = arith.constant 0 : index
      %c0_318 = arith.constant 0 : index
      %220 = vector.load %arg9[%c0_317, %c0_318] : memref<256x8xf32, #tpu.memory_space<vmem>>, vector<256x8xf32>
      %c0_319 = arith.constant 0 : index
      %c0_320 = arith.constant 0 : index
      %221 = vector.load %arg4[%c0_319, %c0_320] : memref<1x8xf32, #tpu.memory_space<vmem>>, vector<1x8xf32>
      %222 = vector.broadcast %221 : vector<1x8xf32> to vector<256x8xf32>
      %223 = arith.mulf %220, %222 : vector<256x8xf32>
      %c0_321 = arith.constant 0 : index
      %c0_322 = arith.constant 0 : index
      %224 = vector.load %arg5[%c0_321, %c0_322] : memref<1x8xf32, #tpu.memory_space<vmem>>, vector<1x8xf32>
      %225 = vector.broadcast %224 : vector<1x8xf32> to vector<256x8xf32>
      %226 = arith.addf %223, %225 : vector<256x8xf32>
      %227 = arith.negf %226 : vector<256x8xf32>
      %228 = math.exp %227 : vector<256x8xf32>
      %cst_323 = arith.constant 1.000000e+00 : f32
      %229 = vector.broadcast %cst_323 : f32 to vector<256x8xf32>
      %230 = arith.addf %229, %228 : vector<256x8xf32>
      %231 = arith.divf %229, %230 : vector<256x8xf32>
      %232 = arith.mulf %226, %231 : vector<256x8xf32>
      %c0_324 = arith.constant 0 : index
      %c0_325 = arith.constant 0 : index
      %c0_326 = arith.constant 0 : index
      %233 = vector.load %arg6[%c0_324, %c0_325, %c0_326] : memref<1x256x8xf32, #tpu.memory_space<vmem>>, vector<1x256x8xf32>
      %234 = vector.shape_cast %233 : vector<1x256x8xf32> to vector<256x8xf32>
      %235 = vector.shape_cast %232 : vector<256x8xf32> to vector<1x256x8xf32>
      tpu.vector_store %arg6[%c0_324, %c0_325, %c0_326], %235 {strides = array<i32>} : memref<1x256x8xf32, #tpu.memory_space<vmem>>, vector<1x256x8xf32>,
    } else {
    }
    return
  }
  func.func @transform_0(%arg0: i32, %arg1: i32) -> (i32, i32, i32, i32) {
    %c0_i32 = arith.constant 0 : i32
    %c0_i32_0 = arith.constant 0 : i32
    %c0_i32_1 = arith.constant 0 : i32
    return %arg0, %c0_i32, %c0_i32_0, %arg1 : i32, i32, i32, i32
  }
  func.func @transform_1(%arg0: i32, %arg1: i32) -> (i32, i32, i32) {
    %c0_i32 = arith.constant 0 : i32
    %c0_i32_0 = arith.constant 0 : i32
    %c0_i32_1 = arith.constant 0 : i32
    return %c0_i32, %arg1, %c0_i32_0 : i32, i32, i32
  }
  func.func @transform_2(%arg0: i32, %arg1: i32) -> (i32, i32) {
    %c0_i32 = arith.constant 0 : i32
    %c0_i32_0 = arith.constant 0 : i32
    %c0_i32_1 = arith.constant 0 : i32
    return %c0_i32, %c0_i32_0 : i32, i32
  }
  func.func @transform_3(%arg0: i32, %arg1: i32) -> (i32, i32) {
    %c0_i32 = arith.constant 0 : i32
    %c0_i32_0 = arith.constant 0 : i32
    %c0_i32_1 = arith.constant 0 : i32
    return %c0_i32, %c0_i32_0 : i32, i32
  }
  func.func @transform_4(%arg0: i32, %arg1: i32) -> (i32, i32, i32) {
    %c0_i32 = arith.constant 0 : i32
    %c0_i32_0 = arith.constant 0 : i32
    %c0_i32_1 = arith.constant 0 : i32
    return %arg0, %c0_i32, %c0_i32_0 : i32, i32, i32
  }
}

</mosaic_0001>

<llo_original>
// kernel: spp_bottleneck.2
$region0: #{spp_bottleneck.2}
  #allocation0 [shape = 'u32[]', space=smem, size = 0x4, offset = 0x4, fixed_abs, tag = 'smem constant byte address 0x4 - core index']
  #allocation1 [shape = 'u32[144,128]{1,0:T(1,128)}', space=vmem, size = 0x12000, scoped, tag = 'internal scratch']
  %s0 = inlined_call_operand.vmem [shape: f32[2,4,256], index: 0, kind: input, shape index: {}]
  %s1 = inlined_call_operand.vmem [shape: f32[4,2], index: 1, kind: input, shape index: {}]
  %s2 = inlined_call_operand.vmem [shape: f32[1,2], index: 2, kind: input, shape index: {}]
  %s3 = inlined_call_operand.vmem [shape: f32[1,2], index: 3, kind: input, shape index: {}]
  %s4 = inlined_call_operand.vmem [shape: f32[2,256,2], index: 4, kind: output, shape index: {}]
  %s5 = sld [smem:[#allocation0]]
  $region49: #{spp_bottleneck.2} parent=0
    _
  %s7 = ssub.s32 1, %s5
  %s8 = scalar_select 0, %s7, %s5
  loop: start=0, step=1, limit=4
  $region2: #{spp_bottleneck.2} parent=0 // loop_pre_header
    _
  $region3: #{spp_bottleneck.2} parent=0 // loop_header
    %s10 = sphi 0, %s14
    %p11 = scmp.ge.s32.totalorder %s10, 4
    %s17 = sphi 0, %s29
    %s18 = sphi 0, %s25
    %s19 = sphi 0, %s17
    %s20 = sphi 0, %s18
    %s21 = sphi 0, %s19
    %s22 = sphi 0, %s20
    %s34 = sphi 0, %s36
    %s37 = sphi 0, %s34
    %s38 = sphi 0, %s37
    %s54 = sphi 0, %s38
    %s58 = sphi 0, %s58
    %s60 = sphi 0, %s58
    %s61 = sphi 0, %s60
    %s75 = sphi 0, %s61
    %s79 = sphi 0, %s79
    %s81 = sphi 0, %s79
    %s82 = sphi 0, %s81
    %s96 = sphi 0, %s82
    %s100 = sphi 0, %s100
    %s102 = sphi 0, %s100
    %s103 = sphi 0, %s102
    %s117 = sphi 0, %s103
    %s125 = sphi 0, %s127
    %s128 = sphi 0, %s125
    %s129 = sphi 0, %s128
    %s145 = sphi 0, %s129
  $region4: #{spp_bottleneck.2} parent=0 // loop_header_branch
    %13 = sbr.rel (%p11) target = $region8
  $region5: #{spp_bottleneck.2} parent=0 // loop_body
    %s15 = ssub.s32 %s10, 1
    %s16 = ssub.s32 %s10, 2
    %s23 = sadd.s32 1, %s18
    %p24 = scmp.ge.s32.totalorder %s23, 1
    %s25 = scalar_select %p24, 0, %s23
    %s26 = sadd.s32 1, %s17
    %s27 = scalar_select %p24, %s26, %s17
    %p28 = scmp.ge.s32.totalorder %s27, 2
    %s29 = scalar_select %p28, 0, %s27
    %s30 = ssub.s32 %s17, %s29
    %s31 = ssub.s32 %s18, %s25
    %s32 = sor.u32 %s30, %s31
    %p33 = scmp.eq.s32.totalorder %s32, 0
    %s35 = sadd.s32 %s34, 1
    %s36 = scalar_select %p33, %s34, %s35
    %p39 = pneg %p33
    %p40 = scmp.eq.s32.totalorder %s10, 1
    %p41 = por %p39, %p40
    %p42 = scmp.ne.s32.totalorder %s34, %s37
    %p43 = scmp.eq.s32.totalorder %s10, 0
    %p44 = por %p42, %p43
    %p45 = scmp.ne.s32.totalorder %s34, %s37
    %p46 = scmp.eq.s32.totalorder %s15, 1
    %p47 = por %p45, %p46
    %p48 = scmp.ne.s32.totalorder %s37, %s38
    %p49 = scmp.eq.s32.totalorder %s15, 0
    %p50 = por %p48, %p49
    %p51 = scmp.ne.s32.totalorder %s37, %s38
    %p52 = scmp.eq.s32.totalorder %s16, 1
    %p53 = por %p51, %p52
    %p55 = scmp.ne.s32.totalorder %s38, %s54
    %p56 = scmp.eq.s32.totalorder %s16, 0
    %p57 = por %p55, %p56
    %s59 = sadd.s32 %s58, 1
    %p62 = scmp.eq.s32.totalorder %s10, 1
    %p63 = scmp.ne.s32.totalorder %s58, %s60
    %p64 = scmp.eq.s32.totalorder %s10, 0
    %p65 = por %p63, %p64
    %p66 = scmp.ne.s32.totalorder %s58, %s60
    %p67 = scmp.eq.s32.totalorder %s15, 1
    %p68 = por %p66, %p67
    %p69 = scmp.ne.s32.totalorder %s60, %s61
    %p70 = scmp.eq.s32.totalorder %s15, 0
    %p71 = por %p69, %p70
    %p72 = scmp.ne.s32.totalorder %s60, %s61
    %p73 = scmp.eq.s32.totalorder %s16, 1
    %p74 = por %p72, %p73
    %p76 = scmp.ne.s32.totalorder %s61, %s75
    %p77 = scmp.eq.s32.totalorder %s16, 0
    %p78 = por %p76, %p77
    %s80 = sadd.s32 %s79, 1
    %p83 = scmp.eq.s32.totalorder %s10, 1
    %p84 = scmp.ne.s32.totalorder %s79, %s81
    %p85 = scmp.eq.s32.totalorder %s10, 0
    %p86 = por %p84, %p85
    %p87 = scmp.ne.s32.totalorder %s79, %s81
    %p88 = scmp.eq.s32.totalorder %s15, 1
    %p89 = por %p87, %p88
    %p90 = scmp.ne.s32.totalorder %s81, %s82
    %p91 = scmp.eq.s32.totalorder %s15, 0
    %p92 = por %p90, %p91
    %p93 = scmp.ne.s32.totalorder %s81, %s82
    %p94 = scmp.eq.s32.totalorder %s16, 1
    %p95 = por %p93, %p94
    %p97 = scmp.ne.s32.totalorder %s82, %s96
    %p98 = scmp.eq.s32.totalorder %s16, 0
    %p99 = por %p97, %p98
    %s101 = sadd.s32 %s100, 1
    %p104 = scmp.eq.s32.totalorder %s10, 1
    %p105 = scmp.ne.s32.totalorder %s100, %s102
    %p106 = scmp.eq.s32.totalorder %s10, 0
    %p107 = por %p105, %p106
    %p108 = scmp.ne.s32.totalorder %s100, %s102
    %p109 = scmp.eq.s32.totalorder %s15, 1
    %p110 = por %p108, %p109
    %p111 = scmp.ne.s32.totalorder %s102, %s103
    %p112 = scmp.eq.s32.totalorder %s15, 0
    %p113 = por %p111, %p112
    %p114 = scmp.ne.s32.totalorder %s102, %s103
    %p115 = scmp.eq.s32.totalorder %s16, 1
    %p116 = por %p114, %p115
    %p118 = scmp.ne.s32.totalorder %s103, %s117
    %p119 = scmp.eq.s32.totalorder %s16, 0
    %p120 = por %p118, %p119
    %s121 = ssub.s32 %s17, %s29
    %s122 = ssub.s32 %s18, %s25
    %s123 = sor.u32 %s121, %s122
    %p124 = scmp.eq.s32.totalorder %s123, 0
    %s126 = sadd.s32 %s125, 1
    %s127 = scalar_select %p124, %s125, %s126
    %p130 = pneg %p124
    %p131 = scmp.eq.s32.totalorder %s10, 1
    %p132 = por %p130, %p131
    %p133 = scmp.ne.s32.totalorder %s125, %s128
    %p134 = scmp.eq.s32.totalorder %s10, 0
    %p135 = por %p133, %p134
    %p136 = scmp.ne.s32.totalorder %s125, %s128
    %p137 = scmp.eq.s32.totalorder %s15, 1
    %p138 = por %p136, %p137
    %p139 = scmp.ne.s32.totalorder %s128, %s129
    %p140 = scmp.eq.s32.totalorder %s15, 0
    %p141 = por %p139, %p140
    %p142 = scmp.ne.s32.totalorder %s128, %s129
    %p143 = scmp.eq.s32.totalorder %s16, 1
    %p144 = por %p142, %p143
    %p146 = scmp.ne.s32.totalorder %s129, %s145
    %p147 = scmp.eq.s32.totalorder %s16, 0
    %p148 = por %p146, %p147
    %p149 = scmp.le.s32.totalorder 1, %s10
    %p150 = scmp.lt.s32.totalorder %s10, 3
    %p151 = pnand %p149, %p150
    %p152 = pneg %p151
    // Predicated region
    $region9: #{spp_bottleneck.2} parent=5 // pred_check
      _
    $region10: #{spp_bottleneck.2} parent=5 // pred_check_branch
      %154 = sbr.rel (%p151) target = $region12
    $region11: #{spp_bottleneck.2} parent=5 // pred_region
      %s155 = ssub.s32 %s10, 1
      // Predicated region
      $region13: #{spp_bottleneck.2} parent=11 // pred_check
        %p156 = pneg %p71
      $region14: #{spp_bottleneck.2} parent=11 // pred_check_branch
        %158 = sbr.rel (%p156) target = $region16
      $region15: #{spp_bottleneck.2} parent=11 // pred_region
        _
      $region16: #{spp_bottleneck.2} parent=11 // pred_fallthru
        _
      // Predicated region
      $region17: #{spp_bottleneck.2} parent=11 // pred_check
        %p159 = pneg %p92
      $region18: #{spp_bottleneck.2} parent=11 // pred_check_branch
        %161 = sbr.rel (%p159) target = $region20
      $region19: #{spp_bottleneck.2} parent=11 // pred_region
        _
      $region20: #{spp_bottleneck.2} parent=11 // pred_fallthru
        _
      // Predicated region
      $region21: #{spp_bottleneck.2} parent=11 // pred_check
        %p162 = pneg %p113
      $region22: #{spp_bottleneck.2} parent=11 // pred_check_branch
        %164 = sbr.rel (%p162) target = $region24
      $region23: #{spp_bottleneck.2} parent=11 // pred_region
        _
      $region24: #{spp_bottleneck.2} parent=11 // pred_fallthru
        _
    $region12: #{spp_bottleneck.2} parent=5 // pred_fallthru
      _
    %p165 = scmp.lt.s32.totalorder %s10, 2
    // Predicated region
    $region25: #{spp_bottleneck.2} parent=5 // pred_check
      %p166 = pneg %p165
    $region26: #{spp_bottleneck.2} parent=5 // pred_check_branch
      %168 = sbr.rel (%p166) target = $region28
    $region27: #{spp_bottleneck.2} parent=5 // pred_region
      // Predicated region
      $region29: #{spp_bottleneck.2} parent=27 // pred_check
        %p169 = pneg %p44
      $region30: #{spp_bottleneck.2} parent=27 // pred_check_branch
        %171 = sbr.rel (%p169) target = $region32
      $region31: #{spp_bottleneck.2} parent=27 // pred_region
        %s172 = smul.u32 2, %s18
        %p173 = scmp.lt.s32.totalorder %s17, 1
        %s174 = scalar_select %p173, %s17, 1
        %p175 = scmp.lt.s32.totalorder %s172, 1
        %s176 = scalar_select %p175, %s172, 1
        %s177 = smul.addr %s174, 2
        %s178 = sadd.s32 %s176, %s177
        %s179 = smul.addr %s178, 4
        %s180 = scalar_lea.vmem %s0, %s179
        %s181 = smul.u32 2, %s18
      $region32: #{spp_bottleneck.2} parent=27 // pred_fallthru
        _
    $region28: #{spp_bottleneck.2} parent=5 // pred_fallthru
      _
    %p182 = scmp.le.s32.totalorder 1, %s10
    %p183 = scmp.lt.s32.totalorder %s10, 3
    %p184 = pnand %p182, %p183
    %p185 = pneg %p184
    // Predicated region
    $region33: #{spp_bottleneck.2} parent=5 // pred_check
      _
    $region34: #{spp_bottleneck.2} parent=5 // pred_check_branch
      %187 = sbr.rel (%p184) target = $region36
    $region35: #{spp_bottleneck.2} parent=5 // pred_region
      %s188 = ssub.s32 %s10, 1
      %s189 = smul.u32 2, %s20
      %p190 = scmp.lt.s32.totalorder %s19, 1
      %s191 = scalar_select %p190, %s19, 1
      %p192 = scmp.lt.s32.totalorder %s189, 1
      %s193 = scalar_select %p192, %s189, 1
      %s194 = smul.addr %s191, 2
      %s195 = sadd.s32 %s193, %s194
      %s196 = smul.addr %s195, 4
      %s197 = scalar_lea.vmem %s0, %s196
      %p198 = pneg %p50
      %p199 = pneg %p47
      %p200 = pneg %p71
      %p201 = pneg %p68
      %p202 = pneg %p92
      %p203 = pneg %p89
      %p204 = pneg %p113
      %p205 = pneg %p110
      %p206 = pneg %p141
      %p207 = pneg %p138
      %s208 = smul.u32 32, %s20
      %p209 = scmp.lt.s32.totalorder %s19, 1
      %s210 = scalar_select %p209, %s19, 1
      %p211 = scmp.lt.s32.totalorder %s208, 31
      %s212 = scalar_select %p211, %s208, 31
      %s213 = smul.addr %s210, 32
      %s214 = sadd.s32 %s212, %s213
      %s215 = smul.addr %s214, 8
      %s216 = scalar_lea.vmem %s4, %s215
      %s217 = smul.u32 2, %s20
      %p218 = scmp.lt.s32.totalorder %s19, 1
      %s219 = scalar_select %p218, %s19, 1
      %p220 = scmp.lt.s32.totalorder %s217, 1
      %s221 = scalar_select %p220, %s217, 1
      %s222 = smul.addr %s219, 2
      %s223 = sadd.s32 %s221, %s222
      %s224 = smul.addr %s223, 4
      %s225 = scalar_lea.vmem %s0, %s224
      %s226 = smul.u32 2, %s20
      %s227 = smul.u32 32, %s20
      %p228 = scmp.lt.s32.totalorder %s19, 1
      %s229 = scalar_select %p228, %s19, 1
      %p230 = scmp.lt.s32.totalorder %s227, 31
      %s231 = scalar_select %p230, %s227, 31
      %s232 = smul.addr %s229, 32
      %s233 = sadd.s32 %s231, %s232
      %s234 = smul.addr %s233, 8
      %s235 = scalar_lea.vmem %s4, %s234
      %s236 = smul.u32 32, %s20
      %v237 = vld [vmem:[%s225] sm:$0xff]
      %v238 = vld [vmem:[%s1] sm:$0xf]
      %v240 = vcombine.high %v237, %v237
      %242 = vxpose.xlu0.b32.start [1/16] %v237, 128
      %243 = vxpose.xlu0.b32.cont [2/16] 0.0, 128
      %244 = vxpose.xlu0.b32.cont [3/16] 0.0, 128
      %245 = vxpose.xlu0.b32.cont [4/16] 0.0, 128
      %246 = vxpose.xlu0.b32.cont [5/16] 0.0, 128
      %247 = vxpose.xlu0.b32.cont [6/16] 0.0, 128
      %248 = vxpose.xlu0.b32.cont [7/16] 0.0, 128
      %249 = vxpose.xlu0.b32.cont [8/16] 0.0, 128
      %250 = vxpose.xlu0.b32.cont [9/16] 0.0, 128
      %251 = vxpose.xlu0.b32.cont [10/16] 0.0, 128
      %252 = vxpose.xlu0.b32.cont [11/16] 0.0, 128
      %253 = vxpose.xlu0.b32.cont [12/16] 0.0, 128
      %254 = vxpose.xlu0.b32.cont [13/16] 0.0, 128
      %255 = vxpose.xlu0.b32.cont [14/16] 0.0, 128
      %256 = vxpose.xlu0.b32.cont [15/16] 0.0, 128
      %257 = vxpose.xlu0.b32.end [16/16] 0.0, 128
      %v258 = vpop.trf.xlu0
      %v259 = vpop.trf.xlu0
      %v260 = vpop.trf.xlu0
      %v261 = vpop.trf.xlu0
      %v262 = vpop.trf.xlu0
      %v263 = vpop.trf.xlu0
      %v264 = vpop.trf.xlu0
      %v265 = vpop.trf.xlu0
      %v266 = vpop.trf.xlu0
      %v267 = vpop.trf.xlu0
      %v268 = vpop.trf.xlu0
      %v269 = vpop.trf.xlu0
      %v270 = vpop.trf.xlu0
      %v271 = vpop.trf.xlu0
      %v272 = vpop.trf.xlu0
      %v273 = vpop.trf.xlu0
      %274 = vxpose.xlu0.b32.start [1/16] %v240, 128
      %275 = vxpose.xlu0.b32.cont [2/16] 0.0, 128
      %276 = vxpose.xlu0.b32.cont [3/16] 0.0, 128
      %277 = vxpose.xlu0.b32.cont [4/16] 0.0, 128
      %278 = vxpose.xlu0.b32.cont [5/16] 0.0, 128
      %279 = vxpose.xlu0.b32.cont [6/16] 0.0, 128
      %280 = vxpose.xlu0.b32.cont [7/16] 0.0, 128
      %281 = vxpose.xlu0.b32.cont [8/16] 0.0, 128
      %282 = vxpose.xlu0.b32.cont [9/16] 0.0, 128
      %283 = vxpose.xlu0.b32.cont [10/16] 0.0, 128
      %284 = vxpose.xlu0.b32.cont [11/16] 0.0, 128
      %285 = vxpose.xlu0.b32.cont [12/16] 0.0, 128
      %286 = vxpose.xlu0.b32.cont [13/16] 0.0, 128
      %287 = vxpose.xlu0.b32.cont [14/16] 0.0, 128
      %288 = vxpose.xlu0.b32.cont [15/16] 0.0, 128
      %289 = vxpose.xlu0.b32.end [16/16] 0.0, 128
      %v290 = vpop.trf.xlu0
      %v291 = vpop.trf.xlu0
      %v292 = vpop.trf.xlu0
      %v293 = vpop.trf.xlu0
      %v294 = vpop.trf.xlu0
      %v295 = vpop.trf.xlu0
      %v296 = vpop.trf.xlu0
      %v297 = vpop.trf.xlu0
      %v298 = vpop.trf.xlu0
      %v299 = vpop.trf.xlu0
      %v300 = vpop.trf.xlu0
      %v301 = vpop.trf.xlu0
      %v302 = vpop.trf.xlu0
      %v303 = vpop.trf.xlu0
      %v304 = vpop.trf.xlu0
      %v305 = vpop.trf.xlu0
      %vm306 = vcmask 31744
      %v308 = vsel %vm306, %v258, 0
      %v311 = vsel %vm306, %v259, 0
      %v314 = vsel %vm306, %v260, 0
      %v317 = vsel %vm306, %v261, 0
      %v320 = vsel %vm306, %v262, 0
      %v323 = vsel %vm306, %v263, 0
      %v326 = vsel %vm306, %v264, 0
      %v329 = vsel %vm306, %v265, 0
      %v332 = vsel %vm306, %v266, 0
      %v335 = vsel %vm306, %v267, 0
      %v338 = vsel %vm306, %v268, 0
      %v341 = vsel %vm306, %v269, 0
      %v344 = vsel %vm306, %v270, 0
      %v347 = vsel %vm306, %v271, 0
      %v350 = vsel %vm306, %v272, 0
      %v353 = vsel %vm306, %v273, 0
      %v356 = vsel %vm306, %v290, 0
      %v359 = vsel %vm306, %v291, 0
      %v362 = vsel %vm306, %v292, 0
      %v365 = vsel %vm306, %v293, 0
      %v368 = vsel %vm306, %v294, 0
      %v371 = vsel %vm306, %v295, 0
      %v374 = vsel %vm306, %v296, 0
      %v377 = vsel %vm306, %v297, 0
      %v380 = vsel %vm306, %v298, 0
      %v383 = vsel %vm306, %v299, 0
      %v386 = vsel %vm306, %v300, 0
      %v389 = vsel %vm306, %v301, 0
      %v392 = vsel %vm306, %v302, 0
      %v395 = vsel %vm306, %v303, 0
      %v398 = vsel %vm306, %v304, 0
      %v401 = vsel %vm306, %v305, 0
      %vm403 = vcmask 1043456
      %v405 = vsel %vm403, %v238, 0
      %407 = vmatprep.subr.mxu0 0.0
      %408 = vmatpush1.msra.mxu0 0.0
      %409 = vmatprep.subr.mxu0 0.0
      %410 = vmatpush1.msra.mxu0 0.0
      %411 = vmatprep.subr.mxu0 0.0
      %412 = vmatpush1.msra.mxu0 0.0
      %413 = vmatprep.subr.mxu0 0.0
      %414 = vmatpush1.msra.mxu0 0.0
      %415 = vmatprep.subr.mxu0 0.0
      %416 = vmatpush1.msra.mxu0 0.0
      %417 = vmatprep.subr.mxu0 0.0
      %418 = vmatpush1.msra.mxu0 0.0
      %419 = vmatprep.subr.mxu0 0.0
      %420 = vmatpush1.msra.mxu0 0.0
      %421 = vmatprep.subr.mxu0 0.0
      %422 = vmatpush1.msra.mxu0 0.0
      %423 = vmatprep.subr.mxu0 0.0
      %424 = vmatpush1.msra.mxu0 0.0
      %425 = vmatprep.subr.mxu0 0.0
      %426 = vmatpush1.msra.mxu0 0.0
      %427 = vmatprep.subr.mxu0 0.0
      %428 = vmatpush1.msra.mxu0 0.0
      %429 = vmatprep.subr.mxu0 0.0
      %430 = vmatpush1.msra.mxu0 0.0
      %431 = vmatprep.subr.mxu0 0.0
      %432 = vmatpush1.msra.mxu0 0.0
      %433 = vmatprep.subr.mxu0 0.0
      %434 = vmatpush1.msra.mxu0 0.0
      %435 = vmatprep.subr.mxu0 0.0
      %436 = vmatpush1.msra.mxu0 0.0
      %437 = vmatprep.subr.mxu0 0.0
      %438 = vmatpush1.msra.mxu0 %v405
      %439 = vmatprep.subr.mxu0 0.0
      %440 = vmatpush2.msra.mxu0 0.0
      %441 = vmatprep.subr.mxu0 0.0
      %442 = vmatpush2.msra.mxu0 0.0
      %443 = vmatprep.subr.mxu0 0.0
      %444 = vmatpush2.msra.mxu0 0.0
      %445 = vmatprep.subr.mxu0 0.0
      %446 = vmatpush2.msra.mxu0 0.0
      %447 = vmatprep.subr.mxu0 0.0
      %448 = vmatpush2.msra.mxu0 0.0
      %449 = vmatprep.subr.mxu0 0.0
      %450 = vmatpush2.msra.mxu0 0.0
      %451 = vmatprep.subr.mxu0 0.0
      %452 = vmatpush2.msra.mxu0 0.0
      %453 = vmatprep.subr.mxu0 0.0
      %454 = vmatpush2.msra.mxu0 0.0
      %455 = vmatprep.subr.mxu0 0.0
      %456 = vmatpush2.msra.mxu0 0.0
      %457 = vmatprep.subr.mxu0 0.0
      %458 = vmatpush2.msra.mxu0 0.0
      %459 = vmatprep.subr.mxu0 0.0
      %460 = vmatpush2.msra.mxu0 0.0
      %461 = vmatprep.subr.mxu0 0.0
      %462 = vmatpush2.msra.mxu0 0.0
      %463 = vmatprep.subr.mxu0 0.0
      %464 = vmatpush2.msra.mxu0 0.0
      %465 = vmatprep.subr.mxu0 0.0
      %466 = vmatpush2.msra.mxu0 0.0
      %467 = vmatprep.subr.mxu0 0.0
      %468 = vmatpush2.msra.mxu0 0.0
      %469 = vmatprep.subr.mxu0 0.0
      %470 = vmatpush2.msra.mxu0 0.0
      %471 = vmatprep.mubr.f32.mxu0 0.0
      %472 = vmatmul.mubr.f32.gmra.mxu0 %v308
      %v473 = vpop.f32.mrf.mxu0
      %v474 = vadd.f32 0.0, %v473
      %v475 = vpop.f32.mrf.mxu0
      %476 = vmatprep.mubr.f32.mxu0 0.0
      %477 = vmatmul.mubr.f32.gmra.mxu0 %v311
      %v478 = vpop.f32.mrf.mxu0
      %v479 = vadd.f32 0.0, %v478
      %v480 = vpop.f32.mrf.mxu0
      %481 = vmatprep.mubr.f32.mxu0 0.0
      %482 = vmatmul.mubr.f32.gmra.mxu0 %v314
      %v483 = vpop.f32.mrf.mxu0
      %v484 = vadd.f32 0.0, %v483
      %v485 = vpop.f32.mrf.mxu0
      %486 = vmatprep.mubr.f32.mxu0 0.0
      %487 = vmatmul.mubr.f32.gmra.mxu0 %v317
      %v488 = vpop.f32.mrf.mxu0
      %v489 = vadd.f32 0.0, %v488
      %v490 = vpop.f32.mrf.mxu0
      %491 = vmatprep.mubr.f32.mxu0 0.0
      %492 = vmatmul.mubr.f32.gmra.mxu0 %v320
      %v493 = vpop.f32.mrf.mxu0
      %v494 = vadd.f32 0.0, %v493
      %v495 = vpop.f32.mrf.mxu0
      %496 = vmatprep.mubr.f32.mxu0 0.0
      %497 = vmatmul.mubr.f32.gmra.mxu0 %v323
      %v498 = vpop.f32.mrf.mxu0
      %v499 = vadd.f32 0.0, %v498
      %v500 = vpop.f32.mrf.mxu0
      %501 = vmatprep.mubr.f32.mxu0 0.0
      %502 = vmatmul.mubr.f32.gmra.mxu0 %v326
      %v503 = vpop.f32.mrf.mxu0
      %v504 = vadd.f32 0.0, %v503
      %v505 = vpop.f32.mrf.mxu0
      %506 = vmatprep.mubr.f32.mxu0 0.0
      %507 = vmatmul.mubr.f32.gmra.mxu0 %v329
      %v508 = vpop.f32.mrf.mxu0
      %v509 = vadd.f32 0.0, %v508
      %v510 = vpop.f32.mrf.mxu0
      %511 = vmatprep.mubr.f32.mxu0 0.0
      %512 = vmatmul.mubr.f32.gmra.mxu0 %v332
      %v513 = vpop.f32.mrf.mxu0
      %v514 = vadd.f32 0.0, %v513
      %v515 = vpop.f32.mrf.mxu0
      %516 = vmatprep.mubr.f32.mxu0 0.0
      %517 = vmatmul.mubr.f32.gmra.mxu0 %v335
      %v518 = vpop.f32.mrf.mxu0
      %v519 = vadd.f32 0.0, %v518
      %v520 = vpop.f32.mrf.mxu0
      %521 = vmatprep.mubr.f32.mxu0 0.0
      %522 = vmatmul.mubr.f32.gmra.mxu0 %v338
      %v523 = vpop.f32.mrf.mxu0
      %v524 = vadd.f32 0.0, %v523
      %v525 = vpop.f32.mrf.mxu0
      %526 = vmatprep.mubr.f32.mxu0 0.0
      %527 = vmatmul.mubr.f32.gmra.mxu0 %v341
      %v528 = vpop.f32.mrf.mxu0
      %v529 = vadd.f32 0.0, %v528
      %v530 = vpop.f32.mrf.mxu0
      %531 = vmatprep.mubr.f32.mxu0 0.0
      %532 = vmatmul.mubr.f32.gmra.mxu0 %v344
      %v533 = vpop.f32.mrf.mxu0
      %v534 = vadd.f32 0.0, %v533
      %v535 = vpop.f32.mrf.mxu0
      %536 = vmatprep.mubr.f32.mxu0 0.0
      %537 = vmatmul.mubr.f32.gmra.mxu0 %v347
      %v538 = vpop.f32.mrf.mxu0
      %v539 = vadd.f32 0.0, %v538
      %v540 = vpop.f32.mrf.mxu0
      %541 = vmatprep.mubr.f32.mxu0 0.0
      %542 = vmatmul.mubr.f32.gmra.mxu0 %v350
      %v543 = vpop.f32.mrf.mxu0
      %v544 = vadd.f32 0.0, %v543
      %v545 = vpop.f32.mrf.mxu0
      %546 = vmatprep.mubr.f32.mxu0 0.0
      %547 = vmatmul.mubr.f32.gmra.mxu0 %v353
      %v548 = vpop.f32.mrf.mxu0
      %v549 = vadd.f32 0.0, %v548
      %v550 = vpop.f32.mrf.mxu0
      %551 = vmatprep.mubr.f32.mxu0 0.0
      %552 = vmatmul.mubr.f32.gmra.mxu0 %v356
      %v553 = vpop.f32.mrf.mxu0
      %v554 = vadd.f32 0.0, %v553
      %v555 = vpop.f32.mrf.mxu0
      %556 = vmatprep.mubr.f32.mxu0 0.0
      %557 = vmatmul.mubr.f32.gmra.mxu0 %v359
      %v558 = vpop.f32.mrf.mxu0
      %v559 = vadd.f32 0.0, %v558
      %v560 = vpop.f32.mrf.mxu0
      %561 = vmatprep.mubr.f32.mxu0 0.0
      %562 = vmatmul.mubr.f32.gmra.mxu0 %v362
      %v563 = vpop.f32.mrf.mxu0
      %v564 = vadd.f32 0.0, %v563
      %v565 = vpop.f32.mrf.mxu0
      %566 = vmatprep.mubr.f32.mxu0 0.0
      %567 = vmatmul.mubr.f32.gmra.mxu0 %v365
      %v568 = vpop.f32.mrf.mxu0
      %v569 = vadd.f32 0.0, %v568
      %v570 = vpop.f32.mrf.mxu0
      %571 = vmatprep.mubr.f32.mxu0 0.0
      %572 = vmatmul.mubr.f32.gmra.mxu0 %v368
      %v573 = vpop.f32.mrf.mxu0
      %v574 = vadd.f32 0.0, %v573
      %v575 = vpop.f32.mrf.mxu0
      %576 = vmatprep.mubr.f32.mxu0 0.0
      %577 = vmatmul.mubr.f32.gmra.mxu0 %v371
      %v578 = vpop.f32.mrf.mxu0
      %v579 = vadd.f32 0.0, %v578
      %v580 = vpop.f32.mrf.mxu0
      %581 = vmatprep.mubr.f32.mxu0 0.0
      %582 = vmatmul.mubr.f32.gmra.mxu0 %v374
      %v583 = vpop.f32.mrf.mxu0
      %v584 = vadd.f32 0.0, %v583
      %v585 = vpop.f32.mrf.mxu0
      %586 = vmatprep.mubr.f32.mxu0 0.0
      %587 = vmatmul.mubr.f32.gmra.mxu0 %v377
      %v588 = vpop.f32.mrf.mxu0
      %v589 = vadd.f32 0.0, %v588
      %v590 = vpop.f32.mrf.mxu0
      %591 = vmatprep.mubr.f32.mxu0 0.0
      %592 = vmatmul.mubr.f32.gmra.mxu0 %v380
      %v593 = vpop.f32.mrf.mxu0
      %v594 = vadd.f32 0.0, %v593
      %v595 = vpop.f32.mrf.mxu0
      %596 = vmatprep.mubr.f32.mxu0 0.0
      %597 = vmatmul.mubr.f32.gmra.mxu0 %v383
      %v598 = vpop.f32.mrf.mxu0
      %v599 = vadd.f32 0.0, %v598
      %v600 = vpop.f32.mrf.mxu0
      %601 = vmatprep.mubr.f32.mxu0 0.0
      %602 = vmatmul.mubr.f32.gmra.mxu0 %v386
      %v603 = vpop.f32.mrf.mxu0
      %v604 = vadd.f32 0.0, %v603
      %v605 = vpop.f32.mrf.mxu0
      %606 = vmatprep.mubr.f32.mxu0 0.0
      %607 = vmatmul.mubr.f32.gmra.mxu0 %v389
      %v608 = vpop.f32.mrf.mxu0
      %v609 = vadd.f32 0.0, %v608
      %v610 = vpop.f32.mrf.mxu0
      %611 = vmatprep.mubr.f32.mxu0 0.0
      %612 = vmatmul.mubr.f32.gmra.mxu0 %v392
      %v613 = vpop.f32.mrf.mxu0
      %v614 = vadd.f32 0.0, %v613
      %v615 = vpop.f32.mrf.mxu0
      %616 = vmatprep.mubr.f32.mxu0 0.0
      %617 = vmatmul.mubr.f32.gmra.mxu0 %v395
      %v618 = vpop.f32.mrf.mxu0
      %v619 = vadd.f32 0.0, %v618
      %v620 = vpop.f32.mrf.mxu0
      %621 = vmatprep.mubr.f32.mxu0 0.0
      %622 = vmatmul.mubr.f32.gmra.mxu0 %v398
      %v623 = vpop.f32.mrf.mxu0
      %v624 = vadd.f32 0.0, %v623
      %v625 = vpop.f32.mrf.mxu0
      %626 = vmatprep.mubr.f32.mxu0 0.0
      %627 = vmatmul.mubr.f32.gmra.mxu0 %v401
      %v628 = vpop.f32.mrf.mxu0
      %v629 = vadd.f32 0.0, %v628
      %v630 = vpop.f32.mrf.mxu0
      %631 = vdwg.mxu0
      %v632 = vld [vmem:[%s2] sm:$0x1]
      %v634 = vlaneseq
      %v635 = vshrl.u32 %v634, 7
      %v636 = vsub.s32 0, %v635
      %v637 = vrot.slane %v632, %v636
      %v639 = vmul.f32 %v474, %v637
      %v640 = vmul.f32 %v479, %v637
      %v641 = vmul.f32 %v484, %v637
      %v642 = vmul.f32 %v489, %v637
      %v643 = vmul.f32 %v494, %v637
      %v644 = vmul.f32 %v499, %v637
      %v645 = vmul.f32 %v504, %v637
      %v646 = vmul.f32 %v509, %v637
      %v647 = vmul.f32 %v514, %v637
      %v648 = vmul.f32 %v519, %v637
      %v649 = vmul.f32 %v524, %v637
      %v650 = vmul.f32 %v529, %v637
      %v651 = vmul.f32 %v534, %v637
      %v652 = vmul.f32 %v539, %v637
      %v653 = vmul.f32 %v544, %v637
      %v654 = vmul.f32 %v549, %v637
      %v655 = vmul.f32 %v554, %v637
      %v656 = vmul.f32 %v559, %v637
      %v657 = vmul.f32 %v564, %v637
      %v658 = vmul.f32 %v569, %v637
      %v659 = vmul.f32 %v574, %v637
      %v660 = vmul.f32 %v579, %v637
      %v661 = vmul.f32 %v584, %v637
      %v662 = vmul.f32 %v589, %v637
      %v663 = vmul.f32 %v594, %v637
      %v664 = vmul.f32 %v599, %v637
      %v665 = vmul.f32 %v604, %v637
      %v666 = vmul.f32 %v609, %v637
      %v667 = vmul.f32 %v614, %v637
      %v668 = vmul.f32 %v619, %v637
      %v669 = vmul.f32 %v624, %v637
      %v670 = vmul.f32 %v629, %v637
      %v671 = vld [vmem:[%s3] sm:$0x1]
      %v673 = vlaneseq
      %v674 = vshrl.u32 %v673, 7
      %v675 = vsub.s32 0, %v674
      %v676 = vrot.slane %v671, %v675
      %v678 = vadd.f32 %v639, %v676
      %v679 = vadd.f32 %v640, %v676
      %v680 = vadd.f32 %v641, %v676
      %v681 = vadd.f32 %v642, %v676
      %v682 = vadd.f32 %v643, %v676
      %v683 = vadd.f32 %v644, %v676
      %v684 = vadd.f32 %v645, %v676
      %v685 = vadd.f32 %v646, %v676
      %v686 = vadd.f32 %v647, %v676
      %v687 = vadd.f32 %v648, %v676
      %v688 = vadd.f32 %v649, %v676
      %v689 = vadd.f32 %v650, %v676
      %v690 = vadd.f32 %v651, %v676
      %v691 = vadd.f32 %v652, %v676
      %v692 = vadd.f32 %v653, %v676
      %v693 = vadd.f32 %v654, %v676
      %v694 = vadd.f32 %v655, %v676
      %v695 = vadd.f32 %v656, %v676
      %v696 = vadd.f32 %v657, %v676
      %v697 = vadd.f32 %v658, %v676
      %v698 = vadd.f32 %v659, %v676
      %v699 = vadd.f32 %v660, %v676
      %v700 = vadd.f32 %v661, %v676
      %v701 = vadd.f32 %v662, %v676
      %v702 = vadd.f32 %v663, %v676
      %v703 = vadd.f32 %v664, %v676
      %v704 = vadd.f32 %v665, %v676
      %v705 = vadd.f32 %v666, %v676
      %v706 = vadd.f32 %v667, %v676
      %v707 = vadd.f32 %v668, %v676
      %v708 = vadd.f32 %v669, %v676
      %v709 = vadd.f32 %v670, %v676
      %v710 = vxor.u32 %v678, 2147483648
      %v711 = vxor.u32 %v679, 2147483648
      %v712 = vxor.u32 %v680, 2147483648
      %v713 = vxor.u32 %v681, 2147483648
      %v714 = vxor.u32 %v682, 2147483648
      %v715 = vxor.u32 %v683, 2147483648
      %v716 = vxor.u32 %v684, 2147483648
      %v717 = vxor.u32 %v685, 2147483648
      %v718 = vxor.u32 %v686, 2147483648
      %v719 = vxor.u32 %v687, 2147483648
      %v720 = vxor.u32 %v688, 2147483648
      %v721 = vxor.u32 %v689, 2147483648
      %v722 = vxor.u32 %v690, 2147483648
      %v723 = vxor.u32 %v691, 2147483648
      %v724 = vxor.u32 %v692, 2147483648
      %v725 = vxor.u32 %v693, 2147483648
      %v726 = vxor.u32 %v694, 2147483648
      %v727 = vxor.u32 %v695, 2147483648
      %v728 = vxor.u32 %v696, 2147483648
      %v729 = vxor.u32 %v697, 2147483648
      %v730 = vxor.u32 %v698, 2147483648
      %v731 = vxor.u32 %v699, 2147483648
      %v732 = vxor.u32 %v700, 2147483648
      %v733 = vxor.u32 %v701, 2147483648
      %v734 = vxor.u32 %v702, 2147483648
      %v735 = vxor.u32 %v703, 2147483648
      %v736 = vxor.u32 %v704, 2147483648
      %v737 = vxor.u32 %v705, 2147483648
      %v738 = vxor.u32 %v706, 2147483648
      %v739 = vxor.u32 %v707, 2147483648
      %v740 = vxor.u32 %v708, 2147483648
      %v741 = vxor.u32 %v709, 2147483648
      %v742 = vmul.f32 %v710, 1.442695
      %v743 = vpow.pop %v742
      %v744 = vmul.f32 %v711, 1.442695
      %v745 = vpow.pop %v744
      %v746 = vmul.f32 %v712, 1.442695
      %v747 = vpow.pop %v746
      %v748 = vmul.f32 %v713, 1.442695
      %v749 = vpow.pop %v748
      %v750 = vmul.f32 %v714, 1.442695
      %v751 = vpow.pop %v750
      %v752 = vmul.f32 %v715, 1.442695
      %v753 = vpow.pop %v752
      %v754 = vmul.f32 %v716, 1.442695
      %v755 = vpow.pop %v754
      %v756 = vmul.f32 %v717, 1.442695
      %v757 = vpow.pop %v756
      %v758 = vmul.f32 %v718, 1.442695
      %v759 = vpow.pop %v758
      %v760 = vmul.f32 %v719, 1.442695
      %v761 = vpow.pop %v760
      %v762 = vmul.f32 %v720, 1.442695
      %v763 = vpow.pop %v762
      %v764 = vmul.f32 %v721, 1.442695
      %v765 = vpow.pop %v764
      %v766 = vmul.f32 %v722, 1.442695
      %v767 = vpow.pop %v766
      %v768 = vmul.f32 %v723, 1.442695
      %v769 = vpow.pop %v768
      %v770 = vmul.f32 %v724, 1.442695
      %v771 = vpow.pop %v770
      %v772 = vmul.f32 %v725, 1.442695
      %v773 = vpow.pop %v772
      %v774 = vmul.f32 %v726, 1.442695
      %v775 = vpow.pop %v774
      %v776 = vmul.f32 %v727, 1.442695
      %v777 = vpow.pop %v776
      %v778 = vmul.f32 %v728, 1.442695
      %v779 = vpow.pop %v778
      %v780 = vmul.f32 %v729, 1.442695
      %v781 = vpow.pop %v780
      %v782 = vmul.f32 %v730, 1.442695
      %v783 = vpow.pop %v782
      %v784 = vmul.f32 %v731, 1.442695
      %v785 = vpow.pop %v784
      %v786 = vmul.f32 %v732, 1.442695
      %v787 = vpow.pop %v786
      %v788 = vmul.f32 %v733, 1.442695
      %v789 = vpow.pop %v788
      %v790 = vmul.f32 %v734, 1.442695
      %v791 = vpow.pop %v790
      %v792 = vmul.f32 %v735, 1.442695
      %v793 = vpow.pop %v792
      %v794 = vmul.f32 %v736, 1.442695
      %v795 = vpow.pop %v794
      %v796 = vmul.f32 %v737, 1.442695
      %v797 = vpow.pop %v796
      %v798 = vmul.f32 %v738, 1.442695
      %v799 = vpow.pop %v798
      %v800 = vmul.f32 %v739, 1.442695
      %v801 = vpow.pop %v800
      %v802 = vmul.f32 %v740, 1.442695
      %v803 = vpow.pop %v802
      %v804 = vmul.f32 %v741, 1.442695
      %v805 = vpow.pop %v804
      %v806 = vadd.f32 %v743, 1.0
      %v807 = vadd.f32 %v745, 1.0
      %v808 = vadd.f32 %v747, 1.0
      %v809 = vadd.f32 %v749, 1.0
      %v810 = vadd.f32 %v751, 1.0
      %v811 = vadd.f32 %v753, 1.0
      %v812 = vadd.f32 %v755, 1.0
      %v813 = vadd.f32 %v757, 1.0
      %v814 = vadd.f32 %v759, 1.0
      %v815 = vadd.f32 %v761, 1.0
      %v816 = vadd.f32 %v763, 1.0
      %v817 = vadd.f32 %v765, 1.0
      %v818 = vadd.f32 %v767, 1.0
      %v819 = vadd.f32 %v769, 1.0
      %v820 = vadd.f32 %v771, 1.0
      %v821 = vadd.f32 %v773, 1.0
      %v822 = vadd.f32 %v775, 1.0
      %v823 = vadd.f32 %v777, 1.0
      %v824 = vadd.f32 %v779, 1.0
      %v825 = vadd.f32 %v781, 1.0
      %v826 = vadd.f32 %v783, 1.0
      %v827 = vadd.f32 %v785, 1.0
      %v828 = vadd.f32 %v787, 1.0
      %v829 = vadd.f32 %v789, 1.0
      %v830 = vadd.f32 %v791, 1.0
      %v831 = vadd.f32 %v793, 1.0
      %v832 = vadd.f32 %v795, 1.0
      %v833 = vadd.f32 %v797, 1.0
      %v834 = vadd.f32 %v799, 1.0
      %v835 = vadd.f32 %v801, 1.0
      %v836 = vadd.f32 %v803, 1.0
      %v837 = vadd.f32 %v805, 1.0
      %v838 = vrcp.pop %v806
      %v839 = vmul.f32 1.0, %v838
      %v840 = vrcp.pop %v807
      %v841 = vmul.f32 1.0, %v840
      %v842 = vrcp.pop %v808
      %v843 = vmul.f32 1.0, %v842
      %v844 = vrcp.pop %v809
      %v845 = vmul.f32 1.0, %v844
      %v846 = vrcp.pop %v810
      %v847 = vmul.f32 1.0, %v846
      %v848 = vrcp.pop %v811
      %v849 = vmul.f32 1.0, %v848
      %v850 = vrcp.pop %v812
      %v851 = vmul.f32 1.0, %v850
      %v852 = vrcp.pop %v813
      %v853 = vmul.f32 1.0, %v852
      %v854 = vrcp.pop %v814
      %v855 = vmul.f32 1.0, %v854
      %v856 = vrcp.pop %v815
      %v857 = vmul.f32 1.0, %v856
      %v858 = vrcp.pop %v816
      %v859 = vmul.f32 1.0, %v858
      %v860 = vrcp.pop %v817
      %v861 = vmul.f32 1.0, %v860
      %v862 = vrcp.pop %v818
      %v863 = vmul.f32 1.0, %v862
      %v864 = vrcp.pop %v819
      %v865 = vmul.f32 1.0, %v864
      %v866 = vrcp.pop %v820
      %v867 = vmul.f32 1.0, %v866
      %v868 = vrcp.pop %v821
      %v869 = vmul.f32 1.0, %v868
      %v870 = vrcp.pop %v822
      %v871 = vmul.f32 1.0, %v870
      %v872 = vrcp.pop %v823
      %v873 = vmul.f32 1.0, %v872
      %v874 = vrcp.pop %v824
      %v875 = vmul.f32 1.0, %v874
      %v876 = vrcp.pop %v825
      %v877 = vmul.f32 1.0, %v876
      %v878 = vrcp.pop %v826
      %v879 = vmul.f32 1.0, %v878
      %v880 = vrcp.pop %v827
      %v881 = vmul.f32 1.0, %v880
      %v882 = vrcp.pop %v828
      %v883 = vmul.f32 1.0, %v882
      %v884 = vrcp.pop %v829
      %v885 = vmul.f32 1.0, %v884
      %v886 = vrcp.pop %v830
      %v887 = vmul.f32 1.0, %v886
      %v888 = vrcp.pop %v831
      %v889 = vmul.f32 1.0, %v888
      %v890 = vrcp.pop %v832
      %v891 = vmul.f32 1.0, %v890
      %v892 = vrcp.pop %v833
      %v893 = vmul.f32 1.0, %v892
      %v894 = vrcp.pop %v834
      %v895 = vmul.f32 1.0, %v894
      %v896 = vrcp.pop %v835
      %v897 = vmul.f32 1.0, %v896
      %v898 = vrcp.pop %v836
      %v899 = vmul.f32 1.0, %v898
      %v900 = vrcp.pop %v837
      %v901 = vmul.f32 1.0, %v900
      %v902 = vmul.f32 %v678, %v839
      %v903 = vmul.f32 %v679, %v841
      %v904 = vmul.f32 %v680, %v843
      %v905 = vmul.f32 %v681, %v845
      %v906 = vmul.f32 %v682, %v847
      %v907 = vmul.f32 %v683, %v849
      %v908 = vmul.f32 %v684, %v851
      %v909 = vmul.f32 %v685, %v853
      %v910 = vmul.f32 %v686, %v855
      %v911 = vmul.f32 %v687, %v857
      %v912 = vmul.f32 %v688, %v859
      %v913 = vmul.f32 %v689, %v861
      %v914 = vmul.f32 %v690, %v863
      %v915 = vmul.f32 %v691, %v865
      %v916 = vmul.f32 %v692, %v867
      %v917 = vmul.f32 %v693, %v869
      %v918 = vmul.f32 %v694, %v871
      %v919 = vmul.f32 %v695, %v873
      %v920 = vmul.f32 %v696, %v875
      %v921 = vmul.f32 %v697, %v877
      %v922 = vmul.f32 %v698, %v879
      %v923 = vmul.f32 %v699, %v881
      %v924 = vmul.f32 %v700, %v883
      %v925 = vmul.f32 %v701, %v885
      %v926 = vmul.f32 %v702, %v887
      %v927 = vmul.f32 %v703, %v889
      %v928 = vmul.f32 %v704, %v891
      %v929 = vmul.f32 %v705, %v893
      %v930 = vmul.f32 %v706, %v895
      %v931 = vmul.f32 %v707, %v897
      %v932 = vmul.f32 %v708, %v899
      %v933 = vmul.f32 %v709, %v901
      %vm934 = vcmask 15360
      %935 = vst.msk [vmem:[%s235] sm:$0xff] %vm934, %v902
      %936 = vst.msk [vmem:[%s235 + $0x8] sm:$0xff] %vm934, %v903
      %937 = vst.msk [vmem:[%s235 + $0x10] sm:$0xff] %vm934, %v904
      %938 = vst.msk [vmem:[%s235 + $0x18] sm:$0xff] %vm934, %v905
      %939 = vst.msk [vmem:[%s235 + $0x20] sm:$0xff] %vm934, %v906
      %940 = vst.msk [vmem:[%s235 + $0x28] sm:$0xff] %vm934, %v907
      %941 = vst.msk [vmem:[%s235 + $0x30] sm:$0xff] %vm934, %v908
      %942 = vst.msk [vmem:[%s235 + $0x38] sm:$0xff] %vm934, %v909
      %943 = vst.msk [vmem:[%s235 + $0x40] sm:$0xff] %vm934, %v910
      %944 = vst.msk [vmem:[%s235 + $0x48] sm:$0xff] %vm934, %v911
      %945 = vst.msk [vmem:[%s235 + $0x50] sm:$0xff] %vm934, %v912
      %946 = vst.msk [vmem:[%s235 + $0x58] sm:$0xff] %vm934, %v913
      %947 = vst.msk [vmem:[%s235 + $0x60] sm:$0xff] %vm934, %v914
      %948 = vst.msk [vmem:[%s235 + $0x68] sm:$0xff] %vm934, %v915
      %949 = vst.msk [vmem:[%s235 + $0x70] sm:$0xff] %vm934, %v916
      %950 = vst.msk [vmem:[%s235 + $0x78] sm:$0xff] %vm934, %v917
      %951 = vst.msk [vmem:[%s235 + $0x80] sm:$0xff] %vm934, %v918
      %952 = vst.msk [vmem:[%s235 + $0x88] sm:$0xff] %vm934, %v919
      %953 = vst.msk [vmem:[%s235 + $0x90] sm:$0xff] %vm934, %v920
      %954 = vst.msk [vmem:[%s235 + $0x98] sm:$0xff] %vm934, %v921
      %955 = vst.msk [vmem:[%s235 + $0xa0] sm:$0xff] %vm934, %v922
      %956 = vst.msk [vmem:[%s235 + $0xa8] sm:$0xff] %vm934, %v923
      %957 = vst.msk [vmem:[%s235 + $0xb0] sm:$0xff] %vm934, %v924
      %958 = vst.msk [vmem:[%s235 + $0xb8] sm:$0xff] %vm934, %v925
      %959 = vst.msk [vmem:[%s235 + $0xc0] sm:$0xff] %vm934, %v926
      %960 = vst.msk [vmem:[%s235 + $0xc8] sm:$0xff] %vm934, %v927
      %961 = vst.msk [vmem:[%s235 + $0xd0] sm:$0xff] %vm934, %v928
      %962 = vst.msk [vmem:[%s235 + $0xd8] sm:$0xff] %vm934, %v929
      %963 = vst.msk [vmem:[%s235 + $0xe0] sm:$0xff] %vm934, %v930
      %964 = vst.msk [vmem:[%s235 + $0xe8] sm:$0xff] %vm934, %v931
      %965 = vst.msk [vmem:[%s235 + $0xf0] sm:$0xff] %vm934, %v932
      %966 = vst.msk [vmem:[%s235 + $0xf8] sm:$0xff] %vm934, %v933
      %s967 = smul.u32 32, %s20
      %p968 = scmp.lt.s32.totalorder %s19, 1
      %s969 = scalar_select %p968, %s19, 1
      %p970 = scmp.lt.s32.totalorder %s967, 31
      %s971 = scalar_select %p970, %s967, 31
      %s972 = smul.addr %s969, 32
      %s973 = sadd.s32 %s971, %s972
      %s974 = smul.addr %s973, 8
      %s975 = scalar_lea.vmem %s4, %s974
      // Predicated region
      $region37: #{spp_bottleneck.2} parent=35 // pred_check
        %p976 = pneg %p138
      $region38: #{spp_bottleneck.2} parent=35 // pred_check_branch
        %978 = sbr.rel (%p976) target = $region40
      $region39: #{spp_bottleneck.2} parent=35 // pred_region
        %s979 = smul.u32 32, %s20
      $region40: #{spp_bottleneck.2} parent=35 // pred_fallthru
        _
    $region36: #{spp_bottleneck.2} parent=5 // pred_fallthru
      _
    %p980 = scmp.le.s32.totalorder 2, %s10
    // Predicated region
    $region41: #{spp_bottleneck.2} parent=5 // pred_check
      %p981 = pneg %p980
    $region42: #{spp_bottleneck.2} parent=5 // pred_check_branch
      %983 = sbr.rel (%p981) target = $region44
    $region43: #{spp_bottleneck.2} parent=5 // pred_region
      %s984 = ssub.s32 %s10, 2
      // Predicated region
      $region45: #{spp_bottleneck.2} parent=43 // pred_check
        %p985 = pneg %p144
      $region46: #{spp_bottleneck.2} parent=43 // pred_check_branch
        %987 = sbr.rel (%p985) target = $region48
      $region47: #{spp_bottleneck.2} parent=43 // pred_region
        %s988 = smul.u32 32, %s22
        %p989 = scmp.lt.s32.totalorder %s21, 1
        %s990 = scalar_select %p989, %s21, 1
        %p991 = scmp.lt.s32.totalorder %s988, 31
        %s992 = scalar_select %p991, %s988, 31
        %s993 = smul.addr %s990, 32
        %s994 = sadd.s32 %s992, %s993
        %s995 = smul.addr %s994, 8
        %s996 = scalar_lea.vmem %s4, %s995
      $region48: #{spp_bottleneck.2} parent=43 // pred_fallthru
        _
    $region44: #{spp_bottleneck.2} parent=5 // pred_fallthru
      _
  $region6: #{spp_bottleneck.2} parent=0 // loop_footer
    %s14 = sadd.s32 1, %s10
  $region7: #{spp_bottleneck.2} parent=0 // loop_footer_branch
    %9 = sbr.rel target = $region3
  $region8: #{spp_bottleneck.2} parent=0 // loop_exit
    _

// kernel: spp_bottleneck.3
$region0: #{spp_bottleneck.3}
  #allocation0 [shape = 'u32[]', space=smem, size = 0x4, offset = 0x4, fixed_abs, tag = 'smem constant byte address 0x4 - core index']
  #allocation1 [shape = 'u32[144,128]{1,0:T(1,128)}', space=vmem, size = 0x12000, scoped, tag = 'internal scratch']
  #allocation2 [shape = 'f32[16,16,2]{2,1,0:T(8,128)}', space=vmem, size = 0x20000, scoped, tag = 'scratch operand']
  #allocation3 [shape = 'f32[16,16,2]{2,1,0:T(8,128)}', space=vmem, size = 0x20000, scoped, tag = 'scratch operand']
  #allocation4 [shape = 'f32[256,8]{1,0:T(8,128)}', space=vmem, size = 0x20000, scoped, tag = 'scratch operand']
  %s0 = inlined_call_operand.vmem [shape: f32[2,16,16,2], index: 0, kind: input, shape index: {}]
  %s1 = inlined_call_operand.vmem [shape: f32[4,2,8], index: 1, kind: input, shape index: {}]
  %s2 = inlined_call_operand.vmem [shape: f32[1,8], index: 2, kind: input, shape index: {}]
  %s3 = inlined_call_operand.vmem [shape: f32[1,8], index: 3, kind: input, shape index: {}]
  %s4 = inlined_call_operand.vmem [shape: f32[2,256,8], index: 4, kind: output, shape index: {}]
  %s5 = sld [smem:[#allocation0]]
  $region57: #{spp_bottleneck.3} parent=0
    _
  %s7 = ssub.s32 1, %s5
  %s8 = scalar_select 0, %s7, %s5
  loop: start=0, step=1, limit=4
  $region2: #{spp_bottleneck.3} parent=0 // loop_pre_header
    _
  $region3: #{spp_bottleneck.3} parent=0 // loop_header
    %s10 = sphi 0, %s14
    %p11 = scmp.ge.s32.totalorder %s10, 4
    %s17 = sphi 0, %s29
    %s18 = sphi 0, %s25
    %s19 = sphi 0, %s17
    %s20 = sphi 0, %s18
    %s21 = sphi 0, %s19
    %s22 = sphi 0, %s20
    %s34 = sphi 0, %s36
    %s37 = sphi 0, %s34
    %s38 = sphi 0, %s37
    %s54 = sphi 0, %s38
    %s60 = sphi 0, %s62
    %s63 = sphi 0, %s60
    %s64 = sphi 0, %s63
    %s80 = sphi 0, %s64
    %s84 = sphi 0, %s84
    %s86 = sphi 0, %s84
    %s87 = sphi 0, %s86
    %s101 = sphi 0, %s87
    %s105 = sphi 0, %s105
    %s107 = sphi 0, %s105
    %s108 = sphi 0, %s107
    %s122 = sphi 0, %s108
    %s128 = sphi 0, %s130
    %s131 = sphi 0, %s128
    %s132 = sphi 0, %s131
    %s148 = sphi 0, %s132
  $region4: #{spp_bottleneck.3} parent=0 // loop_header_branch
    %13 = sbr.rel (%p11) target = $region8
  $region5: #{spp_bottleneck.3} parent=0 // loop_body
    %s15 = ssub.s32 %s10, 1
    %s16 = ssub.s32 %s10, 2
    %s23 = sadd.s32 1, %s18
    %p24 = scmp.ge.s32.totalorder %s23, 1
    %s25 = scalar_select %p24, 0, %s23
    %s26 = sadd.s32 1, %s17
    %s27 = scalar_select %p24, %s26, %s17
    %p28 = scmp.ge.s32.totalorder %s27, 2
    %s29 = scalar_select %p28, 0, %s27
    %s30 = ssub.s32 %s17, %s29
    %s31 = ssub.s32 %s18, %s25
    %s32 = sor.u32 %s30, %s31
    %p33 = scmp.eq.s32.totalorder %s32, 0
    %s35 = sadd.s32 %s34, 1
    %s36 = scalar_select %p33, %s34, %s35
    %p39 = pneg %p33
    %p40 = scmp.eq.s32.totalorder %s10, 1
    %p41 = por %p39, %p40
    %p42 = scmp.ne.s32.totalorder %s34, %s37
    %p43 = scmp.eq.s32.totalorder %s10, 0
    %p44 = por %p42, %p43
    %p45 = scmp.ne.s32.totalorder %s34, %s37
    %p46 = scmp.eq.s32.totalorder %s15, 1
    %p47 = por %p45, %p46
    %p48 = scmp.ne.s32.totalorder %s37, %s38
    %p49 = scmp.eq.s32.totalorder %s15, 0
    %p50 = por %p48, %p49
    %p51 = scmp.ne.s32.totalorder %s37, %s38
    %p52 = scmp.eq.s32.totalorder %s16, 1
    %p53 = por %p51, %p52
    %p55 = scmp.ne.s32.totalorder %s38, %s54
    %p56 = scmp.eq.s32.totalorder %s16, 0
    %p57 = por %p55, %p56
    %s58 = ssub.s32 %s18, %s25
    %p59 = scmp.eq.s32.totalorder %s58, 0
    %s61 = sadd.s32 %s60, 1
    %s62 = scalar_select %p59, %s60, %s61
    %p65 = pneg %p59
    %p66 = scmp.eq.s32.totalorder %s10, 1
    %p67 = por %p65, %p66
    %p68 = scmp.ne.s32.totalorder %s60, %s63
    %p69 = scmp.eq.s32.totalorder %s10, 0
    %p70 = por %p68, %p69
    %p71 = scmp.ne.s32.totalorder %s60, %s63
    %p72 = scmp.eq.s32.totalorder %s15, 1
    %p73 = por %p71, %p72
    %p74 = scmp.ne.s32.totalorder %s63, %s64
    %p75 = scmp.eq.s32.totalorder %s15, 0
    %p76 = por %p74, %p75
    %p77 = scmp.ne.s32.totalorder %s63, %s64
    %p78 = scmp.eq.s32.totalorder %s16, 1
    %p79 = por %p77, %p78
    %p81 = scmp.ne.s32.totalorder %s64, %s80
    %p82 = scmp.eq.s32.totalorder %s16, 0
    %p83 = por %p81, %p82
    %s85 = sadd.s32 %s84, 1
    %p88 = scmp.eq.s32.totalorder %s10, 1
    %p89 = scmp.ne.s32.totalorder %s84, %s86
    %p90 = scmp.eq.s32.totalorder %s10, 0
    %p91 = por %p89, %p90
    %p92 = scmp.ne.s32.totalorder %s84, %s86
    %p93 = scmp.eq.s32.totalorder %s15, 1
    %p94 = por %p92, %p93
    %p95 = scmp.ne.s32.totalorder %s86, %s87
    %p96 = scmp.eq.s32.totalorder %s15, 0
    %p97 = por %p95, %p96
    %p98 = scmp.ne.s32.totalorder %s86, %s87
    %p99 = scmp.eq.s32.totalorder %s16, 1
    %p100 = por %p98, %p99
    %p102 = scmp.ne.s32.totalorder %s87, %s101
    %p103 = scmp.eq.s32.totalorder %s16, 0
    %p104 = por %p102, %p103
    %s106 = sadd.s32 %s105, 1
    %p109 = scmp.eq.s32.totalorder %s10, 1
    %p110 = scmp.ne.s32.totalorder %s105, %s107
    %p111 = scmp.eq.s32.totalorder %s10, 0
    %p112 = por %p110, %p111
    %p113 = scmp.ne.s32.totalorder %s105, %s107
    %p114 = scmp.eq.s32.totalorder %s15, 1
    %p115 = por %p113, %p114
    %p116 = scmp.ne.s32.totalorder %s107, %s108
    %p117 = scmp.eq.s32.totalorder %s15, 0
    %p118 = por %p116, %p117
    %p119 = scmp.ne.s32.totalorder %s107, %s108
    %p120 = scmp.eq.s32.totalorder %s16, 1
    %p121 = por %p119, %p120
    %p123 = scmp.ne.s32.totalorder %s108, %s122
    %p124 = scmp.eq.s32.totalorder %s16, 0
    %p125 = por %p123, %p124
    %s126 = ssub.s32 %s17, %s29
    %p127 = scmp.eq.s32.totalorder %s126, 0
    %s129 = sadd.s32 %s128, 1
    %s130 = scalar_select %p127, %s128, %s129
    %p133 = pneg %p127
    %p134 = scmp.eq.s32.totalorder %s10, 1
    %p135 = por %p133, %p134
    %p136 = scmp.ne.s32.totalorder %s128, %s131
    %p137 = scmp.eq.s32.totalorder %s10, 0
    %p138 = por %p136, %p137
    %p139 = scmp.ne.s32.totalorder %s128, %s131
    %p140 = scmp.eq.s32.totalorder %s15, 1
    %p141 = por %p139, %p140
    %p142 = scmp.ne.s32.totalorder %s131, %s132
    %p143 = scmp.eq.s32.totalorder %s15, 0
    %p144 = por %p142, %p143
    %p145 = scmp.ne.s32.totalorder %s131, %s132
    %p146 = scmp.eq.s32.totalorder %s16, 1
    %p147 = por %p145, %p146
    %p149 = scmp.ne.s32.totalorder %s132, %s148
    %p150 = scmp.eq.s32.totalorder %s16, 0
    %p151 = por %p149, %p150
    %p152 = scmp.le.s32.totalorder 1, %s10
    %p153 = scmp.lt.s32.totalorder %s10, 3
    %p154 = pnand %p152, %p153
    %p155 = pneg %p154
    // Predicated region
    $region9: #{spp_bottleneck.3} parent=5 // pred_check
      _
    $region10: #{spp_bottleneck.3} parent=5 // pred_check_branch
      %157 = sbr.rel (%p154) target = $region12
    $region11: #{spp_bottleneck.3} parent=5 // pred_region
      %s158 = ssub.s32 %s10, 1
      // Predicated region
      $region13: #{spp_bottleneck.3} parent=11 // pred_check
        %p159 = pneg %p76
      $region14: #{spp_bottleneck.3} parent=11 // pred_check_branch
        %161 = sbr.rel (%p159) target = $region16
      $region15: #{spp_bottleneck.3} parent=11 // pred_region
        %p162 = scmp.lt.s32.totalorder %s20, 0
        %s163 = scalar_select %p162, %s20, 0
        %s164 = smul.addr %s163, 2
        %s165 = scalar_lea.vmem %s1, %s164
      $region16: #{spp_bottleneck.3} parent=11 // pred_fallthru
        _
      // Predicated region
      $region17: #{spp_bottleneck.3} parent=11 // pred_check
        %p166 = pneg %p97
      $region18: #{spp_bottleneck.3} parent=11 // pred_check_branch
        %168 = sbr.rel (%p166) target = $region20
      $region19: #{spp_bottleneck.3} parent=11 // pred_region
        _
      $region20: #{spp_bottleneck.3} parent=11 // pred_fallthru
        _
      // Predicated region
      $region21: #{spp_bottleneck.3} parent=11 // pred_check
        %p169 = pneg %p118
      $region22: #{spp_bottleneck.3} parent=11 // pred_check_branch
        %171 = sbr.rel (%p169) target = $region24
      $region23: #{spp_bottleneck.3} parent=11 // pred_region
        _
      $region24: #{spp_bottleneck.3} parent=11 // pred_fallthru
        _
    $region12: #{spp_bottleneck.3} parent=5 // pred_fallthru
      _
    %p172 = scmp.lt.s32.totalorder %s10, 2
    // Predicated region
    $region25: #{spp_bottleneck.3} parent=5 // pred_check
      %p173 = pneg %p172
    $region26: #{spp_bottleneck.3} parent=5 // pred_check_branch
      %175 = sbr.rel (%p173) target = $region28
    $region27: #{spp_bottleneck.3} parent=5 // pred_region
      // Predicated region
      $region29: #{spp_bottleneck.3} parent=27 // pred_check
        %p176 = pneg %p44
      $region30: #{spp_bottleneck.3} parent=27 // pred_check_branch
        %178 = sbr.rel (%p176) target = $region32
      $region31: #{spp_bottleneck.3} parent=27 // pred_region
        %p179 = scmp.lt.s32.totalorder %s17, 1
        %s180 = scalar_select %p179, %s17, 1
        %p181 = scmp.lt.s32.totalorder %s18, 0
        %s182 = scalar_select %p181, %s18, 0
        %s183 = smul.addr %s180, 32
        %s184 = sadd.s32 %s182, %s183
        %s185 = smul.addr %s184, 8
        %s186 = scalar_lea.vmem %s0, %s185
      $region32: #{spp_bottleneck.3} parent=27 // pred_fallthru
        _
    $region28: #{spp_bottleneck.3} parent=5 // pred_fallthru
      _
    %p187 = scmp.le.s32.totalorder 1, %s10
    %p188 = scmp.lt.s32.totalorder %s10, 3
    %p189 = pnand %p187, %p188
    %p190 = pneg %p189
    // Predicated region
    $region33: #{spp_bottleneck.3} parent=5 // pred_check
      _
    $region34: #{spp_bottleneck.3} parent=5 // pred_check_branch
      %192 = sbr.rel (%p189) target = $region36
    $region35: #{spp_bottleneck.3} parent=5 // pred_region
      %s193 = ssub.s32 %s10, 1
      %p194 = scmp.lt.s32.totalorder %s19, 1
      %s195 = scalar_select %p194, %s19, 1
      %p196 = scmp.lt.s32.totalorder %s20, 0
      %s197 = scalar_select %p196, %s20, 0
      %s198 = smul.addr %s195, 32
      %s199 = sadd.s32 %s197, %s198
      %s200 = smul.addr %s199, 8
      %s201 = scalar_lea.vmem %s0, %s200
      %p202 = pneg %p50
      %p203 = pneg %p47
      %p204 = scmp.lt.s32.totalorder %s20, 0
      %s205 = scalar_select %p204, %s20, 0
      %s206 = smul.addr %s205, 2
      %s207 = scalar_lea.vmem %s1, %s206
      %p208 = pneg %p76
      %p209 = pneg %p73
      %p210 = pneg %p97
      %p211 = pneg %p94
      %p212 = pneg %p118
      %p213 = pneg %p115
      %p214 = pneg %p144
      %p215 = pneg %p141
      %p216 = scmp.lt.s32.totalorder %s19, 1
      %s217 = scalar_select %p216, %s19, 1
      %s218 = smul.addr %s217, 32
      %s219 = smul.addr %s218, 8
      %s220 = scalar_lea.vmem %s4, %s219
      %p221 = scmp.lt.s32.totalorder %s19, 1
      %s222 = scalar_select %p221, %s19, 1
      %p223 = scmp.lt.s32.totalorder %s20, 0
      %s224 = scalar_select %p223, %s20, 0
      %s225 = smul.addr %s222, 32
      %s226 = sadd.s32 %s224, %s225
      %s227 = smul.addr %s226, 8
      %s228 = scalar_lea.vmem %s0, %s227
      %p229 = scmp.lt.s32.totalorder %s20, 0
      %s230 = scalar_select %p229, %s20, 0
      %s231 = smul.addr %s230, 2
      %s232 = scalar_lea.vmem %s1, %s231
      %p233 = scmp.lt.s32.totalorder %s19, 1
      %s234 = scalar_select %p233, %s19, 1
      %s235 = smul.addr %s234, 32
      %s236 = smul.addr %s235, 8
      %s237 = scalar_lea.vmem %s4, %s236
      %p238 = scmp.eq.s32.totalorder %s20, 0
      // Predicated region
      $region37: #{spp_bottleneck.3} parent=35 // pred_check
        %p239 = pneg %p238
      $region38: #{spp_bottleneck.3} parent=35 // pred_check_branch
        %241 = sbr.rel (%p239) target = $region40
      $region39: #{spp_bottleneck.3} parent=35 // pred_region
        %vm242 = vcmask 64512
        %243 = vst.msk [vmem:[#allocation4] sm:$0xff] %vm242, 0.0
        %244 = vst.msk [vmem:[#allocation4 + $0x8] sm:$0xff] %vm242, 0.0
        %245 = vst.msk [vmem:[#allocation4 + $0x10] sm:$0xff] %vm242, 0.0
        %246 = vst.msk [vmem:[#allocation4 + $0x18] sm:$0xff] %vm242, 0.0
        %247 = vst.msk [vmem:[#allocation4 + $0x20] sm:$0xff] %vm242, 0.0
        %248 = vst.msk [vmem:[#allocation4 + $0x28] sm:$0xff] %vm242, 0.0
        %249 = vst.msk [vmem:[#allocation4 + $0x30] sm:$0xff] %vm242, 0.0
        %250 = vst.msk [vmem:[#allocation4 + $0x38] sm:$0xff] %vm242, 0.0
        %251 = vst.msk [vmem:[#allocation4 + $0x40] sm:$0xff] %vm242, 0.0
        %252 = vst.msk [vmem:[#allocation4 + $0x48] sm:$0xff] %vm242, 0.0
        %253 = vst.msk [vmem:[#allocation4 + $0x50] sm:$0xff] %vm242, 0.0
        %254 = vst.msk [vmem:[#allocation4 + $0x58] sm:$0xff] %vm242, 0.0
        %255 = vst.msk [vmem:[#allocation4 + $0x60] sm:$0xff] %vm242, 0.0
        %256 = vst.msk [vmem:[#allocation4 + $0x68] sm:$0xff] %vm242, 0.0
        %257 = vst.msk [vmem:[#allocation4 + $0x70] sm:$0xff] %vm242, 0.0
        %258 = vst.msk [vmem:[#allocation4 + $0x78] sm:$0xff] %vm242, 0.0
        %259 = vst.msk [vmem:[#allocation4 + $0x80] sm:$0xff] %vm242, 0.0
        %260 = vst.msk [vmem:[#allocation4 + $0x88] sm:$0xff] %vm242, 0.0
        %261 = vst.msk [vmem:[#allocation4 + $0x90] sm:$0xff] %vm242, 0.0
        %262 = vst.msk [vmem:[#allocation4 + $0x98] sm:$0xff] %vm242, 0.0
        %263 = vst.msk [vmem:[#allocation4 + $0xa0] sm:$0xff] %vm242, 0.0
        %264 = vst.msk [vmem:[#allocation4 + $0xa8] sm:$0xff] %vm242, 0.0
        %265 = vst.msk [vmem:[#allocation4 + $0xb0] sm:$0xff] %vm242, 0.0
        %266 = vst.msk [vmem:[#allocation4 + $0xb8] sm:$0xff] %vm242, 0.0
        %267 = vst.msk [vmem:[#allocation4 + $0xc0] sm:$0xff] %vm242, 0.0
        %268 = vst.msk [vmem:[#allocation4 + $0xc8] sm:$0xff] %vm242, 0.0
        %269 = vst.msk [vmem:[#allocation4 + $0xd0] sm:$0xff] %vm242, 0.0
        %270 = vst.msk [vmem:[#allocation4 + $0xd8] sm:$0xff] %vm242, 0.0
        %271 = vst.msk [vmem:[#allocation4 + $0xe0] sm:$0xff] %vm242, 0.0
        %272 = vst.msk [vmem:[#allocation4 + $0xe8] sm:$0xff] %vm242, 0.0
        %273 = vst.msk [vmem:[#allocation4 + $0xf0] sm:$0xff] %vm242, 0.0
        %274 = vst.msk [vmem:[#allocation4 + $0xf8] sm:$0xff] %vm242, 0.0
      $region40: #{spp_bottleneck.3} parent=35 // pred_fallthru
        _
      %v275 = vld [vmem:[%s228] sm:$0xff]
      %v276 = vld [vmem:[%s228 + $0x8] sm:$0xff]
      %v277 = vld [vmem:[%s228 + $0x10] sm:$0xff]
      %v278 = vld [vmem:[%s228 + $0x18] sm:$0xff]
      %v279 = vld [vmem:[%s228 + $0x20] sm:$0xff]
      %v280 = vld [vmem:[%s228 + $0x28] sm:$0xff]
      %v281 = vld [vmem:[%s228 + $0x30] sm:$0xff]
      %v282 = vld [vmem:[%s228 + $0x38] sm:$0xff]
      %v283 = vld [vmem:[%s228 + $0x40] sm:$0xff]
      %v284 = vld [vmem:[%s228 + $0x48] sm:$0xff]
      %v285 = vld [vmem:[%s228 + $0x50] sm:$0xff]
      %v286 = vld [vmem:[%s228 + $0x58] sm:$0xff]
      %v287 = vld [vmem:[%s228 + $0x60] sm:$0xff]
      %v288 = vld [vmem:[%s228 + $0x68] sm:$0xff]
      %v289 = vld [vmem:[%s228 + $0x70] sm:$0xff]
      %v290 = vld [vmem:[%s228 + $0x78] sm:$0xff]
      %v291 = vld [vmem:[%s228 + $0x80] sm:$0xff]
      %v292 = vld [vmem:[%s228 + $0x88] sm:$0xff]
      %v293 = vld [vmem:[%s228 + $0x90] sm:$0xff]
      %v294 = vld [vmem:[%s228 + $0x98] sm:$0xff]
      %v295 = vld [vmem:[%s228 + $0xa0] sm:$0xff]
      %v296 = vld [vmem:[%s228 + $0xa8] sm:$0xff]
      %v297 = vld [vmem:[%s228 + $0xb0] sm:$0xff]
      %v298 = vld [vmem:[%s228 + $0xb8] sm:$0xff]
      %v299 = vld [vmem:[%s228 + $0xc0] sm:$0xff]
      %v300 = vld [vmem:[%s228 + $0xc8] sm:$0xff]
      %v301 = vld [vmem:[%s228 + $0xd0] sm:$0xff]
      %v302 = vld [vmem:[%s228 + $0xd8] sm:$0xff]
      %v303 = vld [vmem:[%s228 + $0xe0] sm:$0xff]
      %v304 = vld [vmem:[%s228 + $0xe8] sm:$0xff]
      %v305 = vld [vmem:[%s228 + $0xf0] sm:$0xff]
      %v306 = vld [vmem:[%s228 + $0xf8] sm:$0xff]
      %vm307 = vcmask 15360
      %308 = vst.msk [vmem:[#allocation2] sm:$0xff] %vm307, %v275
      %309 = vst.msk [vmem:[#allocation2 + $0x8] sm:$0xff] %vm307, %v276
      %310 = vst.msk [vmem:[#allocation2 + $0x10] sm:$0xff] %vm307, %v277
      %311 = vst.msk [vmem:[#allocation2 + $0x18] sm:$0xff] %vm307, %v278
      %312 = vst.msk [vmem:[#allocation2 + $0x20] sm:$0xff] %vm307, %v279
      %313 = vst.msk [vmem:[#allocation2 + $0x28] sm:$0xff] %vm307, %v280
      %314 = vst.msk [vmem:[#allocation2 + $0x30] sm:$0xff] %vm307, %v281
      %315 = vst.msk [vmem:[#allocation2 + $0x38] sm:$0xff] %vm307, %v282
      %316 = vst.msk [vmem:[#allocation2 + $0x40] sm:$0xff] %vm307, %v283
      %317 = vst.msk [vmem:[#allocation2 + $0x48] sm:$0xff] %vm307, %v284
      %318 = vst.msk [vmem:[#allocation2 + $0x50] sm:$0xff] %vm307, %v285
      %319 = vst.msk [vmem:[#allocation2 + $0x58] sm:$0xff] %vm307, %v286
      %320 = vst.msk [vmem:[#allocation2 + $0x60] sm:$0xff] %vm307, %v287
      %321 = vst.msk [vmem:[#allocation2 + $0x68] sm:$0xff] %vm307, %v288
      %322 = vst.msk [vmem:[#allocation2 + $0x70] sm:$0xff] %vm307, %v289
      %323 = vst.msk [vmem:[#allocation2 + $0x78] sm:$0xff] %vm307, %v290
      %324 = vst.msk [vmem:[#allocation2 + $0x80] sm:$0xff] %vm307, %v291
      %325 = vst.msk [vmem:[#allocation2 + $0x88] sm:$0xff] %vm307, %v292
      %326 = vst.msk [vmem:[#allocation2 + $0x90] sm:$0xff] %vm307, %v293
      %327 = vst.msk [vmem:[#allocation2 + $0x98] sm:$0xff] %vm307, %v294
      %328 = vst.msk [vmem:[#allocation2 + $0xa0] sm:$0xff] %vm307, %v295
      %329 = vst.msk [vmem:[#allocation2 + $0xa8] sm:$0xff] %vm307, %v296
      %330 = vst.msk [vmem:[#allocation2 + $0xb0] sm:$0xff] %vm307, %v297
      %331 = vst.msk [vmem:[#allocation2 + $0xb8] sm:$0xff] %vm307, %v298
      %332 = vst.msk [vmem:[#allocation2 + $0xc0] sm:$0xff] %vm307, %v299
      %333 = vst.msk [vmem:[#allocation2 + $0xc8] sm:$0xff] %vm307, %v300
      %334 = vst.msk [vmem:[#allocation2 + $0xd0] sm:$0xff] %vm307, %v301
      %335 = vst.msk [vmem:[#allocation2 + $0xd8] sm:$0xff] %vm307, %v302
      %336 = vst.msk [vmem:[#allocation2 + $0xe0] sm:$0xff] %vm307, %v303
      %337 = vst.msk [vmem:[#allocation2 + $0xe8] sm:$0xff] %vm307, %v304
      %338 = vst.msk [vmem:[#allocation2 + $0xf0] sm:$0xff] %vm307, %v305
      %339 = vst.msk [vmem:[#allocation2 + $0xf8] sm:$0xff] %vm307, %v306
      %v340 = vld [vmem:[#allocation4] sm:$0xff]
      %v341 = vld [vmem:[#allocation4 + $0x8] sm:$0xff]
      %v342 = vld [vmem:[#allocation4 + $0x10] sm:$0xff]
      %v343 = vld [vmem:[#allocation4 + $0x18] sm:$0xff]
      %v344 = vld [vmem:[#allocation4 + $0x20] sm:$0xff]
      %v345 = vld [vmem:[#allocation4 + $0x28] sm:$0xff]
      %v346 = vld [vmem:[#allocation4 + $0x30] sm:$0xff]
      %v347 = vld [vmem:[#allocation4 + $0x38] sm:$0xff]
      %v348 = vld [vmem:[#allocation4 + $0x40] sm:$0xff]
      %v349 = vld [vmem:[#allocation4 + $0x48] sm:$0xff]
      %v350 = vld [vmem:[#allocation4 + $0x50] sm:$0xff]
      %v351 = vld [vmem:[#allocation4 + $0x58] sm:$0xff]
      %v352 = vld [vmem:[#allocation4 + $0x60] sm:$0xff]
      %v353 = vld [vmem:[#allocation4 + $0x68] sm:$0xff]
      %v354 = vld [vmem:[#allocation4 + $0x70] sm:$0xff]
      %v355 = vld [vmem:[#allocation4 + $0x78] sm:$0xff]
      %v356 = vld [vmem:[#allocation4 + $0x80] sm:$0xff]
      %v357 = vld [vmem:[#allocation4 + $0x88] sm:$0xff]
      %v358 = vld [vmem:[#allocation4 + $0x90] sm:$0xff]
      %v359 = vld [vmem:[#allocation4 + $0x98] sm:$0xff]
      %v360 = vld [vmem:[#allocation4 + $0xa0] sm:$0xff]
      %v361 = vld [vmem:[#allocation4 + $0xa8] sm:$0xff]
      %v362 = vld [vmem:[#allocation4 + $0xb0] sm:$0xff]
      %v363 = vld [vmem:[#allocation4 + $0xb8] sm:$0xff]
      %v364 = vld [vmem:[#allocation4 + $0xc0] sm:$0xff]
      %v365 = vld [vmem:[#allocation4 + $0xc8] sm:$0xff]
      %v366 = vld [vmem:[#allocation4 + $0xd0] sm:$0xff]
      %v367 = vld [vmem:[#allocation4 + $0xd8] sm:$0xff]
      %v368 = vld [vmem:[#allocation4 + $0xe0] sm:$0xff]
      %v369 = vld [vmem:[#allocation4 + $0xe8] sm:$0xff]
      %v370 = vld [vmem:[#allocation4 + $0xf0] sm:$0xff]
      %v371 = vld [vmem:[#allocation4 + $0xf8] sm:$0xff]
      %v372 = vld [vmem:[%s232] sm:$0x3]
      %v374 = vsel %vm307, %v275, 0
      %v377 = vsel %vm307, %v276, 0
      %v380 = vsel %vm307, %v277, 0
      %v383 = vsel %vm307, %v278, 0
      %v386 = vsel %vm307, %v279, 0
      %v389 = vsel %vm307, %v280, 0
      %v392 = vsel %vm307, %v281, 0
      %v395 = vsel %vm307, %v282, 0
      %v398 = vsel %vm307, %v283, 0
      %v401 = vsel %vm307, %v284, 0
      %v404 = vsel %vm307, %v285, 0
      %v407 = vsel %vm307, %v286, 0
      %v410 = vsel %vm307, %v287, 0
      %v413 = vsel %vm307, %v288, 0
      %v416 = vsel %vm307, %v289, 0
      %v419 = vsel %vm307, %v290, 0
      %v422 = vsel %vm307, %v291, 0
      %v425 = vsel %vm307, %v292, 0
      %v428 = vsel %vm307, %v293, 0
      %v431 = vsel %vm307, %v294, 0
      %v434 = vsel %vm307, %v295, 0
      %v437 = vsel %vm307, %v296, 0
      %v440 = vsel %vm307, %v297, 0
      %v443 = vsel %vm307, %v298, 0
      %v446 = vsel %vm307, %v299, 0
      %v449 = vsel %vm307, %v300, 0
      %v452 = vsel %vm307, %v301, 0
      %v455 = vsel %vm307, %v302, 0
      %v458 = vsel %vm307, %v303, 0
      %v461 = vsel %vm307, %v304, 0
      %v464 = vsel %vm307, %v305, 0
      %v467 = vsel %vm307, %v306, 0
      %vm469 = vcmask 1041408
      %v471 = vsel %vm469, %v372, 0
      %473 = vmatprep.subr.mxu0 0.0
      %474 = vmatpush1.msra.mxu0 0.0
      %475 = vmatprep.subr.mxu0 0.0
      %476 = vmatpush1.msra.mxu0 0.0
      %477 = vmatprep.subr.mxu0 0.0
      %478 = vmatpush1.msra.mxu0 0.0
      %479 = vmatprep.subr.mxu0 0.0
      %480 = vmatpush1.msra.mxu0 0.0
      %481 = vmatprep.subr.mxu0 0.0
      %482 = vmatpush1.msra.mxu0 0.0
      %483 = vmatprep.subr.mxu0 0.0
      %484 = vmatpush1.msra.mxu0 0.0
      %485 = vmatprep.subr.mxu0 0.0
      %486 = vmatpush1.msra.mxu0 0.0
      %487 = vmatprep.subr.mxu0 0.0
      %488 = vmatpush1.msra.mxu0 0.0
      %489 = vmatprep.subr.mxu0 0.0
      %490 = vmatpush1.msra.mxu0 0.0
      %491 = vmatprep.subr.mxu0 0.0
      %492 = vmatpush1.msra.mxu0 0.0
      %493 = vmatprep.subr.mxu0 0.0
      %494 = vmatpush1.msra.mxu0 0.0
      %495 = vmatprep.subr.mxu0 0.0
      %496 = vmatpush1.msra.mxu0 0.0
      %497 = vmatprep.subr.mxu0 0.0
      %498 = vmatpush1.msra.mxu0 0.0
      %499 = vmatprep.subr.mxu0 0.0
      %500 = vmatpush1.msra.mxu0 0.0
      %501 = vmatprep.subr.mxu0 0.0
      %502 = vmatpush1.msra.mxu0 0.0
      %503 = vmatprep.subr.mxu0 0.0
      %504 = vmatpush1.msra.mxu0 %v471
      %505 = vmatprep.subr.mxu0 0.0
      %506 = vmatpush2.msra.mxu0 0.0
      %507 = vmatprep.subr.mxu0 0.0
      %508 = vmatpush2.msra.mxu0 0.0
      %509 = vmatprep.subr.mxu0 0.0
      %510 = vmatpush2.msra.mxu0 0.0
      %511 = vmatprep.subr.mxu0 0.0
      %512 = vmatpush2.msra.mxu0 0.0
      %513 = vmatprep.subr.mxu0 0.0
      %514 = vmatpush2.msra.mxu0 0.0
      %515 = vmatprep.subr.mxu0 0.0
      %516 = vmatpush2.msra.mxu0 0.0
      %517 = vmatprep.subr.mxu0 0.0
      %518 = vmatpush2.msra.mxu0 0.0
      %519 = vmatprep.subr.mxu0 0.0
      %520 = vmatpush2.msra.mxu0 0.0
      %521 = vmatprep.subr.mxu0 0.0
      %522 = vmatpush2.msra.mxu0 0.0
      %523 = vmatprep.subr.mxu0 0.0
      %524 = vmatpush2.msra.mxu0 0.0
      %525 = vmatprep.subr.mxu0 0.0
      %526 = vmatpush2.msra.mxu0 0.0
      %527 = vmatprep.subr.mxu0 0.0
      %528 = vmatpush2.msra.mxu0 0.0
      %529 = vmatprep.subr.mxu0 0.0
      %530 = vmatpush2.msra.mxu0 0.0
      %531 = vmatprep.subr.mxu0 0.0
      %532 = vmatpush2.msra.mxu0 0.0
      %533 = vmatprep.subr.mxu0 0.0
      %534 = vmatpush2.msra.mxu0 0.0
      %535 = vmatprep.subr.mxu0 0.0
      %536 = vmatpush2.msra.mxu0 0.0
      %537 = vmatprep.mubr.f32.mxu0 0.0
      %538 = vmatmul.mubr.f32.gmra.mxu0 %v374
      %v539 = vpop.f32.mrf.mxu0
      %v540 = vadd.f32 0.0, %v539
      %v541 = vpop.f32.mrf.mxu0
      %542 = vmatprep.mubr.f32.mxu0 0.0
      %543 = vmatmul.mubr.f32.gmra.mxu0 %v377
      %v544 = vpop.f32.mrf.mxu0
      %v545 = vadd.f32 0.0, %v544
      %v546 = vpop.f32.mrf.mxu0
      %547 = vmatprep.mubr.f32.mxu0 0.0
      %548 = vmatmul.mubr.f32.gmra.mxu0 %v380
      %v549 = vpop.f32.mrf.mxu0
      %v550 = vadd.f32 0.0, %v549
      %v551 = vpop.f32.mrf.mxu0
      %552 = vmatprep.mubr.f32.mxu0 0.0
      %553 = vmatmul.mubr.f32.gmra.mxu0 %v383
      %v554 = vpop.f32.mrf.mxu0
      %v555 = vadd.f32 0.0, %v554
      %v556 = vpop.f32.mrf.mxu0
      %557 = vmatprep.mubr.f32.mxu0 0.0
      %558 = vmatmul.mubr.f32.gmra.mxu0 %v386
      %v559 = vpop.f32.mrf.mxu0
      %v560 = vadd.f32 0.0, %v559
      %v561 = vpop.f32.mrf.mxu0
      %562 = vmatprep.mubr.f32.mxu0 0.0
      %563 = vmatmul.mubr.f32.gmra.mxu0 %v389
      %v564 = vpop.f32.mrf.mxu0
      %v565 = vadd.f32 0.0, %v564
      %v566 = vpop.f32.mrf.mxu0
      %567 = vmatprep.mubr.f32.mxu0 0.0
      %568 = vmatmul.mubr.f32.gmra.mxu0 %v392
      %v569 = vpop.f32.mrf.mxu0
      %v570 = vadd.f32 0.0, %v569
      %v571 = vpop.f32.mrf.mxu0
      %572 = vmatprep.mubr.f32.mxu0 0.0
      %573 = vmatmul.mubr.f32.gmra.mxu0 %v395
      %v574 = vpop.f32.mrf.mxu0
      %v575 = vadd.f32 0.0, %v574
      %v576 = vpop.f32.mrf.mxu0
      %577 = vmatprep.mubr.f32.mxu0 0.0
      %578 = vmatmul.mubr.f32.gmra.mxu0 %v398
      %v579 = vpop.f32.mrf.mxu0
      %v580 = vadd.f32 0.0, %v579
      %v581 = vpop.f32.mrf.mxu0
      %582 = vmatprep.mubr.f32.mxu0 0.0
      %583 = vmatmul.mubr.f32.gmra.mxu0 %v401
      %v584 = vpop.f32.mrf.mxu0
      %v585 = vadd.f32 0.0, %v584
      %v586 = vpop.f32.mrf.mxu0
      %587 = vmatprep.mubr.f32.mxu0 0.0
      %588 = vmatmul.mubr.f32.gmra.mxu0 %v404
      %v589 = vpop.f32.mrf.mxu0
      %v590 = vadd.f32 0.0, %v589
      %v591 = vpop.f32.mrf.mxu0
      %592 = vmatprep.mubr.f32.mxu0 0.0
      %593 = vmatmul.mubr.f32.gmra.mxu0 %v407
      %v594 = vpop.f32.mrf.mxu0
      %v595 = vadd.f32 0.0, %v594
      %v596 = vpop.f32.mrf.mxu0
      %597 = vmatprep.mubr.f32.mxu0 0.0
      %598 = vmatmul.mubr.f32.gmra.mxu0 %v410
      %v599 = vpop.f32.mrf.mxu0
      %v600 = vadd.f32 0.0, %v599
      %v601 = vpop.f32.mrf.mxu0
      %602 = vmatprep.mubr.f32.mxu0 0.0
      %603 = vmatmul.mubr.f32.gmra.mxu0 %v413
      %v604 = vpop.f32.mrf.mxu0
      %v605 = vadd.f32 0.0, %v604
      %v606 = vpop.f32.mrf.mxu0
      %607 = vmatprep.mubr.f32.mxu0 0.0
      %608 = vmatmul.mubr.f32.gmra.mxu0 %v416
      %v609 = vpop.f32.mrf.mxu0
      %v610 = vadd.f32 0.0, %v609
      %v611 = vpop.f32.mrf.mxu0
      %612 = vmatprep.mubr.f32.mxu0 0.0
      %613 = vmatmul.mubr.f32.gmra.mxu0 %v419
      %v614 = vpop.f32.mrf.mxu0
      %v615 = vadd.f32 0.0, %v614
      %v616 = vpop.f32.mrf.mxu0
      %617 = vmatprep.mubr.f32.mxu0 0.0
      %618 = vmatmul.mubr.f32.gmra.mxu0 %v422
      %v619 = vpop.f32.mrf.mxu0
      %v620 = vadd.f32 0.0, %v619
      %v621 = vpop.f32.mrf.mxu0
      %622 = vmatprep.mubr.f32.mxu0 0.0
      %623 = vmatmul.mubr.f32.gmra.mxu0 %v425
      %v624 = vpop.f32.mrf.mxu0
      %v625 = vadd.f32 0.0, %v624
      %v626 = vpop.f32.mrf.mxu0
      %627 = vmatprep.mubr.f32.mxu0 0.0
      %628 = vmatmul.mubr.f32.gmra.mxu0 %v428
      %v629 = vpop.f32.mrf.mxu0
      %v630 = vadd.f32 0.0, %v629
      %v631 = vpop.f32.mrf.mxu0
      %632 = vmatprep.mubr.f32.mxu0 0.0
      %633 = vmatmul.mubr.f32.gmra.mxu0 %v431
      %v634 = vpop.f32.mrf.mxu0
      %v635 = vadd.f32 0.0, %v634
      %v636 = vpop.f32.mrf.mxu0
      %637 = vmatprep.mubr.f32.mxu0 0.0
      %638 = vmatmul.mubr.f32.gmra.mxu0 %v434
      %v639 = vpop.f32.mrf.mxu0
      %v640 = vadd.f32 0.0, %v639
      %v641 = vpop.f32.mrf.mxu0
      %642 = vmatprep.mubr.f32.mxu0 0.0
      %643 = vmatmul.mubr.f32.gmra.mxu0 %v437
      %v644 = vpop.f32.mrf.mxu0
      %v645 = vadd.f32 0.0, %v644
      %v646 = vpop.f32.mrf.mxu0
      %647 = vmatprep.mubr.f32.mxu0 0.0
      %648 = vmatmul.mubr.f32.gmra.mxu0 %v440
      %v649 = vpop.f32.mrf.mxu0
      %v650 = vadd.f32 0.0, %v649
      %v651 = vpop.f32.mrf.mxu0
      %652 = vmatprep.mubr.f32.mxu0 0.0
      %653 = vmatmul.mubr.f32.gmra.mxu0 %v443
      %v654 = vpop.f32.mrf.mxu0
      %v655 = vadd.f32 0.0, %v654
      %v656 = vpop.f32.mrf.mxu0
      %657 = vmatprep.mubr.f32.mxu0 0.0
      %658 = vmatmul.mubr.f32.gmra.mxu0 %v446
      %v659 = vpop.f32.mrf.mxu0
      %v660 = vadd.f32 0.0, %v659
      %v661 = vpop.f32.mrf.mxu0
      %662 = vmatprep.mubr.f32.mxu0 0.0
      %663 = vmatmul.mubr.f32.gmra.mxu0 %v449
      %v664 = vpop.f32.mrf.mxu0
      %v665 = vadd.f32 0.0, %v664
      %v666 = vpop.f32.mrf.mxu0
      %667 = vmatprep.mubr.f32.mxu0 0.0
      %668 = vmatmul.mubr.f32.gmra.mxu0 %v452
      %v669 = vpop.f32.mrf.mxu0
      %v670 = vadd.f32 0.0, %v669
      %v671 = vpop.f32.mrf.mxu0
      %672 = vmatprep.mubr.f32.mxu0 0.0
      %673 = vmatmul.mubr.f32.gmra.mxu0 %v455
      %v674 = vpop.f32.mrf.mxu0
      %v675 = vadd.f32 0.0, %v674
      %v676 = vpop.f32.mrf.mxu0
      %677 = vmatprep.mubr.f32.mxu0 0.0
      %678 = vmatmul.mubr.f32.gmra.mxu0 %v458
      %v679 = vpop.f32.mrf.mxu0
      %v680 = vadd.f32 0.0, %v679
      %v681 = vpop.f32.mrf.mxu0
      %682 = vmatprep.mubr.f32.mxu0 0.0
      %683 = vmatmul.mubr.f32.gmra.mxu0 %v461
      %v684 = vpop.f32.mrf.mxu0
      %v685 = vadd.f32 0.0, %v684
      %v686 = vpop.f32.mrf.mxu0
      %687 = vmatprep.mubr.f32.mxu0 0.0
      %688 = vmatmul.mubr.f32.gmra.mxu0 %v464
      %v689 = vpop.f32.mrf.mxu0
      %v690 = vadd.f32 0.0, %v689
      %v691 = vpop.f32.mrf.mxu0
      %692 = vmatprep.mubr.f32.mxu0 0.0
      %693 = vmatmul.mubr.f32.gmra.mxu0 %v467
      %v694 = vpop.f32.mrf.mxu0
      %v695 = vadd.f32 0.0, %v694
      %v696 = vpop.f32.mrf.mxu0
      %697 = vdwg.mxu0
      %v698 = vadd.f32 %v340, %v540
      %v699 = vadd.f32 %v341, %v545
      %v700 = vadd.f32 %v342, %v550
      %v701 = vadd.f32 %v343, %v555
      %v702 = vadd.f32 %v344, %v560
      %v703 = vadd.f32 %v345, %v565
      %v704 = vadd.f32 %v346, %v570
      %v705 = vadd.f32 %v347, %v575
      %v706 = vadd.f32 %v348, %v580
      %v707 = vadd.f32 %v349, %v585
      %v708 = vadd.f32 %v350, %v590
      %v709 = vadd.f32 %v351, %v595
      %v710 = vadd.f32 %v352, %v600
      %v711 = vadd.f32 %v353, %v605
      %v712 = vadd.f32 %v354, %v610
      %v713 = vadd.f32 %v355, %v615
      %v714 = vadd.f32 %v356, %v620
      %v715 = vadd.f32 %v357, %v625
      %v716 = vadd.f32 %v358, %v630
      %v717 = vadd.f32 %v359, %v635
      %v718 = vadd.f32 %v360, %v640
      %v719 = vadd.f32 %v361, %v645
      %v720 = vadd.f32 %v362, %v650
      %v721 = vadd.f32 %v363, %v655
      %v722 = vadd.f32 %v364, %v660
      %v723 = vadd.f32 %v365, %v665
      %v724 = vadd.f32 %v366, %v670
      %v725 = vadd.f32 %v367, %v675
      %v726 = vadd.f32 %v368, %v680
      %v727 = vadd.f32 %v369, %v685
      %v728 = vadd.f32 %v370, %v690
      %v729 = vadd.f32 %v371, %v695
      %vm730 = vcmask 64512
      %731 = vst.msk [vmem:[#allocation4] sm:$0xff] %vm730, %v698
      %732 = vst.msk [vmem:[#allocation4 + $0x8] sm:$0xff] %vm730, %v699
      %733 = vst.msk [vmem:[#allocation4 + $0x10] sm:$0xff] %vm730, %v700
      %734 = vst.msk [vmem:[#allocation4 + $0x18] sm:$0xff] %vm730, %v701
      %735 = vst.msk [vmem:[#allocation4 + $0x20] sm:$0xff] %vm730, %v702
      %736 = vst.msk [vmem:[#allocation4 + $0x28] sm:$0xff] %vm730, %v703
      %737 = vst.msk [vmem:[#allocation4 + $0x30] sm:$0xff] %vm730, %v704
      %738 = vst.msk [vmem:[#allocation4 + $0x38] sm:$0xff] %vm730, %v705
      %739 = vst.msk [vmem:[#allocation4 + $0x40] sm:$0xff] %vm730, %v706
      %740 = vst.msk [vmem:[#allocation4 + $0x48] sm:$0xff] %vm730, %v707
      %741 = vst.msk [vmem:[#allocation4 + $0x50] sm:$0xff] %vm730, %v708
      %742 = vst.msk [vmem:[#allocation4 + $0x58] sm:$0xff] %vm730, %v709
      %743 = vst.msk [vmem:[#allocation4 + $0x60] sm:$0xff] %vm730, %v710
      %744 = vst.msk [vmem:[#allocation4 + $0x68] sm:$0xff] %vm730, %v711
      %745 = vst.msk [vmem:[#allocation4 + $0x70] sm:$0xff] %vm730, %v712
      %746 = vst.msk [vmem:[#allocation4 + $0x78] sm:$0xff] %vm730, %v713
      %747 = vst.msk [vmem:[#allocation4 + $0x80] sm:$0xff] %vm730, %v714
      %748 = vst.msk [vmem:[#allocation4 + $0x88] sm:$0xff] %vm730, %v715
      %749 = vst.msk [vmem:[#allocation4 + $0x90] sm:$0xff] %vm730, %v716
      %750 = vst.msk [vmem:[#allocation4 + $0x98] sm:$0xff] %vm730, %v717
      %751 = vst.msk [vmem:[#allocation4 + $0xa0] sm:$0xff] %vm730, %v718
      %752 = vst.msk [vmem:[#allocation4 + $0xa8] sm:$0xff] %vm730, %v719
      %753 = vst.msk [vmem:[#allocation4 + $0xb0] sm:$0xff] %vm730, %v720
      %754 = vst.msk [vmem:[#allocation4 + $0xb8] sm:$0xff] %vm730, %v721
      %755 = vst.msk [vmem:[#allocation4 + $0xc0] sm:$0xff] %vm730, %v722
      %756 = vst.msk [vmem:[#allocation4 + $0xc8] sm:$0xff] %vm730, %v723
      %757 = vst.msk [vmem:[#allocation4 + $0xd0] sm:$0xff] %vm730, %v724
      %758 = vst.msk [vmem:[#allocation4 + $0xd8] sm:$0xff] %vm730, %v725
      %759 = vst.msk [vmem:[#allocation4 + $0xe0] sm:$0xff] %vm730, %v726
      %760 = vst.msk [vmem:[#allocation4 + $0xe8] sm:$0xff] %vm730, %v727
      %761 = vst.msk [vmem:[#allocation4 + $0xf0] sm:$0xff] %vm730, %v728
      %762 = vst.msk [vmem:[#allocation4 + $0xf8] sm:$0xff] %vm730, %v729
      %v763 = vld [vmem:[#allocation2] sm:$0xff]
      %v764 = vld [vmem:[#allocation2 + $0x8] sm:$0xff]
      %v765 = vld [vmem:[#allocation2 + $0x10] sm:$0xff]
      %v766 = vld [vmem:[#allocation2 + $0x18] sm:$0xff]
      %v767 = vld [vmem:[#allocation2 + $0x20] sm:$0xff]
      %v768 = vld [vmem:[#allocation2 + $0x28] sm:$0xff]
      %v769 = vsel %vm307, %v763, -inf
      %v770 = vsel %vm307, %v765, -inf
      %v771 = vsel %vm307, %v767, -inf
      %v772 = vmax.f32 %v769, %v771
      %v773 = vmax.f32 %v772, %v770
      %v774 = vsel %vm307, %v764, -inf
      %v775 = vsel %vm307, %v766, -inf
      %v776 = vsel %vm307, %v768, -inf
      %v777 = vmax.f32 %v774, %v776
      %v778 = vmax.f32 %v777, %v775
      %779 = vst.msk [vmem:[#allocation3] sm:$0xff] %vm307, %v773
      %780 = vst.msk [vmem:[#allocation3 + $0x8] sm:$0xff] %vm307, %v778
      %v781 = vld [vmem:[#allocation2] sm:$0xff]
      %v782 = vld [vmem:[#allocation2 + $0x8] sm:$0xff]
      %v783 = vld [vmem:[#allocation2 + $0x10] sm:$0xff]
      %v784 = vld [vmem:[#allocation2 + $0x18] sm:$0xff]
      %v785 = vld [vmem:[#allocation2 + $0x20] sm:$0xff]
      %v786 = vld [vmem:[#allocation2 + $0x28] sm:$0xff]
      %v787 = vld [vmem:[#allocation2 + $0x30] sm:$0xff]
      %v788 = vld [vmem:[#allocation2 + $0x38] sm:$0xff]
      %v789 = vsel %vm307, %v781, -inf
      %v790 = vsel %vm307, %v783, -inf
      %v791 = vsel %vm307, %v785, -inf
      %v792 = vmax.f32 %v789, %v791
      %v793 = vsel %vm307, %v787, -inf
      %v794 = vmax.f32 %v790, %v793
      %v795 = vmax.f32 %v792, %v794
      %v796 = vsel %vm307, %v782, -inf
      %v797 = vsel %vm307, %v784, -inf
      %v798 = vsel %vm307, %v786, -inf
      %v799 = vmax.f32 %v796, %v798
      %v800 = vsel %vm307, %v788, -inf
      %v801 = vmax.f32 %v797, %v800
      %v802 = vmax.f32 %v799, %v801
      %s803 = scalar_lea.vmem [#allocation3], 16
      %804 = vst.msk [vmem:[%s803] sm:$0xff] %vm307, %v795
      %805 = vst.msk [vmem:[%s803 + $0x8] sm:$0xff] %vm307, %v802
      %v806 = vld [vmem:[#allocation2] sm:$0xff]
      %v807 = vld [vmem:[#allocation2 + $0x8] sm:$0xff]
      %v808 = vld [vmem:[#allocation2 + $0x10] sm:$0xff]
      %v809 = vld [vmem:[#allocation2 + $0x18] sm:$0xff]
      %v810 = vld [vmem:[#allocation2 + $0x20] sm:$0xff]
      %v811 = vld [vmem:[#allocation2 + $0x28] sm:$0xff]
      %v812 = vld [vmem:[#allocation2 + $0x30] sm:$0xff]
      %v813 = vld [vmem:[#allocation2 + $0x38] sm:$0xff]
      %v814 = vld [vmem:[#allocation2 + $0x40] sm:$0xff]
      %v815 = vld [vmem:[#allocation2 + $0x48] sm:$0xff]
      %v816 = vld [vmem:[#allocation2 + $0x50] sm:$0xff]
      %v817 = vld [vmem:[#allocation2 + $0x58] sm:$0xff]
      %v818 = vld [vmem:[#allocation2 + $0x60] sm:$0xff]
      %v819 = vld [vmem:[#allocation2 + $0x68] sm:$0xff]
      %v820 = vld [vmem:[#allocation2 + $0x70] sm:$0xff]
      %v821 = vld [vmem:[#allocation2 + $0x78] sm:$0xff]
      %v822 = vld [vmem:[#allocation2 + $0x80] sm:$0xff]
      %v823 = vld [vmem:[#allocation2 + $0x88] sm:$0xff]
      %v824 = vld [vmem:[#allocation2 + $0x90] sm:$0xff]
      %v825 = vld [vmem:[#allocation2 + $0x98] sm:$0xff]
      %v826 = vld [vmem:[#allocation2 + $0xa0] sm:$0xff]
      %v827 = vld [vmem:[#allocation2 + $0xa8] sm:$0xff]
      %v828 = vld [vmem:[#allocation2 + $0xb0] sm:$0xff]
      %v829 = vld [vmem:[#allocation2 + $0xb8] sm:$0xff]
      %s830 = scalar_lea.vmem [#allocation2], 16
      %v831 = vld [vmem:[%s830] sm:$0xff]
      %v832 = vld [vmem:[%s830 + $0x8] sm:$0xff]
      %v833 = vld [vmem:[%s830 + $0x10] sm:$0xff]
      %v834 = vld [vmem:[%s830 + $0x18] sm:$0xff]
      %v835 = vld [vmem:[%s830 + $0x20] sm:$0xff]
      %v836 = vld [vmem:[%s830 + $0x28] sm:$0xff]
      %v837 = vld [vmem:[%s830 + $0x30] sm:$0xff]
      %v838 = vld [vmem:[%s830 + $0x38] sm:$0xff]
      %v839 = vld [vmem:[%s830 + $0x40] sm:$0xff]
      %v840 = vld [vmem:[%s830 + $0x48] sm:$0xff]
      %v841 = vld [vmem:[%s830 + $0x50] sm:$0xff]
      %v842 = vld [vmem:[%s830 + $0x58] sm:$0xff]
      %v843 = vld [vmem:[%s830 + $0x60] sm:$0xff]
      %v844 = vld [vmem:[%s830 + $0x68] sm:$0xff]
      %v845 = vld [vmem:[%s830 + $0x70] sm:$0xff]
      %v846 = vld [vmem:[%s830 + $0x78] sm:$0xff]
      %v847 = vld [vmem:[%s830 + $0x80] sm:$0xff]
      %v848 = vld [vmem:[%s830 + $0x88] sm:$0xff]
      %v849 = vld [vmem:[%s830 + $0x90] sm:$0xff]
      %v850 = vld [vmem:[%s830 + $0x98] sm:$0xff]
      %v851 = vld [vmem:[%s830 + $0xa0] sm:$0xff]
      %v852 = vld [vmem:[%s830 + $0xa8] sm:$0xff]
      %v853 = vld [vmem:[%s830 + $0xb0] sm:$0xff]
      %v854 = vld [vmem:[%s830 + $0xb8] sm:$0xff]
      %v855 = vmax.f32 %v806, %v831
      %v856 = vmax.f32 %v807, %v832
      %v857 = vmax.f32 %v808, %v833
      %v858 = vmax.f32 %v809, %v834
      %v859 = vmax.f32 %v810, %v835
      %v860 = vmax.f32 %v811, %v836
      %v861 = vmax.f32 %v812, %v837
      %v862 = vmax.f32 %v813, %v838
      %v863 = vmax.f32 %v814, %v839
      %v864 = vmax.f32 %v815, %v840
      %v865 = vmax.f32 %v816, %v841
      %v866 = vmax.f32 %v817, %v842
      %v867 = vmax.f32 %v818, %v843
      %v868 = vmax.f32 %v819, %v844
      %v869 = vmax.f32 %v820, %v845
      %v870 = vmax.f32 %v821, %v846
      %v871 = vmax.f32 %v822, %v847
      %v872 = vmax.f32 %v823, %v848
      %v873 = vmax.f32 %v824, %v849
      %v874 = vmax.f32 %v825, %v850
      %v875 = vmax.f32 %v826, %v851
      %v876 = vmax.f32 %v827, %v852
      %v877 = vmax.f32 %v828, %v853
      %v878 = vmax.f32 %v829, %v854
      %s879 = scalar_lea.vmem [#allocation2], 32
      %v880 = vld [vmem:[%s879] sm:$0xff]
      %v881 = vld [vmem:[%s879 + $0x8] sm:$0xff]
      %v882 = vld [vmem:[%s879 + $0x10] sm:$0xff]
      %v883 = vld [vmem:[%s879 + $0x18] sm:$0xff]
      %v884 = vld [vmem:[%s879 + $0x20] sm:$0xff]
      %v885 = vld [vmem:[%s879 + $0x28] sm:$0xff]
      %v886 = vld [vmem:[%s879 + $0x30] sm:$0xff]
      %v887 = vld [vmem:[%s879 + $0x38] sm:$0xff]
      %v888 = vld [vmem:[%s879 + $0x40] sm:$0xff]
      %v889 = vld [vmem:[%s879 + $0x48] sm:$0xff]
      %v890 = vld [vmem:[%s879 + $0x50] sm:$0xff]
      %v891 = vld [vmem:[%s879 + $0x58] sm:$0xff]
      %v892 = vld [vmem:[%s879 + $0x60] sm:$0xff]
      %v893 = vld [vmem:[%s879 + $0x68] sm:$0xff]
      %v894 = vld [vmem:[%s879 + $0x70] sm:$0xff]
      %v895 = vld [vmem:[%s879 + $0x78] sm:$0xff]
      %v896 = vld [vmem:[%s879 + $0x80] sm:$0xff]
      %v897 = vld [vmem:[%s879 + $0x88] sm:$0xff]
      %v898 = vld [vmem:[%s879 + $0x90] sm:$0xff]
      %v899 = vld [vmem:[%s879 + $0x98] sm:$0xff]
      %v900 = vld [vmem:[%s879 + $0xa0] sm:$0xff]
      %v901 = vld [vmem:[%s879 + $0xa8] sm:$0xff]
      %v902 = vld [vmem:[%s879 + $0xb0] sm:$0xff]
      %v903 = vld [vmem:[%s879 + $0xb8] sm:$0xff]
      %v904 = vmax.f32 %v855, %v880
      %v905 = vmax.f32 %v856, %v881
      %v906 = vmax.f32 %v857, %v882
      %v907 = vmax.f32 %v858, %v883
      %v908 = vmax.f32 %v859, %v884
      %v909 = vmax.f32 %v860, %v885
      %v910 = vmax.f32 %v861, %v886
      %v911 = vmax.f32 %v862, %v887
      %v912 = vmax.f32 %v863, %v888
      %v913 = vmax.f32 %v864, %v889
      %v914 = vmax.f32 %v865, %v890
      %v915 = vmax.f32 %v866, %v891
      %v916 = vmax.f32 %v867, %v892
      %v917 = vmax.f32 %v868, %v893
      %v918 = vmax.f32 %v869, %v894
      %v919 = vmax.f32 %v870, %v895
      %v920 = vmax.f32 %v871, %v896
      %v921 = vmax.f32 %v872, %v897
      %v922 = vmax.f32 %v873, %v898
      %v923 = vmax.f32 %v874, %v899
      %v924 = vmax.f32 %v875, %v900
      %v925 = vmax.f32 %v876, %v901
      %v926 = vmax.f32 %v877, %v902
      %v927 = vmax.f32 %v878, %v903
      %s928 = scalar_lea.vmem [#allocation2], 48
      %v929 = vld [vmem:[%s928] sm:$0xff]
      %v930 = vld [vmem:[%s928 + $0x8] sm:$0xff]
      %v931 = vld [vmem:[%s928 + $0x10] sm:$0xff]
      %v932 = vld [vmem:[%s928 + $0x18] sm:$0xff]
      %v933 = vld [vmem:[%s928 + $0x20] sm:$0xff]
      %v934 = vld [vmem:[%s928 + $0x28] sm:$0xff]
      %v935 = vld [vmem:[%s928 + $0x30] sm:$0xff]
      %v936 = vld [vmem:[%s928 + $0x38] sm:$0xff]
      %v937 = vld [vmem:[%s928 + $0x40] sm:$0xff]
      %v938 = vld [vmem:[%s928 + $0x48] sm:$0xff]
      %v939 = vld [vmem:[%s928 + $0x50] sm:$0xff]
      %v940 = vld [vmem:[%s928 + $0x58] sm:$0xff]
      %v941 = vld [vmem:[%s928 + $0x60] sm:$0xff]
      %v942 = vld [vmem:[%s928 + $0x68] sm:$0xff]
      %v943 = vld [vmem:[%s928 + $0x70] sm:$0xff]
      %v944 = vld [vmem:[%s928 + $0x78] sm:$0xff]
      %v945 = vld [vmem:[%s928 + $0x80] sm:$0xff]
      %v946 = vld [vmem:[%s928 + $0x88] sm:$0xff]
      %v947 = vld [vmem:[%s928 + $0x90] sm:$0xff]
      %v948 = vld [vmem:[%s928 + $0x98] sm:$0xff]
      %v949 = vld [vmem:[%s928 + $0xa0] sm:$0xff]
      %v950 = vld [vmem:[%s928 + $0xa8] sm:$0xff]
      %v951 = vld [vmem:[%s928 + $0xb0] sm:$0xff]
      %v952 = vld [vmem:[%s928 + $0xb8] sm:$0xff]
      %v953 = vmax.f32 %v904, %v929
      %v954 = vmax.f32 %v905, %v930
      %v955 = vmax.f32 %v906, %v931
      %v956 = vmax.f32 %v907, %v932
      %v957 = vmax.f32 %v908, %v933
      %v958 = vmax.f32 %v909, %v934
      %v959 = vmax.f32 %v910, %v935
      %v960 = vmax.f32 %v911, %v936
      %v961 = vmax.f32 %v912, %v937
      %v962 = vmax.f32 %v913, %v938
      %v963 = vmax.f32 %v914, %v939
      %v964 = vmax.f32 %v915, %v940
      %v965 = vmax.f32 %v916, %v941
      %v966 = vmax.f32 %v917, %v942
      %v967 = vmax.f32 %v918, %v943
      %v968 = vmax.f32 %v919, %v944
      %v969 = vmax.f32 %v920, %v945
      %v970 = vmax.f32 %v921, %v946
      %v971 = vmax.f32 %v922, %v947
      %v972 = vmax.f32 %v923, %v948
      %v973 = vmax.f32 %v924, %v949
      %v974 = vmax.f32 %v925, %v950
      %v975 = vmax.f32 %v926, %v951
      %v976 = vmax.f32 %v927, %v952
      %s977 = scalar_lea.vmem [#allocation2], 64
      %v978 = vld [vmem:[%s977] sm:$0xff]
      %v979 = vld [vmem:[%s977 + $0x8] sm:$0xff]
      %v980 = vld [vmem:[%s977 + $0x10] sm:$0xff]
      %v981 = vld [vmem:[%s977 + $0x18] sm:$0xff]
      %v982 = vld [vmem:[%s977 + $0x20] sm:$0xff]
      %v983 = vld [vmem:[%s977 + $0x28] sm:$0xff]
      %v984 = vld [vmem:[%s977 + $0x30] sm:$0xff]
      %v985 = vld [vmem:[%s977 + $0x38] sm:$0xff]
      %v986 = vld [vmem:[%s977 + $0x40] sm:$0xff]
      %v987 = vld [vmem:[%s977 + $0x48] sm:$0xff]
      %v988 = vld [vmem:[%s977 + $0x50] sm:$0xff]
      %v989 = vld [vmem:[%s977 + $0x58] sm:$0xff]
      %v990 = vld [vmem:[%s977 + $0x60] sm:$0xff]
      %v991 = vld [vmem:[%s977 + $0x68] sm:$0xff]
      %v992 = vld [vmem:[%s977 + $0x70] sm:$0xff]
      %v993 = vld [vmem:[%s977 + $0x78] sm:$0xff]
      %v994 = vld [vmem:[%s977 + $0x80] sm:$0xff]
      %v995 = vld [vmem:[%s977 + $0x88] sm:$0xff]
      %v996 = vld [vmem:[%s977 + $0x90] sm:$0xff]
      %v997 = vld [vmem:[%s977 + $0x98] sm:$0xff]
      %v998 = vld [vmem:[%s977 + $0xa0] sm:$0xff]
      %v999 = vld [vmem:[%s977 + $0xa8] sm:$0xff]
      %v1000 = vld [vmem:[%s977 + $0xb0] sm:$0xff]
      %v1001 = vld [vmem:[%s977 + $0xb8] sm:$0xff]
      %v1002 = vmax.f32 %v953, %v978
      %v1003 = vmax.f32 %v954, %v979
      %v1004 = vmax.f32 %v955, %v980
      %v1005 = vmax.f32 %v956, %v981
      %v1006 = vmax.f32 %v957, %v982
      %v1007 = vmax.f32 %v958, %v983
      %v1008 = vmax.f32 %v959, %v984
      %v1009 = vmax.f32 %v960, %v985
      %v1010 = vmax.f32 %v961, %v986
      %v1011 = vmax.f32 %v962, %v987
      %v1012 = vmax.f32 %v963, %v988
      %v1013 = vmax.f32 %v964, %v989
      %v1014 = vmax.f32 %v965, %v990
      %v1015 = vmax.f32 %v966, %v991
      %v1016 = vmax.f32 %v967, %v992
      %v1017 = vmax.f32 %v968, %v993
      %v1018 = vmax.f32 %v969, %v994
      %v1019 = vmax.f32 %v970, %v995
      %v1020 = vmax.f32 %v971, %v996
      %v1021 = vmax.f32 %v972, %v997
      %v1022 = vmax.f32 %v973, %v998
      %v1023 = vmax.f32 %v974, %v999
      %v1024 = vmax.f32 %v975, %v1000
      %v1025 = vmax.f32 %v976, %v1001
      %s1026 = scalar_lea.vmem [#allocation3], 32
      %1027 = vst.msk [vmem:[%s1026] sm:$0xff] %vm307, %v1002
      %1028 = vst.msk [vmem:[%s1026 + $0x8] sm:$0xff] %vm307, %v1003
      %1029 = vst.msk [vmem:[%s1026 + $0x10] sm:$0xff] %vm307, %v1004
      %1030 = vst.msk [vmem:[%s1026 + $0x18] sm:$0xff] %vm307, %v1005
      %1031 = vst.msk [vmem:[%s1026 + $0x20] sm:$0xff] %vm307, %v1006
      %1032 = vst.msk [vmem:[%s1026 + $0x28] sm:$0xff] %vm307, %v1007
      %1033 = vst.msk [vmem:[%s1026 + $0x30] sm:$0xff] %vm307, %v1008
      %1034 = vst.msk [vmem:[%s1026 + $0x38] sm:$0xff] %vm307, %v1009
      %1035 = vst.msk [vmem:[%s1026 + $0x40] sm:$0xff] %vm307, %v1010
      %1036 = vst.msk [vmem:[%s1026 + $0x48] sm:$0xff] %vm307, %v1011
      %1037 = vst.msk [vmem:[%s1026 + $0x50] sm:$0xff] %vm307, %v1012
      %1038 = vst.msk [vmem:[%s1026 + $0x58] sm:$0xff] %vm307, %v1013
      %1039 = vst.msk [vmem:[%s1026 + $0x60] sm:$0xff] %vm307, %v1014
      %1040 = vst.msk [vmem:[%s1026 + $0x68] sm:$0xff] %vm307, %v1015
      %1041 = vst.msk [vmem:[%s1026 + $0x70] sm:$0xff] %vm307, %v1016
      %1042 = vst.msk [vmem:[%s1026 + $0x78] sm:$0xff] %vm307, %v1017
      %1043 = vst.msk [vmem:[%s1026 + $0x80] sm:$0xff] %vm307, %v1018
      %1044 = vst.msk [vmem:[%s1026 + $0x88] sm:$0xff] %vm307, %v1019
      %1045 = vst.msk [vmem:[%s1026 + $0x90] sm:$0xff] %vm307, %v1020
      %1046 = vst.msk [vmem:[%s1026 + $0x98] sm:$0xff] %vm307, %v1021
      %1047 = vst.msk [vmem:[%s1026 + $0xa0] sm:$0xff] %vm307, %v1022
      %1048 = vst.msk [vmem:[%s1026 + $0xa8] sm:$0xff] %vm307, %v1023
      %1049 = vst.msk [vmem:[%s1026 + $0xb0] sm:$0xff] %vm307, %v1024
      %1050 = vst.msk [vmem:[%s1026 + $0xb8] sm:$0xff] %vm307, %v1025
      %s1051 = scalar_lea.vmem [#allocation2], 192
      %v1052 = vld [vmem:[%s1051] sm:$0xff]
      %v1053 = vld [vmem:[%s1051 + $0x8] sm:$0xff]
      %v1054 = vld [vmem:[%s1051 + $0x10] sm:$0xff]
      %v1055 = vld [vmem:[%s1051 + $0x18] sm:$0xff]
      %v1056 = vld [vmem:[%s1051 + $0x20] sm:$0xff]
      %v1057 = vld [vmem:[%s1051 + $0x28] sm:$0xff]
      %v1058 = vld [vmem:[%s1051 + $0x30] sm:$0xff]
      %v1059 = vld [vmem:[%s1051 + $0x38] sm:$0xff]
      %v1060 = vsel %vm307, %v1052, -inf
      %v1061 = vsel %vm307, %v1054, -inf
      %v1062 = vsel %vm307, %v1056, -inf
      %v1063 = vmax.f32 %v1060, %v1062
      %v1064 = vsel %vm307, %v1058, -inf
      %v1065 = vmax.f32 %v1061, %v1064
      %v1066 = vmax.f32 %v1063, %v1065
      %v1067 = vsel %vm307, %v1053, -inf
      %v1068 = vsel %vm307, %v1055, -inf
      %v1069 = vsel %vm307, %v1057, -inf
      %v1070 = vmax.f32 %v1067, %v1069
      %v1071 = vsel %vm307, %v1059, -inf
      %v1072 = vmax.f32 %v1068, %v1071
      %v1073 = vmax.f32 %v1070, %v1072
      %s1074 = scalar_lea.vmem [#allocation3], 224
      %1075 = vst.msk [vmem:[%s1074] sm:$0xff] %vm307, %v1066
      %1076 = vst.msk [vmem:[%s1074 + $0x8] sm:$0xff] %vm307, %v1073
      %s1077 = scalar_lea.vmem [#allocation2], 208
      %v1078 = vld [vmem:[%s1077] sm:$0xff]
      %v1079 = vld [vmem:[%s1077 + $0x8] sm:$0xff]
      %v1080 = vld [vmem:[%s1077 + $0x10] sm:$0xff]
      %v1081 = vld [vmem:[%s1077 + $0x18] sm:$0xff]
      %v1082 = vld [vmem:[%s1077 + $0x20] sm:$0xff]
      %v1083 = vld [vmem:[%s1077 + $0x28] sm:$0xff]
      %v1084 = vsel %vm307, %v1078, -inf
      %v1085 = vsel %vm307, %v1080, -inf
      %v1086 = vsel %vm307, %v1082, -inf
      %v1087 = vmax.f32 %v1084, %v1086
      %v1088 = vmax.f32 %v1087, %v1085
      %v1089 = vsel %vm307, %v1079, -inf
      %v1090 = vsel %vm307, %v1081, -inf
      %v1091 = vsel %vm307, %v1083, -inf
      %v1092 = vmax.f32 %v1089, %v1091
      %v1093 = vmax.f32 %v1092, %v1090
      %s1094 = scalar_lea.vmem [#allocation3], 240
      %1095 = vst.msk [vmem:[%s1094] sm:$0xff] %vm307, %v1088
      %1096 = vst.msk [vmem:[%s1094 + $0x8] sm:$0xff] %vm307, %v1093
      %v1097 = vld [vmem:[#allocation3] sm:$0x7]
      %v1098 = vld [vmem:[#allocation3 + $0x10] sm:$0x7]
      %v1099 = vld [vmem:[#allocation3 + $0x20] sm:$0x7]
      %v1100 = vld [vmem:[#allocation3 + $0x30] sm:$0x7]
      %v1101 = vld [vmem:[#allocation3 + $0x40] sm:$0x7]
      %v1102 = vld [vmem:[#allocation3 + $0x50] sm:$0x7]
      %v1103 = vld [vmem:[#allocation3 + $0x60] sm:$0x7]
      %v1104 = vld [vmem:[#allocation3 + $0x70] sm:$0x7]
      %v1105 = vld [vmem:[#allocation3 + $0x80] sm:$0x7]
      %v1106 = vld [vmem:[#allocation3 + $0x90] sm:$0x7]
      %v1107 = vld [vmem:[#allocation3 + $0xa0] sm:$0x7]
      %v1108 = vld [vmem:[#allocation3 + $0xb0] sm:$0x7]
      %v1109 = vld [vmem:[#allocation3 + $0xc0] sm:$0x7]
      %v1110 = vld [vmem:[#allocation3 + $0xd0] sm:$0x7]
      %v1111 = vld [vmem:[#allocation3 + $0xe0] sm:$0x7]
      %v1112 = vld [vmem:[#allocation3 + $0xf0] sm:$0x7]
      %vm1113 = vcmask 10240
      %v1114 = vsel %vm1113, %v1097, -inf
      %v1115 = vrot.slane %v1114, 4
      %v1116 = vmax.f32 %v1114, %v1115
      %v1117 = vrot.slane %v1116, 2
      %v1118 = vmax.f32 %v1116, %v1117
      %v1119 = vrot.slane %v1118, 1
      %v1120 = vmax.f32 %v1118, %v1119
      %v1121 = vsel %vm1113, %v1098, -inf
      %v1122 = vrot.slane %v1121, 4
      %v1123 = vmax.f32 %v1121, %v1122
      %v1124 = vrot.slane %v1123, 2
      %v1125 = vmax.f32 %v1123, %v1124
      %v1126 = vrot.slane %v1125, 1
      %v1127 = vmax.f32 %v1125, %v1126
      %v1128 = vsel %vm1113, %v1099, -inf
      %v1129 = vrot.slane %v1128, 4
      %v1130 = vmax.f32 %v1128, %v1129
      %v1131 = vrot.slane %v1130, 2
      %v1132 = vmax.f32 %v1130, %v1131
      %v1133 = vrot.slane %v1132, 1
      %v1134 = vmax.f32 %v1132, %v1133
      %v1135 = vsel %vm1113, %v1100, -inf
      %v1136 = vrot.slane %v1135, 4
      %v1137 = vmax.f32 %v1135, %v1136
      %v1138 = vrot.slane %v1137, 2
      %v1139 = vmax.f32 %v1137, %v1138
      %v1140 = vrot.slane %v1139, 1
      %v1141 = vmax.f32 %v1139, %v1140
      %v1142 = vsel %vm1113, %v1101, -inf
      %v1143 = vrot.slane %v1142, 4
      %v1144 = vmax.f32 %v1142, %v1143
      %v1145 = vrot.slane %v1144, 2
      %v1146 = vmax.f32 %v1144, %v1145
      %v1147 = vrot.slane %v1146, 1
      %v1148 = vmax.f32 %v1146, %v1147
      %v1149 = vsel %vm1113, %v1102, -inf
      %v1150 = vrot.slane %v1149, 4
      %v1151 = vmax.f32 %v1149, %v1150
      %v1152 = vrot.slane %v1151, 2
      %v1153 = vmax.f32 %v1151, %v1152
      %v1154 = vrot.slane %v1153, 1
      %v1155 = vmax.f32 %v1153, %v1154
      %v1156 = vsel %vm1113, %v1103, -inf
      %v1157 = vrot.slane %v1156, 4
      %v1158 = vmax.f32 %v1156, %v1157
      %v1159 = vrot.slane %v1158, 2
      %v1160 = vmax.f32 %v1158, %v1159
      %v1161 = vrot.slane %v1160, 1
      %v1162 = vmax.f32 %v1160, %v1161
      %v1163 = vsel %vm1113, %v1104, -inf
      %v1164 = vrot.slane %v1163, 4
      %v1165 = vmax.f32 %v1163, %v1164
      %v1166 = vrot.slane %v1165, 2
      %v1167 = vmax.f32 %v1165, %v1166
      %v1168 = vrot.slane %v1167, 1
      %v1169 = vmax.f32 %v1167, %v1168
      %v1170 = vsel %vm1113, %v1105, -inf
      %v1171 = vrot.slane %v1170, 4
      %v1172 = vmax.f32 %v1170, %v1171
      %v1173 = vrot.slane %v1172, 2
      %v1174 = vmax.f32 %v1172, %v1173
      %v1175 = vrot.slane %v1174, 1
      %v1176 = vmax.f32 %v1174, %v1175
      %v1177 = vsel %vm1113, %v1106, -inf
      %v1178 = vrot.slane %v1177, 4
      %v1179 = vmax.f32 %v1177, %v1178
      %v1180 = vrot.slane %v1179, 2
      %v1181 = vmax.f32 %v1179, %v1180
      %v1182 = vrot.slane %v1181, 1
      %v1183 = vmax.f32 %v1181, %v1182
      %v1184 = vsel %vm1113, %v1107, -inf
      %v1185 = vrot.slane %v1184, 4
      %v1186 = vmax.f32 %v1184, %v1185
      %v1187 = vrot.slane %v1186, 2
      %v1188 = vmax.f32 %v1186, %v1187
      %v1189 = vrot.slane %v1188, 1
      %v1190 = vmax.f32 %v1188, %v1189
      %v1191 = vsel %vm1113, %v1108, -inf
      %v1192 = vrot.slane %v1191, 4
      %v1193 = vmax.f32 %v1191, %v1192
      %v1194 = vrot.slane %v1193, 2
      %v1195 = vmax.f32 %v1193, %v1194
      %v1196 = vrot.slane %v1195, 1
      %v1197 = vmax.f32 %v1195, %v1196
      %v1198 = vsel %vm1113, %v1109, -inf
      %v1199 = vrot.slane %v1198, 4
      %v1200 = vmax.f32 %v1198, %v1199
      %v1201 = vrot.slane %v1200, 2
      %v1202 = vmax.f32 %v1200, %v1201
      %v1203 = vrot.slane %v1202, 1
      %v1204 = vmax.f32 %v1202, %v1203
      %v1205 = vsel %vm1113, %v1110, -inf
      %v1206 = vrot.slane %v1205, 4
      %v1207 = vmax.f32 %v1205, %v1206
      %v1208 = vrot.slane %v1207, 2
      %v1209 = vmax.f32 %v1207, %v1208
      %v1210 = vrot.slane %v1209, 1
      %v1211 = vmax.f32 %v1209, %v1210
      %v1212 = vsel %vm1113, %v1111, -inf
      %v1213 = vrot.slane %v1212, 4
      %v1214 = vmax.f32 %v1212, %v1213
      %v1215 = vrot.slane %v1214, 2
      %v1216 = vmax.f32 %v1214, %v1215
      %v1217 = vrot.slane %v1216, 1
      %v1218 = vmax.f32 %v1216, %v1217
      %v1219 = vsel %vm1113, %v1112, -inf
      %v1220 = vrot.slane %v1219, 4
      %v1221 = vmax.f32 %v1219, %v1220
      %v1222 = vrot.slane %v1221, 2
      %v1223 = vmax.f32 %v1221, %v1222
      %v1224 = vrot.slane %v1223, 1
      %v1225 = vmax.f32 %v1223, %v1224
      %vm1226 = vcmask 8192
      %1227 = vst.msk [vmem:[#allocation2] sm:$0x1] %vm1226, %v1120
      %1228 = vst.msk [vmem:[#allocation2 + $0x10] sm:$0x1] %vm1226, %v1127
      %1229 = vst.msk [vmem:[#allocation2 + $0x20] sm:$0x1] %vm1226, %v1134
      %1230 = vst.msk [vmem:[#allocation2 + $0x30] sm:$0x1] %vm1226, %v1141
      %1231 = vst.msk [vmem:[#allocation2 + $0x40] sm:$0x1] %vm1226, %v1148
      %1232 = vst.msk [vmem:[#allocation2 + $0x50] sm:$0x1] %vm1226, %v1155
      %1233 = vst.msk [vmem:[#allocation2 + $0x60] sm:$0x1] %vm1226, %v1162
      %1234 = vst.msk [vmem:[#allocation2 + $0x70] sm:$0x1] %vm1226, %v1169
      %1235 = vst.msk [vmem:[#allocation2 + $0x80] sm:$0x1] %vm1226, %v1176
      %1236 = vst.msk [vmem:[#allocation2 + $0x90] sm:$0x1] %vm1226, %v1183
      %1237 = vst.msk [vmem:[#allocation2 + $0xa0] sm:$0x1] %vm1226, %v1190
      %1238 = vst.msk [vmem:[#allocation2 + $0xb0] sm:$0x1] %vm1226, %v1197
      %1239 = vst.msk [vmem:[#allocation2 + $0xc0] sm:$0x1] %vm1226, %v1204
      %1240 = vst.msk [vmem:[#allocation2 + $0xd0] sm:$0x1] %vm1226, %v1211
      %1241 = vst.msk [vmem:[#allocation2 + $0xe0] sm:$0x1] %vm1226, %v1218
      %1242 = vst.msk [vmem:[#allocation2 + $0xf0] sm:$0x1] %vm1226, %v1225
      %v1243 = vld [vmem:[#allocation3] sm:$0xf]
      %v1244 = vld [vmem:[#allocation3 + $0x10] sm:$0xf]
      %v1245 = vld [vmem:[#allocation3 + $0x20] sm:$0xf]
      %v1246 = vld [vmem:[#allocation3 + $0x30] sm:$0xf]
      %v1247 = vld [vmem:[#allocation3 + $0x40] sm:$0xf]
      %v1248 = vld [vmem:[#allocation3 + $0x50] sm:$0xf]
      %v1249 = vld [vmem:[#allocation3 + $0x60] sm:$0xf]
      %v1250 = vld [vmem:[#allocation3 + $0x70] sm:$0xf]
      %v1251 = vld [vmem:[#allocation3 + $0x80] sm:$0xf]
      %v1252 = vld [vmem:[#allocation3 + $0x90] sm:$0xf]
      %v1253 = vld [vmem:[#allocation3 + $0xa0] sm:$0xf]
      %v1254 = vld [vmem:[#allocation3 + $0xb0] sm:$0xf]
      %v1255 = vld [vmem:[#allocation3 + $0xc0] sm:$0xf]
      %v1256 = vld [vmem:[#allocation3 + $0xd0] sm:$0xf]
      %v1257 = vld [vmem:[#allocation3 + $0xe0] sm:$0xf]
      %v1258 = vld [vmem:[#allocation3 + $0xf0] sm:$0xf]
      %vm1259 = vcmask 11264
      %v1260 = vsel %vm1259, %v1243, -inf
      %v1261 = vrot.slane %v1260, 4
      %v1262 = vmax.f32 %v1260, %v1261
      %v1263 = vrot.slane %v1262, 2
      %v1264 = vmax.f32 %v1262, %v1263
      %v1265 = vrot.slane %v1264, 1
      %v1266 = vmax.f32 %v1264, %v1265
      %v1267 = vsel %vm1259, %v1244, -inf
      %v1268 = vrot.slane %v1267, 4
      %v1269 = vmax.f32 %v1267, %v1268
      %v1270 = vrot.slane %v1269, 2
      %v1271 = vmax.f32 %v1269, %v1270
      %v1272 = vrot.slane %v1271, 1
      %v1273 = vmax.f32 %v1271, %v1272
      %v1274 = vsel %vm1259, %v1245, -inf
      %v1275 = vrot.slane %v1274, 4
      %v1276 = vmax.f32 %v1274, %v1275
      %v1277 = vrot.slane %v1276, 2
      %v1278 = vmax.f32 %v1276, %v1277
      %v1279 = vrot.slane %v1278, 1
      %v1280 = vmax.f32 %v1278, %v1279
      %v1281 = vsel %vm1259, %v1246, -inf
      %v1282 = vrot.slane %v1281, 4
      %v1283 = vmax.f32 %v1281, %v1282
      %v1284 = vrot.slane %v1283, 2
      %v1285 = vmax.f32 %v1283, %v1284
      %v1286 = vrot.slane %v1285, 1
      %v1287 = vmax.f32 %v1285, %v1286
      %v1288 = vsel %vm1259, %v1247, -inf
      %v1289 = vrot.slane %v1288, 4
      %v1290 = vmax.f32 %v1288, %v1289
      %v1291 = vrot.slane %v1290, 2
      %v1292 = vmax.f32 %v1290, %v1291
      %v1293 = vrot.slane %v1292, 1
      %v1294 = vmax.f32 %v1292, %v1293
      %v1295 = vsel %vm1259, %v1248, -inf
      %v1296 = vrot.slane %v1295, 4
      %v1297 = vmax.f32 %v1295, %v1296
      %v1298 = vrot.slane %v1297, 2
      %v1299 = vmax.f32 %v1297, %v1298
      %v1300 = vrot.slane %v1299, 1
      %v1301 = vmax.f32 %v1299, %v1300
      %v1302 = vsel %vm1259, %v1249, -inf
      %v1303 = vrot.slane %v1302, 4
      %v1304 = vmax.f32 %v1302, %v1303
      %v1305 = vrot.slane %v1304, 2
      %v1306 = vmax.f32 %v1304, %v1305
      %v1307 = vrot.slane %v1306, 1
      %v1308 = vmax.f32 %v1306, %v1307
      %v1309 = vsel %vm1259, %v1250, -inf
      %v1310 = vrot.slane %v1309, 4
      %v1311 = vmax.f32 %v1309, %v1310
      %v1312 = vrot.slane %v1311, 2
      %v1313 = vmax.f32 %v1311, %v1312
      %v1314 = vrot.slane %v1313, 1
      %v1315 = vmax.f32 %v1313, %v1314
      %v1316 = vsel %vm1259, %v1251, -inf
      %v1317 = vrot.slane %v1316, 4
      %v1318 = vmax.f32 %v1316, %v1317
      %v1319 = vrot.slane %v1318, 2
      %v1320 = vmax.f32 %v1318, %v1319
      %v1321 = vrot.slane %v1320, 1
      %v1322 = vmax.f32 %v1320, %v1321
      %v1323 = vsel %vm1259, %v1252, -inf
      %v1324 = vrot.slane %v1323, 4
      %v1325 = vmax.f32 %v1323, %v1324
      %v1326 = vrot.slane %v1325, 2
      %v1327 = vmax.f32 %v1325, %v1326
      %v1328 = vrot.slane %v1327, 1
      %v1329 = vmax.f32 %v1327, %v1328
      %v1330 = vsel %vm1259, %v1253, -inf
      %v1331 = vrot.slane %v1330, 4
      %v1332 = vmax.f32 %v1330, %v1331
      %v1333 = vrot.slane %v1332, 2
      %v1334 = vmax.f32 %v1332, %v1333
      %v1335 = vrot.slane %v1334, 1
      %v1336 = vmax.f32 %v1334, %v1335
      %v1337 = vsel %vm1259, %v1254, -inf
      %v1338 = vrot.slane %v1337, 4
      %v1339 = vmax.f32 %v1337, %v1338
      %v1340 = vrot.slane %v1339, 2
      %v1341 = vmax.f32 %v1339, %v1340
      %v1342 = vrot.slane %v1341, 1
      %v1343 = vmax.f32 %v1341, %v1342
      %v1344 = vsel %vm1259, %v1255, -inf
      %v1345 = vrot.slane %v1344, 4
      %v1346 = vmax.f32 %v1344, %v1345
      %v1347 = vrot.slane %v1346, 2
      %v1348 = vmax.f32 %v1346, %v1347
      %v1349 = vrot.slane %v1348, 1
      %v1350 = vmax.f32 %v1348, %v1349
      %v1351 = vsel %vm1259, %v1256, -inf
      %v1352 = vrot.slane %v1351, 4
      %v1353 = vmax.f32 %v1351, %v1352
      %v1354 = vrot.slane %v1353, 2
      %v1355 = vmax.f32 %v1353, %v1354
      %v1356 = vrot.slane %v1355, 1
      %v1357 = vmax.f32 %v1355, %v1356
      %v1358 = vsel %vm1259, %v1257, -inf
      %v1359 = vrot.slane %v1358, 4
      %v1360 = vmax.f32 %v1358, %v1359
      %v1361 = vrot.slane %v1360, 2
      %v1362 = vmax.f32 %v1360, %v1361
      %v1363 = vrot.slane %v1362, 1
      %v1364 = vmax.f32 %v1362, %v1363
      %v1365 = vsel %vm1259, %v1258, -inf
      %v1366 = vrot.slane %v1365, 4
      %v1367 = vmax.f32 %v1365, %v1366
      %v1368 = vrot.slane %v1367, 2
      %v1369 = vmax.f32 %v1367, %v1368
      %v1370 = vrot.slane %v1369, 1
      %v1371 = vmax.f32 %v1369, %v1370
      %1372 = vst.msk [vmem:[#allocation2 + $0x1] sm:$0x1] %vm1226, %v1266
      %1373 = vst.msk [vmem:[#allocation2 + $0x11] sm:$0x1] %vm1226, %v1273
      %1374 = vst.msk [vmem:[#allocation2 + $0x21] sm:$0x1] %vm1226, %v1280
      %1375 = vst.msk [vmem:[#allocation2 + $0x31] sm:$0x1] %vm1226, %v1287
      %1376 = vst.msk [vmem:[#allocation2 + $0x41] sm:$0x1] %vm1226, %v1294
      %1377 = vst.msk [vmem:[#allocation2 + $0x51] sm:$0x1] %vm1226, %v1301
      %1378 = vst.msk [vmem:[#allocation2 + $0x61] sm:$0x1] %vm1226, %v1308
      %1379 = vst.msk [vmem:[#allocation2 + $0x71] sm:$0x1] %vm1226, %v1315
      %1380 = vst.msk [vmem:[#allocation2 + $0x81] sm:$0x1] %vm1226, %v1322
      %1381 = vst.msk [vmem:[#allocation2 + $0x91] sm:$0x1] %vm1226, %v1329
      %1382 = vst.msk [vmem:[#allocation2 + $0xa1] sm:$0x1] %vm1226, %v1336
      %1383 = vst.msk [vmem:[#allocation2 + $0xb1] sm:$0x1] %vm1226, %v1343
      %1384 = vst.msk [vmem:[#allocation2 + $0xc1] sm:$0x1] %vm1226, %v1350
      %1385 = vst.msk [vmem:[#allocation2 + $0xd1] sm:$0x1] %vm1226, %v1357
      %1386 = vst.msk [vmem:[#allocation2 + $0xe1] sm:$0x1] %vm1226, %v1364
      %1387 = vst.msk [vmem:[#allocation2 + $0xf1] sm:$0x1] %vm1226, %v1371
      %v1388 = vld [vmem:[#allocation3] sm:$0xff]
      %v1389 = vld [vmem:[#allocation3 + $0x8] sm:$0xf]
      %v1390 = vld [vmem:[#allocation3 + $0x10] sm:$0xff]
      %v1391 = vld [vmem:[#allocation3 + $0x18] sm:$0xf]
      %v1392 = vld [vmem:[#allocation3 + $0x20] sm:$0xff]
      %v1393 = vld [vmem:[#allocation3 + $0x28] sm:$0xf]
      %v1394 = vld [vmem:[#allocation3 + $0x30] sm:$0xff]
      %v1395 = vld [vmem:[#allocation3 + $0x38] sm:$0xf]
      %v1396 = vld [vmem:[#allocation3 + $0x40] sm:$0xff]
      %v1397 = vld [vmem:[#allocation3 + $0x48] sm:$0xf]
      %v1398 = vld [vmem:[#allocation3 + $0x50] sm:$0xff]
      %v1399 = vld [vmem:[#allocation3 + $0x58] sm:$0xf]
      %v1400 = vld [vmem:[#allocation3 + $0x60] sm:$0xff]
      %v1401 = vld [vmem:[#allocation3 + $0x68] sm:$0xf]
      %v1402 = vld [vmem:[#allocation3 + $0x70] sm:$0xff]
      %v1403 = vld [vmem:[#allocation3 + $0x78] sm:$0xf]
      %v1404 = vld [vmem:[#allocation3 + $0x80] sm:$0xff]
      %v1405 = vld [vmem:[#allocation3 + $0x88] sm:$0xf]
      %v1406 = vld [vmem:[#allocation3 + $0x90] sm:$0xff]
      %v1407 = vld [vmem:[#allocation3 + $0x98] sm:$0xf]
      %v1408 = vld [vmem:[#allocation3 + $0xa0] sm:$0xff]
      %v1409 = vld [vmem:[#allocation3 + $0xa8] sm:$0xf]
      %v1410 = vld [vmem:[#allocation3 + $0xb0] sm:$0xff]
      %v1411 = vld [vmem:[#allocation3 + $0xb8] sm:$0xf]
      %v1412 = vld [vmem:[#allocation3 + $0xc0] sm:$0xff]
      %v1413 = vld [vmem:[#allocation3 + $0xc8] sm:$0xf]
      %v1414 = vld [vmem:[#allocation3 + $0xd0] sm:$0xff]
      %v1415 = vld [vmem:[#allocation3 + $0xd8] sm:$0xf]
      %v1416 = vld [vmem:[#allocation3 + $0xe0] sm:$0xff]
      %v1417 = vld [vmem:[#allocation3 + $0xe8] sm:$0xf]
      %v1418 = vld [vmem:[#allocation3 + $0xf0] sm:$0xff]
      %v1419 = vld [vmem:[#allocation3 + $0xf8] sm:$0xf]
      %v1420 = vld [vmem:[#allocation3 + $0x1] sm:$0xff]
      %v1421 = vld [vmem:[#allocation3 + $0x9] sm:$0xf]
      %v1422 = vld [vmem:[#allocation3 + $0x11] sm:$0xff]
      %v1423 = vld [vmem:[#allocation3 + $0x19] sm:$0xf]
      %v1424 = vld [vmem:[#allocation3 + $0x21] sm:$0xff]
      %v1425 = vld [vmem:[#allocation3 + $0x29] sm:$0xf]
      %v1426 = vld [vmem:[#allocation3 + $0x31] sm:$0xff]
      %v1427 = vld [vmem:[#allocation3 + $0x39] sm:$0xf]
      %v1428 = vld [vmem:[#allocation3 + $0x41] sm:$0xff]
      %v1429 = vld [vmem:[#allocation3 + $0x49] sm:$0xf]
      %v1430 = vld [vmem:[#allocation3 + $0x51] sm:$0xff]
      %v1431 = vld [vmem:[#allocation3 + $0x59] sm:$0xf]
      %v1432 = vld [vmem:[#allocation3 + $0x61] sm:$0xff]
      %v1433 = vld [vmem:[#allocation3 + $0x69] sm:$0xf]
      %v1434 = vld [vmem:[#allocation3 + $0x71] sm:$0xff]
      %v1435 = vld [vmem:[#allocation3 + $0x79] sm:$0xf]
      %v1436 = vld [vmem:[#allocation3 + $0x81] sm:$0xff]
      %v1437 = vld [vmem:[#allocation3 + $0x89] sm:$0xf]
      %v1438 = vld [vmem:[#allocation3 + $0x91] sm:$0xff]
      %v1439 = vld [vmem:[#allocation3 + $0x99] sm:$0xf]
      %v1440 = vld [vmem:[#allocation3 + $0xa1] sm:$0xff]
      %v1441 = vld [vmem:[#allocation3 + $0xa9] sm:$0xf]
      %v1442 = vld [vmem:[#allocation3 + $0xb1] sm:$0xff]
      %v1443 = vld [vmem:[#allocation3 + $0xb9] sm:$0xf]
      %v1444 = vld [vmem:[#allocation3 + $0xc1] sm:$0xff]
      %v1445 = vld [vmem:[#allocation3 + $0xc9] sm:$0xf]
      %v1446 = vld [vmem:[#allocation3 + $0xd1] sm:$0xff]
      %v1447 = vld [vmem:[#allocation3 + $0xd9] sm:$0xf]
      %v1448 = vld [vmem:[#allocation3 + $0xe1] sm:$0xff]
      %v1449 = vld [vmem:[#allocation3 + $0xe9] sm:$0xf]
      %v1450 = vld [vmem:[#allocation3 + $0xf1] sm:$0xff]
      %v1451 = vld [vmem:[#allocation3 + $0xf9] sm:$0xf]
      %v1452 = vmax.f32 %v1388, %v1420
      %v1453 = vmax.f32 %v1389, %v1421
      %v1454 = vmax.f32 %v1390, %v1422
      %v1455 = vmax.f32 %v1391, %v1423
      %v1456 = vmax.f32 %v1392, %v1424
      %v1457 = vmax.f32 %v1393, %v1425
      %v1458 = vmax.f32 %v1394, %v1426
      %v1459 = vmax.f32 %v1395, %v1427
      %v1460 = vmax.f32 %v1396, %v1428
      %v1461 = vmax.f32 %v1397, %v1429
      %v1462 = vmax.f32 %v1398, %v1430
      %v1463 = vmax.f32 %v1399, %v1431
      %v1464 = vmax.f32 %v1400, %v1432
      %v1465 = vmax.f32 %v1401, %v1433
      %v1466 = vmax.f32 %v1402, %v1434
      %v1467 = vmax.f32 %v1403, %v1435
      %v1468 = vmax.f32 %v1404, %v1436
      %v1469 = vmax.f32 %v1405, %v1437
      %v1470 = vmax.f32 %v1406, %v1438
      %v1471 = vmax.f32 %v1407, %v1439
      %v1472 = vmax.f32 %v1408, %v1440
      %v1473 = vmax.f32 %v1409, %v1441
      %v1474 = vmax.f32 %v1410, %v1442
      %v1475 = vmax.f32 %v1411, %v1443
      %v1476 = vmax.f32 %v1412, %v1444
      %v1477 = vmax.f32 %v1413, %v1445
      %v1478 = vmax.f32 %v1414, %v1446
      %v1479 = vmax.f32 %v1415, %v1447
      %v1480 = vmax.f32 %v1416, %v1448
      %v1481 = vmax.f32 %v1417, %v1449
      %v1482 = vmax.f32 %v1418, %v1450
      %v1483 = vmax.f32 %v1419, %v1451
      %v1484 = vld [vmem:[#allocation3 + $0x2] sm:$0xff]
      %v1485 = vld [vmem:[#allocation3 + $0xa] sm:$0xf]
      %v1486 = vld [vmem:[#allocation3 + $0x12] sm:$0xff]
      %v1487 = vld [vmem:[#allocation3 + $0x1a] sm:$0xf]
      %v1488 = vld [vmem:[#allocation3 + $0x22] sm:$0xff]
      %v1489 = vld [vmem:[#allocation3 + $0x2a] sm:$0xf]
      %v1490 = vld [vmem:[#allocation3 + $0x32] sm:$0xff]
      %v1491 = vld [vmem:[#allocation3 + $0x3a] sm:$0xf]
      %v1492 = vld [vmem:[#allocation3 + $0x42] sm:$0xff]
      %v1493 = vld [vmem:[#allocation3 + $0x4a] sm:$0xf]
      %v1494 = vld [vmem:[#allocation3 + $0x52] sm:$0xff]
      %v1495 = vld [vmem:[#allocation3 + $0x5a] sm:$0xf]
      %v1496 = vld [vmem:[#allocation3 + $0x62] sm:$0xff]
      %v1497 = vld [vmem:[#allocation3 + $0x6a] sm:$0xf]
      %v1498 = vld [vmem:[#allocation3 + $0x72] sm:$0xff]
      %v1499 = vld [vmem:[#allocation3 + $0x7a] sm:$0xf]
      %v1500 = vld [vmem:[#allocation3 + $0x82] sm:$0xff]
      %v1501 = vld [vmem:[#allocation3 + $0x8a] sm:$0xf]
      %v1502 = vld [vmem:[#allocation3 + $0x92] sm:$0xff]
      %v1503 = vld [vmem:[#allocation3 + $0x9a] sm:$0xf]
      %v1504 = vld [vmem:[#allocation3 + $0xa2] sm:$0xff]
      %v1505 = vld [vmem:[#allocation3 + $0xaa] sm:$0xf]
      %v1506 = vld [vmem:[#allocation3 + $0xb2] sm:$0xff]
      %v1507 = vld [vmem:[#allocation3 + $0xba] sm:$0xf]
      %v1508 = vld [vmem:[#allocation3 + $0xc2] sm:$0xff]
      %v1509 = vld [vmem:[#allocation3 + $0xca] sm:$0xf]
      %v1510 = vld [vmem:[#allocation3 + $0xd2] sm:$0xff]
      %v1511 = vld [vmem:[#allocation3 + $0xda] sm:$0xf]
      %v1512 = vld [vmem:[#allocation3 + $0xe2] sm:$0xff]
      %v1513 = vld [vmem:[#allocation3 + $0xea] sm:$0xf]
      %v1514 = vld [vmem:[#allocation3 + $0xf2] sm:$0xff]
      %v1515 = vld [vmem:[#allocation3 + $0xfa] sm:$0xf]
      %v1516 = vmax.f32 %v1452, %v1484
      %v1517 = vmax.f32 %v1453, %v1485
      %v1518 = vmax.f32 %v1454, %v1486
      %v1519 = vmax.f32 %v1455, %v1487
      %v1520 = vmax.f32 %v1456, %v1488
      %v1521 = vmax.f32 %v1457, %v1489
      %v1522 = vmax.f32 %v1458, %v1490
      %v1523 = vmax.f32 %v1459, %v1491
      %v1524 = vmax.f32 %v1460, %v1492
      %v1525 = vmax.f32 %v1461, %v1493
      %v1526 = vmax.f32 %v1462, %v1494
      %v1527 = vmax.f32 %v1463, %v1495
      %v1528 = vmax.f32 %v1464, %v1496
      %v1529 = vmax.f32 %v1465, %v1497
      %v1530 = vmax.f32 %v1466, %v1498
      %v1531 = vmax.f32 %v1467, %v1499
      %v1532 = vmax.f32 %v1468, %v1500
      %v1533 = vmax.f32 %v1469, %v1501
      %v1534 = vmax.f32 %v1470, %v1502
      %v1535 = vmax.f32 %v1471, %v1503
      %v1536 = vmax.f32 %v1472, %v1504
      %v1537 = vmax.f32 %v1473, %v1505
      %v1538 = vmax.f32 %v1474, %v1506
      %v1539 = vmax.f32 %v1475, %v1507
      %v1540 = vmax.f32 %v1476, %v1508
      %v1541 = vmax.f32 %v1477, %v1509
      %v1542 = vmax.f32 %v1478, %v1510
      %v1543 = vmax.f32 %v1479, %v1511
      %v1544 = vmax.f32 %v1480, %v1512
      %v1545 = vmax.f32 %v1481, %v1513
      %v1546 = vmax.f32 %v1482, %v1514
      %v1547 = vmax.f32 %v1483, %v1515
      %v1548 = vld [vmem:[#allocation3 + $0x3] sm:$0xff]
      %v1549 = vld [vmem:[#allocation3 + $0xb] sm:$0xf]
      %v1550 = vld [vmem:[#allocation3 + $0x13] sm:$0xff]
      %v1551 = vld [vmem:[#allocation3 + $0x1b] sm:$0xf]
      %v1552 = vld [vmem:[#allocation3 + $0x23] sm:$0xff]
      %v1553 = vld [vmem:[#allocation3 + $0x2b] sm:$0xf]
      %v1554 = vld [vmem:[#allocation3 + $0x33] sm:$0xff]
      %v1555 = vld [vmem:[#allocation3 + $0x3b] sm:$0xf]
      %v1556 = vld [vmem:[#allocation3 + $0x43] sm:$0xff]
      %v1557 = vld [vmem:[#allocation3 + $0x4b] sm:$0xf]
      %v1558 = vld [vmem:[#allocation3 + $0x53] sm:$0xff]
      %v1559 = vld [vmem:[#allocation3 + $0x5b] sm:$0xf]
      %v1560 = vld [vmem:[#allocation3 + $0x63] sm:$0xff]
      %v1561 = vld [vmem:[#allocation3 + $0x6b] sm:$0xf]
      %v1562 = vld [vmem:[#allocation3 + $0x73] sm:$0xff]
      %v1563 = vld [vmem:[#allocation3 + $0x7b] sm:$0xf]
      %v1564 = vld [vmem:[#allocation3 + $0x83] sm:$0xff]
      %v1565 = vld [vmem:[#allocation3 + $0x8b] sm:$0xf]
      %v1566 = vld [vmem:[#allocation3 + $0x93] sm:$0xff]
      %v1567 = vld [vmem:[#allocation3 + $0x9b] sm:$0xf]
      %v1568 = vld [vmem:[#allocation3 + $0xa3] sm:$0xff]
      %v1569 = vld [vmem:[#allocation3 + $0xab] sm:$0xf]
      %v1570 = vld [vmem:[#allocation3 + $0xb3] sm:$0xff]
      %v1571 = vld [vmem:[#allocation3 + $0xbb] sm:$0xf]
      %v1572 = vld [vmem:[#allocation3 + $0xc3] sm:$0xff]
      %v1573 = vld [vmem:[#allocation3 + $0xcb] sm:$0xf]
      %v1574 = vld [vmem:[#allocation3 + $0xd3] sm:$0xff]
      %v1575 = vld [vmem:[#allocation3 + $0xdb] sm:$0xf]
      %v1576 = vld [vmem:[#allocation3 + $0xe3] sm:$0xff]
      %v1577 = vld [vmem:[#allocation3 + $0xeb] sm:$0xf]
      %v1578 = vld [vmem:[#allocation3 + $0xf3] sm:$0xff]
      %v1579 = vld [vmem:[#allocation3 + $0xfb] sm:$0xf]
      %v1580 = vmax.f32 %v1516, %v1548
      %v1581 = vmax.f32 %v1517, %v1549
      %v1582 = vmax.f32 %v1518, %v1550
      %v1583 = vmax.f32 %v1519, %v1551
      %v1584 = vmax.f32 %v1520, %v1552
      %v1585 = vmax.f32 %v1521, %v1553
      %v1586 = vmax.f32 %v1522, %v1554
      %v1587 = vmax.f32 %v1523, %v1555
      %v1588 = vmax.f32 %v1524, %v1556
      %v1589 = vmax.f32 %v1525, %v1557
      %v1590 = vmax.f32 %v1526, %v1558
      %v1591 = vmax.f32 %v1527, %v1559
      %v1592 = vmax.f32 %v1528, %v1560
      %v1593 = vmax.f32 %v1529, %v1561
      %v1594 = vmax.f32 %v1530, %v1562
      %v1595 = vmax.f32 %v1531, %v1563
      %v1596 = vmax.f32 %v1532, %v1564
      %v1597 = vmax.f32 %v1533, %v1565
      %v1598 = vmax.f32 %v1534, %v1566
      %v1599 = vmax.f32 %v1535, %v1567
      %v1600 = vmax.f32 %v1536, %v1568
      %v1601 = vmax.f32 %v1537, %v1569
      %v1602 = vmax.f32 %v1538, %v1570
      %v1603 = vmax.f32 %v1539, %v1571
      %v1604 = vmax.f32 %v1540, %v1572
      %v1605 = vmax.f32 %v1541, %v1573
      %v1606 = vmax.f32 %v1542, %v1574
      %v1607 = vmax.f32 %v1543, %v1575
      %v1608 = vmax.f32 %v1544, %v1576
      %v1609 = vmax.f32 %v1545, %v1577
      %v1610 = vmax.f32 %v1546, %v1578
      %v1611 = vmax.f32 %v1547, %v1579
      %v1612 = vld [vmem:[#allocation3 + $0x4] sm:$0xff]
      %v1613 = vld [vmem:[#allocation3 + $0xc] sm:$0xf]
      %v1614 = vld [vmem:[#allocation3 + $0x14] sm:$0xff]
      %v1615 = vld [vmem:[#allocation3 + $0x1c] sm:$0xf]
      %v1616 = vld [vmem:[#allocation3 + $0x24] sm:$0xff]
      %v1617 = vld [vmem:[#allocation3 + $0x2c] sm:$0xf]
      %v1618 = vld [vmem:[#allocation3 + $0x34] sm:$0xff]
      %v1619 = vld [vmem:[#allocation3 + $0x3c] sm:$0xf]
      %v1620 = vld [vmem:[#allocation3 + $0x44] sm:$0xff]
      %v1621 = vld [vmem:[#allocation3 + $0x4c] sm:$0xf]
      %v1622 = vld [vmem:[#allocation3 + $0x54] sm:$0xff]
      %v1623 = vld [vmem:[#allocation3 + $0x5c] sm:$0xf]
      %v1624 = vld [vmem:[#allocation3 + $0x64] sm:$0xff]
      %v1625 = vld [vmem:[#allocation3 + $0x6c] sm:$0xf]
      %v1626 = vld [vmem:[#allocation3 + $0x74] sm:$0xff]
      %v1627 = vld [vmem:[#allocation3 + $0x7c] sm:$0xf]
      %v1628 = vld [vmem:[#allocation3 + $0x84] sm:$0xff]
      %v1629 = vld [vmem:[#allocation3 + $0x8c] sm:$0xf]
      %v1630 = vld [vmem:[#allocation3 + $0x94] sm:$0xff]
      %v1631 = vld [vmem:[#allocation3 + $0x9c] sm:$0xf]
      %v1632 = vld [vmem:[#allocation3 + $0xa4] sm:$0xff]
      %v1633 = vld [vmem:[#allocation3 + $0xac] sm:$0xf]
      %v1634 = vld [vmem:[#allocation3 + $0xb4] sm:$0xff]
      %v1635 = vld [vmem:[#allocation3 + $0xbc] sm:$0xf]
      %v1636 = vld [vmem:[#allocation3 + $0xc4] sm:$0xff]
      %v1637 = vld [vmem:[#allocation3 + $0xcc] sm:$0xf]
      %v1638 = vld [vmem:[#allocation3 + $0xd4] sm:$0xff]
      %v1639 = vld [vmem:[#allocation3 + $0xdc] sm:$0xf]
      %v1640 = vld [vmem:[#allocation3 + $0xe4] sm:$0xff]
      %v1641 = vld [vmem:[#allocation3 + $0xec] sm:$0xf]
      %v1642 = vld [vmem:[#allocation3 + $0xf4] sm:$0xff]
      %v1643 = vld [vmem:[#allocation3 + $0xfc] sm:$0xf]
      %v1644 = vmax.f32 %v1580, %v1612
      %v1645 = vmax.f32 %v1581, %v1613
      %v1646 = vmax.f32 %v1582, %v1614
      %v1647 = vmax.f32 %v1583, %v1615
      %v1648 = vmax.f32 %v1584, %v1616
      %v1649 = vmax.f32 %v1585, %v1617
      %v1650 = vmax.f32 %v1586, %v1618
      %v1651 = vmax.f32 %v1587, %v1619
      %v1652 = vmax.f32 %v1588, %v1620
      %v1653 = vmax.f32 %v1589, %v1621
      %v1654 = vmax.f32 %v1590, %v1622
      %v1655 = vmax.f32 %v1591, %v1623
      %v1656 = vmax.f32 %v1592, %v1624
      %v1657 = vmax.f32 %v1593, %v1625
      %v1658 = vmax.f32 %v1594, %v1626
      %v1659 = vmax.f32 %v1595, %v1627
      %v1660 = vmax.f32 %v1596, %v1628
      %v1661 = vmax.f32 %v1597, %v1629
      %v1662 = vmax.f32 %v1598, %v1630
      %v1663 = vmax.f32 %v1599, %v1631
      %v1664 = vmax.f32 %v1600, %v1632
      %v1665 = vmax.f32 %v1601, %v1633
      %v1666 = vmax.f32 %v1602, %v1634
      %v1667 = vmax.f32 %v1603, %v1635
      %v1668 = vmax.f32 %v1604, %v1636
      %v1669 = vmax.f32 %v1605, %v1637
      %v1670 = vmax.f32 %v1606, %v1638
      %v1671 = vmax.f32 %v1607, %v1639
      %v1672 = vmax.f32 %v1608, %v1640
      %v1673 = vmax.f32 %v1609, %v1641
      %v1674 = vmax.f32 %v1610, %v1642
      %v1675 = vmax.f32 %v1611, %v1643
      %1676 = vst.msk [vmem:[#allocation2 + $0x2] sm:$0xff] %vm307, %v1644
      %1677 = vst.msk [vmem:[#allocation2 + $0xa] sm:$0xf] %vm1259, %v1645
      %1678 = vst.msk [vmem:[#allocation2 + $0x12] sm:$0xff] %vm307, %v1646
      %1679 = vst.msk [vmem:[#allocation2 + $0x1a] sm:$0xf] %vm1259, %v1647
      %1680 = vst.msk [vmem:[#allocation2 + $0x22] sm:$0xff] %vm307, %v1648
      %1681 = vst.msk [vmem:[#allocation2 + $0x2a] sm:$0xf] %vm1259, %v1649
      %1682 = vst.msk [vmem:[#allocation2 + $0x32] sm:$0xff] %vm307, %v1650
      %1683 = vst.msk [vmem:[#allocation2 + $0x3a] sm:$0xf] %vm1259, %v1651
      %1684 = vst.msk [vmem:[#allocation2 + $0x42] sm:$0xff] %vm307, %v1652
      %1685 = vst.msk [vmem:[#allocation2 + $0x4a] sm:$0xf] %vm1259, %v1653
      %1686 = vst.msk [vmem:[#allocation2 + $0x52] sm:$0xff] %vm307, %v1654
      %1687 = vst.msk [vmem:[#allocation2 + $0x5a] sm:$0xf] %vm1259, %v1655
      %1688 = vst.msk [vmem:[#allocation2 + $0x62] sm:$0xff] %vm307, %v1656
      %1689 = vst.msk [vmem:[#allocation2 + $0x6a] sm:$0xf] %vm1259, %v1657
      %1690 = vst.msk [vmem:[#allocation2 + $0x72] sm:$0xff] %vm307, %v1658
      %1691 = vst.msk [vmem:[#allocation2 + $0x7a] sm:$0xf] %vm1259, %v1659
      %1692 = vst.msk [vmem:[#allocation2 + $0x82] sm:$0xff] %vm307, %v1660
      %1693 = vst.msk [vmem:[#allocation2 + $0x8a] sm:$0xf] %vm1259, %v1661
      %1694 = vst.msk [vmem:[#allocation2 + $0x92] sm:$0xff] %vm307, %v1662
      %1695 = vst.msk [vmem:[#allocation2 + $0x9a] sm:$0xf] %vm1259, %v1663
      %1696 = vst.msk [vmem:[#allocation2 + $0xa2] sm:$0xff] %vm307, %v1664
      %1697 = vst.msk [vmem:[#allocation2 + $0xaa] sm:$0xf] %vm1259, %v1665
      %1698 = vst.msk [vmem:[#allocation2 + $0xb2] sm:$0xff] %vm307, %v1666
      %1699 = vst.msk [vmem:[#allocation2 + $0xba] sm:$0xf] %vm1259, %v1667
      %1700 = vst.msk [vmem:[#allocation2 + $0xc2] sm:$0xff] %vm307, %v1668
      %1701 = vst.msk [vmem:[#allocation2 + $0xca] sm:$0xf] %vm1259, %v1669
      %1702 = vst.msk [vmem:[#allocation2 + $0xd2] sm:$0xff] %vm307, %v1670
      %1703 = vst.msk [vmem:[#allocation2 + $0xda] sm:$0xf] %vm1259, %v1671
      %1704 = vst.msk [vmem:[#allocation2 + $0xe2] sm:$0xff] %vm307, %v1672
      %1705 = vst.msk [vmem:[#allocation2 + $0xea] sm:$0xf] %vm1259, %v1673
      %1706 = vst.msk [vmem:[#allocation2 + $0xf2] sm:$0xff] %vm307, %v1674
      %1707 = vst.msk [vmem:[#allocation2 + $0xfa] sm:$0xf] %vm1259, %v1675
      %v1708 = vld [vmem:[#allocation3 + $0xc] sm:$0xf]
      %v1709 = vld [vmem:[#allocation3 + $0x1c] sm:$0xf]
      %v1710 = vld [vmem:[#allocation3 + $0x2c] sm:$0xf]
      %v1711 = vld [vmem:[#allocation3 + $0x3c] sm:$0xf]
      %v1712 = vld [vmem:[#allocation3 + $0x4c] sm:$0xf]
      %v1713 = vld [vmem:[#allocation3 + $0x5c] sm:$0xf]
      %v1714 = vld [vmem:[#allocation3 + $0x6c] sm:$0xf]
      %v1715 = vld [vmem:[#allocation3 + $0x7c] sm:$0xf]
      %v1716 = vld [vmem:[#allocation3 + $0x8c] sm:$0xf]
      %v1717 = vld [vmem:[#allocation3 + $0x9c] sm:$0xf]
      %v1718 = vld [vmem:[#allocation3 + $0xac] sm:$0xf]
      %v1719 = vld [vmem:[#allocation3 + $0xbc] sm:$0xf]
      %v1720 = vld [vmem:[#allocation3 + $0xcc] sm:$0xf]
      %v1721 = vld [vmem:[#allocation3 + $0xdc] sm:$0xf]
      %v1722 = vld [vmem:[#allocation3 + $0xec] sm:$0xf]
      %v1723 = vld [vmem:[#allocation3 + $0xfc] sm:$0xf]
      %v1724 = vsel %vm1259, %v1708, -inf
      %v1725 = vrot.slane %v1724, 4
      %v1726 = vmax.f32 %v1724, %v1725
      %v1727 = vrot.slane %v1726, 2
      %v1728 = vmax.f32 %v1726, %v1727
      %v1729 = vrot.slane %v1728, 1
      %v1730 = vmax.f32 %v1728, %v1729
      %v1731 = vsel %vm1259, %v1709, -inf
      %v1732 = vrot.slane %v1731, 4
      %v1733 = vmax.f32 %v1731, %v1732
      %v1734 = vrot.slane %v1733, 2
      %v1735 = vmax.f32 %v1733, %v1734
      %v1736 = vrot.slane %v1735, 1
      %v1737 = vmax.f32 %v1735, %v1736
      %v1738 = vsel %vm1259, %v1710, -inf
      %v1739 = vrot.slane %v1738, 4
      %v1740 = vmax.f32 %v1738, %v1739
      %v1741 = vrot.slane %v1740, 2
      %v1742 = vmax.f32 %v1740, %v1741
      %v1743 = vrot.slane %v1742, 1
      %v1744 = vmax.f32 %v1742, %v1743
      %v1745 = vsel %vm1259, %v1711, -inf
      %v1746 = vrot.slane %v1745, 4
      %v1747 = vmax.f32 %v1745, %v1746
      %v1748 = vrot.slane %v1747, 2
      %v1749 = vmax.f32 %v1747, %v1748
      %v1750 = vrot.slane %v1749, 1
      %v1751 = vmax.f32 %v1749, %v1750
      %v1752 = vsel %vm1259, %v1712, -inf
      %v1753 = vrot.slane %v1752, 4
      %v1754 = vmax.f32 %v1752, %v1753
      %v1755 = vrot.slane %v1754, 2
      %v1756 = vmax.f32 %v1754, %v1755
      %v1757 = vrot.slane %v1756, 1
      %v1758 = vmax.f32 %v1756, %v1757
      %v1759 = vsel %vm1259, %v1713, -inf
      %v1760 = vrot.slane %v1759, 4
      %v1761 = vmax.f32 %v1759, %v1760
      %v1762 = vrot.slane %v1761, 2
      %v1763 = vmax.f32 %v1761, %v1762
      %v1764 = vrot.slane %v1763, 1
      %v1765 = vmax.f32 %v1763, %v1764
      %v1766 = vsel %vm1259, %v1714, -inf
      %v1767 = vrot.slane %v1766, 4
      %v1768 = vmax.f32 %v1766, %v1767
      %v1769 = vrot.slane %v1768, 2
      %v1770 = vmax.f32 %v1768, %v1769
      %v1771 = vrot.slane %v1770, 1
      %v1772 = vmax.f32 %v1770, %v1771
      %v1773 = vsel %vm1259, %v1715, -inf
      %v1774 = vrot.slane %v1773, 4
      %v1775 = vmax.f32 %v1773, %v1774
      %v1776 = vrot.slane %v1775, 2
      %v1777 = vmax.f32 %v1775, %v1776
      %v1778 = vrot.slane %v1777, 1
      %v1779 = vmax.f32 %v1777, %v1778
      %v1780 = vsel %vm1259, %v1716, -inf
      %v1781 = vrot.slane %v1780, 4
      %v1782 = vmax.f32 %v1780, %v1781
      %v1783 = vrot.slane %v1782, 2
      %v1784 = vmax.f32 %v1782, %v1783
      %v1785 = vrot.slane %v1784, 1
      %v1786 = vmax.f32 %v1784, %v1785
      %v1787 = vsel %vm1259, %v1717, -inf
      %v1788 = vrot.slane %v1787, 4
      %v1789 = vmax.f32 %v1787, %v1788
      %v1790 = vrot.slane %v1789, 2
      %v1791 = vmax.f32 %v1789, %v1790
      %v1792 = vrot.slane %v1791, 1
      %v1793 = vmax.f32 %v1791, %v1792
      %v1794 = vsel %vm1259, %v1718, -inf
      %v1795 = vrot.slane %v1794, 4
      %v1796 = vmax.f32 %v1794, %v1795
      %v1797 = vrot.slane %v1796, 2
      %v1798 = vmax.f32 %v1796, %v1797
      %v1799 = vrot.slane %v1798, 1
      %v1800 = vmax.f32 %v1798, %v1799
      %v1801 = vsel %vm1259, %v1719, -inf
      %v1802 = vrot.slane %v1801, 4
      %v1803 = vmax.f32 %v1801, %v1802
      %v1804 = vrot.slane %v1803, 2
      %v1805 = vmax.f32 %v1803, %v1804
      %v1806 = vrot.slane %v1805, 1
      %v1807 = vmax.f32 %v1805, %v1806
      %v1808 = vsel %vm1259, %v1720, -inf
      %v1809 = vrot.slane %v1808, 4
      %v1810 = vmax.f32 %v1808, %v1809
      %v1811 = vrot.slane %v1810, 2
      %v1812 = vmax.f32 %v1810, %v1811
      %v1813 = vrot.slane %v1812, 1
      %v1814 = vmax.f32 %v1812, %v1813
      %v1815 = vsel %vm1259, %v1721, -inf
      %v1816 = vrot.slane %v1815, 4
      %v1817 = vmax.f32 %v1815, %v1816
      %v1818 = vrot.slane %v1817, 2
      %v1819 = vmax.f32 %v1817, %v1818
      %v1820 = vrot.slane %v1819, 1
      %v1821 = vmax.f32 %v1819, %v1820
      %v1822 = vsel %vm1259, %v1722, -inf
      %v1823 = vrot.slane %v1822, 4
      %v1824 = vmax.f32 %v1822, %v1823
      %v1825 = vrot.slane %v1824, 2
      %v1826 = vmax.f32 %v1824, %v1825
      %v1827 = vrot.slane %v1826, 1
      %v1828 = vmax.f32 %v1826, %v1827
      %v1829 = vsel %vm1259, %v1723, -inf
      %v1830 = vrot.slane %v1829, 4
      %v1831 = vmax.f32 %v1829, %v1830
      %v1832 = vrot.slane %v1831, 2
      %v1833 = vmax.f32 %v1831, %v1832
      %v1834 = vrot.slane %v1833, 1
      %v1835 = vmax.f32 %v1833, %v1834
      %1836 = vst.msk [vmem:[#allocation2 + $0xe] sm:$0x1] %vm1226, %v1730
      %1837 = vst.msk [vmem:[#allocation2 + $0x1e] sm:$0x1] %vm1226, %v1737
      %1838 = vst.msk [vmem:[#allocation2 + $0x2e] sm:$0x1] %vm1226, %v1744
      %1839 = vst.msk [vmem:[#allocation2 + $0x3e] sm:$0x1] %vm1226, %v1751
      %1840 = vst.msk [vmem:[#allocation2 + $0x4e] sm:$0x1] %vm1226, %v1758
      %1841 = vst.msk [vmem:[#allocation2 + $0x5e] sm:$0x1] %vm1226, %v1765
      %1842 = vst.msk [vmem:[#allocation2 + $0x6e] sm:$0x1] %vm1226, %v1772
      %1843 = vst.msk [vmem:[#allocation2 + $0x7e] sm:$0x1] %vm1226, %v1779
      %1844 = vst.msk [vmem:[#allocation2 + $0x8e] sm:$0x1] %vm1226, %v1786
      %1845 = vst.msk [vmem:[#allocation2 + $0x9e] sm:$0x1] %vm1226, %v1793
      %1846 = vst.msk [vmem:[#allocation2 + $0xae] sm:$0x1] %vm1226, %v1800
      %1847 = vst.msk [vmem:[#allocation2 + $0xbe] sm:$0x1] %vm1226, %v1807
      %1848 = vst.msk [vmem:[#allocation2 + $0xce] sm:$0x1] %vm1226, %v1814
      %1849 = vst.msk [vmem:[#allocation2 + $0xde] sm:$0x1] %vm1226, %v1821
      %1850 = vst.msk [vmem:[#allocation2 + $0xee] sm:$0x1] %vm1226, %v1828
      %1851 = vst.msk [vmem:[#allocation2 + $0xfe] sm:$0x1] %vm1226, %v1835
      %v1852 = vld [vmem:[#allocation3 + $0xd] sm:$0x7]
      %v1853 = vld [vmem:[#allocation3 + $0x1d] sm:$0x7]
      %v1854 = vld [vmem:[#allocation3 + $0x2d] sm:$0x7]
      %v1855 = vld [vmem:[#allocation3 + $0x3d] sm:$0x7]
      %v1856 = vld [vmem:[#allocation3 + $0x4d] sm:$0x7]
      %v1857 = vld [vmem:[#allocation3 + $0x5d] sm:$0x7]
      %v1858 = vld [vmem:[#allocation3 + $0x6d] sm:$0x7]
      %v1859 = vld [vmem:[#allocation3 + $0x7d] sm:$0x7]
      %v1860 = vld [vmem:[#allocation3 + $0x8d] sm:$0x7]
      %v1861 = vld [vmem:[#allocation3 + $0x9d] sm:$0x7]
      %v1862 = vld [vmem:[#allocation3 + $0xad] sm:$0x7]
      %v1863 = vld [vmem:[#allocation3 + $0xbd] sm:$0x7]
      %v1864 = vld [vmem:[#allocation3 + $0xcd] sm:$0x7]
      %v1865 = vld [vmem:[#allocation3 + $0xdd] sm:$0x7]
      %v1866 = vld [vmem:[#allocation3 + $0xed] sm:$0x7]
      %v1867 = vld [vmem:[#allocation3 + $0xfd] sm:$0x7]
      %v1868 = vsel %vm1113, %v1852, -inf
      %v1869 = vrot.slane %v1868, 4
      %v1870 = vmax.f32 %v1868, %v1869
      %v1871 = vrot.slane %v1870, 2
      %v1872 = vmax.f32 %v1870, %v1871
      %v1873 = vrot.slane %v1872, 1
      %v1874 = vmax.f32 %v1872, %v1873
      %v1875 = vsel %vm1113, %v1853, -inf
      %v1876 = vrot.slane %v1875, 4
      %v1877 = vmax.f32 %v1875, %v1876
      %v1878 = vrot.slane %v1877, 2
      %v1879 = vmax.f32 %v1877, %v1878
      %v1880 = vrot.slane %v1879, 1
      %v1881 = vmax.f32 %v1879, %v1880
      %v1882 = vsel %vm1113, %v1854, -inf
      %v1883 = vrot.slane %v1882, 4
      %v1884 = vmax.f32 %v1882, %v1883
      %v1885 = vrot.slane %v1884, 2
      %v1886 = vmax.f32 %v1884, %v1885
      %v1887 = vrot.slane %v1886, 1
      %v1888 = vmax.f32 %v1886, %v1887
      %v1889 = vsel %vm1113, %v1855, -inf
      %v1890 = vrot.slane %v1889, 4
      %v1891 = vmax.f32 %v1889, %v1890
      %v1892 = vrot.slane %v1891, 2
      %v1893 = vmax.f32 %v1891, %v1892
      %v1894 = vrot.slane %v1893, 1
      %v1895 = vmax.f32 %v1893, %v1894
      %v1896 = vsel %vm1113, %v1856, -inf
      %v1897 = vrot.slane %v1896, 4
      %v1898 = vmax.f32 %v1896, %v1897
      %v1899 = vrot.slane %v1898, 2
      %v1900 = vmax.f32 %v1898, %v1899
      %v1901 = vrot.slane %v1900, 1
      %v1902 = vmax.f32 %v1900, %v1901
      %v1903 = vsel %vm1113, %v1857, -inf
      %v1904 = vrot.slane %v1903, 4
      %v1905 = vmax.f32 %v1903, %v1904
      %v1906 = vrot.slane %v1905, 2
      %v1907 = vmax.f32 %v1905, %v1906
      %v1908 = vrot.slane %v1907, 1
      %v1909 = vmax.f32 %v1907, %v1908
      %v1910 = vsel %vm1113, %v1858, -inf
      %v1911 = vrot.slane %v1910, 4
      %v1912 = vmax.f32 %v1910, %v1911
      %v1913 = vrot.slane %v1912, 2
      %v1914 = vmax.f32 %v1912, %v1913
      %v1915 = vrot.slane %v1914, 1
      %v1916 = vmax.f32 %v1914, %v1915
      %v1917 = vsel %vm1113, %v1859, -inf
      %v1918 = vrot.slane %v1917, 4
      %v1919 = vmax.f32 %v1917, %v1918
      %v1920 = vrot.slane %v1919, 2
      %v1921 = vmax.f32 %v1919, %v1920
      %v1922 = vrot.slane %v1921, 1
      %v1923 = vmax.f32 %v1921, %v1922
      %v1924 = vsel %vm1113, %v1860, -inf
      %v1925 = vrot.slane %v1924, 4
      %v1926 = vmax.f32 %v1924, %v1925
      %v1927 = vrot.slane %v1926, 2
      %v1928 = vmax.f32 %v1926, %v1927
      %v1929 = vrot.slane %v1928, 1
      %v1930 = vmax.f32 %v1928, %v1929
      %v1931 = vsel %vm1113, %v1861, -inf
      %v1932 = vrot.slane %v1931, 4
      %v1933 = vmax.f32 %v1931, %v1932
      %v1934 = vrot.slane %v1933, 2
      %v1935 = vmax.f32 %v1933, %v1934
      %v1936 = vrot.slane %v1935, 1
      %v1937 = vmax.f32 %v1935, %v1936
      %v1938 = vsel %vm1113, %v1862, -inf
      %v1939 = vrot.slane %v1938, 4
      %v1940 = vmax.f32 %v1938, %v1939
      %v1941 = vrot.slane %v1940, 2
      %v1942 = vmax.f32 %v1940, %v1941
      %v1943 = vrot.slane %v1942, 1
      %v1944 = vmax.f32 %v1942, %v1943
      %v1945 = vsel %vm1113, %v1863, -inf
      %v1946 = vrot.slane %v1945, 4
      %v1947 = vmax.f32 %v1945, %v1946
      %v1948 = vrot.slane %v1947, 2
      %v1949 = vmax.f32 %v1947, %v1948
      %v1950 = vrot.slane %v1949, 1
      %v1951 = vmax.f32 %v1949, %v1950
      %v1952 = vsel %vm1113, %v1864, -inf
      %v1953 = vrot.slane %v1952, 4
      %v1954 = vmax.f32 %v1952, %v1953
      %v1955 = vrot.slane %v1954, 2
      %v1956 = vmax.f32 %v1954, %v1955
      %v1957 = vrot.slane %v1956, 1
      %v1958 = vmax.f32 %v1956, %v1957
      %v1959 = vsel %vm1113, %v1865, -inf
      %v1960 = vrot.slane %v1959, 4
      %v1961 = vmax.f32 %v1959, %v1960
      %v1962 = vrot.slane %v1961, 2
      %v1963 = vmax.f32 %v1961, %v1962
      %v1964 = vrot.slane %v1963, 1
      %v1965 = vmax.f32 %v1963, %v1964
      %v1966 = vsel %vm1113, %v1866, -inf
      %v1967 = vrot.slane %v1966, 4
      %v1968 = vmax.f32 %v1966, %v1967
      %v1969 = vrot.slane %v1968, 2
      %v1970 = vmax.f32 %v1968, %v1969
      %v1971 = vrot.slane %v1970, 1
      %v1972 = vmax.f32 %v1970, %v1971
      %v1973 = vsel %vm1113, %v1867, -inf
      %v1974 = vrot.slane %v1973, 4
      %v1975 = vmax.f32 %v1973, %v1974
      %v1976 = vrot.slane %v1975, 2
      %v1977 = vmax.f32 %v1975, %v1976
      %v1978 = vrot.slane %v1977, 1
      %v1979 = vmax.f32 %v1977, %v1978
      %1980 = vst.msk [vmem:[#allocation2 + $0xf] sm:$0x1] %vm1226, %v1874
      %1981 = vst.msk [vmem:[#allocation2 + $0x1f] sm:$0x1] %vm1226, %v1881
      %1982 = vst.msk [vmem:[#allocation2 + $0x2f] sm:$0x1] %vm1226, %v1888
      %1983 = vst.msk [vmem:[#allocation2 + $0x3f] sm:$0x1] %vm1226, %v1895
      %1984 = vst.msk [vmem:[#allocation2 + $0x4f] sm:$0x1] %vm1226, %v1902
      %1985 = vst.msk [vmem:[#allocation2 + $0x5f] sm:$0x1] %vm1226, %v1909
      %1986 = vst.msk [vmem:[#allocation2 + $0x6f] sm:$0x1] %vm1226, %v1916
      %1987 = vst.msk [vmem:[#allocation2 + $0x7f] sm:$0x1] %vm1226, %v1923
      %1988 = vst.msk [vmem:[#allocation2 + $0x8f] sm:$0x1] %vm1226, %v1930
      %1989 = vst.msk [vmem:[#allocation2 + $0x9f] sm:$0x1] %vm1226, %v1937
      %1990 = vst.msk [vmem:[#allocation2 + $0xaf] sm:$0x1] %vm1226, %v1944
      %1991 = vst.msk [vmem:[#allocation2 + $0xbf] sm:$0x1] %vm1226, %v1951
      %1992 = vst.msk [vmem:[#allocation2 + $0xcf] sm:$0x1] %vm1226, %v1958
      %1993 = vst.msk [vmem:[#allocation2 + $0xdf] sm:$0x1] %vm1226, %v1965
      %1994 = vst.msk [vmem:[#allocation2 + $0xef] sm:$0x1] %vm1226, %v1972
      %1995 = vst.msk [vmem:[#allocation2 + $0xff] sm:$0x1] %vm1226, %v1979
      %v1996 = vld [vmem:[#allocation4] sm:$0xff]
      %v1997 = vld [vmem:[#allocation4 + $0x8] sm:$0xff]
      %v1998 = vld [vmem:[#allocation4 + $0x10] sm:$0xff]
      %v1999 = vld [vmem:[#allocation4 + $0x18] sm:$0xff]
      %v2000 = vld [vmem:[#allocation4 + $0x20] sm:$0xff]
      %v2001 = vld [vmem:[#allocation4 + $0x28] sm:$0xff]
      %v2002 = vld [vmem:[#allocation4 + $0x30] sm:$0xff]
      %v2003 = vld [vmem:[#allocation4 + $0x38] sm:$0xff]
      %v2004 = vld [vmem:[#allocation4 + $0x40] sm:$0xff]
      %v2005 = vld [vmem:[#allocation4 + $0x48] sm:$0xff]
      %v2006 = vld [vmem:[#allocation4 + $0x50] sm:$0xff]
      %v2007 = vld [vmem:[#allocation4 + $0x58] sm:$0xff]
      %v2008 = vld [vmem:[#allocation4 + $0x60] sm:$0xff]
      %v2009 = vld [vmem:[#allocation4 + $0x68] sm:$0xff]
      %v2010 = vld [vmem:[#allocation4 + $0x70] sm:$0xff]
      %v2011 = vld [vmem:[#allocation4 + $0x78] sm:$0xff]
      %v2012 = vld [vmem:[#allocation4 + $0x80] sm:$0xff]
      %v2013 = vld [vmem:[#allocation4 + $0x88] sm:$0xff]
      %v2014 = vld [vmem:[#allocation4 + $0x90] sm:$0xff]
      %v2015 = vld [vmem:[#allocation4 + $0x98] sm:$0xff]
      %v2016 = vld [vmem:[#allocation4 + $0xa0] sm:$0xff]
      %v2017 = vld [vmem:[#allocation4 + $0xa8] sm:$0xff]
      %v2018 = vld [vmem:[#allocation4 + $0xb0] sm:$0xff]
      %v2019 = vld [vmem:[#allocation4 + $0xb8] sm:$0xff]
      %v2020 = vld [vmem:[#allocation4 + $0xc0] sm:$0xff]
      %v2021 = vld [vmem:[#allocation4 + $0xc8] sm:$0xff]
      %v2022 = vld [vmem:[#allocation4 + $0xd0] sm:$0xff]
      %v2023 = vld [vmem:[#allocation4 + $0xd8] sm:$0xff]
      %v2024 = vld [vmem:[#allocation4 + $0xe0] sm:$0xff]
      %v2025 = vld [vmem:[#allocation4 + $0xe8] sm:$0xff]
      %v2026 = vld [vmem:[#allocation4 + $0xf0] sm:$0xff]
      %v2027 = vld [vmem:[#allocation4 + $0xf8] sm:$0xff]
      %v2028 = vld [vmem:[#allocation2] sm:$0xff]
      %v2029 = vld [vmem:[#allocation2 + $0x8] sm:$0xff]
      %v2030 = vld [vmem:[#allocation2 + $0x10] sm:$0xff]
      %v2031 = vld [vmem:[#allocation2 + $0x18] sm:$0xff]
      %v2032 = vld [vmem:[#allocation2 + $0x20] sm:$0xff]
      %v2033 = vld [vmem:[#allocation2 + $0x28] sm:$0xff]
      %v2034 = vld [vmem:[#allocation2 + $0x30] sm:$0xff]
      %v2035 = vld [vmem:[#allocation2 + $0x38] sm:$0xff]
      %v2036 = vld [vmem:[#allocation2 + $0x40] sm:$0xff]
      %v2037 = vld [vmem:[#allocation2 + $0x48] sm:$0xff]
      %v2038 = vld [vmem:[#allocation2 + $0x50] sm:$0xff]
      %v2039 = vld [vmem:[#allocation2 + $0x58] sm:$0xff]
      %v2040 = vld [vmem:[#allocation2 + $0x60] sm:$0xff]
      %v2041 = vld [vmem:[#allocation2 + $0x68] sm:$0xff]
      %v2042 = vld [vmem:[#allocation2 + $0x70] sm:$0xff]
      %v2043 = vld [vmem:[#allocation2 + $0x78] sm:$0xff]
      %v2044 = vld [vmem:[#allocation2 + $0x80] sm:$0xff]
      %v2045 = vld [vmem:[#allocation2 + $0x88] sm:$0xff]
      %v2046 = vld [vmem:[#allocation2 + $0x90] sm:$0xff]
      %v2047 = vld [vmem:[#allocation2 + $0x98] sm:$0xff]
      %v2048 = vld [vmem:[#allocation2 + $0xa0] sm:$0xff]
      %v2049 = vld [vmem:[#allocation2 + $0xa8] sm:$0xff]
      %v2050 = vld [vmem:[#allocation2 + $0xb0] sm:$0xff]
      %v2051 = vld [vmem:[#allocation2 + $0xb8] sm:$0xff]
      %v2052 = vld [vmem:[#allocation2 + $0xc0] sm:$0xff]
      %v2053 = vld [vmem:[#allocation2 + $0xc8] sm:$0xff]
      %v2054 = vld [vmem:[#allocation2 + $0xd0] sm:$0xff]
      %v2055 = vld [vmem:[#allocation2 + $0xd8] sm:$0xff]
      %v2056 = vld [vmem:[#allocation2 + $0xe0] sm:$0xff]
      %v2057 = vld [vmem:[#allocation2 + $0xe8] sm:$0xff]
      %v2058 = vld [vmem:[#allocation2 + $0xf0] sm:$0xff]
      %v2059 = vld [vmem:[#allocation2 + $0xf8] sm:$0xff]
      %s2060 = scalar_lea.vmem %s232, 2
      %v2061 = vld [vmem:[%s2060] sm:$0x3]
      %v2063 = vsel %vm307, %v2028, 0
      %v2066 = vsel %vm307, %v2029, 0
      %v2069 = vsel %vm307, %v2030, 0
      %v2072 = vsel %vm307, %v2031, 0
      %v2075 = vsel %vm307, %v2032, 0
      %v2078 = vsel %vm307, %v2033, 0
      %v2081 = vsel %vm307, %v2034, 0
      %v2084 = vsel %vm307, %v2035, 0
      %v2087 = vsel %vm307, %v2036, 0
      %v2090 = vsel %vm307, %v2037, 0
      %v2093 = vsel %vm307, %v2038, 0
      %v2096 = vsel %vm307, %v2039, 0
      %v2099 = vsel %vm307, %v2040, 0
      %v2102 = vsel %vm307, %v2041, 0
      %v2105 = vsel %vm307, %v2042, 0
      %v2108 = vsel %vm307, %v2043, 0
      %v2111 = vsel %vm307, %v2044, 0
      %v2114 = vsel %vm307, %v2045, 0
      %v2117 = vsel %vm307, %v2046, 0
      %v2120 = vsel %vm307, %v2047, 0
      %v2123 = vsel %vm307, %v2048, 0
      %v2126 = vsel %vm307, %v2049, 0
      %v2129 = vsel %vm307, %v2050, 0
      %v2132 = vsel %vm307, %v2051, 0
      %v2135 = vsel %vm307, %v2052, 0
      %v2138 = vsel %vm307, %v2053, 0
      %v2141 = vsel %vm307, %v2054, 0
      %v2144 = vsel %vm307, %v2055, 0
      %v2147 = vsel %vm307, %v2056, 0
      %v2150 = vsel %vm307, %v2057, 0
      %v2153 = vsel %vm307, %v2058, 0
      %v2156 = vsel %vm307, %v2059, 0
      %v2159 = vsel %vm469, %v2061, 0
      %2161 = vmatprep.subr.mxu0 0.0
      %2162 = vmatpush1.msra.mxu0 0.0
      %2163 = vmatprep.subr.mxu0 0.0
      %2164 = vmatpush1.msra.mxu0 0.0
      %2165 = vmatprep.subr.mxu0 0.0
      %2166 = vmatpush1.msra.mxu0 0.0
      %2167 = vmatprep.subr.mxu0 0.0
      %2168 = vmatpush1.msra.mxu0 0.0
      %2169 = vmatprep.subr.mxu0 0.0
      %2170 = vmatpush1.msra.mxu0 0.0
      %2171 = vmatprep.subr.mxu0 0.0
      %2172 = vmatpush1.msra.mxu0 0.0
      %2173 = vmatprep.subr.mxu0 0.0
      %2174 = vmatpush1.msra.mxu0 0.0
      %2175 = vmatprep.subr.mxu0 0.0
      %2176 = vmatpush1.msra.mxu0 0.0
      %2177 = vmatprep.subr.mxu0 0.0
      %2178 = vmatpush1.msra.mxu0 0.0
      %2179 = vmatprep.subr.mxu0 0.0
      %2180 = vmatpush1.msra.mxu0 0.0
      %2181 = vmatprep.subr.mxu0 0.0
      %2182 = vmatpush1.msra.mxu0 0.0
      %2183 = vmatprep.subr.mxu0 0.0
      %2184 = vmatpush1.msra.mxu0 0.0
      %2185 = vmatprep.subr.mxu0 0.0
      %2186 = vmatpush1.msra.mxu0 0.0
      %2187 = vmatprep.subr.mxu0 0.0
      %2188 = vmatpush1.msra.mxu0 0.0
      %2189 = vmatprep.subr.mxu0 0.0
      %2190 = vmatpush1.msra.mxu0 0.0
      %2191 = vmatprep.subr.mxu0 0.0
      %2192 = vmatpush1.msra.mxu0 %v2159
      %2193 = vmatprep.subr.mxu0 0.0
      %2194 = vmatpush2.msra.mxu0 0.0
      %2195 = vmatprep.subr.mxu0 0.0
      %2196 = vmatpush2.msra.mxu0 0.0
      %2197 = vmatprep.subr.mxu0 0.0
      %2198 = vmatpush2.msra.mxu0 0.0
      %2199 = vmatprep.subr.mxu0 0.0
      %2200 = vmatpush2.msra.mxu0 0.0
      %2201 = vmatprep.subr.mxu0 0.0
      %2202 = vmatpush2.msra.mxu0 0.0
      %2203 = vmatprep.subr.mxu0 0.0
      %2204 = vmatpush2.msra.mxu0 0.0
      %2205 = vmatprep.subr.mxu0 0.0
      %2206 = vmatpush2.msra.mxu0 0.0
      %2207 = vmatprep.subr.mxu0 0.0
      %2208 = vmatpush2.msra.mxu0 0.0
      %2209 = vmatprep.subr.mxu0 0.0
      %2210 = vmatpush2.msra.mxu0 0.0
      %2211 = vmatprep.subr.mxu0 0.0
      %2212 = vmatpush2.msra.mxu0 0.0
      %2213 = vmatprep.subr.mxu0 0.0
      %2214 = vmatpush2.msra.mxu0 0.0
      %2215 = vmatprep.subr.mxu0 0.0
      %2216 = vmatpush2.msra.mxu0 0.0
      %2217 = vmatprep.subr.mxu0 0.0
      %2218 = vmatpush2.msra.mxu0 0.0
      %2219 = vmatprep.subr.mxu0 0.0
      %2220 = vmatpush2.msra.mxu0 0.0
      %2221 = vmatprep.subr.mxu0 0.0
      %2222 = vmatpush2.msra.mxu0 0.0
      %2223 = vmatprep.subr.mxu0 0.0
      %2224 = vmatpush2.msra.mxu0 0.0
      %2225 = vmatprep.mubr.f32.mxu0 0.0
      %2226 = vmatmul.mubr.f32.gmra.mxu0 %v2063
      %v2227 = vpop.f32.mrf.mxu0
      %v2228 = vadd.f32 0.0, %v2227
      %v2229 = vpop.f32.mrf.mxu0
      %2230 = vmatprep.mubr.f32.mxu0 0.0
      %2231 = vmatmul.mubr.f32.gmra.mxu0 %v2066
      %v2232 = vpop.f32.mrf.mxu0
      %v2233 = vadd.f32 0.0, %v2232
      %v2234 = vpop.f32.mrf.mxu0
      %2235 = vmatprep.mubr.f32.mxu0 0.0
      %2236 = vmatmul.mubr.f32.gmra.mxu0 %v2069
      %v2237 = vpop.f32.mrf.mxu0
      %v2238 = vadd.f32 0.0, %v2237
      %v2239 = vpop.f32.mrf.mxu0
      %2240 = vmatprep.mubr.f32.mxu0 0.0
      %2241 = vmatmul.mubr.f32.gmra.mxu0 %v2072
      %v2242 = vpop.f32.mrf.mxu0
      %v2243 = vadd.f32 0.0, %v2242
      %v2244 = vpop.f32.mrf.mxu0
      %2245 = vmatprep.mubr.f32.mxu0 0.0
      %2246 = vmatmul.mubr.f32.gmra.mxu0 %v2075
      %v2247 = vpop.f32.mrf.mxu0
      %v2248 = vadd.f32 0.0, %v2247
      %v2249 = vpop.f32.mrf.mxu0
      %2250 = vmatprep.mubr.f32.mxu0 0.0
      %2251 = vmatmul.mubr.f32.gmra.mxu0 %v2078
      %v2252 = vpop.f32.mrf.mxu0
      %v2253 = vadd.f32 0.0, %v2252
      %v2254 = vpop.f32.mrf.mxu0
      %2255 = vmatprep.mubr.f32.mxu0 0.0
      %2256 = vmatmul.mubr.f32.gmra.mxu0 %v2081
      %v2257 = vpop.f32.mrf.mxu0
      %v2258 = vadd.f32 0.0, %v2257
      %v2259 = vpop.f32.mrf.mxu0
      %2260 = vmatprep.mubr.f32.mxu0 0.0
      %2261 = vmatmul.mubr.f32.gmra.mxu0 %v2084
      %v2262 = vpop.f32.mrf.mxu0
      %v2263 = vadd.f32 0.0, %v2262
      %v2264 = vpop.f32.mrf.mxu0
      %2265 = vmatprep.mubr.f32.mxu0 0.0
      %2266 = vmatmul.mubr.f32.gmra.mxu0 %v2087
      %v2267 = vpop.f32.mrf.mxu0
      %v2268 = vadd.f32 0.0, %v2267
      %v2269 = vpop.f32.mrf.mxu0
      %2270 = vmatprep.mubr.f32.mxu0 0.0
      %2271 = vmatmul.mubr.f32.gmra.mxu0 %v2090
      %v2272 = vpop.f32.mrf.mxu0
      %v2273 = vadd.f32 0.0, %v2272
      %v2274 = vpop.f32.mrf.mxu0
      %2275 = vmatprep.mubr.f32.mxu0 0.0
      %2276 = vmatmul.mubr.f32.gmra.mxu0 %v2093
      %v2277 = vpop.f32.mrf.mxu0
      %v2278 = vadd.f32 0.0, %v2277
      %v2279 = vpop.f32.mrf.mxu0
      %2280 = vmatprep.mubr.f32.mxu0 0.0
      %2281 = vmatmul.mubr.f32.gmra.mxu0 %v2096
      %v2282 = vpop.f32.mrf.mxu0
      %v2283 = vadd.f32 0.0, %v2282
      %v2284 = vpop.f32.mrf.mxu0
      %2285 = vmatprep.mubr.f32.mxu0 0.0
      %2286 = vmatmul.mubr.f32.gmra.mxu0 %v2099
      %v2287 = vpop.f32.mrf.mxu0
      %v2288 = vadd.f32 0.0, %v2287
      %v2289 = vpop.f32.mrf.mxu0
      %2290 = vmatprep.mubr.f32.mxu0 0.0
      %2291 = vmatmul.mubr.f32.gmra.mxu0 %v2102
      %v2292 = vpop.f32.mrf.mxu0
      %v2293 = vadd.f32 0.0, %v2292
      %v2294 = vpop.f32.mrf.mxu0
      %2295 = vmatprep.mubr.f32.mxu0 0.0
      %2296 = vmatmul.mubr.f32.gmra.mxu0 %v2105
      %v2297 = vpop.f32.mrf.mxu0
      %v2298 = vadd.f32 0.0, %v2297
      %v2299 = vpop.f32.mrf.mxu0
      %2300 = vmatprep.mubr.f32.mxu0 0.0
      %2301 = vmatmul.mubr.f32.gmra.mxu0 %v2108
      %v2302 = vpop.f32.mrf.mxu0
      %v2303 = vadd.f32 0.0, %v2302
      %v2304 = vpop.f32.mrf.mxu0
      %2305 = vmatprep.mubr.f32.mxu0 0.0
      %2306 = vmatmul.mubr.f32.gmra.mxu0 %v2111
      %v2307 = vpop.f32.mrf.mxu0
      %v2308 = vadd.f32 0.0, %v2307
      %v2309 = vpop.f32.mrf.mxu0
      %2310 = vmatprep.mubr.f32.mxu0 0.0
      %2311 = vmatmul.mubr.f32.gmra.mxu0 %v2114
      %v2312 = vpop.f32.mrf.mxu0
      %v2313 = vadd.f32 0.0, %v2312
      %v2314 = vpop.f32.mrf.mxu0
      %2315 = vmatprep.mubr.f32.mxu0 0.0
      %2316 = vmatmul.mubr.f32.gmra.mxu0 %v2117
      %v2317 = vpop.f32.mrf.mxu0
      %v2318 = vadd.f32 0.0, %v2317
      %v2319 = vpop.f32.mrf.mxu0
      %2320 = vmatprep.mubr.f32.mxu0 0.0
      %2321 = vmatmul.mubr.f32.gmra.mxu0 %v2120
      %v2322 = vpop.f32.mrf.mxu0
      %v2323 = vadd.f32 0.0, %v2322
      %v2324 = vpop.f32.mrf.mxu0
      %2325 = vmatprep.mubr.f32.mxu0 0.0
      %2326 = vmatmul.mubr.f32.gmra.mxu0 %v2123
      %v2327 = vpop.f32.mrf.mxu0
      %v2328 = vadd.f32 0.0, %v2327
      %v2329 = vpop.f32.mrf.mxu0
      %2330 = vmatprep.mubr.f32.mxu0 0.0
      %2331 = vmatmul.mubr.f32.gmra.mxu0 %v2126
      %v2332 = vpop.f32.mrf.mxu0
      %v2333 = vadd.f32 0.0, %v2332
      %v2334 = vpop.f32.mrf.mxu0
      %2335 = vmatprep.mubr.f32.mxu0 0.0
      %2336 = vmatmul.mubr.f32.gmra.mxu0 %v2129
      %v2337 = vpop.f32.mrf.mxu0
      %v2338 = vadd.f32 0.0, %v2337
      %v2339 = vpop.f32.mrf.mxu0
      %2340 = vmatprep.mubr.f32.mxu0 0.0
      %2341 = vmatmul.mubr.f32.gmra.mxu0 %v2132
      %v2342 = vpop.f32.mrf.mxu0
      %v2343 = vadd.f32 0.0, %v2342
      %v2344 = vpop.f32.mrf.mxu0
      %2345 = vmatprep.mubr.f32.mxu0 0.0
      %2346 = vmatmul.mubr.f32.gmra.mxu0 %v2135
      %v2347 = vpop.f32.mrf.mxu0
      %v2348 = vadd.f32 0.0, %v2347
      %v2349 = vpop.f32.mrf.mxu0
      %2350 = vmatprep.mubr.f32.mxu0 0.0
      %2351 = vmatmul.mubr.f32.gmra.mxu0 %v2138
      %v2352 = vpop.f32.mrf.mxu0
      %v2353 = vadd.f32 0.0, %v2352
      %v2354 = vpop.f32.mrf.mxu0
      %2355 = vmatprep.mubr.f32.mxu0 0.0
      %2356 = vmatmul.mubr.f32.gmra.mxu0 %v2141
      %v2357 = vpop.f32.mrf.mxu0
      %v2358 = vadd.f32 0.0, %v2357
      %v2359 = vpop.f32.mrf.mxu0
      %2360 = vmatprep.mubr.f32.mxu0 0.0
      %2361 = vmatmul.mubr.f32.gmra.mxu0 %v2144
      %v2362 = vpop.f32.mrf.mxu0
      %v2363 = vadd.f32 0.0, %v2362
      %v2364 = vpop.f32.mrf.mxu0
      %2365 = vmatprep.mubr.f32.mxu0 0.0
      %2366 = vmatmul.mubr.f32.gmra.mxu0 %v2147
      %v2367 = vpop.f32.mrf.mxu0
      %v2368 = vadd.f32 0.0, %v2367
      %v2369 = vpop.f32.mrf.mxu0
      %2370 = vmatprep.mubr.f32.mxu0 0.0
      %2371 = vmatmul.mubr.f32.gmra.mxu0 %v2150
      %v2372 = vpop.f32.mrf.mxu0
      %v2373 = vadd.f32 0.0, %v2372
      %v2374 = vpop.f32.mrf.mxu0
      %2375 = vmatprep.mubr.f32.mxu0 0.0
      %2376 = vmatmul.mubr.f32.gmra.mxu0 %v2153
      %v2377 = vpop.f32.mrf.mxu0
      %v2378 = vadd.f32 0.0, %v2377
      %v2379 = vpop.f32.mrf.mxu0
      %2380 = vmatprep.mubr.f32.mxu0 0.0
      %2381 = vmatmul.mubr.f32.gmra.mxu0 %v2156
      %v2382 = vpop.f32.mrf.mxu0
      %v2383 = vadd.f32 0.0, %v2382
      %v2384 = vpop.f32.mrf.mxu0
      %2385 = vdwg.mxu0
      %v2386 = vadd.f32 %v1996, %v2228
      %v2387 = vadd.f32 %v1997, %v2233
      %v2388 = vadd.f32 %v1998, %v2238
      %v2389 = vadd.f32 %v1999, %v2243
      %v2390 = vadd.f32 %v2000, %v2248
      %v2391 = vadd.f32 %v2001, %v2253
      %v2392 = vadd.f32 %v2002, %v2258
      %v2393 = vadd.f32 %v2003, %v2263
      %v2394 = vadd.f32 %v2004, %v2268
      %v2395 = vadd.f32 %v2005, %v2273
      %v2396 = vadd.f32 %v2006, %v2278
      %v2397 = vadd.f32 %v2007, %v2283
      %v2398 = vadd.f32 %v2008, %v2288
      %v2399 = vadd.f32 %v2009, %v2293
      %v2400 = vadd.f32 %v2010, %v2298
      %v2401 = vadd.f32 %v2011, %v2303
      %v2402 = vadd.f32 %v2012, %v2308
      %v2403 = vadd.f32 %v2013, %v2313
      %v2404 = vadd.f32 %v2014, %v2318
      %v2405 = vadd.f32 %v2015, %v2323
      %v2406 = vadd.f32 %v2016, %v2328
      %v2407 = vadd.f32 %v2017, %v2333
      %v2408 = vadd.f32 %v2018, %v2338
      %v2409 = vadd.f32 %v2019, %v2343
      %v2410 = vadd.f32 %v2020, %v2348
      %v2411 = vadd.f32 %v2021, %v2353
      %v2412 = vadd.f32 %v2022, %v2358
      %v2413 = vadd.f32 %v2023, %v2363
      %v2414 = vadd.f32 %v2024, %v2368
      %v2415 = vadd.f32 %v2025, %v2373
      %v2416 = vadd.f32 %v2026, %v2378
      %v2417 = vadd.f32 %v2027, %v2383
      %2418 = vst.msk [vmem:[#allocation4] sm:$0xff] %vm730, %v2386
      %2419 = vst.msk [vmem:[#allocation4 + $0x8] sm:$0xff] %vm730, %v2387
      %2420 = vst.msk [vmem:[#allocation4 + $0x10] sm:$0xff] %vm730, %v2388
      %2421 = vst.msk [vmem:[#allocation4 + $0x18] sm:$0xff] %vm730, %v2389
      %2422 = vst.msk [vmem:[#allocation4 + $0x20] sm:$0xff] %vm730, %v2390
      %2423 = vst.msk [vmem:[#allocation4 + $0x28] sm:$0xff] %vm730, %v2391
      %2424 = vst.msk [vmem:[#allocation4 + $0x30] sm:$0xff] %vm730, %v2392
      %2425 = vst.msk [vmem:[#allocation4 + $0x38] sm:$0xff] %vm730, %v2393
      %2426 = vst.msk [vmem:[#allocation4 + $0x40] sm:$0xff] %vm730, %v2394
      %2427 = vst.msk [vmem:[#allocation4 + $0x48] sm:$0xff] %vm730, %v2395
      %2428 = vst.msk [vmem:[#allocation4 + $0x50] sm:$0xff] %vm730, %v2396
      %2429 = vst.msk [vmem:[#allocation4 + $0x58] sm:$0xff] %vm730, %v2397
      %2430 = vst.msk [vmem:[#allocation4 + $0x60] sm:$0xff] %vm730, %v2398
      %2431 = vst.msk [vmem:[#allocation4 + $0x68] sm:$0xff] %vm730, %v2399
      %2432 = vst.msk [vmem:[#allocation4 + $0x70] sm:$0xff] %vm730, %v2400
      %2433 = vst.msk [vmem:[#allocation4 + $0x78] sm:$0xff] %vm730, %v2401
      %2434 = vst.msk [vmem:[#allocation4 + $0x80] sm:$0xff] %vm730, %v2402
      %2435 = vst.msk [vmem:[#allocation4 + $0x88] sm:$0xff] %vm730, %v2403
      %2436 = vst.msk [vmem:[#allocation4 + $0x90] sm:$0xff] %vm730, %v2404
      %2437 = vst.msk [vmem:[#allocation4 + $0x98] sm:$0xff] %vm730, %v2405
      %2438 = vst.msk [vmem:[#allocation4 + $0xa0] sm:$0xff] %vm730, %v2406
      %2439 = vst.msk [vmem:[#allocation4 + $0xa8] sm:$0xff] %vm730, %v2407
      %2440 = vst.msk [vmem:[#allocation4 + $0xb0] sm:$0xff] %vm730, %v2408
      %2441 = vst.msk [vmem:[#allocation4 + $0xb8] sm:$0xff] %vm730, %v2409
      %2442 = vst.msk [vmem:[#allocation4 + $0xc0] sm:$0xff] %vm730, %v2410
      %2443 = vst.msk [vmem:[#allocation4 + $0xc8] sm:$0xff] %vm730, %v2411
      %2444 = vst.msk [vmem:[#allocation4 + $0xd0] sm:$0xff] %vm730, %v2412
      %2445 = vst.msk [vmem:[#allocation4 + $0xd8] sm:$0xff] %vm730, %v2413
      %2446 = vst.msk [vmem:[#allocation4 + $0xe0] sm:$0xff] %vm730, %v2414
      %2447 = vst.msk [vmem:[#allocation4 + $0xe8] sm:$0xff] %vm730, %v2415
      %2448 = vst.msk [vmem:[#allocation4 + $0xf0] sm:$0xff] %vm730, %v2416
      %2449 = vst.msk [vmem:[#allocation4 + $0xf8] sm:$0xff] %vm730, %v2417
      %v2450 = vld [vmem:[#allocation2] sm:$0xff]
      %v2451 = vld [vmem:[#allocation2 + $0x8] sm:$0xff]
      %v2452 = vld [vmem:[#allocation2 + $0x10] sm:$0xff]
      %v2453 = vld [vmem:[#allocation2 + $0x18] sm:$0xff]
      %v2454 = vld [vmem:[#allocation2 + $0x20] sm:$0xff]
      %v2455 = vld [vmem:[#allocation2 + $0x28] sm:$0xff]
      %v2456 = vsel %vm307, %v2450, -inf
      %v2457 = vsel %vm307, %v2452, -inf
      %v2458 = vsel %vm307, %v2454, -inf
      %v2459 = vmax.f32 %v2456, %v2458
      %v2460 = vmax.f32 %v2459, %v2457
      %v2461 = vsel %vm307, %v2451, -inf
      %v2462 = vsel %vm307, %v2453, -inf
      %v2463 = vsel %vm307, %v2455, -inf
      %v2464 = vmax.f32 %v2461, %v2463
      %v2465 = vmax.f32 %v2464, %v2462
      %2466 = vst.msk [vmem:[#allocation3] sm:$0xff] %vm307, %v2460
      %2467 = vst.msk [vmem:[#allocation3 + $0x8] sm:$0xff] %vm307, %v2465
      %v2468 = vld [vmem:[#allocation2] sm:$0xff]
      %v2469 = vld [vmem:[#allocation2 + $0x8] sm:$0xff]
      %v2470 = vld [vmem:[#allocation2 + $0x10] sm:$0xff]
      %v2471 = vld [vmem:[#allocation2 + $0x18] sm:$0xff]
      %v2472 = vld [vmem:[#allocation2 + $0x20] sm:$0xff]
      %v2473 = vld [vmem:[#allocation2 + $0x28] sm:$0xff]
      %v2474 = vld [vmem:[#allocation2 + $0x30] sm:$0xff]
      %v2475 = vld [vmem:[#allocation2 + $0x38] sm:$0xff]
      %v2476 = vsel %vm307, %v2468, -inf
      %v2477 = vsel %vm307, %v2470, -inf
      %v2478 = vsel %vm307, %v2472, -inf
      %v2479 = vmax.f32 %v2476, %v2478
      %v2480 = vsel %vm307, %v2474, -inf
      %v2481 = vmax.f32 %v2477, %v2480
      %v2482 = vmax.f32 %v2479, %v2481
      %v2483 = vsel %vm307, %v2469, -inf
      %v2484 = vsel %vm307, %v2471, -inf
      %v2485 = vsel %vm307, %v2473, -inf
      %v2486 = vmax.f32 %v2483, %v2485
      %v2487 = vsel %vm307, %v2475, -inf
      %v2488 = vmax.f32 %v2484, %v2487
      %v2489 = vmax.f32 %v2486, %v2488
      %2490 = vst.msk [vmem:[%s803] sm:$0xff] %vm307, %v2482
      %2491 = vst.msk [vmem:[%s803 + $0x8] sm:$0xff] %vm307, %v2489
      %v2492 = vld [vmem:[#allocation2] sm:$0xff]
      %v2493 = vld [vmem:[#allocation2 + $0x8] sm:$0xff]
      %v2494 = vld [vmem:[#allocation2 + $0x10] sm:$0xff]
      %v2495 = vld [vmem:[#allocation2 + $0x18] sm:$0xff]
      %v2496 = vld [vmem:[#allocation2 + $0x20] sm:$0xff]
      %v2497 = vld [vmem:[#allocation2 + $0x28] sm:$0xff]
      %v2498 = vld [vmem:[#allocation2 + $0x30] sm:$0xff]
      %v2499 = vld [vmem:[#allocation2 + $0x38] sm:$0xff]
      %v2500 = vld [vmem:[#allocation2 + $0x40] sm:$0xff]
      %v2501 = vld [vmem:[#allocation2 + $0x48] sm:$0xff]
      %v2502 = vld [vmem:[#allocation2 + $0x50] sm:$0xff]
      %v2503 = vld [vmem:[#allocation2 + $0x58] sm:$0xff]
      %v2504 = vld [vmem:[#allocation2 + $0x60] sm:$0xff]
      %v2505 = vld [vmem:[#allocation2 + $0x68] sm:$0xff]
      %v2506 = vld [vmem:[#allocation2 + $0x70] sm:$0xff]
      %v2507 = vld [vmem:[#allocation2 + $0x78] sm:$0xff]
      %v2508 = vld [vmem:[#allocation2 + $0x80] sm:$0xff]
      %v2509 = vld [vmem:[#allocation2 + $0x88] sm:$0xff]
      %v2510 = vld [vmem:[#allocation2 + $0x90] sm:$0xff]
      %v2511 = vld [vmem:[#allocation2 + $0x98] sm:$0xff]
      %v2512 = vld [vmem:[#allocation2 + $0xa0] sm:$0xff]
      %v2513 = vld [vmem:[#allocation2 + $0xa8] sm:$0xff]
      %v2514 = vld [vmem:[#allocation2 + $0xb0] sm:$0xff]
      %v2515 = vld [vmem:[#allocation2 + $0xb8] sm:$0xff]
      %v2516 = vld [vmem:[%s830] sm:$0xff]
      %v2517 = vld [vmem:[%s830 + $0x8] sm:$0xff]
      %v2518 = vld [vmem:[%s830 + $0x10] sm:$0xff]
      %v2519 = vld [vmem:[%s830 + $0x18] sm:$0xff]
      %v2520 = vld [vmem:[%s830 + $0x20] sm:$0xff]
      %v2521 = vld [vmem:[%s830 + $0x28] sm:$0xff]
      %v2522 = vld [vmem:[%s830 + $0x30] sm:$0xff]
      %v2523 = vld [vmem:[%s830 + $0x38] sm:$0xff]
      %v2524 = vld [vmem:[%s830 + $0x40] sm:$0xff]
      %v2525 = vld [vmem:[%s830 + $0x48] sm:$0xff]
      %v2526 = vld [vmem:[%s830 + $0x50] sm:$0xff]
      %v2527 = vld [vmem:[%s830 + $0x58] sm:$0xff]
      %v2528 = vld [vmem:[%s830 + $0x60] sm:$0xff]
      %v2529 = vld [vmem:[%s830 + $0x68] sm:$0xff]
      %v2530 = vld [vmem:[%s830 + $0x70] sm:$0xff]
      %v2531 = vld [vmem:[%s830 + $0x78] sm:$0xff]
      %v2532 = vld [vmem:[%s830 + $0x80] sm:$0xff]
      %v2533 = vld [vmem:[%s830 + $0x88] sm:$0xff]
      %v2534 = vld [vmem:[%s830 + $0x90] sm:$0xff]
      %v2535 = vld [vmem:[%s830 + $0x98] sm:$0xff]
      %v2536 = vld [vmem:[%s830 + $0xa0] sm:$0xff]
      %v2537 = vld [vmem:[%s830 + $0xa8] sm:$0xff]
      %v2538 = vld [vmem:[%s830 + $0xb0] sm:$0xff]
      %v2539 = vld [vmem:[%s830 + $0xb8] sm:$0xff]
      %v2540 = vmax.f32 %v2492, %v2516
      %v2541 = vmax.f32 %v2493, %v2517
      %v2542 = vmax.f32 %v2494, %v2518
      %v2543 = vmax.f32 %v2495, %v2519
      %v2544 = vmax.f32 %v2496, %v2520
      %v2545 = vmax.f32 %v2497, %v2521
      %v2546 = vmax.f32 %v2498, %v2522
      %v2547 = vmax.f32 %v2499, %v2523
      %v2548 = vmax.f32 %v2500, %v2524
      %v2549 = vmax.f32 %v2501, %v2525
      %v2550 = vmax.f32 %v2502, %v2526
      %v2551 = vmax.f32 %v2503, %v2527
      %v2552 = vmax.f32 %v2504, %v2528
      %v2553 = vmax.f32 %v2505, %v2529
      %v2554 = vmax.f32 %v2506, %v2530
      %v2555 = vmax.f32 %v2507, %v2531
      %v2556 = vmax.f32 %v2508, %v2532
      %v2557 = vmax.f32 %v2509, %v2533
      %v2558 = vmax.f32 %v2510, %v2534
      %v2559 = vmax.f32 %v2511, %v2535
      %v2560 = vmax.f32 %v2512, %v2536
      %v2561 = vmax.f32 %v2513, %v2537
      %v2562 = vmax.f32 %v2514, %v2538
      %v2563 = vmax.f32 %v2515, %v2539
      %v2564 = vld [vmem:[%s879] sm:$0xff]
      %v2565 = vld [vmem:[%s879 + $0x8] sm:$0xff]
      %v2566 = vld [vmem:[%s879 + $0x10] sm:$0xff]
      %v2567 = vld [vmem:[%s879 + $0x18] sm:$0xff]
      %v2568 = vld [vmem:[%s879 + $0x20] sm:$0xff]
      %v2569 = vld [vmem:[%s879 + $0x28] sm:$0xff]
      %v2570 = vld [vmem:[%s879 + $0x30] sm:$0xff]
      %v2571 = vld [vmem:[%s879 + $0x38] sm:$0xff]
      %v2572 = vld [vmem:[%s879 + $0x40] sm:$0xff]
      %v2573 = vld [vmem:[%s879 + $0x48] sm:$0xff]
      %v2574 = vld [vmem:[%s879 + $0x50] sm:$0xff]
      %v2575 = vld [vmem:[%s879 + $0x58] sm:$0xff]
      %v2576 = vld [vmem:[%s879 + $0x60] sm:$0xff]
      %v2577 = vld [vmem:[%s879 + $0x68] sm:$0xff]
      %v2578 = vld [vmem:[%s879 + $0x70] sm:$0xff]
      %v2579 = vld [vmem:[%s879 + $0x78] sm:$0xff]
      %v2580 = vld [vmem:[%s879 + $0x80] sm:$0xff]
      %v2581 = vld [vmem:[%s879 + $0x88] sm:$0xff]
      %v2582 = vld [vmem:[%s879 + $0x90] sm:$0xff]
      %v2583 = vld [vmem:[%s879 + $0x98] sm:$0xff]
      %v2584 = vld [vmem:[%s879 + $0xa0] sm:$0xff]
      %v2585 = vld [vmem:[%s879 + $0xa8] sm:$0xff]
      %v2586 = vld [vmem:[%s879 + $0xb0] sm:$0xff]
      %v2587 = vld [vmem:[%s879 + $0xb8] sm:$0xff]
      %v2588 = vmax.f32 %v2540, %v2564
      %v2589 = vmax.f32 %v2541, %v2565
      %v2590 = vmax.f32 %v2542, %v2566
      %v2591 = vmax.f32 %v2543, %v2567
      %v2592 = vmax.f32 %v2544, %v2568
      %v2593 = vmax.f32 %v2545, %v2569
      %v2594 = vmax.f32 %v2546, %v2570
      %v2595 = vmax.f32 %v2547, %v2571
      %v2596 = vmax.f32 %v2548, %v2572
      %v2597 = vmax.f32 %v2549, %v2573
      %v2598 = vmax.f32 %v2550, %v2574
      %v2599 = vmax.f32 %v2551, %v2575
      %v2600 = vmax.f32 %v2552, %v2576
      %v2601 = vmax.f32 %v2553, %v2577
      %v2602 = vmax.f32 %v2554, %v2578
      %v2603 = vmax.f32 %v2555, %v2579
      %v2604 = vmax.f32 %v2556, %v2580
      %v2605 = vmax.f32 %v2557, %v2581
      %v2606 = vmax.f32 %v2558, %v2582
      %v2607 = vmax.f32 %v2559, %v2583
      %v2608 = vmax.f32 %v2560, %v2584
      %v2609 = vmax.f32 %v2561, %v2585
      %v2610 = vmax.f32 %v2562, %v2586
      %v2611 = vmax.f32 %v2563, %v2587
      %v2612 = vld [vmem:[%s928] sm:$0xff]
      %v2613 = vld [vmem:[%s928 + $0x8] sm:$0xff]
      %v2614 = vld [vmem:[%s928 + $0x10] sm:$0xff]
      %v2615 = vld [vmem:[%s928 + $0x18] sm:$0xff]
      %v2616 = vld [vmem:[%s928 + $0x20] sm:$0xff]
      %v2617 = vld [vmem:[%s928 + $0x28] sm:$0xff]
      %v2618 = vld [vmem:[%s928 + $0x30] sm:$0xff]
      %v2619 = vld [vmem:[%s928 + $0x38] sm:$0xff]
      %v2620 = vld [vmem:[%s928 + $0x40] sm:$0xff]
      %v2621 = vld [vmem:[%s928 + $0x48] sm:$0xff]
      %v2622 = vld [vmem:[%s928 + $0x50] sm:$0xff]
      %v2623 = vld [vmem:[%s928 + $0x58] sm:$0xff]
      %v2624 = vld [vmem:[%s928 + $0x60] sm:$0xff]
      %v2625 = vld [vmem:[%s928 + $0x68] sm:$0xff]
      %v2626 = vld [vmem:[%s928 + $0x70] sm:$0xff]
      %v2627 = vld [vmem:[%s928 + $0x78] sm:$0xff]
      %v2628 = vld [vmem:[%s928 + $0x80] sm:$0xff]
      %v2629 = vld [vmem:[%s928 + $0x88] sm:$0xff]
      %v2630 = vld [vmem:[%s928 + $0x90] sm:$0xff]
      %v2631 = vld [vmem:[%s928 + $0x98] sm:$0xff]
      %v2632 = vld [vmem:[%s928 + $0xa0] sm:$0xff]
      %v2633 = vld [vmem:[%s928 + $0xa8] sm:$0xff]
      %v2634 = vld [vmem:[%s928 + $0xb0] sm:$0xff]
      %v2635 = vld [vmem:[%s928 + $0xb8] sm:$0xff]
      %v2636 = vmax.f32 %v2588, %v2612
      %v2637 = vmax.f32 %v2589, %v2613
      %v2638 = vmax.f32 %v2590, %v2614
      %v2639 = vmax.f32 %v2591, %v2615
      %v2640 = vmax.f32 %v2592, %v2616
      %v2641 = vmax.f32 %v2593, %v2617
      %v2642 = vmax.f32 %v2594, %v2618
      %v2643 = vmax.f32 %v2595, %v2619
      %v2644 = vmax.f32 %v2596, %v2620
      %v2645 = vmax.f32 %v2597, %v2621
      %v2646 = vmax.f32 %v2598, %v2622
      %v2647 = vmax.f32 %v2599, %v2623
      %v2648 = vmax.f32 %v2600, %v2624
      %v2649 = vmax.f32 %v2601, %v2625
      %v2650 = vmax.f32 %v2602, %v2626
      %v2651 = vmax.f32 %v2603, %v2627
      %v2652 = vmax.f32 %v2604, %v2628
      %v2653 = vmax.f32 %v2605, %v2629
      %v2654 = vmax.f32 %v2606, %v2630
      %v2655 = vmax.f32 %v2607, %v2631
      %v2656 = vmax.f32 %v2608, %v2632
      %v2657 = vmax.f32 %v2609, %v2633
      %v2658 = vmax.f32 %v2610, %v2634
      %v2659 = vmax.f32 %v2611, %v2635
      %v2660 = vld [vmem:[%s977] sm:$0xff]
      %v2661 = vld [vmem:[%s977 + $0x8] sm:$0xff]
      %v2662 = vld [vmem:[%s977 + $0x10] sm:$0xff]
      %v2663 = vld [vmem:[%s977 + $0x18] sm:$0xff]
      %v2664 = vld [vmem:[%s977 + $0x20] sm:$0xff]
      %v2665 = vld [vmem:[%s977 + $0x28] sm:$0xff]
      %v2666 = vld [vmem:[%s977 + $0x30] sm:$0xff]
      %v2667 = vld [vmem:[%s977 + $0x38] sm:$0xff]
      %v2668 = vld [vmem:[%s977 + $0x40] sm:$0xff]
      %v2669 = vld [vmem:[%s977 + $0x48] sm:$0xff]
      %v2670 = vld [vmem:[%s977 + $0x50] sm:$0xff]
      %v2671 = vld [vmem:[%s977 + $0x58] sm:$0xff]
      %v2672 = vld [vmem:[%s977 + $0x60] sm:$0xff]
      %v2673 = vld [vmem:[%s977 + $0x68] sm:$0xff]
      %v2674 = vld [vmem:[%s977 + $0x70] sm:$0xff]
      %v2675 = vld [vmem:[%s977 + $0x78] sm:$0xff]
      %v2676 = vld [vmem:[%s977 + $0x80] sm:$0xff]
      %v2677 = vld [vmem:[%s977 + $0x88] sm:$0xff]
      %v2678 = vld [vmem:[%s977 + $0x90] sm:$0xff]
      %v2679 = vld [vmem:[%s977 + $0x98] sm:$0xff]
      %v2680 = vld [vmem:[%s977 + $0xa0] sm:$0xff]
      %v2681 = vld [vmem:[%s977 + $0xa8] sm:$0xff]
      %v2682 = vld [vmem:[%s977 + $0xb0] sm:$0xff]
      %v2683 = vld [vmem:[%s977 + $0xb8] sm:$0xff]
      %v2684 = vmax.f32 %v2636, %v2660
      %v2685 = vmax.f32 %v2637, %v2661
      %v2686 = vmax.f32 %v2638, %v2662
      %v2687 = vmax.f32 %v2639, %v2663
      %v2688 = vmax.f32 %v2640, %v2664
      %v2689 = vmax.f32 %v2641, %v2665
      %v2690 = vmax.f32 %v2642, %v2666
      %v2691 = vmax.f32 %v2643, %v2667
      %v2692 = vmax.f32 %v2644, %v2668
      %v2693 = vmax.f32 %v2645, %v2669
      %v2694 = vmax.f32 %v2646, %v2670
      %v2695 = vmax.f32 %v2647, %v2671
      %v2696 = vmax.f32 %v2648, %v2672
      %v2697 = vmax.f32 %v2649, %v2673
      %v2698 = vmax.f32 %v2650, %v2674
      %v2699 = vmax.f32 %v2651, %v2675
      %v2700 = vmax.f32 %v2652, %v2676
      %v2701 = vmax.f32 %v2653, %v2677
      %v2702 = vmax.f32 %v2654, %v2678
      %v2703 = vmax.f32 %v2655, %v2679
      %v2704 = vmax.f32 %v2656, %v2680
      %v2705 = vmax.f32 %v2657, %v2681
      %v2706 = vmax.f32 %v2658, %v2682
      %v2707 = vmax.f32 %v2659, %v2683
      %2708 = vst.msk [vmem:[%s1026] sm:$0xff] %vm307, %v2684
      %2709 = vst.msk [vmem:[%s1026 + $0x8] sm:$0xff] %vm307, %v2685
      %2710 = vst.msk [vmem:[%s1026 + $0x10] sm:$0xff] %vm307, %v2686
      %2711 = vst.msk [vmem:[%s1026 + $0x18] sm:$0xff] %vm307, %v2687
      %2712 = vst.msk [vmem:[%s1026 + $0x20] sm:$0xff] %vm307, %v2688
      %2713 = vst.msk [vmem:[%s1026 + $0x28] sm:$0xff] %vm307, %v2689
      %2714 = vst.msk [vmem:[%s1026 + $0x30] sm:$0xff] %vm307, %v2690
      %2715 = vst.msk [vmem:[%s1026 + $0x38] sm:$0xff] %vm307, %v2691
      %2716 = vst.msk [vmem:[%s1026 + $0x40] sm:$0xff] %vm307, %v2692
      %2717 = vst.msk [vmem:[%s1026 + $0x48] sm:$0xff] %vm307, %v2693
      %2718 = vst.msk [vmem:[%s1026 + $0x50] sm:$0xff] %vm307, %v2694
      %2719 = vst.msk [vmem:[%s1026 + $0x58] sm:$0xff] %vm307, %v2695
      %2720 = vst.msk [vmem:[%s1026 + $0x60] sm:$0xff] %vm307, %v2696
      %2721 = vst.msk [vmem:[%s1026 + $0x68] sm:$0xff] %vm307, %v2697
      %2722 = vst.msk [vmem:[%s1026 + $0x70] sm:$0xff] %vm307, %v2698
      %2723 = vst.msk [vmem:[%s1026 + $0x78] sm:$0xff] %vm307, %v2699
      %2724 = vst.msk [vmem:[%s1026 + $0x80] sm:$0xff] %vm307, %v2700
      %2725 = vst.msk [vmem:[%s1026 + $0x88] sm:$0xff] %vm307, %v2701
      %2726 = vst.msk [vmem:[%s1026 + $0x90] sm:$0xff] %vm307, %v2702
      %2727 = vst.msk [vmem:[%s1026 + $0x98] sm:$0xff] %vm307, %v2703
      %2728 = vst.msk [vmem:[%s1026 + $0xa0] sm:$0xff] %vm307, %v2704
      %2729 = vst.msk [vmem:[%s1026 + $0xa8] sm:$0xff] %vm307, %v2705
      %2730 = vst.msk [vmem:[%s1026 + $0xb0] sm:$0xff] %vm307, %v2706
      %2731 = vst.msk [vmem:[%s1026 + $0xb8] sm:$0xff] %vm307, %v2707
      %v2732 = vld [vmem:[%s1051] sm:$0xff]
      %v2733 = vld [vmem:[%s1051 + $0x8] sm:$0xff]
      %v2734 = vld [vmem:[%s1051 + $0x10] sm:$0xff]
      %v2735 = vld [vmem:[%s1051 + $0x18] sm:$0xff]
      %v2736 = vld [vmem:[%s1051 + $0x20] sm:$0xff]
      %v2737 = vld [vmem:[%s1051 + $0x28] sm:$0xff]
      %v2738 = vld [vmem:[%s1051 + $0x30] sm:$0xff]
      %v2739 = vld [vmem:[%s1051 + $0x38] sm:$0xff]
      %v2740 = vsel %vm307, %v2732, -inf
      %v2741 = vsel %vm307, %v2734, -inf
      %v2742 = vsel %vm307, %v2736, -inf
      %v2743 = vmax.f32 %v2740, %v2742
      %v2744 = vsel %vm307, %v2738, -inf
      %v2745 = vmax.f32 %v2741, %v2744
      %v2746 = vmax.f32 %v2743, %v2745
      %v2747 = vsel %vm307, %v2733, -inf
      %v2748 = vsel %vm307, %v2735, -inf
      %v2749 = vsel %vm307, %v2737, -inf
      %v2750 = vmax.f32 %v2747, %v2749
      %v2751 = vsel %vm307, %v2739, -inf
      %v2752 = vmax.f32 %v2748, %v2751
      %v2753 = vmax.f32 %v2750, %v2752
      %2754 = vst.msk [vmem:[%s1074] sm:$0xff] %vm307, %v2746
      %2755 = vst.msk [vmem:[%s1074 + $0x8] sm:$0xff] %vm307, %v2753
      %v2756 = vld [vmem:[%s1077] sm:$0xff]
      %v2757 = vld [vmem:[%s1077 + $0x8] sm:$0xff]
      %v2758 = vld [vmem:[%s1077 + $0x10] sm:$0xff]
      %v2759 = vld [vmem:[%s1077 + $0x18] sm:$0xff]
      %v2760 = vld [vmem:[%s1077 + $0x20] sm:$0xff]
      %v2761 = vld [vmem:[%s1077 + $0x28] sm:$0xff]
      %v2762 = vsel %vm307, %v2756, -inf
      %v2763 = vsel %vm307, %v2758, -inf
      %v2764 = vsel %vm307, %v2760, -inf
      %v2765 = vmax.f32 %v2762, %v2764
      %v2766 = vmax.f32 %v2765, %v2763
      %v2767 = vsel %vm307, %v2757, -inf
      %v2768 = vsel %vm307, %v2759, -inf
      %v2769 = vsel %vm307, %v2761, -inf
      %v2770 = vmax.f32 %v2767, %v2769
      %v2771 = vmax.f32 %v2770, %v2768
      %2772 = vst.msk [vmem:[%s1094] sm:$0xff] %vm307, %v2766
      %2773 = vst.msk [vmem:[%s1094 + $0x8] sm:$0xff] %vm307, %v2771
      %v2774 = vld [vmem:[#allocation3] sm:$0x7]
      %v2775 = vld [vmem:[#allocation3 + $0x10] sm:$0x7]
      %v2776 = vld [vmem:[#allocation3 + $0x20] sm:$0x7]
      %v2777 = vld [vmem:[#allocation3 + $0x30] sm:$0x7]
      %v2778 = vld [vmem:[#allocation3 + $0x40] sm:$0x7]
      %v2779 = vld [vmem:[#allocation3 + $0x50] sm:$0x7]
      %v2780 = vld [vmem:[#allocation3 + $0x60] sm:$0x7]
      %v2781 = vld [vmem:[#allocation3 + $0x70] sm:$0x7]
      %v2782 = vld [vmem:[#allocation3 + $0x80] sm:$0x7]
      %v2783 = vld [vmem:[#allocation3 + $0x90] sm:$0x7]
      %v2784 = vld [vmem:[#allocation3 + $0xa0] sm:$0x7]
      %v2785 = vld [vmem:[#allocation3 + $0xb0] sm:$0x7]
      %v2786 = vld [vmem:[#allocation3 + $0xc0] sm:$0x7]
      %v2787 = vld [vmem:[#allocation3 + $0xd0] sm:$0x7]
      %v2788 = vld [vmem:[#allocation3 + $0xe0] sm:$0x7]
      %v2789 = vld [vmem:[#allocation3 + $0xf0] sm:$0x7]
      %v2790 = vsel %vm1113, %v2774, -inf
      %v2791 = vrot.slane %v2790, 4
      %v2792 = vmax.f32 %v2790, %v2791
      %v2793 = vrot.slane %v2792, 2
      %v2794 = vmax.f32 %v2792, %v2793
      %v2795 = vrot.slane %v2794, 1
      %v2796 = vmax.f32 %v2794, %v2795
      %v2797 = vsel %vm1113, %v2775, -inf
      %v2798 = vrot.slane %v2797, 4
      %v2799 = vmax.f32 %v2797, %v2798
      %v2800 = vrot.slane %v2799, 2
      %v2801 = vmax.f32 %v2799, %v2800
      %v2802 = vrot.slane %v2801, 1
      %v2803 = vmax.f32 %v2801, %v2802
      %v2804 = vsel %vm1113, %v2776, -inf
      %v2805 = vrot.slane %v2804, 4
      %v2806 = vmax.f32 %v2804, %v2805
      %v2807 = vrot.slane %v2806, 2
      %v2808 = vmax.f32 %v2806, %v2807
      %v2809 = vrot.slane %v2808, 1
      %v2810 = vmax.f32 %v2808, %v2809
      %v2811 = vsel %vm1113, %v2777, -inf
      %v2812 = vrot.slane %v2811, 4
      %v2813 = vmax.f32 %v2811, %v2812
      %v2814 = vrot.slane %v2813, 2
      %v2815 = vmax.f32 %v2813, %v2814
      %v2816 = vrot.slane %v2815, 1
      %v2817 = vmax.f32 %v2815, %v2816
      %v2818 = vsel %vm1113, %v2778, -inf
      %v2819 = vrot.slane %v2818, 4
      %v2820 = vmax.f32 %v2818, %v2819
      %v2821 = vrot.slane %v2820, 2
      %v2822 = vmax.f32 %v2820, %v2821
      %v2823 = vrot.slane %v2822, 1
      %v2824 = vmax.f32 %v2822, %v2823
      %v2825 = vsel %vm1113, %v2779, -inf
      %v2826 = vrot.slane %v2825, 4
      %v2827 = vmax.f32 %v2825, %v2826
      %v2828 = vrot.slane %v2827, 2
      %v2829 = vmax.f32 %v2827, %v2828
      %v2830 = vrot.slane %v2829, 1
      %v2831 = vmax.f32 %v2829, %v2830
      %v2832 = vsel %vm1113, %v2780, -inf
      %v2833 = vrot.slane %v2832, 4
      %v2834 = vmax.f32 %v2832, %v2833
      %v2835 = vrot.slane %v2834, 2
      %v2836 = vmax.f32 %v2834, %v2835
      %v2837 = vrot.slane %v2836, 1
      %v2838 = vmax.f32 %v2836, %v2837
      %v2839 = vsel %vm1113, %v2781, -inf
      %v2840 = vrot.slane %v2839, 4
      %v2841 = vmax.f32 %v2839, %v2840
      %v2842 = vrot.slane %v2841, 2
      %v2843 = vmax.f32 %v2841, %v2842
      %v2844 = vrot.slane %v2843, 1
      %v2845 = vmax.f32 %v2843, %v2844
      %v2846 = vsel %vm1113, %v2782, -inf
      %v2847 = vrot.slane %v2846, 4
      %v2848 = vmax.f32 %v2846, %v2847
      %v2849 = vrot.slane %v2848, 2
      %v2850 = vmax.f32 %v2848, %v2849
      %v2851 = vrot.slane %v2850, 1
      %v2852 = vmax.f32 %v2850, %v2851
      %v2853 = vsel %vm1113, %v2783, -inf
      %v2854 = vrot.slane %v2853, 4
      %v2855 = vmax.f32 %v2853, %v2854
      %v2856 = vrot.slane %v2855, 2
      %v2857 = vmax.f32 %v2855, %v2856
      %v2858 = vrot.slane %v2857, 1
      %v2859 = vmax.f32 %v2857, %v2858
      %v2860 = vsel %vm1113, %v2784, -inf
      %v2861 = vrot.slane %v2860, 4
      %v2862 = vmax.f32 %v2860, %v2861
      %v2863 = vrot.slane %v2862, 2
      %v2864 = vmax.f32 %v2862, %v2863
      %v2865 = vrot.slane %v2864, 1
      %v2866 = vmax.f32 %v2864, %v2865
      %v2867 = vsel %vm1113, %v2785, -inf
      %v2868 = vrot.slane %v2867, 4
      %v2869 = vmax.f32 %v2867, %v2868
      %v2870 = vrot.slane %v2869, 2
      %v2871 = vmax.f32 %v2869, %v2870
      %v2872 = vrot.slane %v2871, 1
      %v2873 = vmax.f32 %v2871, %v2872
      %v2874 = vsel %vm1113, %v2786, -inf
      %v2875 = vrot.slane %v2874, 4
      %v2876 = vmax.f32 %v2874, %v2875
      %v2877 = vrot.slane %v2876, 2
      %v2878 = vmax.f32 %v2876, %v2877
      %v2879 = vrot.slane %v2878, 1
      %v2880 = vmax.f32 %v2878, %v2879
      %v2881 = vsel %vm1113, %v2787, -inf
      %v2882 = vrot.slane %v2881, 4
      %v2883 = vmax.f32 %v2881, %v2882
      %v2884 = vrot.slane %v2883, 2
      %v2885 = vmax.f32 %v2883, %v2884
      %v2886 = vrot.slane %v2885, 1
      %v2887 = vmax.f32 %v2885, %v2886
      %v2888 = vsel %vm1113, %v2788, -inf
      %v2889 = vrot.slane %v2888, 4
      %v2890 = vmax.f32 %v2888, %v2889
      %v2891 = vrot.slane %v2890, 2
      %v2892 = vmax.f32 %v2890, %v2891
      %v2893 = vrot.slane %v2892, 1
      %v2894 = vmax.f32 %v2892, %v2893
      %v2895 = vsel %vm1113, %v2789, -inf
      %v2896 = vrot.slane %v2895, 4
      %v2897 = vmax.f32 %v2895, %v2896
      %v2898 = vrot.slane %v2897, 2
      %v2899 = vmax.f32 %v2897, %v2898
      %v2900 = vrot.slane %v2899, 1
      %v2901 = vmax.f32 %v2899, %v2900
      %2902 = vst.msk [vmem:[#allocation2] sm:$0x1] %vm1226, %v2796
      %2903 = vst.msk [vmem:[#allocation2 + $0x10] sm:$0x1] %vm1226, %v2803
      %2904 = vst.msk [vmem:[#allocation2 + $0x20] sm:$0x1] %vm1226, %v2810
      %2905 = vst.msk [vmem:[#allocation2 + $0x30] sm:$0x1] %vm1226, %v2817
      %2906 = vst.msk [vmem:[#allocation2 + $0x40] sm:$0x1] %vm1226, %v2824
      %2907 = vst.msk [vmem:[#allocation2 + $0x50] sm:$0x1] %vm1226, %v2831
      %2908 = vst.msk [vmem:[#allocation2 + $0x60] sm:$0x1] %vm1226, %v2838
      %2909 = vst.msk [vmem:[#allocation2 + $0x70] sm:$0x1] %vm1226, %v2845
      %2910 = vst.msk [vmem:[#allocation2 + $0x80] sm:$0x1] %vm1226, %v2852
      %2911 = vst.msk [vmem:[#allocation2 + $0x90] sm:$0x1] %vm1226, %v2859
      %2912 = vst.msk [vmem:[#allocation2 + $0xa0] sm:$0x1] %vm1226, %v2866
      %2913 = vst.msk [vmem:[#allocation2 + $0xb0] sm:$0x1] %vm1226, %v2873
      %2914 = vst.msk [vmem:[#allocation2 + $0xc0] sm:$0x1] %vm1226, %v2880
      %2915 = vst.msk [vmem:[#allocation2 + $0xd0] sm:$0x1] %vm1226, %v2887
      %2916 = vst.msk [vmem:[#allocation2 + $0xe0] sm:$0x1] %vm1226, %v2894
      %2917 = vst.msk [vmem:[#allocation2 + $0xf0] sm:$0x1] %vm1226, %v2901
      %v2918 = vld [vmem:[#allocation3] sm:$0xf]
      %v2919 = vld [vmem:[#allocation3 + $0x10] sm:$0xf]
      %v2920 = vld [vmem:[#allocation3 + $0x20] sm:$0xf]
      %v2921 = vld [vmem:[#allocation3 + $0x30] sm:$0xf]
      %v2922 = vld [vmem:[#allocation3 + $0x40] sm:$0xf]
      %v2923 = vld [vmem:[#allocation3 + $0x50] sm:$0xf]
      %v2924 = vld [vmem:[#allocation3 + $0x60] sm:$0xf]
      %v2925 = vld [vmem:[#allocation3 + $0x70] sm:$0xf]
      %v2926 = vld [vmem:[#allocation3 + $0x80] sm:$0xf]
      %v2927 = vld [vmem:[#allocation3 + $0x90] sm:$0xf]
      %v2928 = vld [vmem:[#allocation3 + $0xa0] sm:$0xf]
      %v2929 = vld [vmem:[#allocation3 + $0xb0] sm:$0xf]
      %v2930 = vld [vmem:[#allocation3 + $0xc0] sm:$0xf]
      %v2931 = vld [vmem:[#allocation3 + $0xd0] sm:$0xf]
      %v2932 = vld [vmem:[#allocation3 + $0xe0] sm:$0xf]
      %v2933 = vld [vmem:[#allocation3 + $0xf0] sm:$0xf]
      %v2934 = vsel %vm1259, %v2918, -inf
      %v2935 = vrot.slane %v2934, 4
      %v2936 = vmax.f32 %v2934, %v2935
      %v2937 = vrot.slane %v2936, 2
      %v2938 = vmax.f32 %v2936, %v2937
      %v2939 = vrot.slane %v2938, 1
      %v2940 = vmax.f32 %v2938, %v2939
      %v2941 = vsel %vm1259, %v2919, -inf
      %v2942 = vrot.slane %v2941, 4
      %v2943 = vmax.f32 %v2941, %v2942
      %v2944 = vrot.slane %v2943, 2
      %v2945 = vmax.f32 %v2943, %v2944
      %v2946 = vrot.slane %v2945, 1
      %v2947 = vmax.f32 %v2945, %v2946
      %v2948 = vsel %vm1259, %v2920, -inf
      %v2949 = vrot.slane %v2948, 4
      %v2950 = vmax.f32 %v2948, %v2949
      %v2951 = vrot.slane %v2950, 2
      %v2952 = vmax.f32 %v2950, %v2951
      %v2953 = vrot.slane %v2952, 1
      %v2954 = vmax.f32 %v2952, %v2953
      %v2955 = vsel %vm1259, %v2921, -inf
      %v2956 = vrot.slane %v2955, 4
      %v2957 = vmax.f32 %v2955, %v2956
      %v2958 = vrot.slane %v2957, 2
      %v2959 = vmax.f32 %v2957, %v2958
      %v2960 = vrot.slane %v2959, 1
      %v2961 = vmax.f32 %v2959, %v2960
      %v2962 = vsel %vm1259, %v2922, -inf
      %v2963 = vrot.slane %v2962, 4
      %v2964 = vmax.f32 %v2962, %v2963
      %v2965 = vrot.slane %v2964, 2
      %v2966 = vmax.f32 %v2964, %v2965
      %v2967 = vrot.slane %v2966, 1
      %v2968 = vmax.f32 %v2966, %v2967
      %v2969 = vsel %vm1259, %v2923, -inf
      %v2970 = vrot.slane %v2969, 4
      %v2971 = vmax.f32 %v2969, %v2970
      %v2972 = vrot.slane %v2971, 2
      %v2973 = vmax.f32 %v2971, %v2972
      %v2974 = vrot.slane %v2973, 1
      %v2975 = vmax.f32 %v2973, %v2974
      %v2976 = vsel %vm1259, %v2924, -inf
      %v2977 = vrot.slane %v2976, 4
      %v2978 = vmax.f32 %v2976, %v2977
      %v2979 = vrot.slane %v2978, 2
      %v2980 = vmax.f32 %v2978, %v2979
      %v2981 = vrot.slane %v2980, 1
      %v2982 = vmax.f32 %v2980, %v2981
      %v2983 = vsel %vm1259, %v2925, -inf
      %v2984 = vrot.slane %v2983, 4
      %v2985 = vmax.f32 %v2983, %v2984
      %v2986 = vrot.slane %v2985, 2
      %v2987 = vmax.f32 %v2985, %v2986
      %v2988 = vrot.slane %v2987, 1
      %v2989 = vmax.f32 %v2987, %v2988
      %v2990 = vsel %vm1259, %v2926, -inf
      %v2991 = vrot.slane %v2990, 4
      %v2992 = vmax.f32 %v2990, %v2991
      %v2993 = vrot.slane %v2992, 2
      %v2994 = vmax.f32 %v2992, %v2993
      %v2995 = vrot.slane %v2994, 1
      %v2996 = vmax.f32 %v2994, %v2995
      %v2997 = vsel %vm1259, %v2927, -inf
      %v2998 = vrot.slane %v2997, 4
      %v2999 = vmax.f32 %v2997, %v2998
      %v3000 = vrot.slane %v2999, 2
      %v3001 = vmax.f32 %v2999, %v3000
      %v3002 = vrot.slane %v3001, 1
      %v3003 = vmax.f32 %v3001, %v3002
      %v3004 = vsel %vm1259, %v2928, -inf
      %v3005 = vrot.slane %v3004, 4
      %v3006 = vmax.f32 %v3004, %v3005
      %v3007 = vrot.slane %v3006, 2
      %v3008 = vmax.f32 %v3006, %v3007
      %v3009 = vrot.slane %v3008, 1
      %v3010 = vmax.f32 %v3008, %v3009
      %v3011 = vsel %vm1259, %v2929, -inf
      %v3012 = vrot.slane %v3011, 4
      %v3013 = vmax.f32 %v3011, %v3012
      %v3014 = vrot.slane %v3013, 2
      %v3015 = vmax.f32 %v3013, %v3014
      %v3016 = vrot.slane %v3015, 1
      %v3017 = vmax.f32 %v3015, %v3016
      %v3018 = vsel %vm1259, %v2930, -inf
      %v3019 = vrot.slane %v3018, 4
      %v3020 = vmax.f32 %v3018, %v3019
      %v3021 = vrot.slane %v3020, 2
      %v3022 = vmax.f32 %v3020, %v3021
      %v3023 = vrot.slane %v3022, 1
      %v3024 = vmax.f32 %v3022, %v3023
      %v3025 = vsel %vm1259, %v2931, -inf
      %v3026 = vrot.slane %v3025, 4
      %v3027 = vmax.f32 %v3025, %v3026
      %v3028 = vrot.slane %v3027, 2
      %v3029 = vmax.f32 %v3027, %v3028
      %v3030 = vrot.slane %v3029, 1
      %v3031 = vmax.f32 %v3029, %v3030
      %v3032 = vsel %vm1259, %v2932, -inf
      %v3033 = vrot.slane %v3032, 4
      %v3034 = vmax.f32 %v3032, %v3033
      %v3035 = vrot.slane %v3034, 2
      %v3036 = vmax.f32 %v3034, %v3035
      %v3037 = vrot.slane %v3036, 1
      %v3038 = vmax.f32 %v3036, %v3037
      %v3039 = vsel %vm1259, %v2933, -inf
      %v3040 = vrot.slane %v3039, 4
      %v3041 = vmax.f32 %v3039, %v3040
      %v3042 = vrot.slane %v3041, 2
      %v3043 = vmax.f32 %v3041, %v3042
      %v3044 = vrot.slane %v3043, 1
      %v3045 = vmax.f32 %v3043, %v3044
      %3046 = vst.msk [vmem:[#allocation2 + $0x1] sm:$0x1] %vm1226, %v2940
      %3047 = vst.msk [vmem:[#allocation2 + $0x11] sm:$0x1] %vm1226, %v2947
      %3048 = vst.msk [vmem:[#allocation2 + $0x21] sm:$0x1] %vm1226, %v2954
      %3049 = vst.msk [vmem:[#allocation2 + $0x31] sm:$0x1] %vm1226, %v2961
      %3050 = vst.msk [vmem:[#allocation2 + $0x41] sm:$0x1] %vm1226, %v2968
      %3051 = vst.msk [vmem:[#allocation2 + $0x51] sm:$0x1] %vm1226, %v2975
      %3052 = vst.msk [vmem:[#allocation2 + $0x61] sm:$0x1] %vm1226, %v2982
      %3053 = vst.msk [vmem:[#allocation2 + $0x71] sm:$0x1] %vm1226, %v2989
      %3054 = vst.msk [vmem:[#allocation2 + $0x81] sm:$0x1] %vm1226, %v2996
      %3055 = vst.msk [vmem:[#allocation2 + $0x91] sm:$0x1] %vm1226, %v3003
      %3056 = vst.msk [vmem:[#allocation2 + $0xa1] sm:$0x1] %vm1226, %v3010
      %3057 = vst.msk [vmem:[#allocation2 + $0xb1] sm:$0x1] %vm1226, %v3017
      %3058 = vst.msk [vmem:[#allocation2 + $0xc1] sm:$0x1] %vm1226, %v3024
      %3059 = vst.msk [vmem:[#allocation2 + $0xd1] sm:$0x1] %vm1226, %v3031
      %3060 = vst.msk [vmem:[#allocation2 + $0xe1] sm:$0x1] %vm1226, %v3038
      %3061 = vst.msk [vmem:[#allocation2 + $0xf1] sm:$0x1] %vm1226, %v3045
      %v3062 = vld [vmem:[#allocation3] sm:$0xff]
      %v3063 = vld [vmem:[#allocation3 + $0x8] sm:$0xf]
      %v3064 = vld [vmem:[#allocation3 + $0x10] sm:$0xff]
      %v3065 = vld [vmem:[#allocation3 + $0x18] sm:$0xf]
      %v3066 = vld [vmem:[#allocation3 + $0x20] sm:$0xff]
      %v3067 = vld [vmem:[#allocation3 + $0x28] sm:$0xf]
      %v3068 = vld [vmem:[#allocation3 + $0x30] sm:$0xff]
      %v3069 = vld [vmem:[#allocation3 + $0x38] sm:$0xf]
      %v3070 = vld [vmem:[#allocation3 + $0x40] sm:$0xff]
      %v3071 = vld [vmem:[#allocation3 + $0x48] sm:$0xf]
      %v3072 = vld [vmem:[#allocation3 + $0x50] sm:$0xff]
      %v3073 = vld [vmem:[#allocation3 + $0x58] sm:$0xf]
      %v3074 = vld [vmem:[#allocation3 + $0x60] sm:$0xff]
      %v3075 = vld [vmem:[#allocation3 + $0x68] sm:$0xf]
      %v3076 = vld [vmem:[#allocation3 + $0x70] sm:$0xff]
      %v3077 = vld [vmem:[#allocation3 + $0x78] sm:$0xf]
      %v3078 = vld [vmem:[#allocation3 + $0x80] sm:$0xff]
      %v3079 = vld [vmem:[#allocation3 + $0x88] sm:$0xf]
      %v3080 = vld [vmem:[#allocation3 + $0x90] sm:$0xff]
      %v3081 = vld [vmem:[#allocation3 + $0x98] sm:$0xf]
      %v3082 = vld [vmem:[#allocation3 + $0xa0] sm:$0xff]
      %v3083 = vld [vmem:[#allocation3 + $0xa8] sm:$0xf]
      %v3084 = vld [vmem:[#allocation3 + $0xb0] sm:$0xff]
      %v3085 = vld [vmem:[#allocation3 + $0xb8] sm:$0xf]
      %v3086 = vld [vmem:[#allocation3 + $0xc0] sm:$0xff]
      %v3087 = vld [vmem:[#allocation3 + $0xc8] sm:$0xf]
      %v3088 = vld [vmem:[#allocation3 + $0xd0] sm:$0xff]
      %v3089 = vld [vmem:[#allocation3 + $0xd8] sm:$0xf]
      %v3090 = vld [vmem:[#allocation3 + $0xe0] sm:$0xff]
      %v3091 = vld [vmem:[#allocation3 + $0xe8] sm:$0xf]
      %v3092 = vld [vmem:[#allocation3 + $0xf0] sm:$0xff]
      %v3093 = vld [vmem:[#allocation3 + $0xf8] sm:$0xf]
      %v3094 = vld [vmem:[#allocation3 + $0x1] sm:$0xff]
      %v3095 = vld [vmem:[#allocation3 + $0x9] sm:$0xf]
      %v3096 = vld [vmem:[#allocation3 + $0x11] sm:$0xff]
      %v3097 = vld [vmem:[#allocation3 + $0x19] sm:$0xf]
      %v3098 = vld [vmem:[#allocation3 + $0x21] sm:$0xff]
      %v3099 = vld [vmem:[#allocation3 + $0x29] sm:$0xf]
      %v3100 = vld [vmem:[#allocation3 + $0x31] sm:$0xff]
      %v3101 = vld [vmem:[#allocation3 + $0x39] sm:$0xf]
      %v3102 = vld [vmem:[#allocation3 + $0x41] sm:$0xff]
      %v3103 = vld [vmem:[#allocation3 + $0x49] sm:$0xf]
      %v3104 = vld [vmem:[#allocation3 + $0x51] sm:$0xff]
      %v3105 = vld [vmem:[#allocation3 + $0x59] sm:$0xf]
      %v3106 = vld [vmem:[#allocation3 + $0x61] sm:$0xff]
      %v3107 = vld [vmem:[#allocation3 + $0x69] sm:$0xf]
      %v3108 = vld [vmem:[#allocation3 + $0x71] sm:$0xff]
      %v3109 = vld [vmem:[#allocation3 + $0x79] sm:$0xf]
      %v3110 = vld [vmem:[#allocation3 + $0x81] sm:$0xff]
      %v3111 = vld [vmem:[#allocation3 + $0x89] sm:$0xf]
      %v3112 = vld [vmem:[#allocation3 + $0x91] sm:$0xff]
      %v3113 = vld [vmem:[#allocation3 + $0x99] sm:$0xf]
      %v3114 = vld [vmem:[#allocation3 + $0xa1] sm:$0xff]
      %v3115 = vld [vmem:[#allocation3 + $0xa9] sm:$0xf]
      %v3116 = vld [vmem:[#allocation3 + $0xb1] sm:$0xff]
      %v3117 = vld [vmem:[#allocation3 + $0xb9] sm:$0xf]
      %v3118 = vld [vmem:[#allocation3 + $0xc1] sm:$0xff]
      %v3119 = vld [vmem:[#allocation3 + $0xc9] sm:$0xf]
      %v3120 = vld [vmem:[#allocation3 + $0xd1] sm:$0xff]
      %v3121 = vld [vmem:[#allocation3 + $0xd9] sm:$0xf]
      %v3122 = vld [vmem:[#allocation3 + $0xe1] sm:$0xff]
      %v3123 = vld [vmem:[#allocation3 + $0xe9] sm:$0xf]
      %v3124 = vld [vmem:[#allocation3 + $0xf1] sm:$0xff]
      %v3125 = vld [vmem:[#allocation3 + $0xf9] sm:$0xf]
      %v3126 = vmax.f32 %v3062, %v3094
      %v3127 = vmax.f32 %v3063, %v3095
      %v3128 = vmax.f32 %v3064, %v3096
      %v3129 = vmax.f32 %v3065, %v3097
      %v3130 = vmax.f32 %v3066, %v3098
      %v3131 = vmax.f32 %v3067, %v3099
      %v3132 = vmax.f32 %v3068, %v3100
      %v3133 = vmax.f32 %v3069, %v3101
      %v3134 = vmax.f32 %v3070, %v3102
      %v3135 = vmax.f32 %v3071, %v3103
      %v3136 = vmax.f32 %v3072, %v3104
      %v3137 = vmax.f32 %v3073, %v3105
      %v3138 = vmax.f32 %v3074, %v3106
      %v3139 = vmax.f32 %v3075, %v3107
      %v3140 = vmax.f32 %v3076, %v3108
      %v3141 = vmax.f32 %v3077, %v3109
      %v3142 = vmax.f32 %v3078, %v3110
      %v3143 = vmax.f32 %v3079, %v3111
      %v3144 = vmax.f32 %v3080, %v3112
      %v3145 = vmax.f32 %v3081, %v3113
      %v3146 = vmax.f32 %v3082, %v3114
      %v3147 = vmax.f32 %v3083, %v3115
      %v3148 = vmax.f32 %v3084, %v3116
      %v3149 = vmax.f32 %v3085, %v3117
      %v3150 = vmax.f32 %v3086, %v3118
      %v3151 = vmax.f32 %v3087, %v3119
      %v3152 = vmax.f32 %v3088, %v3120
      %v3153 = vmax.f32 %v3089, %v3121
      %v3154 = vmax.f32 %v3090, %v3122
      %v3155 = vmax.f32 %v3091, %v3123
      %v3156 = vmax.f32 %v3092, %v3124
      %v3157 = vmax.f32 %v3093, %v3125
      %v3158 = vld [vmem:[#allocation3 + $0x2] sm:$0xff]
      %v3159 = vld [vmem:[#allocation3 + $0xa] sm:$0xf]
      %v3160 = vld [vmem:[#allocation3 + $0x12] sm:$0xff]
      %v3161 = vld [vmem:[#allocation3 + $0x1a] sm:$0xf]
      %v3162 = vld [vmem:[#allocation3 + $0x22] sm:$0xff]
      %v3163 = vld [vmem:[#allocation3 + $0x2a] sm:$0xf]
      %v3164 = vld [vmem:[#allocation3 + $0x32] sm:$0xff]
      %v3165 = vld [vmem:[#allocation3 + $0x3a] sm:$0xf]
      %v3166 = vld [vmem:[#allocation3 + $0x42] sm:$0xff]
      %v3167 = vld [vmem:[#allocation3 + $0x4a] sm:$0xf]
      %v3168 = vld [vmem:[#allocation3 + $0x52] sm:$0xff]
      %v3169 = vld [vmem:[#allocation3 + $0x5a] sm:$0xf]
      %v3170 = vld [vmem:[#allocation3 + $0x62] sm:$0xff]
      %v3171 = vld [vmem:[#allocation3 + $0x6a] sm:$0xf]
      %v3172 = vld [vmem:[#allocation3 + $0x72] sm:$0xff]
      %v3173 = vld [vmem:[#allocation3 + $0x7a] sm:$0xf]
      %v3174 = vld [vmem:[#allocation3 + $0x82] sm:$0xff]
      %v3175 = vld [vmem:[#allocation3 + $0x8a] sm:$0xf]
      %v3176 = vld [vmem:[#allocation3 + $0x92] sm:$0xff]
      %v3177 = vld [vmem:[#allocation3 + $0x9a] sm:$0xf]
      %v3178 = vld [vmem:[#allocation3 + $0xa2] sm:$0xff]
      %v3179 = vld [vmem:[#allocation3 + $0xaa] sm:$0xf]
      %v3180 = vld [vmem:[#allocation3 + $0xb2] sm:$0xff]
      %v3181 = vld [vmem:[#allocation3 + $0xba] sm:$0xf]
      %v3182 = vld [vmem:[#allocation3 + $0xc2] sm:$0xff]
      %v3183 = vld [vmem:[#allocation3 + $0xca] sm:$0xf]
      %v3184 = vld [vmem:[#allocation3 + $0xd2] sm:$0xff]
      %v3185 = vld [vmem:[#allocation3 + $0xda] sm:$0xf]
      %v3186 = vld [vmem:[#allocation3 + $0xe2] sm:$0xff]
      %v3187 = vld [vmem:[#allocation3 + $0xea] sm:$0xf]
      %v3188 = vld [vmem:[#allocation3 + $0xf2] sm:$0xff]
      %v3189 = vld [vmem:[#allocation3 + $0xfa] sm:$0xf]
      %v3190 = vmax.f32 %v3126, %v3158
      %v3191 = vmax.f32 %v3127, %v3159
      %v3192 = vmax.f32 %v3128, %v3160
      %v3193 = vmax.f32 %v3129, %v3161
      %v3194 = vmax.f32 %v3130, %v3162
      %v3195 = vmax.f32 %v3131, %v3163
      %v3196 = vmax.f32 %v3132, %v3164
      %v3197 = vmax.f32 %v3133, %v3165
      %v3198 = vmax.f32 %v3134, %v3166
      %v3199 = vmax.f32 %v3135, %v3167
      %v3200 = vmax.f32 %v3136, %v3168
      %v3201 = vmax.f32 %v3137, %v3169
      %v3202 = vmax.f32 %v3138, %v3170
      %v3203 = vmax.f32 %v3139, %v3171
      %v3204 = vmax.f32 %v3140, %v3172
      %v3205 = vmax.f32 %v3141, %v3173
      %v3206 = vmax.f32 %v3142, %v3174
      %v3207 = vmax.f32 %v3143, %v3175
      %v3208 = vmax.f32 %v3144, %v3176
      %v3209 = vmax.f32 %v3145, %v3177
      %v3210 = vmax.f32 %v3146, %v3178
      %v3211 = vmax.f32 %v3147, %v3179
      %v3212 = vmax.f32 %v3148, %v3180
      %v3213 = vmax.f32 %v3149, %v3181
      %v3214 = vmax.f32 %v3150, %v3182
      %v3215 = vmax.f32 %v3151, %v3183
      %v3216 = vmax.f32 %v3152, %v3184
      %v3217 = vmax.f32 %v3153, %v3185
      %v3218 = vmax.f32 %v3154, %v3186
      %v3219 = vmax.f32 %v3155, %v3187
      %v3220 = vmax.f32 %v3156, %v3188
      %v3221 = vmax.f32 %v3157, %v3189
      %v3222 = vld [vmem:[#allocation3 + $0x3] sm:$0xff]
      %v3223 = vld [vmem:[#allocation3 + $0xb] sm:$0xf]
      %v3224 = vld [vmem:[#allocation3 + $0x13] sm:$0xff]
      %v3225 = vld [vmem:[#allocation3 + $0x1b] sm:$0xf]
      %v3226 = vld [vmem:[#allocation3 + $0x23] sm:$0xff]
      %v3227 = vld [vmem:[#allocation3 + $0x2b] sm:$0xf]
      %v3228 = vld [vmem:[#allocation3 + $0x33] sm:$0xff]
      %v3229 = vld [vmem:[#allocation3 + $0x3b] sm:$0xf]
      %v3230 = vld [vmem:[#allocation3 + $0x43] sm:$0xff]
      %v3231 = vld [vmem:[#allocation3 + $0x4b] sm:$0xf]
      %v3232 = vld [vmem:[#allocation3 + $0x53] sm:$0xff]
      %v3233 = vld [vmem:[#allocation3 + $0x5b] sm:$0xf]
      %v3234 = vld [vmem:[#allocation3 + $0x63] sm:$0xff]
      %v3235 = vld [vmem:[#allocation3 + $0x6b] sm:$0xf]
      %v3236 = vld [vmem:[#allocation3 + $0x73] sm:$0xff]
      %v3237 = vld [vmem:[#allocation3 + $0x7b] sm:$0xf]
      %v3238 = vld [vmem:[#allocation3 + $0x83] sm:$0xff]
      %v3239 = vld [vmem:[#allocation3 + $0x8b] sm:$0xf]
      %v3240 = vld [vmem:[#allocation3 + $0x93] sm:$0xff]
      %v3241 = vld [vmem:[#allocation3 + $0x9b] sm:$0xf]
      %v3242 = vld [vmem:[#allocation3 + $0xa3] sm:$0xff]
      %v3243 = vld [vmem:[#allocation3 + $0xab] sm:$0xf]
      %v3244 = vld [vmem:[#allocation3 + $0xb3] sm:$0xff]
      %v3245 = vld [vmem:[#allocation3 + $0xbb] sm:$0xf]
      %v3246 = vld [vmem:[#allocation3 + $0xc3] sm:$0xff]
      %v3247 = vld [vmem:[#allocation3 + $0xcb] sm:$0xf]
      %v3248 = vld [vmem:[#allocation3 + $0xd3] sm:$0xff]
      %v3249 = vld [vmem:[#allocation3 + $0xdb] sm:$0xf]
      %v3250 = vld [vmem:[#allocation3 + $0xe3] sm:$0xff]
      %v3251 = vld [vmem:[#allocation3 + $0xeb] sm:$0xf]
      %v3252 = vld [vmem:[#allocation3 + $0xf3] sm:$0xff]
      %v3253 = vld [vmem:[#allocation3 + $0xfb] sm:$0xf]
      %v3254 = vmax.f32 %v3190, %v3222
      %v3255 = vmax.f32 %v3191, %v3223
      %v3256 = vmax.f32 %v3192, %v3224
      %v3257 = vmax.f32 %v3193, %v3225
      %v3258 = vmax.f32 %v3194, %v3226
      %v3259 = vmax.f32 %v3195, %v3227
      %v3260 = vmax.f32 %v3196, %v3228
      %v3261 = vmax.f32 %v3197, %v3229
      %v3262 = vmax.f32 %v3198, %v3230
      %v3263 = vmax.f32 %v3199, %v3231
      %v3264 = vmax.f32 %v3200, %v3232
      %v3265 = vmax.f32 %v3201, %v3233
      %v3266 = vmax.f32 %v3202, %v3234
      %v3267 = vmax.f32 %v3203, %v3235
      %v3268 = vmax.f32 %v3204, %v3236
      %v3269 = vmax.f32 %v3205, %v3237
      %v3270 = vmax.f32 %v3206, %v3238
      %v3271 = vmax.f32 %v3207, %v3239
      %v3272 = vmax.f32 %v3208, %v3240
      %v3273 = vmax.f32 %v3209, %v3241
      %v3274 = vmax.f32 %v3210, %v3242
      %v3275 = vmax.f32 %v3211, %v3243
      %v3276 = vmax.f32 %v3212, %v3244
      %v3277 = vmax.f32 %v3213, %v3245
      %v3278 = vmax.f32 %v3214, %v3246
      %v3279 = vmax.f32 %v3215, %v3247
      %v3280 = vmax.f32 %v3216, %v3248
      %v3281 = vmax.f32 %v3217, %v3249
      %v3282 = vmax.f32 %v3218, %v3250
      %v3283 = vmax.f32 %v3219, %v3251
      %v3284 = vmax.f32 %v3220, %v3252
      %v3285 = vmax.f32 %v3221, %v3253
      %v3286 = vld [vmem:[#allocation3 + $0x4] sm:$0xff]
      %v3287 = vld [vmem:[#allocation3 + $0xc] sm:$0xf]
      %v3288 = vld [vmem:[#allocation3 + $0x14] sm:$0xff]
      %v3289 = vld [vmem:[#allocation3 + $0x1c] sm:$0xf]
      %v3290 = vld [vmem:[#allocation3 + $0x24] sm:$0xff]
      %v3291 = vld [vmem:[#allocation3 + $0x2c] sm:$0xf]
      %v3292 = vld [vmem:[#allocation3 + $0x34] sm:$0xff]
      %v3293 = vld [vmem:[#allocation3 + $0x3c] sm:$0xf]
      %v3294 = vld [vmem:[#allocation3 + $0x44] sm:$0xff]
      %v3295 = vld [vmem:[#allocation3 + $0x4c] sm:$0xf]
      %v3296 = vld [vmem:[#allocation3 + $0x54] sm:$0xff]
      %v3297 = vld [vmem:[#allocation3 + $0x5c] sm:$0xf]
      %v3298 = vld [vmem:[#allocation3 + $0x64] sm:$0xff]
      %v3299 = vld [vmem:[#allocation3 + $0x6c] sm:$0xf]
      %v3300 = vld [vmem:[#allocation3 + $0x74] sm:$0xff]
      %v3301 = vld [vmem:[#allocation3 + $0x7c] sm:$0xf]
      %v3302 = vld [vmem:[#allocation3 + $0x84] sm:$0xff]
      %v3303 = vld [vmem:[#allocation3 + $0x8c] sm:$0xf]
      %v3304 = vld [vmem:[#allocation3 + $0x94] sm:$0xff]
      %v3305 = vld [vmem:[#allocation3 + $0x9c] sm:$0xf]
      %v3306 = vld [vmem:[#allocation3 + $0xa4] sm:$0xff]
      %v3307 = vld [vmem:[#allocation3 + $0xac] sm:$0xf]
      %v3308 = vld [vmem:[#allocation3 + $0xb4] sm:$0xff]
      %v3309 = vld [vmem:[#allocation3 + $0xbc] sm:$0xf]
      %v3310 = vld [vmem:[#allocation3 + $0xc4] sm:$0xff]
      %v3311 = vld [vmem:[#allocation3 + $0xcc] sm:$0xf]
      %v3312 = vld [vmem:[#allocation3 + $0xd4] sm:$0xff]
      %v3313 = vld [vmem:[#allocation3 + $0xdc] sm:$0xf]
      %v3314 = vld [vmem:[#allocation3 + $0xe4] sm:$0xff]
      %v3315 = vld [vmem:[#allocation3 + $0xec] sm:$0xf]
      %v3316 = vld [vmem:[#allocation3 + $0xf4] sm:$0xff]
      %v3317 = vld [vmem:[#allocation3 + $0xfc] sm:$0xf]
      %v3318 = vmax.f32 %v3254, %v3286
      %v3319 = vmax.f32 %v3255, %v3287
      %v3320 = vmax.f32 %v3256, %v3288
      %v3321 = vmax.f32 %v3257, %v3289
      %v3322 = vmax.f32 %v3258, %v3290
      %v3323 = vmax.f32 %v3259, %v3291
      %v3324 = vmax.f32 %v3260, %v3292
      %v3325 = vmax.f32 %v3261, %v3293
      %v3326 = vmax.f32 %v3262, %v3294
      %v3327 = vmax.f32 %v3263, %v3295
      %v3328 = vmax.f32 %v3264, %v3296
      %v3329 = vmax.f32 %v3265, %v3297
      %v3330 = vmax.f32 %v3266, %v3298
      %v3331 = vmax.f32 %v3267, %v3299
      %v3332 = vmax.f32 %v3268, %v3300
      %v3333 = vmax.f32 %v3269, %v3301
      %v3334 = vmax.f32 %v3270, %v3302
      %v3335 = vmax.f32 %v3271, %v3303
      %v3336 = vmax.f32 %v3272, %v3304
      %v3337 = vmax.f32 %v3273, %v3305
      %v3338 = vmax.f32 %v3274, %v3306
      %v3339 = vmax.f32 %v3275, %v3307
      %v3340 = vmax.f32 %v3276, %v3308
      %v3341 = vmax.f32 %v3277, %v3309
      %v3342 = vmax.f32 %v3278, %v3310
      %v3343 = vmax.f32 %v3279, %v3311
      %v3344 = vmax.f32 %v3280, %v3312
      %v3345 = vmax.f32 %v3281, %v3313
      %v3346 = vmax.f32 %v3282, %v3314
      %v3347 = vmax.f32 %v3283, %v3315
      %v3348 = vmax.f32 %v3284, %v3316
      %v3349 = vmax.f32 %v3285, %v3317
      %3350 = vst.msk [vmem:[#allocation2 + $0x2] sm:$0xff] %vm307, %v3318
      %3351 = vst.msk [vmem:[#allocation2 + $0xa] sm:$0xf] %vm1259, %v3319
      %3352 = vst.msk [vmem:[#allocation2 + $0x12] sm:$0xff] %vm307, %v3320
      %3353 = vst.msk [vmem:[#allocation2 + $0x1a] sm:$0xf] %vm1259, %v3321
      %3354 = vst.msk [vmem:[#allocation2 + $0x22] sm:$0xff] %vm307, %v3322
      %3355 = vst.msk [vmem:[#allocation2 + $0x2a] sm:$0xf] %vm1259, %v3323
      %3356 = vst.msk [vmem:[#allocation2 + $0x32] sm:$0xff] %vm307, %v3324
      %3357 = vst.msk [vmem:[#allocation2 + $0x3a] sm:$0xf] %vm1259, %v3325
      %3358 = vst.msk [vmem:[#allocation2 + $0x42] sm:$0xff] %vm307, %v3326
      %3359 = vst.msk [vmem:[#allocation2 + $0x4a] sm:$0xf] %vm1259, %v3327
      %3360 = vst.msk [vmem:[#allocation2 + $0x52] sm:$0xff] %vm307, %v3328
      %3361 = vst.msk [vmem:[#allocation2 + $0x5a] sm:$0xf] %vm1259, %v3329
      %3362 = vst.msk [vmem:[#allocation2 + $0x62] sm:$0xff] %vm307, %v3330
      %3363 = vst.msk [vmem:[#allocation2 + $0x6a] sm:$0xf] %vm1259, %v3331
      %3364 = vst.msk [vmem:[#allocation2 + $0x72] sm:$0xff] %vm307, %v3332
      %3365 = vst.msk [vmem:[#allocation2 + $0x7a] sm:$0xf] %vm1259, %v3333
      %3366 = vst.msk [vmem:[#allocation2 + $0x82] sm:$0xff] %vm307, %v3334
      %3367 = vst.msk [vmem:[#allocation2 + $0x8a] sm:$0xf] %vm1259, %v3335
      %3368 = vst.msk [vmem:[#allocation2 + $0x92] sm:$0xff] %vm307, %v3336
      %3369 = vst.msk [vmem:[#allocation2 + $0x9a] sm:$0xf] %vm1259, %v3337
      %3370 = vst.msk [vmem:[#allocation2 + $0xa2] sm:$0xff] %vm307, %v3338
      %3371 = vst.msk [vmem:[#allocation2 + $0xaa] sm:$0xf] %vm1259, %v3339
      %3372 = vst.msk [vmem:[#allocation2 + $0xb2] sm:$0xff] %vm307, %v3340
      %3373 = vst.msk [vmem:[#allocation2 + $0xba] sm:$0xf] %vm1259, %v3341
      %3374 = vst.msk [vmem:[#allocation2 + $0xc2] sm:$0xff] %vm307, %v3342
      %3375 = vst.msk [vmem:[#allocation2 + $0xca] sm:$0xf] %vm1259, %v3343
      %3376 = vst.msk [vmem:[#allocation2 + $0xd2] sm:$0xff] %vm307, %v3344
      %3377 = vst.msk [vmem:[#allocation2 + $0xda] sm:$0xf] %vm1259, %v3345
      %3378 = vst.msk [vmem:[#allocation2 + $0xe2] sm:$0xff] %vm307, %v3346
      %3379 = vst.msk [vmem:[#allocation2 + $0xea] sm:$0xf] %vm1259, %v3347
      %3380 = vst.msk [vmem:[#allocation2 + $0xf2] sm:$0xff] %vm307, %v3348
      %3381 = vst.msk [vmem:[#allocation2 + $0xfa] sm:$0xf] %vm1259, %v3349
      %v3382 = vld [vmem:[#allocation3 + $0xc] sm:$0xf]
      %v3383 = vld [vmem:[#allocation3 + $0x1c] sm:$0xf]
      %v3384 = vld [vmem:[#allocation3 + $0x2c] sm:$0xf]
      %v3385 = vld [vmem:[#allocation3 + $0x3c] sm:$0xf]
      %v3386 = vld [vmem:[#allocation3 + $0x4c] sm:$0xf]
      %v3387 = vld [vmem:[#allocation3 + $0x5c] sm:$0xf]
      %v3388 = vld [vmem:[#allocation3 + $0x6c] sm:$0xf]
      %v3389 = vld [vmem:[#allocation3 + $0x7c] sm:$0xf]
      %v3390 = vld [vmem:[#allocation3 + $0x8c] sm:$0xf]
      %v3391 = vld [vmem:[#allocation3 + $0x9c] sm:$0xf]
      %v3392 = vld [vmem:[#allocation3 + $0xac] sm:$0xf]
      %v3393 = vld [vmem:[#allocation3 + $0xbc] sm:$0xf]
      %v3394 = vld [vmem:[#allocation3 + $0xcc] sm:$0xf]
      %v3395 = vld [vmem:[#allocation3 + $0xdc] sm:$0xf]
      %v3396 = vld [vmem:[#allocation3 + $0xec] sm:$0xf]
      %v3397 = vld [vmem:[#allocation3 + $0xfc] sm:$0xf]
      %v3398 = vsel %vm1259, %v3382, -inf
      %v3399 = vrot.slane %v3398, 4
      %v3400 = vmax.f32 %v3398, %v3399
      %v3401 = vrot.slane %v3400, 2
      %v3402 = vmax.f32 %v3400, %v3401
      %v3403 = vrot.slane %v3402, 1
      %v3404 = vmax.f32 %v3402, %v3403
      %v3405 = vsel %vm1259, %v3383, -inf
      %v3406 = vrot.slane %v3405, 4
      %v3407 = vmax.f32 %v3405, %v3406
      %v3408 = vrot.slane %v3407, 2
      %v3409 = vmax.f32 %v3407, %v3408
      %v3410 = vrot.slane %v3409, 1
      %v3411 = vmax.f32 %v3409, %v3410
      %v3412 = vsel %vm1259, %v3384, -inf
      %v3413 = vrot.slane %v3412, 4
      %v3414 = vmax.f32 %v3412, %v3413
      %v3415 = vrot.slane %v3414, 2
      %v3416 = vmax.f32 %v3414, %v3415
      %v3417 = vrot.slane %v3416, 1
      %v3418 = vmax.f32 %v3416, %v3417
      %v3419 = vsel %vm1259, %v3385, -inf
      %v3420 = vrot.slane %v3419, 4
      %v3421 = vmax.f32 %v3419, %v3420
      %v3422 = vrot.slane %v3421, 2
      %v3423 = vmax.f32 %v3421, %v3422
      %v3424 = vrot.slane %v3423, 1
      %v3425 = vmax.f32 %v3423, %v3424
      %v3426 = vsel %vm1259, %v3386, -inf
      %v3427 = vrot.slane %v3426, 4
      %v3428 = vmax.f32 %v3426, %v3427
      %v3429 = vrot.slane %v3428, 2
      %v3430 = vmax.f32 %v3428, %v3429
      %v3431 = vrot.slane %v3430, 1
      %v3432 = vmax.f32 %v3430, %v3431
      %v3433 = vsel %vm1259, %v3387, -inf
      %v3434 = vrot.slane %v3433, 4
      %v3435 = vmax.f32 %v3433, %v3434
      %v3436 = vrot.slane %v3435, 2
      %v3437 = vmax.f32 %v3435, %v3436
      %v3438 = vrot.slane %v3437, 1
      %v3439 = vmax.f32 %v3437, %v3438
      %v3440 = vsel %vm1259, %v3388, -inf
      %v3441 = vrot.slane %v3440, 4
      %v3442 = vmax.f32 %v3440, %v3441
      %v3443 = vrot.slane %v3442, 2
      %v3444 = vmax.f32 %v3442, %v3443
      %v3445 = vrot.slane %v3444, 1
      %v3446 = vmax.f32 %v3444, %v3445
      %v3447 = vsel %vm1259, %v3389, -inf
      %v3448 = vrot.slane %v3447, 4
      %v3449 = vmax.f32 %v3447, %v3448
      %v3450 = vrot.slane %v3449, 2
      %v3451 = vmax.f32 %v3449, %v3450
      %v3452 = vrot.slane %v3451, 1
      %v3453 = vmax.f32 %v3451, %v3452
      %v3454 = vsel %vm1259, %v3390, -inf
      %v3455 = vrot.slane %v3454, 4
      %v3456 = vmax.f32 %v3454, %v3455
      %v3457 = vrot.slane %v3456, 2
      %v3458 = vmax.f32 %v3456, %v3457
      %v3459 = vrot.slane %v3458, 1
      %v3460 = vmax.f32 %v3458, %v3459
      %v3461 = vsel %vm1259, %v3391, -inf
      %v3462 = vrot.slane %v3461, 4
      %v3463 = vmax.f32 %v3461, %v3462
      %v3464 = vrot.slane %v3463, 2
      %v3465 = vmax.f32 %v3463, %v3464
      %v3466 = vrot.slane %v3465, 1
      %v3467 = vmax.f32 %v3465, %v3466
      %v3468 = vsel %vm1259, %v3392, -inf
      %v3469 = vrot.slane %v3468, 4
      %v3470 = vmax.f32 %v3468, %v3469
      %v3471 = vrot.slane %v3470, 2
      %v3472 = vmax.f32 %v3470, %v3471
      %v3473 = vrot.slane %v3472, 1
      %v3474 = vmax.f32 %v3472, %v3473
      %v3475 = vsel %vm1259, %v3393, -inf
      %v3476 = vrot.slane %v3475, 4
      %v3477 = vmax.f32 %v3475, %v3476
      %v3478 = vrot.slane %v3477, 2
      %v3479 = vmax.f32 %v3477, %v3478
      %v3480 = vrot.slane %v3479, 1
      %v3481 = vmax.f32 %v3479, %v3480
      %v3482 = vsel %vm1259, %v3394, -inf
      %v3483 = vrot.slane %v3482, 4
      %v3484 = vmax.f32 %v3482, %v3483
      %v3485 = vrot.slane %v3484, 2
      %v3486 = vmax.f32 %v3484, %v3485
      %v3487 = vrot.slane %v3486, 1
      %v3488 = vmax.f32 %v3486, %v3487
      %v3489 = vsel %vm1259, %v3395, -inf
      %v3490 = vrot.slane %v3489, 4
      %v3491 = vmax.f32 %v3489, %v3490
      %v3492 = vrot.slane %v3491, 2
      %v3493 = vmax.f32 %v3491, %v3492
      %v3494 = vrot.slane %v3493, 1
      %v3495 = vmax.f32 %v3493, %v3494
      %v3496 = vsel %vm1259, %v3396, -inf
      %v3497 = vrot.slane %v3496, 4
      %v3498 = vmax.f32 %v3496, %v3497
      %v3499 = vrot.slane %v3498, 2
      %v3500 = vmax.f32 %v3498, %v3499
      %v3501 = vrot.slane %v3500, 1
      %v3502 = vmax.f32 %v3500, %v3501
      %v3503 = vsel %vm1259, %v3397, -inf
      %v3504 = vrot.slane %v3503, 4
      %v3505 = vmax.f32 %v3503, %v3504
      %v3506 = vrot.slane %v3505, 2
      %v3507 = vmax.f32 %v3505, %v3506
      %v3508 = vrot.slane %v3507, 1
      %v3509 = vmax.f32 %v3507, %v3508
      %3510 = vst.msk [vmem:[#allocation2 + $0xe] sm:$0x1] %vm1226, %v3404
      %3511 = vst.msk [vmem:[#allocation2 + $0x1e] sm:$0x1] %vm1226, %v3411
      %3512 = vst.msk [vmem:[#allocation2 + $0x2e] sm:$0x1] %vm1226, %v3418
      %3513 = vst.msk [vmem:[#allocation2 + $0x3e] sm:$0x1] %vm1226, %v3425
      %3514 = vst.msk [vmem:[#allocation2 + $0x4e] sm:$0x1] %vm1226, %v3432
      %3515 = vst.msk [vmem:[#allocation2 + $0x5e] sm:$0x1] %vm1226, %v3439
      %3516 = vst.msk [vmem:[#allocation2 + $0x6e] sm:$0x1] %vm1226, %v3446
      %3517 = vst.msk [vmem:[#allocation2 + $0x7e] sm:$0x1] %vm1226, %v3453
      %3518 = vst.msk [vmem:[#allocation2 + $0x8e] sm:$0x1] %vm1226, %v3460
      %3519 = vst.msk [vmem:[#allocation2 + $0x9e] sm:$0x1] %vm1226, %v3467
      %3520 = vst.msk [vmem:[#allocation2 + $0xae] sm:$0x1] %vm1226, %v3474
      %3521 = vst.msk [vmem:[#allocation2 + $0xbe] sm:$0x1] %vm1226, %v3481
      %3522 = vst.msk [vmem:[#allocation2 + $0xce] sm:$0x1] %vm1226, %v3488
      %3523 = vst.msk [vmem:[#allocation2 + $0xde] sm:$0x1] %vm1226, %v3495
      %3524 = vst.msk [vmem:[#allocation2 + $0xee] sm:$0x1] %vm1226, %v3502
      %3525 = vst.msk [vmem:[#allocation2 + $0xfe] sm:$0x1] %vm1226, %v3509
      %v3526 = vld [vmem:[#allocation3 + $0xd] sm:$0x7]
      %v3527 = vld [vmem:[#allocation3 + $0x1d] sm:$0x7]
      %v3528 = vld [vmem:[#allocation3 + $0x2d] sm:$0x7]
      %v3529 = vld [vmem:[#allocation3 + $0x3d] sm:$0x7]
      %v3530 = vld [vmem:[#allocation3 + $0x4d] sm:$0x7]
      %v3531 = vld [vmem:[#allocation3 + $0x5d] sm:$0x7]
      %v3532 = vld [vmem:[#allocation3 + $0x6d] sm:$0x7]
      %v3533 = vld [vmem:[#allocation3 + $0x7d] sm:$0x7]
      %v3534 = vld [vmem:[#allocation3 + $0x8d] sm:$0x7]
      %v3535 = vld [vmem:[#allocation3 + $0x9d] sm:$0x7]
      %v3536 = vld [vmem:[#allocation3 + $0xad] sm:$0x7]
      %v3537 = vld [vmem:[#allocation3 + $0xbd] sm:$0x7]
      %v3538 = vld [vmem:[#allocation3 + $0xcd] sm:$0x7]
      %v3539 = vld [vmem:[#allocation3 + $0xdd] sm:$0x7]
      %v3540 = vld [vmem:[#allocation3 + $0xed] sm:$0x7]
      %v3541 = vld [vmem:[#allocation3 + $0xfd] sm:$0x7]
      %v3542 = vsel %vm1113, %v3526, -inf
      %v3543 = vrot.slane %v3542, 4
      %v3544 = vmax.f32 %v3542, %v3543
      %v3545 = vrot.slane %v3544, 2
      %v3546 = vmax.f32 %v3544, %v3545
      %v3547 = vrot.slane %v3546, 1
      %v3548 = vmax.f32 %v3546, %v3547
      %v3549 = vsel %vm1113, %v3527, -inf
      %v3550 = vrot.slane %v3549, 4
      %v3551 = vmax.f32 %v3549, %v3550
      %v3552 = vrot.slane %v3551, 2
      %v3553 = vmax.f32 %v3551, %v3552
      %v3554 = vrot.slane %v3553, 1
      %v3555 = vmax.f32 %v3553, %v3554
      %v3556 = vsel %vm1113, %v3528, -inf
      %v3557 = vrot.slane %v3556, 4
      %v3558 = vmax.f32 %v3556, %v3557
      %v3559 = vrot.slane %v3558, 2
      %v3560 = vmax.f32 %v3558, %v3559
      %v3561 = vrot.slane %v3560, 1
      %v3562 = vmax.f32 %v3560, %v3561
      %v3563 = vsel %vm1113, %v3529, -inf
      %v3564 = vrot.slane %v3563, 4
      %v3565 = vmax.f32 %v3563, %v3564
      %v3566 = vrot.slane %v3565, 2
      %v3567 = vmax.f32 %v3565, %v3566
      %v3568 = vrot.slane %v3567, 1
      %v3569 = vmax.f32 %v3567, %v3568
      %v3570 = vsel %vm1113, %v3530, -inf
      %v3571 = vrot.slane %v3570, 4
      %v3572 = vmax.f32 %v3570, %v3571
      %v3573 = vrot.slane %v3572, 2
      %v3574 = vmax.f32 %v3572, %v3573
      %v3575 = vrot.slane %v3574, 1
      %v3576 = vmax.f32 %v3574, %v3575
      %v3577 = vsel %vm1113, %v3531, -inf
      %v3578 = vrot.slane %v3577, 4
      %v3579 = vmax.f32 %v3577, %v3578
      %v3580 = vrot.slane %v3579, 2
      %v3581 = vmax.f32 %v3579, %v3580
      %v3582 = vrot.slane %v3581, 1
      %v3583 = vmax.f32 %v3581, %v3582
      %v3584 = vsel %vm1113, %v3532, -inf
      %v3585 = vrot.slane %v3584, 4
      %v3586 = vmax.f32 %v3584, %v3585
      %v3587 = vrot.slane %v3586, 2
      %v3588 = vmax.f32 %v3586, %v3587
      %v3589 = vrot.slane %v3588, 1
      %v3590 = vmax.f32 %v3588, %v3589
      %v3591 = vsel %vm1113, %v3533, -inf
      %v3592 = vrot.slane %v3591, 4
      %v3593 = vmax.f32 %v3591, %v3592
      %v3594 = vrot.slane %v3593, 2
      %v3595 = vmax.f32 %v3593, %v3594
      %v3596 = vrot.slane %v3595, 1
      %v3597 = vmax.f32 %v3595, %v3596
      %v3598 = vsel %vm1113, %v3534, -inf
      %v3599 = vrot.slane %v3598, 4
      %v3600 = vmax.f32 %v3598, %v3599
      %v3601 = vrot.slane %v3600, 2
      %v3602 = vmax.f32 %v3600, %v3601
      %v3603 = vrot.slane %v3602, 1
      %v3604 = vmax.f32 %v3602, %v3603
      %v3605 = vsel %vm1113, %v3535, -inf
      %v3606 = vrot.slane %v3605, 4
      %v3607 = vmax.f32 %v3605, %v3606
      %v3608 = vrot.slane %v3607, 2
      %v3609 = vmax.f32 %v3607, %v3608
      %v3610 = vrot.slane %v3609, 1
      %v3611 = vmax.f32 %v3609, %v3610
      %v3612 = vsel %vm1113, %v3536, -inf
      %v3613 = vrot.slane %v3612, 4
      %v3614 = vmax.f32 %v3612, %v3613
      %v3615 = vrot.slane %v3614, 2
      %v3616 = vmax.f32 %v3614, %v3615
      %v3617 = vrot.slane %v3616, 1
      %v3618 = vmax.f32 %v3616, %v3617
      %v3619 = vsel %vm1113, %v3537, -inf
      %v3620 = vrot.slane %v3619, 4
      %v3621 = vmax.f32 %v3619, %v3620
      %v3622 = vrot.slane %v3621, 2
      %v3623 = vmax.f32 %v3621, %v3622
      %v3624 = vrot.slane %v3623, 1
      %v3625 = vmax.f32 %v3623, %v3624
      %v3626 = vsel %vm1113, %v3538, -inf
      %v3627 = vrot.slane %v3626, 4
      %v3628 = vmax.f32 %v3626, %v3627
      %v3629 = vrot.slane %v3628, 2
      %v3630 = vmax.f32 %v3628, %v3629
      %v3631 = vrot.slane %v3630, 1
      %v3632 = vmax.f32 %v3630, %v3631
      %v3633 = vsel %vm1113, %v3539, -inf
      %v3634 = vrot.slane %v3633, 4
      %v3635 = vmax.f32 %v3633, %v3634
      %v3636 = vrot.slane %v3635, 2
      %v3637 = vmax.f32 %v3635, %v3636
      %v3638 = vrot.slane %v3637, 1
      %v3639 = vmax.f32 %v3637, %v3638
      %v3640 = vsel %vm1113, %v3540, -inf
      %v3641 = vrot.slane %v3640, 4
      %v3642 = vmax.f32 %v3640, %v3641
      %v3643 = vrot.slane %v3642, 2
      %v3644 = vmax.f32 %v3642, %v3643
      %v3645 = vrot.slane %v3644, 1
      %v3646 = vmax.f32 %v3644, %v3645
      %v3647 = vsel %vm1113, %v3541, -inf
      %v3648 = vrot.slane %v3647, 4
      %v3649 = vmax.f32 %v3647, %v3648
      %v3650 = vrot.slane %v3649, 2
      %v3651 = vmax.f32 %v3649, %v3650
      %v3652 = vrot.slane %v3651, 1
      %v3653 = vmax.f32 %v3651, %v3652
      %3654 = vst.msk [vmem:[#allocation2 + $0xf] sm:$0x1] %vm1226, %v3548
      %3655 = vst.msk [vmem:[#allocation2 + $0x1f] sm:$0x1] %vm1226, %v3555
      %3656 = vst.msk [vmem:[#allocation2 + $0x2f] sm:$0x1] %vm1226, %v3562
      %3657 = vst.msk [vmem:[#allocation2 + $0x3f] sm:$0x1] %vm1226, %v3569
      %3658 = vst.msk [vmem:[#allocation2 + $0x4f] sm:$0x1] %vm1226, %v3576
      %3659 = vst.msk [vmem:[#allocation2 + $0x5f] sm:$0x1] %vm1226, %v3583
      %3660 = vst.msk [vmem:[#allocation2 + $0x6f] sm:$0x1] %vm1226, %v3590
      %3661 = vst.msk [vmem:[#allocation2 + $0x7f] sm:$0x1] %vm1226, %v3597
      %3662 = vst.msk [vmem:[#allocation2 + $0x8f] sm:$0x1] %vm1226, %v3604
      %3663 = vst.msk [vmem:[#allocation2 + $0x9f] sm:$0x1] %vm1226, %v3611
      %3664 = vst.msk [vmem:[#allocation2 + $0xaf] sm:$0x1] %vm1226, %v3618
      %3665 = vst.msk [vmem:[#allocation2 + $0xbf] sm:$0x1] %vm1226, %v3625
      %3666 = vst.msk [vmem:[#allocation2 + $0xcf] sm:$0x1] %vm1226, %v3632
      %3667 = vst.msk [vmem:[#allocation2 + $0xdf] sm:$0x1] %vm1226, %v3639
      %3668 = vst.msk [vmem:[#allocation2 + $0xef] sm:$0x1] %vm1226, %v3646
      %3669 = vst.msk [vmem:[#allocation2 + $0xff] sm:$0x1] %vm1226, %v3653
      %v3670 = vld [vmem:[#allocation4] sm:$0xff]
      %v3671 = vld [vmem:[#allocation4 + $0x8] sm:$0xff]
      %v3672 = vld [vmem:[#allocation4 + $0x10] sm:$0xff]
      %v3673 = vld [vmem:[#allocation4 + $0x18] sm:$0xff]
      %v3674 = vld [vmem:[#allocation4 + $0x20] sm:$0xff]
      %v3675 = vld [vmem:[#allocation4 + $0x28] sm:$0xff]
      %v3676 = vld [vmem:[#allocation4 + $0x30] sm:$0xff]
      %v3677 = vld [vmem:[#allocation4 + $0x38] sm:$0xff]
      %v3678 = vld [vmem:[#allocation4 + $0x40] sm:$0xff]
      %v3679 = vld [vmem:[#allocation4 + $0x48] sm:$0xff]
      %v3680 = vld [vmem:[#allocation4 + $0x50] sm:$0xff]
      %v3681 = vld [vmem:[#allocation4 + $0x58] sm:$0xff]
      %v3682 = vld [vmem:[#allocation4 + $0x60] sm:$0xff]
      %v3683 = vld [vmem:[#allocation4 + $0x68] sm:$0xff]
      %v3684 = vld [vmem:[#allocation4 + $0x70] sm:$0xff]
      %v3685 = vld [vmem:[#allocation4 + $0x78] sm:$0xff]
      %v3686 = vld [vmem:[#allocation4 + $0x80] sm:$0xff]
      %v3687 = vld [vmem:[#allocation4 + $0x88] sm:$0xff]
      %v3688 = vld [vmem:[#allocation4 + $0x90] sm:$0xff]
      %v3689 = vld [vmem:[#allocation4 + $0x98] sm:$0xff]
      %v3690 = vld [vmem:[#allocation4 + $0xa0] sm:$0xff]
      %v3691 = vld [vmem:[#allocation4 + $0xa8] sm:$0xff]
      %v3692 = vld [vmem:[#allocation4 + $0xb0] sm:$0xff]
      %v3693 = vld [vmem:[#allocation4 + $0xb8] sm:$0xff]
      %v3694 = vld [vmem:[#allocation4 + $0xc0] sm:$0xff]
      %v3695 = vld [vmem:[#allocation4 + $0xc8] sm:$0xff]
      %v3696 = vld [vmem:[#allocation4 + $0xd0] sm:$0xff]
      %v3697 = vld [vmem:[#allocation4 + $0xd8] sm:$0xff]
      %v3698 = vld [vmem:[#allocation4 + $0xe0] sm:$0xff]
      %v3699 = vld [vmem:[#allocation4 + $0xe8] sm:$0xff]
      %v3700 = vld [vmem:[#allocation4 + $0xf0] sm:$0xff]
      %v3701 = vld [vmem:[#allocation4 + $0xf8] sm:$0xff]
      %v3702 = vld [vmem:[#allocation2] sm:$0xff]
      %v3703 = vld [vmem:[#allocation2 + $0x8] sm:$0xff]
      %v3704 = vld [vmem:[#allocation2 + $0x10] sm:$0xff]
      %v3705 = vld [vmem:[#allocation2 + $0x18] sm:$0xff]
      %v3706 = vld [vmem:[#allocation2 + $0x20] sm:$0xff]
      %v3707 = vld [vmem:[#allocation2 + $0x28] sm:$0xff]
      %v3708 = vld [vmem:[#allocation2 + $0x30] sm:$0xff]
      %v3709 = vld [vmem:[#allocation2 + $0x38] sm:$0xff]
      %v3710 = vld [vmem:[#allocation2 + $0x40] sm:$0xff]
      %v3711 = vld [vmem:[#allocation2 + $0x48] sm:$0xff]
      %v3712 = vld [vmem:[#allocation2 + $0x50] sm:$0xff]
      %v3713 = vld [vmem:[#allocation2 + $0x58] sm:$0xff]
      %v3714 = vld [vmem:[#allocation2 + $0x60] sm:$0xff]
      %v3715 = vld [vmem:[#allocation2 + $0x68] sm:$0xff]
      %v3716 = vld [vmem:[#allocation2 + $0x70] sm:$0xff]
      %v3717 = vld [vmem:[#allocation2 + $0x78] sm:$0xff]
      %v3718 = vld [vmem:[#allocation2 + $0x80] sm:$0xff]
      %v3719 = vld [vmem:[#allocation2 + $0x88] sm:$0xff]
      %v3720 = vld [vmem:[#allocation2 + $0x90] sm:$0xff]
      %v3721 = vld [vmem:[#allocation2 + $0x98] sm:$0xff]
      %v3722 = vld [vmem:[#allocation2 + $0xa0] sm:$0xff]
      %v3723 = vld [vmem:[#allocation2 + $0xa8] sm:$0xff]
      %v3724 = vld [vmem:[#allocation2 + $0xb0] sm:$0xff]
      %v3725 = vld [vmem:[#allocation2 + $0xb8] sm:$0xff]
      %v3726 = vld [vmem:[#allocation2 + $0xc0] sm:$0xff]
      %v3727 = vld [vmem:[#allocation2 + $0xc8] sm:$0xff]
      %v3728 = vld [vmem:[#allocation2 + $0xd0] sm:$0xff]
      %v3729 = vld [vmem:[#allocation2 + $0xd8] sm:$0xff]
      %v3730 = vld [vmem:[#allocation2 + $0xe0] sm:$0xff]
      %v3731 = vld [vmem:[#allocation2 + $0xe8] sm:$0xff]
      %v3732 = vld [vmem:[#allocation2 + $0xf0] sm:$0xff]
      %v3733 = vld [vmem:[#allocation2 + $0xf8] sm:$0xff]
      %s3734 = scalar_lea.vmem %s232, 4
      %v3735 = vld [vmem:[%s3734] sm:$0x3]
      %v3737 = vsel %vm307, %v3702, 0
      %v3740 = vsel %vm307, %v3703, 0
      %v3743 = vsel %vm307, %v3704, 0
      %v3746 = vsel %vm307, %v3705, 0
      %v3749 = vsel %vm307, %v3706, 0
      %v3752 = vsel %vm307, %v3707, 0
      %v3755 = vsel %vm307, %v3708, 0
      %v3758 = vsel %vm307, %v3709, 0
      %v3761 = vsel %vm307, %v3710, 0
      %v3764 = vsel %vm307, %v3711, 0
      %v3767 = vsel %vm307, %v3712, 0
      %v3770 = vsel %vm307, %v3713, 0
      %v3773 = vsel %vm307, %v3714, 0
      %v3776 = vsel %vm307, %v3715, 0
      %v3779 = vsel %vm307, %v3716, 0
      %v3782 = vsel %vm307, %v3717, 0
      %v3785 = vsel %vm307, %v3718, 0
      %v3788 = vsel %vm307, %v3719, 0
      %v3791 = vsel %vm307, %v3720, 0
      %v3794 = vsel %vm307, %v3721, 0
      %v3797 = vsel %vm307, %v3722, 0
      %v3800 = vsel %vm307, %v3723, 0
      %v3803 = vsel %vm307, %v3724, 0
      %v3806 = vsel %vm307, %v3725, 0
      %v3809 = vsel %vm307, %v3726, 0
      %v3812 = vsel %vm307, %v3727, 0
      %v3815 = vsel %vm307, %v3728, 0
      %v3818 = vsel %vm307, %v3729, 0
      %v3821 = vsel %vm307, %v3730, 0
      %v3824 = vsel %vm307, %v3731, 0
      %v3827 = vsel %vm307, %v3732, 0
      %v3830 = vsel %vm307, %v3733, 0
      %v3833 = vsel %vm469, %v3735, 0
      %3835 = vmatprep.subr.mxu0 0.0
      %3836 = vmatpush1.msra.mxu0 0.0
      %3837 = vmatprep.subr.mxu0 0.0
      %3838 = vmatpush1.msra.mxu0 0.0
      %3839 = vmatprep.subr.mxu0 0.0
      %3840 = vmatpush1.msra.mxu0 0.0
      %3841 = vmatprep.subr.mxu0 0.0
      %3842 = vmatpush1.msra.mxu0 0.0
      %3843 = vmatprep.subr.mxu0 0.0
      %3844 = vmatpush1.msra.mxu0 0.0
      %3845 = vmatprep.subr.mxu0 0.0
      %3846 = vmatpush1.msra.mxu0 0.0
      %3847 = vmatprep.subr.mxu0 0.0
      %3848 = vmatpush1.msra.mxu0 0.0
      %3849 = vmatprep.subr.mxu0 0.0
      %3850 = vmatpush1.msra.mxu0 0.0
      %3851 = vmatprep.subr.mxu0 0.0
      %3852 = vmatpush1.msra.mxu0 0.0
      %3853 = vmatprep.subr.mxu0 0.0
      %3854 = vmatpush1.msra.mxu0 0.0
      %3855 = vmatprep.subr.mxu0 0.0
      %3856 = vmatpush1.msra.mxu0 0.0
      %3857 = vmatprep.subr.mxu0 0.0
      %3858 = vmatpush1.msra.mxu0 0.0
      %3859 = vmatprep.subr.mxu0 0.0
      %3860 = vmatpush1.msra.mxu0 0.0
      %3861 = vmatprep.subr.mxu0 0.0
      %3862 = vmatpush1.msra.mxu0 0.0
      %3863 = vmatprep.subr.mxu0 0.0
      %3864 = vmatpush1.msra.mxu0 0.0
      %3865 = vmatprep.subr.mxu0 0.0
      %3866 = vmatpush1.msra.mxu0 %v3833
      %3867 = vmatprep.subr.mxu0 0.0
      %3868 = vmatpush2.msra.mxu0 0.0
      %3869 = vmatprep.subr.mxu0 0.0
      %3870 = vmatpush2.msra.mxu0 0.0
      %3871 = vmatprep.subr.mxu0 0.0
      %3872 = vmatpush2.msra.mxu0 0.0
      %3873 = vmatprep.subr.mxu0 0.0
      %3874 = vmatpush2.msra.mxu0 0.0
      %3875 = vmatprep.subr.mxu0 0.0
      %3876 = vmatpush2.msra.mxu0 0.0
      %3877 = vmatprep.subr.mxu0 0.0
      %3878 = vmatpush2.msra.mxu0 0.0
      %3879 = vmatprep.subr.mxu0 0.0
      %3880 = vmatpush2.msra.mxu0 0.0
      %3881 = vmatprep.subr.mxu0 0.0
      %3882 = vmatpush2.msra.mxu0 0.0
      %3883 = vmatprep.subr.mxu0 0.0
      %3884 = vmatpush2.msra.mxu0 0.0
      %3885 = vmatprep.subr.mxu0 0.0
      %3886 = vmatpush2.msra.mxu0 0.0
      %3887 = vmatprep.subr.mxu0 0.0
      %3888 = vmatpush2.msra.mxu0 0.0
      %3889 = vmatprep.subr.mxu0 0.0
      %3890 = vmatpush2.msra.mxu0 0.0
      %3891 = vmatprep.subr.mxu0 0.0
      %3892 = vmatpush2.msra.mxu0 0.0
      %3893 = vmatprep.subr.mxu0 0.0
      %3894 = vmatpush2.msra.mxu0 0.0
      %3895 = vmatprep.subr.mxu0 0.0
      %3896 = vmatpush2.msra.mxu0 0.0
      %3897 = vmatprep.subr.mxu0 0.0
      %3898 = vmatpush2.msra.mxu0 0.0
      %3899 = vmatprep.mubr.f32.mxu0 0.0
      %3900 = vmatmul.mubr.f32.gmra.mxu0 %v3737
      %v3901 = vpop.f32.mrf.mxu0
      %v3902 = vadd.f32 0.0, %v3901
      %v3903 = vpop.f32.mrf.mxu0
      %3904 = vmatprep.mubr.f32.mxu0 0.0
      %3905 = vmatmul.mubr.f32.gmra.mxu0 %v3740
      %v3906 = vpop.f32.mrf.mxu0
      %v3907 = vadd.f32 0.0, %v3906
      %v3908 = vpop.f32.mrf.mxu0
      %3909 = vmatprep.mubr.f32.mxu0 0.0
      %3910 = vmatmul.mubr.f32.gmra.mxu0 %v3743
      %v3911 = vpop.f32.mrf.mxu0
      %v3912 = vadd.f32 0.0, %v3911
      %v3913 = vpop.f32.mrf.mxu0
      %3914 = vmatprep.mubr.f32.mxu0 0.0
      %3915 = vmatmul.mubr.f32.gmra.mxu0 %v3746
      %v3916 = vpop.f32.mrf.mxu0
      %v3917 = vadd.f32 0.0, %v3916
      %v3918 = vpop.f32.mrf.mxu0
      %3919 = vmatprep.mubr.f32.mxu0 0.0
      %3920 = vmatmul.mubr.f32.gmra.mxu0 %v3749
      %v3921 = vpop.f32.mrf.mxu0
      %v3922 = vadd.f32 0.0, %v3921
      %v3923 = vpop.f32.mrf.mxu0
      %3924 = vmatprep.mubr.f32.mxu0 0.0
      %3925 = vmatmul.mubr.f32.gmra.mxu0 %v3752
      %v3926 = vpop.f32.mrf.mxu0
      %v3927 = vadd.f32 0.0, %v3926
      %v3928 = vpop.f32.mrf.mxu0
      %3929 = vmatprep.mubr.f32.mxu0 0.0
      %3930 = vmatmul.mubr.f32.gmra.mxu0 %v3755
      %v3931 = vpop.f32.mrf.mxu0
      %v3932 = vadd.f32 0.0, %v3931
      %v3933 = vpop.f32.mrf.mxu0
      %3934 = vmatprep.mubr.f32.mxu0 0.0
      %3935 = vmatmul.mubr.f32.gmra.mxu0 %v3758
      %v3936 = vpop.f32.mrf.mxu0
      %v3937 = vadd.f32 0.0, %v3936
      %v3938 = vpop.f32.mrf.mxu0
      %3939 = vmatprep.mubr.f32.mxu0 0.0
      %3940 = vmatmul.mubr.f32.gmra.mxu0 %v3761
      %v3941 = vpop.f32.mrf.mxu0
      %v3942 = vadd.f32 0.0, %v3941
      %v3943 = vpop.f32.mrf.mxu0
      %3944 = vmatprep.mubr.f32.mxu0 0.0
      %3945 = vmatmul.mubr.f32.gmra.mxu0 %v3764
      %v3946 = vpop.f32.mrf.mxu0
      %v3947 = vadd.f32 0.0, %v3946
      %v3948 = vpop.f32.mrf.mxu0
      %3949 = vmatprep.mubr.f32.mxu0 0.0
      %3950 = vmatmul.mubr.f32.gmra.mxu0 %v3767
      %v3951 = vpop.f32.mrf.mxu0
      %v3952 = vadd.f32 0.0, %v3951
      %v3953 = vpop.f32.mrf.mxu0
      %3954 = vmatprep.mubr.f32.mxu0 0.0
      %3955 = vmatmul.mubr.f32.gmra.mxu0 %v3770
      %v3956 = vpop.f32.mrf.mxu0
      %v3957 = vadd.f32 0.0, %v3956
      %v3958 = vpop.f32.mrf.mxu0
      %3959 = vmatprep.mubr.f32.mxu0 0.0
      %3960 = vmatmul.mubr.f32.gmra.mxu0 %v3773
      %v3961 = vpop.f32.mrf.mxu0
      %v3962 = vadd.f32 0.0, %v3961
      %v3963 = vpop.f32.mrf.mxu0
      %3964 = vmatprep.mubr.f32.mxu0 0.0
      %3965 = vmatmul.mubr.f32.gmra.mxu0 %v3776
      %v3966 = vpop.f32.mrf.mxu0
      %v3967 = vadd.f32 0.0, %v3966
      %v3968 = vpop.f32.mrf.mxu0
      %3969 = vmatprep.mubr.f32.mxu0 0.0
      %3970 = vmatmul.mubr.f32.gmra.mxu0 %v3779
      %v3971 = vpop.f32.mrf.mxu0
      %v3972 = vadd.f32 0.0, %v3971
      %v3973 = vpop.f32.mrf.mxu0
      %3974 = vmatprep.mubr.f32.mxu0 0.0
      %3975 = vmatmul.mubr.f32.gmra.mxu0 %v3782
      %v3976 = vpop.f32.mrf.mxu0
      %v3977 = vadd.f32 0.0, %v3976
      %v3978 = vpop.f32.mrf.mxu0
      %3979 = vmatprep.mubr.f32.mxu0 0.0
      %3980 = vmatmul.mubr.f32.gmra.mxu0 %v3785
      %v3981 = vpop.f32.mrf.mxu0
      %v3982 = vadd.f32 0.0, %v3981
      %v3983 = vpop.f32.mrf.mxu0
      %3984 = vmatprep.mubr.f32.mxu0 0.0
      %3985 = vmatmul.mubr.f32.gmra.mxu0 %v3788
      %v3986 = vpop.f32.mrf.mxu0
      %v3987 = vadd.f32 0.0, %v3986
      %v3988 = vpop.f32.mrf.mxu0
      %3989 = vmatprep.mubr.f32.mxu0 0.0
      %3990 = vmatmul.mubr.f32.gmra.mxu0 %v3791
      %v3991 = vpop.f32.mrf.mxu0
      %v3992 = vadd.f32 0.0, %v3991
      %v3993 = vpop.f32.mrf.mxu0
      %3994 = vmatprep.mubr.f32.mxu0 0.0
      %3995 = vmatmul.mubr.f32.gmra.mxu0 %v3794
      %v3996 = vpop.f32.mrf.mxu0
      %v3997 = vadd.f32 0.0, %v3996
      %v3998 = vpop.f32.mrf.mxu0
      %3999 = vmatprep.mubr.f32.mxu0 0.0
      %4000 = vmatmul.mubr.f32.gmra.mxu0 %v3797
      %v4001 = vpop.f32.mrf.mxu0
      %v4002 = vadd.f32 0.0, %v4001
      %v4003 = vpop.f32.mrf.mxu0
      %4004 = vmatprep.mubr.f32.mxu0 0.0
      %4005 = vmatmul.mubr.f32.gmra.mxu0 %v3800
      %v4006 = vpop.f32.mrf.mxu0
      %v4007 = vadd.f32 0.0, %v4006
      %v4008 = vpop.f32.mrf.mxu0
      %4009 = vmatprep.mubr.f32.mxu0 0.0
      %4010 = vmatmul.mubr.f32.gmra.mxu0 %v3803
      %v4011 = vpop.f32.mrf.mxu0
      %v4012 = vadd.f32 0.0, %v4011
      %v4013 = vpop.f32.mrf.mxu0
      %4014 = vmatprep.mubr.f32.mxu0 0.0
      %4015 = vmatmul.mubr.f32.gmra.mxu0 %v3806
      %v4016 = vpop.f32.mrf.mxu0
      %v4017 = vadd.f32 0.0, %v4016
      %v4018 = vpop.f32.mrf.mxu0
      %4019 = vmatprep.mubr.f32.mxu0 0.0
      %4020 = vmatmul.mubr.f32.gmra.mxu0 %v3809
      %v4021 = vpop.f32.mrf.mxu0
      %v4022 = vadd.f32 0.0, %v4021
      %v4023 = vpop.f32.mrf.mxu0
      %4024 = vmatprep.mubr.f32.mxu0 0.0
      %4025 = vmatmul.mubr.f32.gmra.mxu0 %v3812
      %v4026 = vpop.f32.mrf.mxu0
      %v4027 = vadd.f32 0.0, %v4026
      %v4028 = vpop.f32.mrf.mxu0
      %4029 = vmatprep.mubr.f32.mxu0 0.0
      %4030 = vmatmul.mubr.f32.gmra.mxu0 %v3815
      %v4031 = vpop.f32.mrf.mxu0
      %v4032 = vadd.f32 0.0, %v4031
      %v4033 = vpop.f32.mrf.mxu0
      %4034 = vmatprep.mubr.f32.mxu0 0.0
      %4035 = vmatmul.mubr.f32.gmra.mxu0 %v3818
      %v4036 = vpop.f32.mrf.mxu0
      %v4037 = vadd.f32 0.0, %v4036
      %v4038 = vpop.f32.mrf.mxu0
      %4039 = vmatprep.mubr.f32.mxu0 0.0
      %4040 = vmatmul.mubr.f32.gmra.mxu0 %v3821
      %v4041 = vpop.f32.mrf.mxu0
      %v4042 = vadd.f32 0.0, %v4041
      %v4043 = vpop.f32.mrf.mxu0
      %4044 = vmatprep.mubr.f32.mxu0 0.0
      %4045 = vmatmul.mubr.f32.gmra.mxu0 %v3824
      %v4046 = vpop.f32.mrf.mxu0
      %v4047 = vadd.f32 0.0, %v4046
      %v4048 = vpop.f32.mrf.mxu0
      %4049 = vmatprep.mubr.f32.mxu0 0.0
      %4050 = vmatmul.mubr.f32.gmra.mxu0 %v3827
      %v4051 = vpop.f32.mrf.mxu0
      %v4052 = vadd.f32 0.0, %v4051
      %v4053 = vpop.f32.mrf.mxu0
      %4054 = vmatprep.mubr.f32.mxu0 0.0
      %4055 = vmatmul.mubr.f32.gmra.mxu0 %v3830
      %v4056 = vpop.f32.mrf.mxu0
      %v4057 = vadd.f32 0.0, %v4056
      %v4058 = vpop.f32.mrf.mxu0
      %4059 = vdwg.mxu0
      %v4060 = vadd.f32 %v3670, %v3902
      %v4061 = vadd.f32 %v3671, %v3907
      %v4062 = vadd.f32 %v3672, %v3912
      %v4063 = vadd.f32 %v3673, %v3917
      %v4064 = vadd.f32 %v3674, %v3922
      %v4065 = vadd.f32 %v3675, %v3927
      %v4066 = vadd.f32 %v3676, %v3932
      %v4067 = vadd.f32 %v3677, %v3937
      %v4068 = vadd.f32 %v3678, %v3942
      %v4069 = vadd.f32 %v3679, %v3947
      %v4070 = vadd.f32 %v3680, %v3952
      %v4071 = vadd.f32 %v3681, %v3957
      %v4072 = vadd.f32 %v3682, %v3962
      %v4073 = vadd.f32 %v3683, %v3967
      %v4074 = vadd.f32 %v3684, %v3972
      %v4075 = vadd.f32 %v3685, %v3977
      %v4076 = vadd.f32 %v3686, %v3982
      %v4077 = vadd.f32 %v3687, %v3987
      %v4078 = vadd.f32 %v3688, %v3992
      %v4079 = vadd.f32 %v3689, %v3997
      %v4080 = vadd.f32 %v3690, %v4002
      %v4081 = vadd.f32 %v3691, %v4007
      %v4082 = vadd.f32 %v3692, %v4012
      %v4083 = vadd.f32 %v3693, %v4017
      %v4084 = vadd.f32 %v3694, %v4022
      %v4085 = vadd.f32 %v3695, %v4027
      %v4086 = vadd.f32 %v3696, %v4032
      %v4087 = vadd.f32 %v3697, %v4037
      %v4088 = vadd.f32 %v3698, %v4042
      %v4089 = vadd.f32 %v3699, %v4047
      %v4090 = vadd.f32 %v3700, %v4052
      %v4091 = vadd.f32 %v3701, %v4057
      %4092 = vst.msk [vmem:[#allocation4] sm:$0xff] %vm730, %v4060
      %4093 = vst.msk [vmem:[#allocation4 + $0x8] sm:$0xff] %vm730, %v4061
      %4094 = vst.msk [vmem:[#allocation4 + $0x10] sm:$0xff] %vm730, %v4062
      %4095 = vst.msk [vmem:[#allocation4 + $0x18] sm:$0xff] %vm730, %v4063
      %4096 = vst.msk [vmem:[#allocation4 + $0x20] sm:$0xff] %vm730, %v4064
      %4097 = vst.msk [vmem:[#allocation4 + $0x28] sm:$0xff] %vm730, %v4065
      %4098 = vst.msk [vmem:[#allocation4 + $0x30] sm:$0xff] %vm730, %v4066
      %4099 = vst.msk [vmem:[#allocation4 + $0x38] sm:$0xff] %vm730, %v4067
      %4100 = vst.msk [vmem:[#allocation4 + $0x40] sm:$0xff] %vm730, %v4068
      %4101 = vst.msk [vmem:[#allocation4 + $0x48] sm:$0xff] %vm730, %v4069
      %4102 = vst.msk [vmem:[#allocation4 + $0x50] sm:$0xff] %vm730, %v4070
      %4103 = vst.msk [vmem:[#allocation4 + $0x58] sm:$0xff] %vm730, %v4071
      %4104 = vst.msk [vmem:[#allocation4 + $0x60] sm:$0xff] %vm730, %v4072
      %4105 = vst.msk [vmem:[#allocation4 + $0x68] sm:$0xff] %vm730, %v4073
      %4106 = vst.msk [vmem:[#allocation4 + $0x70] sm:$0xff] %vm730, %v4074
      %4107 = vst.msk [vmem:[#allocation4 + $0x78] sm:$0xff] %vm730, %v4075
      %4108 = vst.msk [vmem:[#allocation4 + $0x80] sm:$0xff] %vm730, %v4076
      %4109 = vst.msk [vmem:[#allocation4 + $0x88] sm:$0xff] %vm730, %v4077
      %4110 = vst.msk [vmem:[#allocation4 + $0x90] sm:$0xff] %vm730, %v4078
      %4111 = vst.msk [vmem:[#allocation4 + $0x98] sm:$0xff] %vm730, %v4079
      %4112 = vst.msk [vmem:[#allocation4 + $0xa0] sm:$0xff] %vm730, %v4080
      %4113 = vst.msk [vmem:[#allocation4 + $0xa8] sm:$0xff] %vm730, %v4081
      %4114 = vst.msk [vmem:[#allocation4 + $0xb0] sm:$0xff] %vm730, %v4082
      %4115 = vst.msk [vmem:[#allocation4 + $0xb8] sm:$0xff] %vm730, %v4083
      %4116 = vst.msk [vmem:[#allocation4 + $0xc0] sm:$0xff] %vm730, %v4084
      %4117 = vst.msk [vmem:[#allocation4 + $0xc8] sm:$0xff] %vm730, %v4085
      %4118 = vst.msk [vmem:[#allocation4 + $0xd0] sm:$0xff] %vm730, %v4086
      %4119 = vst.msk [vmem:[#allocation4 + $0xd8] sm:$0xff] %vm730, %v4087
      %4120 = vst.msk [vmem:[#allocation4 + $0xe0] sm:$0xff] %vm730, %v4088
      %4121 = vst.msk [vmem:[#allocation4 + $0xe8] sm:$0xff] %vm730, %v4089
      %4122 = vst.msk [vmem:[#allocation4 + $0xf0] sm:$0xff] %vm730, %v4090
      %4123 = vst.msk [vmem:[#allocation4 + $0xf8] sm:$0xff] %vm730, %v4091
      %v4124 = vld [vmem:[#allocation2] sm:$0xff]
      %v4125 = vld [vmem:[#allocation2 + $0x8] sm:$0xff]
      %v4126 = vld [vmem:[#allocation2 + $0x10] sm:$0xff]
      %v4127 = vld [vmem:[#allocation2 + $0x18] sm:$0xff]
      %v4128 = vld [vmem:[#allocation2 + $0x20] sm:$0xff]
      %v4129 = vld [vmem:[#allocation2 + $0x28] sm:$0xff]
      %v4130 = vsel %vm307, %v4124, -inf
      %v4131 = vsel %vm307, %v4126, -inf
      %v4132 = vsel %vm307, %v4128, -inf
      %v4133 = vmax.f32 %v4130, %v4132
      %v4134 = vmax.f32 %v4133, %v4131
      %v4135 = vsel %vm307, %v4125, -inf
      %v4136 = vsel %vm307, %v4127, -inf
      %v4137 = vsel %vm307, %v4129, -inf
      %v4138 = vmax.f32 %v4135, %v4137
      %v4139 = vmax.f32 %v4138, %v4136
      %4140 = vst.msk [vmem:[#allocation3] sm:$0xff] %vm307, %v4134
      %4141 = vst.msk [vmem:[#allocation3 + $0x8] sm:$0xff] %vm307, %v4139
      %v4142 = vld [vmem:[#allocation2] sm:$0xff]
      %v4143 = vld [vmem:[#allocation2 + $0x8] sm:$0xff]
      %v4144 = vld [vmem:[#allocation2 + $0x10] sm:$0xff]
      %v4145 = vld [vmem:[#allocation2 + $0x18] sm:$0xff]
      %v4146 = vld [vmem:[#allocation2 + $0x20] sm:$0xff]
      %v4147 = vld [vmem:[#allocation2 + $0x28] sm:$0xff]
      %v4148 = vld [vmem:[#allocation2 + $0x30] sm:$0xff]
      %v4149 = vld [vmem:[#allocation2 + $0x38] sm:$0xff]
      %v4150 = vsel %vm307, %v4142, -inf
      %v4151 = vsel %vm307, %v4144, -inf
      %v4152 = vsel %vm307, %v4146, -inf
      %v4153 = vmax.f32 %v4150, %v4152
      %v4154 = vsel %vm307, %v4148, -inf
      %v4155 = vmax.f32 %v4151, %v4154
      %v4156 = vmax.f32 %v4153, %v4155
      %v4157 = vsel %vm307, %v4143, -inf
      %v4158 = vsel %vm307, %v4145, -inf
      %v4159 = vsel %vm307, %v4147, -inf
      %v4160 = vmax.f32 %v4157, %v4159
      %v4161 = vsel %vm307, %v4149, -inf
      %v4162 = vmax.f32 %v4158, %v4161
      %v4163 = vmax.f32 %v4160, %v4162
      %4164 = vst.msk [vmem:[%s803] sm:$0xff] %vm307, %v4156
      %4165 = vst.msk [vmem:[%s803 + $0x8] sm:$0xff] %vm307, %v4163
      %v4166 = vld [vmem:[#allocation2] sm:$0xff]
      %v4167 = vld [vmem:[#allocation2 + $0x8] sm:$0xff]
      %v4168 = vld [vmem:[#allocation2 + $0x10] sm:$0xff]
      %v4169 = vld [vmem:[#allocation2 + $0x18] sm:$0xff]
      %v4170 = vld [vmem:[#allocation2 + $0x20] sm:$0xff]
      %v4171 = vld [vmem:[#allocation2 + $0x28] sm:$0xff]
      %v4172 = vld [vmem:[#allocation2 + $0x30] sm:$0xff]
      %v4173 = vld [vmem:[#allocation2 + $0x38] sm:$0xff]
      %v4174 = vld [vmem:[#allocation2 + $0x40] sm:$0xff]
      %v4175 = vld [vmem:[#allocation2 + $0x48] sm:$0xff]
      %v4176 = vld [vmem:[#allocation2 + $0x50] sm:$0xff]
      %v4177 = vld [vmem:[#allocation2 + $0x58] sm:$0xff]
      %v4178 = vld [vmem:[#allocation2 + $0x60] sm:$0xff]
      %v4179 = vld [vmem:[#allocation2 + $0x68] sm:$0xff]
      %v4180 = vld [vmem:[#allocation2 + $0x70] sm:$0xff]
      %v4181 = vld [vmem:[#allocation2 + $0x78] sm:$0xff]
      %v4182 = vld [vmem:[#allocation2 + $0x80] sm:$0xff]
      %v4183 = vld [vmem:[#allocation2 + $0x88] sm:$0xff]
      %v4184 = vld [vmem:[#allocation2 + $0x90] sm:$0xff]
      %v4185 = vld [vmem:[#allocation2 + $0x98] sm:$0xff]
      %v4186 = vld [vmem:[#allocation2 + $0xa0] sm:$0xff]
      %v4187 = vld [vmem:[#allocation2 + $0xa8] sm:$0xff]
      %v4188 = vld [vmem:[#allocation2 + $0xb0] sm:$0xff]
      %v4189 = vld [vmem:[#allocation2 + $0xb8] sm:$0xff]
      %v4190 = vld [vmem:[%s830] sm:$0xff]
      %v4191 = vld [vmem:[%s830 + $0x8] sm:$0xff]
      %v4192 = vld [vmem:[%s830 + $0x10] sm:$0xff]
      %v4193 = vld [vmem:[%s830 + $0x18] sm:$0xff]
      %v4194 = vld [vmem:[%s830 + $0x20] sm:$0xff]
      %v4195 = vld [vmem:[%s830 + $0x28] sm:$0xff]
      %v4196 = vld [vmem:[%s830 + $0x30] sm:$0xff]
      %v4197 = vld [vmem:[%s830 + $0x38] sm:$0xff]
      %v4198 = vld [vmem:[%s830 + $0x40] sm:$0xff]
      %v4199 = vld [vmem:[%s830 + $0x48] sm:$0xff]
      %v4200 = vld [vmem:[%s830 + $0x50] sm:$0xff]
      %v4201 = vld [vmem:[%s830 + $0x58] sm:$0xff]
      %v4202 = vld [vmem:[%s830 + $0x60] sm:$0xff]
      %v4203 = vld [vmem:[%s830 + $0x68] sm:$0xff]
      %v4204 = vld [vmem:[%s830 + $0x70] sm:$0xff]
      %v4205 = vld [vmem:[%s830 + $0x78] sm:$0xff]
      %v4206 = vld [vmem:[%s830 + $0x80] sm:$0xff]
      %v4207 = vld [vmem:[%s830 + $0x88] sm:$0xff]
      %v4208 = vld [vmem:[%s830 + $0x90] sm:$0xff]
      %v4209 = vld [vmem:[%s830 + $0x98] sm:$0xff]
      %v4210 = vld [vmem:[%s830 + $0xa0] sm:$0xff]
      %v4211 = vld [vmem:[%s830 + $0xa8] sm:$0xff]
      %v4212 = vld [vmem:[%s830 + $0xb0] sm:$0xff]
      %v4213 = vld [vmem:[%s830 + $0xb8] sm:$0xff]
      %v4214 = vmax.f32 %v4166, %v4190
      %v4215 = vmax.f32 %v4167, %v4191
      %v4216 = vmax.f32 %v4168, %v4192
      %v4217 = vmax.f32 %v4169, %v4193
      %v4218 = vmax.f32 %v4170, %v4194
      %v4219 = vmax.f32 %v4171, %v4195
      %v4220 = vmax.f32 %v4172, %v4196
      %v4221 = vmax.f32 %v4173, %v4197
      %v4222 = vmax.f32 %v4174, %v4198
      %v4223 = vmax.f32 %v4175, %v4199
      %v4224 = vmax.f32 %v4176, %v4200
      %v4225 = vmax.f32 %v4177, %v4201
      %v4226 = vmax.f32 %v4178, %v4202
      %v4227 = vmax.f32 %v4179, %v4203
      %v4228 = vmax.f32 %v4180, %v4204
      %v4229 = vmax.f32 %v4181, %v4205
      %v4230 = vmax.f32 %v4182, %v4206
      %v4231 = vmax.f32 %v4183, %v4207
      %v4232 = vmax.f32 %v4184, %v4208
      %v4233 = vmax.f32 %v4185, %v4209
      %v4234 = vmax.f32 %v4186, %v4210
      %v4235 = vmax.f32 %v4187, %v4211
      %v4236 = vmax.f32 %v4188, %v4212
      %v4237 = vmax.f32 %v4189, %v4213
      %v4238 = vld [vmem:[%s879] sm:$0xff]
      %v4239 = vld [vmem:[%s879 + $0x8] sm:$0xff]
      %v4240 = vld [vmem:[%s879 + $0x10] sm:$0xff]
      %v4241 = vld [vmem:[%s879 + $0x18] sm:$0xff]
      %v4242 = vld [vmem:[%s879 + $0x20] sm:$0xff]
      %v4243 = vld [vmem:[%s879 + $0x28] sm:$0xff]
      %v4244 = vld [vmem:[%s879 + $0x30] sm:$0xff]
      %v4245 = vld [vmem:[%s879 + $0x38] sm:$0xff]
      %v4246 = vld [vmem:[%s879 + $0x40] sm:$0xff]
      %v4247 = vld [vmem:[%s879 + $0x48] sm:$0xff]
      %v4248 = vld [vmem:[%s879 + $0x50] sm:$0xff]
      %v4249 = vld [vmem:[%s879 + $0x58] sm:$0xff]
      %v4250 = vld [vmem:[%s879 + $0x60] sm:$0xff]
      %v4251 = vld [vmem:[%s879 + $0x68] sm:$0xff]
      %v4252 = vld [vmem:[%s879 + $0x70] sm:$0xff]
      %v4253 = vld [vmem:[%s879 + $0x78] sm:$0xff]
      %v4254 = vld [vmem:[%s879 + $0x80] sm:$0xff]
      %v4255 = vld [vmem:[%s879 + $0x88] sm:$0xff]
      %v4256 = vld [vmem:[%s879 + $0x90] sm:$0xff]
      %v4257 = vld [vmem:[%s879 + $0x98] sm:$0xff]
      %v4258 = vld [vmem:[%s879 + $0xa0] sm:$0xff]
      %v4259 = vld [vmem:[%s879 + $0xa8] sm:$0xff]
      %v4260 = vld [vmem:[%s879 + $0xb0] sm:$0xff]
      %v4261 = vld [vmem:[%s879 + $0xb8] sm:$0xff]
      %v4262 = vmax.f32 %v4214, %v4238
      %v4263 = vmax.f32 %v4215, %v4239
      %v4264 = vmax.f32 %v4216, %v4240
      %v4265 = vmax.f32 %v4217, %v4241
      %v4266 = vmax.f32 %v4218, %v4242
      %v4267 = vmax.f32 %v4219, %v4243
      %v4268 = vmax.f32 %v4220, %v4244
      %v4269 = vmax.f32 %v4221, %v4245
      %v4270 = vmax.f32 %v4222, %v4246
      %v4271 = vmax.f32 %v4223, %v4247
      %v4272 = vmax.f32 %v4224, %v4248
      %v4273 = vmax.f32 %v4225, %v4249
      %v4274 = vmax.f32 %v4226, %v4250
      %v4275 = vmax.f32 %v4227, %v4251
      %v4276 = vmax.f32 %v4228, %v4252
      %v4277 = vmax.f32 %v4229, %v4253
      %v4278 = vmax.f32 %v4230, %v4254
      %v4279 = vmax.f32 %v4231, %v4255
      %v4280 = vmax.f32 %v4232, %v4256
      %v4281 = vmax.f32 %v4233, %v4257
      %v4282 = vmax.f32 %v4234, %v4258
      %v4283 = vmax.f32 %v4235, %v4259
      %v4284 = vmax.f32 %v4236, %v4260
      %v4285 = vmax.f32 %v4237, %v4261
      %v4286 = vld [vmem:[%s928] sm:$0xff]
      %v4287 = vld [vmem:[%s928 + $0x8] sm:$0xff]
      %v4288 = vld [vmem:[%s928 + $0x10] sm:$0xff]
      %v4289 = vld [vmem:[%s928 + $0x18] sm:$0xff]
      %v4290 = vld [vmem:[%s928 + $0x20] sm:$0xff]
      %v4291 = vld [vmem:[%s928 + $0x28] sm:$0xff]
      %v4292 = vld [vmem:[%s928 + $0x30] sm:$0xff]
      %v4293 = vld [vmem:[%s928 + $0x38] sm:$0xff]
      %v4294 = vld [vmem:[%s928 + $0x40] sm:$0xff]
      %v4295 = vld [vmem:[%s928 + $0x48] sm:$0xff]
      %v4296 = vld [vmem:[%s928 + $0x50] sm:$0xff]
      %v4297 = vld [vmem:[%s928 + $0x58] sm:$0xff]
      %v4298 = vld [vmem:[%s928 + $0x60] sm:$0xff]
      %v4299 = vld [vmem:[%s928 + $0x68] sm:$0xff]
      %v4300 = vld [vmem:[%s928 + $0x70] sm:$0xff]
      %v4301 = vld [vmem:[%s928 + $0x78] sm:$0xff]
      %v4302 = vld [vmem:[%s928 + $0x80] sm:$0xff]
      %v4303 = vld [vmem:[%s928 + $0x88] sm:$0xff]
      %v4304 = vld [vmem:[%s928 + $0x90] sm:$0xff]
      %v4305 = vld [vmem:[%s928 + $0x98] sm:$0xff]
      %v4306 = vld [vmem:[%s928 + $0xa0] sm:$0xff]
      %v4307 = vld [vmem:[%s928 + $0xa8] sm:$0xff]
      %v4308 = vld [vmem:[%s928 + $0xb0] sm:$0xff]
      %v4309 = vld [vmem:[%s928 + $0xb8] sm:$0xff]
      %v4310 = vmax.f32 %v4262, %v4286
      %v4311 = vmax.f32 %v4263, %v4287
      %v4312 = vmax.f32 %v4264, %v4288
      %v4313 = vmax.f32 %v4265, %v4289
      %v4314 = vmax.f32 %v4266, %v4290
      %v4315 = vmax.f32 %v4267, %v4291
      %v4316 = vmax.f32 %v4268, %v4292
      %v4317 = vmax.f32 %v4269, %v4293
      %v4318 = vmax.f32 %v4270, %v4294
      %v4319 = vmax.f32 %v4271, %v4295
      %v4320 = vmax.f32 %v4272, %v4296
      %v4321 = vmax.f32 %v4273, %v4297
      %v4322 = vmax.f32 %v4274, %v4298
      %v4323 = vmax.f32 %v4275, %v4299
      %v4324 = vmax.f32 %v4276, %v4300
      %v4325 = vmax.f32 %v4277, %v4301
      %v4326 = vmax.f32 %v4278, %v4302
      %v4327 = vmax.f32 %v4279, %v4303
      %v4328 = vmax.f32 %v4280, %v4304
      %v4329 = vmax.f32 %v4281, %v4305
      %v4330 = vmax.f32 %v4282, %v4306
      %v4331 = vmax.f32 %v4283, %v4307
      %v4332 = vmax.f32 %v4284, %v4308
      %v4333 = vmax.f32 %v4285, %v4309
      %v4334 = vld [vmem:[%s977] sm:$0xff]
      %v4335 = vld [vmem:[%s977 + $0x8] sm:$0xff]
      %v4336 = vld [vmem:[%s977 + $0x10] sm:$0xff]
      %v4337 = vld [vmem:[%s977 + $0x18] sm:$0xff]
      %v4338 = vld [vmem:[%s977 + $0x20] sm:$0xff]
      %v4339 = vld [vmem:[%s977 + $0x28] sm:$0xff]
      %v4340 = vld [vmem:[%s977 + $0x30] sm:$0xff]
      %v4341 = vld [vmem:[%s977 + $0x38] sm:$0xff]
      %v4342 = vld [vmem:[%s977 + $0x40] sm:$0xff]
      %v4343 = vld [vmem:[%s977 + $0x48] sm:$0xff]
      %v4344 = vld [vmem:[%s977 + $0x50] sm:$0xff]
      %v4345 = vld [vmem:[%s977 + $0x58] sm:$0xff]
      %v4346 = vld [vmem:[%s977 + $0x60] sm:$0xff]
      %v4347 = vld [vmem:[%s977 + $0x68] sm:$0xff]
      %v4348 = vld [vmem:[%s977 + $0x70] sm:$0xff]
      %v4349 = vld [vmem:[%s977 + $0x78] sm:$0xff]
      %v4350 = vld [vmem:[%s977 + $0x80] sm:$0xff]
      %v4351 = vld [vmem:[%s977 + $0x88] sm:$0xff]
      %v4352 = vld [vmem:[%s977 + $0x90] sm:$0xff]
      %v4353 = vld [vmem:[%s977 + $0x98] sm:$0xff]
      %v4354 = vld [vmem:[%s977 + $0xa0] sm:$0xff]
      %v4355 = vld [vmem:[%s977 + $0xa8] sm:$0xff]
      %v4356 = vld [vmem:[%s977 + $0xb0] sm:$0xff]
      %v4357 = vld [vmem:[%s977 + $0xb8] sm:$0xff]
      %v4358 = vmax.f32 %v4310, %v4334
      %v4359 = vmax.f32 %v4311, %v4335
      %v4360 = vmax.f32 %v4312, %v4336
      %v4361 = vmax.f32 %v4313, %v4337
      %v4362 = vmax.f32 %v4314, %v4338
      %v4363 = vmax.f32 %v4315, %v4339
      %v4364 = vmax.f32 %v4316, %v4340
      %v4365 = vmax.f32 %v4317, %v4341
      %v4366 = vmax.f32 %v4318, %v4342
      %v4367 = vmax.f32 %v4319, %v4343
      %v4368 = vmax.f32 %v4320, %v4344
      %v4369 = vmax.f32 %v4321, %v4345
      %v4370 = vmax.f32 %v4322, %v4346
      %v4371 = vmax.f32 %v4323, %v4347
      %v4372 = vmax.f32 %v4324, %v4348
      %v4373 = vmax.f32 %v4325, %v4349
      %v4374 = vmax.f32 %v4326, %v4350
      %v4375 = vmax.f32 %v4327, %v4351
      %v4376 = vmax.f32 %v4328, %v4352
      %v4377 = vmax.f32 %v4329, %v4353
      %v4378 = vmax.f32 %v4330, %v4354
      %v4379 = vmax.f32 %v4331, %v4355
      %v4380 = vmax.f32 %v4332, %v4356
      %v4381 = vmax.f32 %v4333, %v4357
      %4382 = vst.msk [vmem:[%s1026] sm:$0xff] %vm307, %v4358
      %4383 = vst.msk [vmem:[%s1026 + $0x8] sm:$0xff] %vm307, %v4359
      %4384 = vst.msk [vmem:[%s1026 + $0x10] sm:$0xff] %vm307, %v4360
      %4385 = vst.msk [vmem:[%s1026 + $0x18] sm:$0xff] %vm307, %v4361
      %4386 = vst.msk [vmem:[%s1026 + $0x20] sm:$0xff] %vm307, %v4362
      %4387 = vst.msk [vmem:[%s1026 + $0x28] sm:$0xff] %vm307, %v4363
      %4388 = vst.msk [vmem:[%s1026 + $0x30] sm:$0xff] %vm307, %v4364
      %4389 = vst.msk [vmem:[%s1026 + $0x38] sm:$0xff] %vm307, %v4365
      %4390 = vst.msk [vmem:[%s1026 + $0x40] sm:$0xff] %vm307, %v4366
      %4391 = vst.msk [vmem:[%s1026 + $0x48] sm:$0xff] %vm307, %v4367
      %4392 = vst.msk [vmem:[%s1026 + $0x50] sm:$0xff] %vm307, %v4368
      %4393 = vst.msk [vmem:[%s1026 + $0x58] sm:$0xff] %vm307, %v4369
      %4394 = vst.msk [vmem:[%s1026 + $0x60] sm:$0xff] %vm307, %v4370
      %4395 = vst.msk [vmem:[%s1026 + $0x68] sm:$0xff] %vm307, %v4371
      %4396 = vst.msk [vmem:[%s1026 + $0x70] sm:$0xff] %vm307, %v4372
      %4397 = vst.msk [vmem:[%s1026 + $0x78] sm:$0xff] %vm307, %v4373
      %4398 = vst.msk [vmem:[%s1026 + $0x80] sm:$0xff] %vm307, %v4374
      %4399 = vst.msk [vmem:[%s1026 + $0x88] sm:$0xff] %vm307, %v4375
      %4400 = vst.msk [vmem:[%s1026 + $0x90] sm:$0xff] %vm307, %v4376
      %4401 = vst.msk [vmem:[%s1026 + $0x98] sm:$0xff] %vm307, %v4377
      %4402 = vst.msk [vmem:[%s1026 + $0xa0] sm:$0xff] %vm307, %v4378
      %4403 = vst.msk [vmem:[%s1026 + $0xa8] sm:$0xff] %vm307, %v4379
      %4404 = vst.msk [vmem:[%s1026 + $0xb0] sm:$0xff] %vm307, %v4380
      %4405 = vst.msk [vmem:[%s1026 + $0xb8] sm:$0xff] %vm307, %v4381
      %v4406 = vld [vmem:[%s1051] sm:$0xff]
      %v4407 = vld [vmem:[%s1051 + $0x8] sm:$0xff]
      %v4408 = vld [vmem:[%s1051 + $0x10] sm:$0xff]
      %v4409 = vld [vmem:[%s1051 + $0x18] sm:$0xff]
      %v4410 = vld [vmem:[%s1051 + $0x20] sm:$0xff]
      %v4411 = vld [vmem:[%s1051 + $0x28] sm:$0xff]
      %v4412 = vld [vmem:[%s1051 + $0x30] sm:$0xff]
      %v4413 = vld [vmem:[%s1051 + $0x38] sm:$0xff]
      %v4414 = vsel %vm307, %v4406, -inf
      %v4415 = vsel %vm307, %v4408, -inf
      %v4416 = vsel %vm307, %v4410, -inf
      %v4417 = vmax.f32 %v4414, %v4416
      %v4418 = vsel %vm307, %v4412, -inf
      %v4419 = vmax.f32 %v4415, %v4418
      %v4420 = vmax.f32 %v4417, %v4419
      %v4421 = vsel %vm307, %v4407, -inf
      %v4422 = vsel %vm307, %v4409, -inf
      %v4423 = vsel %vm307, %v4411, -inf
      %v4424 = vmax.f32 %v4421, %v4423
      %v4425 = vsel %vm307, %v4413, -inf
      %v4426 = vmax.f32 %v4422, %v4425
      %v4427 = vmax.f32 %v4424, %v4426
      %4428 = vst.msk [vmem:[%s1074] sm:$0xff] %vm307, %v4420
      %4429 = vst.msk [vmem:[%s1074 + $0x8] sm:$0xff] %vm307, %v4427
      %v4430 = vld [vmem:[%s1077] sm:$0xff]
      %v4431 = vld [vmem:[%s1077 + $0x8] sm:$0xff]
      %v4432 = vld [vmem:[%s1077 + $0x10] sm:$0xff]
      %v4433 = vld [vmem:[%s1077 + $0x18] sm:$0xff]
      %v4434 = vld [vmem:[%s1077 + $0x20] sm:$0xff]
      %v4435 = vld [vmem:[%s1077 + $0x28] sm:$0xff]
      %v4436 = vsel %vm307, %v4430, -inf
      %v4437 = vsel %vm307, %v4432, -inf
      %v4438 = vsel %vm307, %v4434, -inf
      %v4439 = vmax.f32 %v4436, %v4438
      %v4440 = vmax.f32 %v4439, %v4437
      %v4441 = vsel %vm307, %v4431, -inf
      %v4442 = vsel %vm307, %v4433, -inf
      %v4443 = vsel %vm307, %v4435, -inf
      %v4444 = vmax.f32 %v4441, %v4443
      %v4445 = vmax.f32 %v4444, %v4442
      %4446 = vst.msk [vmem:[%s1094] sm:$0xff] %vm307, %v4440
      %4447 = vst.msk [vmem:[%s1094 + $0x8] sm:$0xff] %vm307, %v4445
      %v4448 = vld [vmem:[#allocation3] sm:$0x7]
      %v4449 = vld [vmem:[#allocation3 + $0x10] sm:$0x7]
      %v4450 = vld [vmem:[#allocation3 + $0x20] sm:$0x7]
      %v4451 = vld [vmem:[#allocation3 + $0x30] sm:$0x7]
      %v4452 = vld [vmem:[#allocation3 + $0x40] sm:$0x7]
      %v4453 = vld [vmem:[#allocation3 + $0x50] sm:$0x7]
      %v4454 = vld [vmem:[#allocation3 + $0x60] sm:$0x7]
      %v4455 = vld [vmem:[#allocation3 + $0x70] sm:$0x7]
      %v4456 = vld [vmem:[#allocation3 + $0x80] sm:$0x7]
      %v4457 = vld [vmem:[#allocation3 + $0x90] sm:$0x7]
      %v4458 = vld [vmem:[#allocation3 + $0xa0] sm:$0x7]
      %v4459 = vld [vmem:[#allocation3 + $0xb0] sm:$0x7]
      %v4460 = vld [vmem:[#allocation3 + $0xc0] sm:$0x7]
      %v4461 = vld [vmem:[#allocation3 + $0xd0] sm:$0x7]
      %v4462 = vld [vmem:[#allocation3 + $0xe0] sm:$0x7]
      %v4463 = vld [vmem:[#allocation3 + $0xf0] sm:$0x7]
      %v4464 = vsel %vm1113, %v4448, -inf
      %v4465 = vrot.slane %v4464, 4
      %v4466 = vmax.f32 %v4464, %v4465
      %v4467 = vrot.slane %v4466, 2
      %v4468 = vmax.f32 %v4466, %v4467
      %v4469 = vrot.slane %v4468, 1
      %v4470 = vmax.f32 %v4468, %v4469
      %v4471 = vsel %vm1113, %v4449, -inf
      %v4472 = vrot.slane %v4471, 4
      %v4473 = vmax.f32 %v4471, %v4472
      %v4474 = vrot.slane %v4473, 2
      %v4475 = vmax.f32 %v4473, %v4474
      %v4476 = vrot.slane %v4475, 1
      %v4477 = vmax.f32 %v4475, %v4476
      %v4478 = vsel %vm1113, %v4450, -inf
      %v4479 = vrot.slane %v4478, 4
      %v4480 = vmax.f32 %v4478, %v4479
      %v4481 = vrot.slane %v4480, 2
      %v4482 = vmax.f32 %v4480, %v4481
      %v4483 = vrot.slane %v4482, 1
      %v4484 = vmax.f32 %v4482, %v4483
      %v4485 = vsel %vm1113, %v4451, -inf
      %v4486 = vrot.slane %v4485, 4
      %v4487 = vmax.f32 %v4485, %v4486
      %v4488 = vrot.slane %v4487, 2
      %v4489 = vmax.f32 %v4487, %v4488
      %v4490 = vrot.slane %v4489, 1
      %v4491 = vmax.f32 %v4489, %v4490
      %v4492 = vsel %vm1113, %v4452, -inf
      %v4493 = vrot.slane %v4492, 4
      %v4494 = vmax.f32 %v4492, %v4493
      %v4495 = vrot.slane %v4494, 2
      %v4496 = vmax.f32 %v4494, %v4495
      %v4497 = vrot.slane %v4496, 1
      %v4498 = vmax.f32 %v4496, %v4497
      %v4499 = vsel %vm1113, %v4453, -inf
      %v4500 = vrot.slane %v4499, 4
      %v4501 = vmax.f32 %v4499, %v4500
      %v4502 = vrot.slane %v4501, 2
      %v4503 = vmax.f32 %v4501, %v4502
      %v4504 = vrot.slane %v4503, 1
      %v4505 = vmax.f32 %v4503, %v4504
      %v4506 = vsel %vm1113, %v4454, -inf
      %v4507 = vrot.slane %v4506, 4
      %v4508 = vmax.f32 %v4506, %v4507
      %v4509 = vrot.slane %v4508, 2
      %v4510 = vmax.f32 %v4508, %v4509
      %v4511 = vrot.slane %v4510, 1
      %v4512 = vmax.f32 %v4510, %v4511
      %v4513 = vsel %vm1113, %v4455, -inf
      %v4514 = vrot.slane %v4513, 4
      %v4515 = vmax.f32 %v4513, %v4514
      %v4516 = vrot.slane %v4515, 2
      %v4517 = vmax.f32 %v4515, %v4516
      %v4518 = vrot.slane %v4517, 1
      %v4519 = vmax.f32 %v4517, %v4518
      %v4520 = vsel %vm1113, %v4456, -inf
      %v4521 = vrot.slane %v4520, 4
      %v4522 = vmax.f32 %v4520, %v4521
      %v4523 = vrot.slane %v4522, 2
      %v4524 = vmax.f32 %v4522, %v4523
      %v4525 = vrot.slane %v4524, 1
      %v4526 = vmax.f32 %v4524, %v4525
      %v4527 = vsel %vm1113, %v4457, -inf
      %v4528 = vrot.slane %v4527, 4
      %v4529 = vmax.f32 %v4527, %v4528
      %v4530 = vrot.slane %v4529, 2
      %v4531 = vmax.f32 %v4529, %v4530
      %v4532 = vrot.slane %v4531, 1
      %v4533 = vmax.f32 %v4531, %v4532
      %v4534 = vsel %vm1113, %v4458, -inf
      %v4535 = vrot.slane %v4534, 4
      %v4536 = vmax.f32 %v4534, %v4535
      %v4537 = vrot.slane %v4536, 2
      %v4538 = vmax.f32 %v4536, %v4537
      %v4539 = vrot.slane %v4538, 1
      %v4540 = vmax.f32 %v4538, %v4539
      %v4541 = vsel %vm1113, %v4459, -inf
      %v4542 = vrot.slane %v4541, 4
      %v4543 = vmax.f32 %v4541, %v4542
      %v4544 = vrot.slane %v4543, 2
      %v4545 = vmax.f32 %v4543, %v4544
      %v4546 = vrot.slane %v4545, 1
      %v4547 = vmax.f32 %v4545, %v4546
      %v4548 = vsel %vm1113, %v4460, -inf
      %v4549 = vrot.slane %v4548, 4
      %v4550 = vmax.f32 %v4548, %v4549
      %v4551 = vrot.slane %v4550, 2
      %v4552 = vmax.f32 %v4550, %v4551
      %v4553 = vrot.slane %v4552, 1
      %v4554 = vmax.f32 %v4552, %v4553
      %v4555 = vsel %vm1113, %v4461, -inf
      %v4556 = vrot.slane %v4555, 4
      %v4557 = vmax.f32 %v4555, %v4556
      %v4558 = vrot.slane %v4557, 2
      %v4559 = vmax.f32 %v4557, %v4558
      %v4560 = vrot.slane %v4559, 1
      %v4561 = vmax.f32 %v4559, %v4560
      %v4562 = vsel %vm1113, %v4462, -inf
      %v4563 = vrot.slane %v4562, 4
      %v4564 = vmax.f32 %v4562, %v4563
      %v4565 = vrot.slane %v4564, 2
      %v4566 = vmax.f32 %v4564, %v4565
      %v4567 = vrot.slane %v4566, 1
      %v4568 = vmax.f32 %v4566, %v4567
      %v4569 = vsel %vm1113, %v4463, -inf
      %v4570 = vrot.slane %v4569, 4
      %v4571 = vmax.f32 %v4569, %v4570
      %v4572 = vrot.slane %v4571, 2
      %v4573 = vmax.f32 %v4571, %v4572
      %v4574 = vrot.slane %v4573, 1
      %v4575 = vmax.f32 %v4573, %v4574
      %4576 = vst.msk [vmem:[#allocation2] sm:$0x1] %vm1226, %v4470
      %4577 = vst.msk [vmem:[#allocation2 + $0x10] sm:$0x1] %vm1226, %v4477
      %4578 = vst.msk [vmem:[#allocation2 + $0x20] sm:$0x1] %vm1226, %v4484
      %4579 = vst.msk [vmem:[#allocation2 + $0x30] sm:$0x1] %vm1226, %v4491
      %4580 = vst.msk [vmem:[#allocation2 + $0x40] sm:$0x1] %vm1226, %v4498
      %4581 = vst.msk [vmem:[#allocation2 + $0x50] sm:$0x1] %vm1226, %v4505
      %4582 = vst.msk [vmem:[#allocation2 + $0x60] sm:$0x1] %vm1226, %v4512
      %4583 = vst.msk [vmem:[#allocation2 + $0x70] sm:$0x1] %vm1226, %v4519
      %4584 = vst.msk [vmem:[#allocation2 + $0x80] sm:$0x1] %vm1226, %v4526
      %4585 = vst.msk [vmem:[#allocation2 + $0x90] sm:$0x1] %vm1226, %v4533
      %4586 = vst.msk [vmem:[#allocation2 + $0xa0] sm:$0x1] %vm1226, %v4540
      %4587 = vst.msk [vmem:[#allocation2 + $0xb0] sm:$0x1] %vm1226, %v4547
      %4588 = vst.msk [vmem:[#allocation2 + $0xc0] sm:$0x1] %vm1226, %v4554
      %4589 = vst.msk [vmem:[#allocation2 + $0xd0] sm:$0x1] %vm1226, %v4561
      %4590 = vst.msk [vmem:[#allocation2 + $0xe0] sm:$0x1] %vm1226, %v4568
      %4591 = vst.msk [vmem:[#allocation2 + $0xf0] sm:$0x1] %vm1226, %v4575
      %v4592 = vld [vmem:[#allocation3] sm:$0xf]
      %v4593 = vld [vmem:[#allocation3 + $0x10] sm:$0xf]
      %v4594 = vld [vmem:[#allocation3 + $0x20] sm:$0xf]
      %v4595 = vld [vmem:[#allocation3 + $0x30] sm:$0xf]
      %v4596 = vld [vmem:[#allocation3 + $0x40] sm:$0xf]
      %v4597 = vld [vmem:[#allocation3 + $0x50] sm:$0xf]
      %v4598 = vld [vmem:[#allocation3 + $0x60] sm:$0xf]
      %v4599 = vld [vmem:[#allocation3 + $0x70] sm:$0xf]
      %v4600 = vld [vmem:[#allocation3 + $0x80] sm:$0xf]
      %v4601 = vld [vmem:[#allocation3 + $0x90] sm:$0xf]
      %v4602 = vld [vmem:[#allocation3 + $0xa0] sm:$0xf]
      %v4603 = vld [vmem:[#allocation3 + $0xb0] sm:$0xf]
      %v4604 = vld [vmem:[#allocation3 + $0xc0] sm:$0xf]
      %v4605 = vld [vmem:[#allocation3 + $0xd0] sm:$0xf]
      %v4606 = vld [vmem:[#allocation3 + $0xe0] sm:$0xf]
      %v4607 = vld [vmem:[#allocation3 + $0xf0] sm:$0xf]
      %v4608 = vsel %vm1259, %v4592, -inf
      %v4609 = vrot.slane %v4608, 4
      %v4610 = vmax.f32 %v4608, %v4609
      %v4611 = vrot.slane %v4610, 2
      %v4612 = vmax.f32 %v4610, %v4611
      %v4613 = vrot.slane %v4612, 1
      %v4614 = vmax.f32 %v4612, %v4613
      %v4615 = vsel %vm1259, %v4593, -inf
      %v4616 = vrot.slane %v4615, 4
      %v4617 = vmax.f32 %v4615, %v4616
      %v4618 = vrot.slane %v4617, 2
      %v4619 = vmax.f32 %v4617, %v4618
      %v4620 = vrot.slane %v4619, 1
      %v4621 = vmax.f32 %v4619, %v4620
      %v4622 = vsel %vm1259, %v4594, -inf
      %v4623 = vrot.slane %v4622, 4
      %v4624 = vmax.f32 %v4622, %v4623
      %v4625 = vrot.slane %v4624, 2
      %v4626 = vmax.f32 %v4624, %v4625
      %v4627 = vrot.slane %v4626, 1
      %v4628 = vmax.f32 %v4626, %v4627
      %v4629 = vsel %vm1259, %v4595, -inf
      %v4630 = vrot.slane %v4629, 4
      %v4631 = vmax.f32 %v4629, %v4630
      %v4632 = vrot.slane %v4631, 2
      %v4633 = vmax.f32 %v4631, %v4632
      %v4634 = vrot.slane %v4633, 1
      %v4635 = vmax.f32 %v4633, %v4634
      %v4636 = vsel %vm1259, %v4596, -inf
      %v4637 = vrot.slane %v4636, 4
      %v4638 = vmax.f32 %v4636, %v4637
      %v4639 = vrot.slane %v4638, 2
      %v4640 = vmax.f32 %v4638, %v4639
      %v4641 = vrot.slane %v4640, 1
      %v4642 = vmax.f32 %v4640, %v4641
      %v4643 = vsel %vm1259, %v4597, -inf
      %v4644 = vrot.slane %v4643, 4
      %v4645 = vmax.f32 %v4643, %v4644
      %v4646 = vrot.slane %v4645, 2
      %v4647 = vmax.f32 %v4645, %v4646
      %v4648 = vrot.slane %v4647, 1
      %v4649 = vmax.f32 %v4647, %v4648
      %v4650 = vsel %vm1259, %v4598, -inf
      %v4651 = vrot.slane %v4650, 4
      %v4652 = vmax.f32 %v4650, %v4651
      %v4653 = vrot.slane %v4652, 2
      %v4654 = vmax.f32 %v4652, %v4653
      %v4655 = vrot.slane %v4654, 1
      %v4656 = vmax.f32 %v4654, %v4655
      %v4657 = vsel %vm1259, %v4599, -inf
      %v4658 = vrot.slane %v4657, 4
      %v4659 = vmax.f32 %v4657, %v4658
      %v4660 = vrot.slane %v4659, 2
      %v4661 = vmax.f32 %v4659, %v4660
      %v4662 = vrot.slane %v4661, 1
      %v4663 = vmax.f32 %v4661, %v4662
      %v4664 = vsel %vm1259, %v4600, -inf
      %v4665 = vrot.slane %v4664, 4
      %v4666 = vmax.f32 %v4664, %v4665
      %v4667 = vrot.slane %v4666, 2
      %v4668 = vmax.f32 %v4666, %v4667
      %v4669 = vrot.slane %v4668, 1
      %v4670 = vmax.f32 %v4668, %v4669
      %v4671 = vsel %vm1259, %v4601, -inf
      %v4672 = vrot.slane %v4671, 4
      %v4673 = vmax.f32 %v4671, %v4672
      %v4674 = vrot.slane %v4673, 2
      %v4675 = vmax.f32 %v4673, %v4674
      %v4676 = vrot.slane %v4675, 1
      %v4677 = vmax.f32 %v4675, %v4676
      %v4678 = vsel %vm1259, %v4602, -inf
      %v4679 = vrot.slane %v4678, 4
      %v4680 = vmax.f32 %v4678, %v4679
      %v4681 = vrot.slane %v4680, 2
      %v4682 = vmax.f32 %v4680, %v4681
      %v4683 = vrot.slane %v4682, 1
      %v4684 = vmax.f32 %v4682, %v4683
      %v4685 = vsel %vm1259, %v4603, -inf
      %v4686 = vrot.slane %v4685, 4
      %v4687 = vmax.f32 %v4685, %v4686
      %v4688 = vrot.slane %v4687, 2
      %v4689 = vmax.f32 %v4687, %v4688
      %v4690 = vrot.slane %v4689, 1
      %v4691 = vmax.f32 %v4689, %v4690
      %v4692 = vsel %vm1259, %v4604, -inf
      %v4693 = vrot.slane %v4692, 4
      %v4694 = vmax.f32 %v4692, %v4693
      %v4695 = vrot.slane %v4694, 2
      %v4696 = vmax.f32 %v4694, %v4695
      %v4697 = vrot.slane %v4696, 1
      %v4698 = vmax.f32 %v4696, %v4697
      %v4699 = vsel %vm1259, %v4605, -inf
      %v4700 = vrot.slane %v4699, 4
      %v4701 = vmax.f32 %v4699, %v4700
      %v4702 = vrot.slane %v4701, 2
      %v4703 = vmax.f32 %v4701, %v4702
      %v4704 = vrot.slane %v4703, 1
      %v4705 = vmax.f32 %v4703, %v4704
      %v4706 = vsel %vm1259, %v4606, -inf
      %v4707 = vrot.slane %v4706, 4
      %v4708 = vmax.f32 %v4706, %v4707
      %v4709 = vrot.slane %v4708, 2
      %v4710 = vmax.f32 %v4708, %v4709
      %v4711 = vrot.slane %v4710, 1
      %v4712 = vmax.f32 %v4710, %v4711
      %v4713 = vsel %vm1259, %v4607, -inf
      %v4714 = vrot.slane %v4713, 4
      %v4715 = vmax.f32 %v4713, %v4714
      %v4716 = vrot.slane %v4715, 2
      %v4717 = vmax.f32 %v4715, %v4716
      %v4718 = vrot.slane %v4717, 1
      %v4719 = vmax.f32 %v4717, %v4718
      %4720 = vst.msk [vmem:[#allocation2 + $0x1] sm:$0x1] %vm1226, %v4614
      %4721 = vst.msk [vmem:[#allocation2 + $0x11] sm:$0x1] %vm1226, %v4621
      %4722 = vst.msk [vmem:[#allocation2 + $0x21] sm:$0x1] %vm1226, %v4628
      %4723 = vst.msk [vmem:[#allocation2 + $0x31] sm:$0x1] %vm1226, %v4635
      %4724 = vst.msk [vmem:[#allocation2 + $0x41] sm:$0x1] %vm1226, %v4642
      %4725 = vst.msk [vmem:[#allocation2 + $0x51] sm:$0x1] %vm1226, %v4649
      %4726 = vst.msk [vmem:[#allocation2 + $0x61] sm:$0x1] %vm1226, %v4656
      %4727 = vst.msk [vmem:[#allocation2 + $0x71] sm:$0x1] %vm1226, %v4663
      %4728 = vst.msk [vmem:[#allocation2 + $0x81] sm:$0x1] %vm1226, %v4670
      %4729 = vst.msk [vmem:[#allocation2 + $0x91] sm:$0x1] %vm1226, %v4677
      %4730 = vst.msk [vmem:[#allocation2 + $0xa1] sm:$0x1] %vm1226, %v4684
      %4731 = vst.msk [vmem:[#allocation2 + $0xb1] sm:$0x1] %vm1226, %v4691
      %4732 = vst.msk [vmem:[#allocation2 + $0xc1] sm:$0x1] %vm1226, %v4698
      %4733 = vst.msk [vmem:[#allocation2 + $0xd1] sm:$0x1] %vm1226, %v4705
      %4734 = vst.msk [vmem:[#allocation2 + $0xe1] sm:$0x1] %vm1226, %v4712
      %4735 = vst.msk [vmem:[#allocation2 + $0xf1] sm:$0x1] %vm1226, %v4719
      %v4736 = vld [vmem:[#allocation3] sm:$0xff]
      %v4737 = vld [vmem:[#allocation3 + $0x8] sm:$0xf]
      %v4738 = vld [vmem:[#allocation3 + $0x10] sm:$0xff]
      %v4739 = vld [vmem:[#allocation3 + $0x18] sm:$0xf]
      %v4740 = vld [vmem:[#allocation3 + $0x20] sm:$0xff]
      %v4741 = vld [vmem:[#allocation3 + $0x28] sm:$0xf]
      %v4742 = vld [vmem:[#allocation3 + $0x30] sm:$0xff]
      %v4743 = vld [vmem:[#allocation3 + $0x38] sm:$0xf]
      %v4744 = vld [vmem:[#allocation3 + $0x40] sm:$0xff]
      %v4745 = vld [vmem:[#allocation3 + $0x48] sm:$0xf]
      %v4746 = vld [vmem:[#allocation3 + $0x50] sm:$0xff]
      %v4747 = vld [vmem:[#allocation3 + $0x58] sm:$0xf]
      %v4748 = vld [vmem:[#allocation3 + $0x60] sm:$0xff]
      %v4749 = vld [vmem:[#allocation3 + $0x68] sm:$0xf]
      %v4750 = vld [vmem:[#allocation3 + $0x70] sm:$0xff]
      %v4751 = vld [vmem:[#allocation3 + $0x78] sm:$0xf]
      %v4752 = vld [vmem:[#allocation3 + $0x80] sm:$0xff]
      %v4753 = vld [vmem:[#allocation3 + $0x88] sm:$0xf]
      %v4754 = vld [vmem:[#allocation3 + $0x90] sm:$0xff]
      %v4755 = vld [vmem:[#allocation3 + $0x98] sm:$0xf]
      %v4756 = vld [vmem:[#allocation3 + $0xa0] sm:$0xff]
      %v4757 = vld [vmem:[#allocation3 + $0xa8] sm:$0xf]
      %v4758 = vld [vmem:[#allocation3 + $0xb0] sm:$0xff]
      %v4759 = vld [vmem:[#allocation3 + $0xb8] sm:$0xf]
      %v4760 = vld [vmem:[#allocation3 + $0xc0] sm:$0xff]
      %v4761 = vld [vmem:[#allocation3 + $0xc8] sm:$0xf]
      %v4762 = vld [vmem:[#allocation3 + $0xd0] sm:$0xff]
      %v4763 = vld [vmem:[#allocation3 + $0xd8] sm:$0xf]
      %v4764 = vld [vmem:[#allocation3 + $0xe0] sm:$0xff]
      %v4765 = vld [vmem:[#allocation3 + $0xe8] sm:$0xf]
      %v4766 = vld [vmem:[#allocation3 + $0xf0] sm:$0xff]
      %v4767 = vld [vmem:[#allocation3 + $0xf8] sm:$0xf]
      %v4768 = vld [vmem:[#allocation3 + $0x1] sm:$0xff]
      %v4769 = vld [vmem:[#allocation3 + $0x9] sm:$0xf]
      %v4770 = vld [vmem:[#allocation3 + $0x11] sm:$0xff]
      %v4771 = vld [vmem:[#allocation3 + $0x19] sm:$0xf]
      %v4772 = vld [vmem:[#allocation3 + $0x21] sm:$0xff]
      %v4773 = vld [vmem:[#allocation3 + $0x29] sm:$0xf]
      %v4774 = vld [vmem:[#allocation3 + $0x31] sm:$0xff]
      %v4775 = vld [vmem:[#allocation3 + $0x39] sm:$0xf]
      %v4776 = vld [vmem:[#allocation3 + $0x41] sm:$0xff]
      %v4777 = vld [vmem:[#allocation3 + $0x49] sm:$0xf]
      %v4778 = vld [vmem:[#allocation3 + $0x51] sm:$0xff]
      %v4779 = vld [vmem:[#allocation3 + $0x59] sm:$0xf]
      %v4780 = vld [vmem:[#allocation3 + $0x61] sm:$0xff]
      %v4781 = vld [vmem:[#allocation3 + $0x69] sm:$0xf]
      %v4782 = vld [vmem:[#allocation3 + $0x71] sm:$0xff]
      %v4783 = vld [vmem:[#allocation3 + $0x79] sm:$0xf]
      %v4784 = vld [vmem:[#allocation3 + $0x81] sm:$0xff]
      %v4785 = vld [vmem:[#allocation3 + $0x89] sm:$0xf]
      %v4786 = vld [vmem:[#allocation3 + $0x91] sm:$0xff]
      %v4787 = vld [vmem:[#allocation3 + $0x99] sm:$0xf]
      %v4788 = vld [vmem:[#allocation3 + $0xa1] sm:$0xff]
      %v4789 = vld [vmem:[#allocation3 + $0xa9] sm:$0xf]
      %v4790 = vld [vmem:[#allocation3 + $0xb1] sm:$0xff]
      %v4791 = vld [vmem:[#allocation3 + $0xb9] sm:$0xf]
      %v4792 = vld [vmem:[#allocation3 + $0xc1] sm:$0xff]
      %v4793 = vld [vmem:[#allocation3 + $0xc9] sm:$0xf]
      %v4794 = vld [vmem:[#allocation3 + $0xd1] sm:$0xff]
      %v4795 = vld [vmem:[#allocation3 + $0xd9] sm:$0xf]
      %v4796 = vld [vmem:[#allocation3 + $0xe1] sm:$0xff]
      %v4797 = vld [vmem:[#allocation3 + $0xe9] sm:$0xf]
      %v4798 = vld [vmem:[#allocation3 + $0xf1] sm:$0xff]
      %v4799 = vld [vmem:[#allocation3 + $0xf9] sm:$0xf]
      %v4800 = vmax.f32 %v4736, %v4768
      %v4801 = vmax.f32 %v4737, %v4769
      %v4802 = vmax.f32 %v4738, %v4770
      %v4803 = vmax.f32 %v4739, %v4771
      %v4804 = vmax.f32 %v4740, %v4772
      %v4805 = vmax.f32 %v4741, %v4773
      %v4806 = vmax.f32 %v4742, %v4774
      %v4807 = vmax.f32 %v4743, %v4775
      %v4808 = vmax.f32 %v4744, %v4776
      %v4809 = vmax.f32 %v4745, %v4777
      %v4810 = vmax.f32 %v4746, %v4778
      %v4811 = vmax.f32 %v4747, %v4779
      %v4812 = vmax.f32 %v4748, %v4780
      %v4813 = vmax.f32 %v4749, %v4781
      %v4814 = vmax.f32 %v4750, %v4782
      %v4815 = vmax.f32 %v4751, %v4783
      %v4816 = vmax.f32 %v4752, %v4784
      %v4817 = vmax.f32 %v4753, %v4785
      %v4818 = vmax.f32 %v4754, %v4786
      %v4819 = vmax.f32 %v4755, %v4787
      %v4820 = vmax.f32 %v4756, %v4788
      %v4821 = vmax.f32 %v4757, %v4789
      %v4822 = vmax.f32 %v4758, %v4790
      %v4823 = vmax.f32 %v4759, %v4791
      %v4824 = vmax.f32 %v4760, %v4792
      %v4825 = vmax.f32 %v4761, %v4793
      %v4826 = vmax.f32 %v4762, %v4794
      %v4827 = vmax.f32 %v4763, %v4795
      %v4828 = vmax.f32 %v4764, %v4796
      %v4829 = vmax.f32 %v4765, %v4797
      %v4830 = vmax.f32 %v4766, %v4798
      %v4831 = vmax.f32 %v4767, %v4799
      %v4832 = vld [vmem:[#allocation3 + $0x2] sm:$0xff]
      %v4833 = vld [vmem:[#allocation3 + $0xa] sm:$0xf]
      %v4834 = vld [vmem:[#allocation3 + $0x12] sm:$0xff]
      %v4835 = vld [vmem:[#allocation3 + $0x1a] sm:$0xf]
      %v4836 = vld [vmem:[#allocation3 + $0x22] sm:$0xff]
      %v4837 = vld [vmem:[#allocation3 + $0x2a] sm:$0xf]
      %v4838 = vld [vmem:[#allocation3 + $0x32] sm:$0xff]
      %v4839 = vld [vmem:[#allocation3 + $0x3a] sm:$0xf]
      %v4840 = vld [vmem:[#allocation3 + $0x42] sm:$0xff]
      %v4841 = vld [vmem:[#allocation3 + $0x4a] sm:$0xf]
      %v4842 = vld [vmem:[#allocation3 + $0x52] sm:$0xff]
      %v4843 = vld [vmem:[#allocation3 + $0x5a] sm:$0xf]
      %v4844 = vld [vmem:[#allocation3 + $0x62] sm:$0xff]
      %v4845 = vld [vmem:[#allocation3 + $0x6a] sm:$0xf]
      %v4846 = vld [vmem:[#allocation3 + $0x72] sm:$0xff]
      %v4847 = vld [vmem:[#allocation3 + $0x7a] sm:$0xf]
      %v4848 = vld [vmem:[#allocation3 + $0x82] sm:$0xff]
      %v4849 = vld [vmem:[#allocation3 + $0x8a] sm:$0xf]
      %v4850 = vld [vmem:[#allocation3 + $0x92] sm:$0xff]
      %v4851 = vld [vmem:[#allocation3 + $0x9a] sm:$0xf]
      %v4852 = vld [vmem:[#allocation3 + $0xa2] sm:$0xff]
      %v4853 = vld [vmem:[#allocation3 + $0xaa] sm:$0xf]
      %v4854 = vld [vmem:[#allocation3 + $0xb2] sm:$0xff]
      %v4855 = vld [vmem:[#allocation3 + $0xba] sm:$0xf]
      %v4856 = vld [vmem:[#allocation3 + $0xc2] sm:$0xff]
      %v4857 = vld [vmem:[#allocation3 + $0xca] sm:$0xf]
      %v4858 = vld [vmem:[#allocation3 + $0xd2] sm:$0xff]
      %v4859 = vld [vmem:[#allocation3 + $0xda] sm:$0xf]
      %v4860 = vld [vmem:[#allocation3 + $0xe2] sm:$0xff]
      %v4861 = vld [vmem:[#allocation3 + $0xea] sm:$0xf]
      %v4862 = vld [vmem:[#allocation3 + $0xf2] sm:$0xff]
      %v4863 = vld [vmem:[#allocation3 + $0xfa] sm:$0xf]
      %v4864 = vmax.f32 %v4800, %v4832
      %v4865 = vmax.f32 %v4801, %v4833
      %v4866 = vmax.f32 %v4802, %v4834
      %v4867 = vmax.f32 %v4803, %v4835
      %v4868 = vmax.f32 %v4804, %v4836
      %v4869 = vmax.f32 %v4805, %v4837
      %v4870 = vmax.f32 %v4806, %v4838
      %v4871 = vmax.f32 %v4807, %v4839
      %v4872 = vmax.f32 %v4808, %v4840
      %v4873 = vmax.f32 %v4809, %v4841
      %v4874 = vmax.f32 %v4810, %v4842
      %v4875 = vmax.f32 %v4811, %v4843
      %v4876 = vmax.f32 %v4812, %v4844
      %v4877 = vmax.f32 %v4813, %v4845
      %v4878 = vmax.f32 %v4814, %v4846
      %v4879 = vmax.f32 %v4815, %v4847
      %v4880 = vmax.f32 %v4816, %v4848
      %v4881 = vmax.f32 %v4817, %v4849
      %v4882 = vmax.f32 %v4818, %v4850
      %v4883 = vmax.f32 %v4819, %v4851
      %v4884 = vmax.f32 %v4820, %v4852
      %v4885 = vmax.f32 %v4821, %v4853
      %v4886 = vmax.f32 %v4822, %v4854
      %v4887 = vmax.f32 %v4823, %v4855
      %v4888 = vmax.f32 %v4824, %v4856
      %v4889 = vmax.f32 %v4825, %v4857
      %v4890 = vmax.f32 %v4826, %v4858
      %v4891 = vmax.f32 %v4827, %v4859
      %v4892 = vmax.f32 %v4828, %v4860
      %v4893 = vmax.f32 %v4829, %v4861
      %v4894 = vmax.f32 %v4830, %v4862
      %v4895 = vmax.f32 %v4831, %v4863
      %v4896 = vld [vmem:[#allocation3 + $0x3] sm:$0xff]
      %v4897 = vld [vmem:[#allocation3 + $0xb] sm:$0xf]
      %v4898 = vld [vmem:[#allocation3 + $0x13] sm:$0xff]
      %v4899 = vld [vmem:[#allocation3 + $0x1b] sm:$0xf]
      %v4900 = vld [vmem:[#allocation3 + $0x23] sm:$0xff]
      %v4901 = vld [vmem:[#allocation3 + $0x2b] sm:$0xf]
      %v4902 = vld [vmem:[#allocation3 + $0x33] sm:$0xff]
      %v4903 = vld [vmem:[#allocation3 + $0x3b] sm:$0xf]
      %v4904 = vld [vmem:[#allocation3 + $0x43] sm:$0xff]
      %v4905 = vld [vmem:[#allocation3 + $0x4b] sm:$0xf]
      %v4906 = vld [vmem:[#allocation3 + $0x53] sm:$0xff]
      %v4907 = vld [vmem:[#allocation3 + $0x5b] sm:$0xf]
      %v4908 = vld [vmem:[#allocation3 + $0x63] sm:$0xff]
      %v4909 = vld [vmem:[#allocation3 + $0x6b] sm:$0xf]
      %v4910 = vld [vmem:[#allocation3 + $0x73] sm:$0xff]
      %v4911 = vld [vmem:[#allocation3 + $0x7b] sm:$0xf]
      %v4912 = vld [vmem:[#allocation3 + $0x83] sm:$0xff]
      %v4913 = vld [vmem:[#allocation3 + $0x8b] sm:$0xf]
      %v4914 = vld [vmem:[#allocation3 + $0x93] sm:$0xff]
      %v4915 = vld [vmem:[#allocation3 + $0x9b] sm:$0xf]
      %v4916 = vld [vmem:[#allocation3 + $0xa3] sm:$0xff]
      %v4917 = vld [vmem:[#allocation3 + $0xab] sm:$0xf]
      %v4918 = vld [vmem:[#allocation3 + $0xb3] sm:$0xff]
      %v4919 = vld [vmem:[#allocation3 + $0xbb] sm:$0xf]
      %v4920 = vld [vmem:[#allocation3 + $0xc3] sm:$0xff]
      %v4921 = vld [vmem:[#allocation3 + $0xcb] sm:$0xf]
      %v4922 = vld [vmem:[#allocation3 + $0xd3] sm:$0xff]
      %v4923 = vld [vmem:[#allocation3 + $0xdb] sm:$0xf]
      %v4924 = vld [vmem:[#allocation3 + $0xe3] sm:$0xff]
      %v4925 = vld [vmem:[#allocation3 + $0xeb] sm:$0xf]
      %v4926 = vld [vmem:[#allocation3 + $0xf3] sm:$0xff]
      %v4927 = vld [vmem:[#allocation3 + $0xfb] sm:$0xf]
      %v4928 = vmax.f32 %v4864, %v4896
      %v4929 = vmax.f32 %v4865, %v4897
      %v4930 = vmax.f32 %v4866, %v4898
      %v4931 = vmax.f32 %v4867, %v4899
      %v4932 = vmax.f32 %v4868, %v4900
      %v4933 = vmax.f32 %v4869, %v4901
      %v4934 = vmax.f32 %v4870, %v4902
      %v4935 = vmax.f32 %v4871, %v4903
      %v4936 = vmax.f32 %v4872, %v4904
      %v4937 = vmax.f32 %v4873, %v4905
      %v4938 = vmax.f32 %v4874, %v4906
      %v4939 = vmax.f32 %v4875, %v4907
      %v4940 = vmax.f32 %v4876, %v4908
      %v4941 = vmax.f32 %v4877, %v4909
      %v4942 = vmax.f32 %v4878, %v4910
      %v4943 = vmax.f32 %v4879, %v4911
      %v4944 = vmax.f32 %v4880, %v4912
      %v4945 = vmax.f32 %v4881, %v4913
      %v4946 = vmax.f32 %v4882, %v4914
      %v4947 = vmax.f32 %v4883, %v4915
      %v4948 = vmax.f32 %v4884, %v4916
      %v4949 = vmax.f32 %v4885, %v4917
      %v4950 = vmax.f32 %v4886, %v4918
      %v4951 = vmax.f32 %v4887, %v4919
      %v4952 = vmax.f32 %v4888, %v4920
      %v4953 = vmax.f32 %v4889, %v4921
      %v4954 = vmax.f32 %v4890, %v4922
      %v4955 = vmax.f32 %v4891, %v4923
      %v4956 = vmax.f32 %v4892, %v4924
      %v4957 = vmax.f32 %v4893, %v4925
      %v4958 = vmax.f32 %v4894, %v4926
      %v4959 = vmax.f32 %v4895, %v4927
      %v4960 = vld [vmem:[#allocation3 + $0x4] sm:$0xff]
      %v4961 = vld [vmem:[#allocation3 + $0xc] sm:$0xf]
      %v4962 = vld [vmem:[#allocation3 + $0x14] sm:$0xff]
      %v4963 = vld [vmem:[#allocation3 + $0x1c] sm:$0xf]
      %v4964 = vld [vmem:[#allocation3 + $0x24] sm:$0xff]
      %v4965 = vld [vmem:[#allocation3 + $0x2c] sm:$0xf]
      %v4966 = vld [vmem:[#allocation3 + $0x34] sm:$0xff]
      %v4967 = vld [vmem:[#allocation3 + $0x3c] sm:$0xf]
      %v4968 = vld [vmem:[#allocation3 + $0x44] sm:$0xff]
      %v4969 = vld [vmem:[#allocation3 + $0x4c] sm:$0xf]
      %v4970 = vld [vmem:[#allocation3 + $0x54] sm:$0xff]
      %v4971 = vld [vmem:[#allocation3 + $0x5c] sm:$0xf]
      %v4972 = vld [vmem:[#allocation3 + $0x64] sm:$0xff]
      %v4973 = vld [vmem:[#allocation3 + $0x6c] sm:$0xf]
      %v4974 = vld [vmem:[#allocation3 + $0x74] sm:$0xff]
      %v4975 = vld [vmem:[#allocation3 + $0x7c] sm:$0xf]
      %v4976 = vld [vmem:[#allocation3 + $0x84] sm:$0xff]
      %v4977 = vld [vmem:[#allocation3 + $0x8c] sm:$0xf]
      %v4978 = vld [vmem:[#allocation3 + $0x94] sm:$0xff]
      %v4979 = vld [vmem:[#allocation3 + $0x9c] sm:$0xf]
      %v4980 = vld [vmem:[#allocation3 + $0xa4] sm:$0xff]
      %v4981 = vld [vmem:[#allocation3 + $0xac] sm:$0xf]
      %v4982 = vld [vmem:[#allocation3 + $0xb4] sm:$0xff]
      %v4983 = vld [vmem:[#allocation3 + $0xbc] sm:$0xf]
      %v4984 = vld [vmem:[#allocation3 + $0xc4] sm:$0xff]
      %v4985 = vld [vmem:[#allocation3 + $0xcc] sm:$0xf]
      %v4986 = vld [vmem:[#allocation3 + $0xd4] sm:$0xff]
      %v4987 = vld [vmem:[#allocation3 + $0xdc] sm:$0xf]
      %v4988 = vld [vmem:[#allocation3 + $0xe4] sm:$0xff]
      %v4989 = vld [vmem:[#allocation3 + $0xec] sm:$0xf]
      %v4990 = vld [vmem:[#allocation3 + $0xf4] sm:$0xff]
      %v4991 = vld [vmem:[#allocation3 + $0xfc] sm:$0xf]
      %v4992 = vmax.f32 %v4928, %v4960
      %v4993 = vmax.f32 %v4929, %v4961
      %v4994 = vmax.f32 %v4930, %v4962
      %v4995 = vmax.f32 %v4931, %v4963
      %v4996 = vmax.f32 %v4932, %v4964
      %v4997 = vmax.f32 %v4933, %v4965
      %v4998 = vmax.f32 %v4934, %v4966
      %v4999 = vmax.f32 %v4935, %v4967
      %v5000 = vmax.f32 %v4936, %v4968
      %v5001 = vmax.f32 %v4937, %v4969
      %v5002 = vmax.f32 %v4938, %v4970
      %v5003 = vmax.f32 %v4939, %v4971
      %v5004 = vmax.f32 %v4940, %v4972
      %v5005 = vmax.f32 %v4941, %v4973
      %v5006 = vmax.f32 %v4942, %v4974
      %v5007 = vmax.f32 %v4943, %v4975
      %v5008 = vmax.f32 %v4944, %v4976
      %v5009 = vmax.f32 %v4945, %v4977
      %v5010 = vmax.f32 %v4946, %v4978
      %v5011 = vmax.f32 %v4947, %v4979
      %v5012 = vmax.f32 %v4948, %v4980
      %v5013 = vmax.f32 %v4949, %v4981
      %v5014 = vmax.f32 %v4950, %v4982
      %v5015 = vmax.f32 %v4951, %v4983
      %v5016 = vmax.f32 %v4952, %v4984
      %v5017 = vmax.f32 %v4953, %v4985
      %v5018 = vmax.f32 %v4954, %v4986
      %v5019 = vmax.f32 %v4955, %v4987
      %v5020 = vmax.f32 %v4956, %v4988
      %v5021 = vmax.f32 %v4957, %v4989
      %v5022 = vmax.f32 %v4958, %v4990
      %v5023 = vmax.f32 %v4959, %v4991
      %5024 = vst.msk [vmem:[#allocation2 + $0x2] sm:$0xff] %vm307, %v4992
      %5025 = vst.msk [vmem:[#allocation2 + $0xa] sm:$0xf] %vm1259, %v4993
      %5026 = vst.msk [vmem:[#allocation2 + $0x12] sm:$0xff] %vm307, %v4994
      %5027 = vst.msk [vmem:[#allocation2 + $0x1a] sm:$0xf] %vm1259, %v4995
      %5028 = vst.msk [vmem:[#allocation2 + $0x22] sm:$0xff] %vm307, %v4996
      %5029 = vst.msk [vmem:[#allocation2 + $0x2a] sm:$0xf] %vm1259, %v4997
      %5030 = vst.msk [vmem:[#allocation2 + $0x32] sm:$0xff] %vm307, %v4998
      %5031 = vst.msk [vmem:[#allocation2 + $0x3a] sm:$0xf] %vm1259, %v4999
      %5032 = vst.msk [vmem:[#allocation2 + $0x42] sm:$0xff] %vm307, %v5000
      %5033 = vst.msk [vmem:[#allocation2 + $0x4a] sm:$0xf] %vm1259, %v5001
      %5034 = vst.msk [vmem:[#allocation2 + $0x52] sm:$0xff] %vm307, %v5002
      %5035 = vst.msk [vmem:[#allocation2 + $0x5a] sm:$0xf] %vm1259, %v5003
      %5036 = vst.msk [vmem:[#allocation2 + $0x62] sm:$0xff] %vm307, %v5004
      %5037 = vst.msk [vmem:[#allocation2 + $0x6a] sm:$0xf] %vm1259, %v5005
      %5038 = vst.msk [vmem:[#allocation2 + $0x72] sm:$0xff] %vm307, %v5006
      %5039 = vst.msk [vmem:[#allocation2 + $0x7a] sm:$0xf] %vm1259, %v5007
      %5040 = vst.msk [vmem:[#allocation2 + $0x82] sm:$0xff] %vm307, %v5008
      %5041 = vst.msk [vmem:[#allocation2 + $0x8a] sm:$0xf] %vm1259, %v5009
      %5042 = vst.msk [vmem:[#allocation2 + $0x92] sm:$0xff] %vm307, %v5010
      %5043 = vst.msk [vmem:[#allocation2 + $0x9a] sm:$0xf] %vm1259, %v5011
      %5044 = vst.msk [vmem:[#allocation2 + $0xa2] sm:$0xff] %vm307, %v5012
      %5045 = vst.msk [vmem:[#allocation2 + $0xaa] sm:$0xf] %vm1259, %v5013
      %5046 = vst.msk [vmem:[#allocation2 + $0xb2] sm:$0xff] %vm307, %v5014
      %5047 = vst.msk [vmem:[#allocation2 + $0xba] sm:$0xf] %vm1259, %v5015
      %5048 = vst.msk [vmem:[#allocation2 + $0xc2] sm:$0xff] %vm307, %v5016
      %5049 = vst.msk [vmem:[#allocation2 + $0xca] sm:$0xf] %vm1259, %v5017
      %5050 = vst.msk [vmem:[#allocation2 + $0xd2] sm:$0xff] %vm307, %v5018
      %5051 = vst.msk [vmem:[#allocation2 + $0xda] sm:$0xf] %vm1259, %v5019
      %5052 = vst.msk [vmem:[#allocation2 + $0xe2] sm:$0xff] %vm307, %v5020
      %5053 = vst.msk [vmem:[#allocation2 + $0xea] sm:$0xf] %vm1259, %v5021
      %5054 = vst.msk [vmem:[#allocation2 + $0xf2] sm:$0xff] %vm307, %v5022
      %5055 = vst.msk [vmem:[#allocation2 + $0xfa] sm:$0xf] %vm1259, %v5023
      %v5056 = vld [vmem:[#allocation3 + $0xc] sm:$0xf]
      %v5057 = vld [vmem:[#allocation3 + $0x1c] sm:$0xf]
      %v5058 = vld [vmem:[#allocation3 + $0x2c] sm:$0xf]
      %v5059 = vld [vmem:[#allocation3 + $0x3c] sm:$0xf]
      %v5060 = vld [vmem:[#allocation3 + $0x4c] sm:$0xf]
      %v5061 = vld [vmem:[#allocation3 + $0x5c] sm:$0xf]
      %v5062 = vld [vmem:[#allocation3 + $0x6c] sm:$0xf]
      %v5063 = vld [vmem:[#allocation3 + $0x7c] sm:$0xf]
      %v5064 = vld [vmem:[#allocation3 + $0x8c] sm:$0xf]
      %v5065 = vld [vmem:[#allocation3 + $0x9c] sm:$0xf]
      %v5066 = vld [vmem:[#allocation3 + $0xac] sm:$0xf]
      %v5067 = vld [vmem:[#allocation3 + $0xbc] sm:$0xf]
      %v5068 = vld [vmem:[#allocation3 + $0xcc] sm:$0xf]
      %v5069 = vld [vmem:[#allocation3 + $0xdc] sm:$0xf]
      %v5070 = vld [vmem:[#allocation3 + $0xec] sm:$0xf]
      %v5071 = vld [vmem:[#allocation3 + $0xfc] sm:$0xf]
      %v5072 = vsel %vm1259, %v5056, -inf
      %v5073 = vrot.slane %v5072, 4
      %v5074 = vmax.f32 %v5072, %v5073
      %v5075 = vrot.slane %v5074, 2
      %v5076 = vmax.f32 %v5074, %v5075
      %v5077 = vrot.slane %v5076, 1
      %v5078 = vmax.f32 %v5076, %v5077
      %v5079 = vsel %vm1259, %v5057, -inf
      %v5080 = vrot.slane %v5079, 4
      %v5081 = vmax.f32 %v5079, %v5080
      %v5082 = vrot.slane %v5081, 2
      %v5083 = vmax.f32 %v5081, %v5082
      %v5084 = vrot.slane %v5083, 1
      %v5085 = vmax.f32 %v5083, %v5084
      %v5086 = vsel %vm1259, %v5058, -inf
      %v5087 = vrot.slane %v5086, 4
      %v5088 = vmax.f32 %v5086, %v5087
      %v5089 = vrot.slane %v5088, 2
      %v5090 = vmax.f32 %v5088, %v5089
      %v5091 = vrot.slane %v5090, 1
      %v5092 = vmax.f32 %v5090, %v5091
      %v5093 = vsel %vm1259, %v5059, -inf
      %v5094 = vrot.slane %v5093, 4
      %v5095 = vmax.f32 %v5093, %v5094
      %v5096 = vrot.slane %v5095, 2
      %v5097 = vmax.f32 %v5095, %v5096
      %v5098 = vrot.slane %v5097, 1
      %v5099 = vmax.f32 %v5097, %v5098
      %v5100 = vsel %vm1259, %v5060, -inf
      %v5101 = vrot.slane %v5100, 4
      %v5102 = vmax.f32 %v5100, %v5101
      %v5103 = vrot.slane %v5102, 2
      %v5104 = vmax.f32 %v5102, %v5103
      %v5105 = vrot.slane %v5104, 1
      %v5106 = vmax.f32 %v5104, %v5105
      %v5107 = vsel %vm1259, %v5061, -inf
      %v5108 = vrot.slane %v5107, 4
      %v5109 = vmax.f32 %v5107, %v5108
      %v5110 = vrot.slane %v5109, 2
      %v5111 = vmax.f32 %v5109, %v5110
      %v5112 = vrot.slane %v5111, 1
      %v5113 = vmax.f32 %v5111, %v5112
      %v5114 = vsel %vm1259, %v5062, -inf
      %v5115 = vrot.slane %v5114, 4
      %v5116 = vmax.f32 %v5114, %v5115
      %v5117 = vrot.slane %v5116, 2
      %v5118 = vmax.f32 %v5116, %v5117
      %v5119 = vrot.slane %v5118, 1
      %v5120 = vmax.f32 %v5118, %v5119
      %v5121 = vsel %vm1259, %v5063, -inf
      %v5122 = vrot.slane %v5121, 4
      %v5123 = vmax.f32 %v5121, %v5122
      %v5124 = vrot.slane %v5123, 2
      %v5125 = vmax.f32 %v5123, %v5124
      %v5126 = vrot.slane %v5125, 1
      %v5127 = vmax.f32 %v5125, %v5126
      %v5128 = vsel %vm1259, %v5064, -inf
      %v5129 = vrot.slane %v5128, 4
      %v5130 = vmax.f32 %v5128, %v5129
      %v5131 = vrot.slane %v5130, 2
      %v5132 = vmax.f32 %v5130, %v5131
      %v5133 = vrot.slane %v5132, 1
      %v5134 = vmax.f32 %v5132, %v5133
      %v5135 = vsel %vm1259, %v5065, -inf
      %v5136 = vrot.slane %v5135, 4
      %v5137 = vmax.f32 %v5135, %v5136
      %v5138 = vrot.slane %v5137, 2
      %v5139 = vmax.f32 %v5137, %v5138
      %v5140 = vrot.slane %v5139, 1
      %v5141 = vmax.f32 %v5139, %v5140
      %v5142 = vsel %vm1259, %v5066, -inf
      %v5143 = vrot.slane %v5142, 4
      %v5144 = vmax.f32 %v5142, %v5143
      %v5145 = vrot.slane %v5144, 2
      %v5146 = vmax.f32 %v5144, %v5145
      %v5147 = vrot.slane %v5146, 1
      %v5148 = vmax.f32 %v5146, %v5147
      %v5149 = vsel %vm1259, %v5067, -inf
      %v5150 = vrot.slane %v5149, 4
      %v5151 = vmax.f32 %v5149, %v5150
      %v5152 = vrot.slane %v5151, 2
      %v5153 = vmax.f32 %v5151, %v5152
      %v5154 = vrot.slane %v5153, 1
      %v5155 = vmax.f32 %v5153, %v5154
      %v5156 = vsel %vm1259, %v5068, -inf
      %v5157 = vrot.slane %v5156, 4
      %v5158 = vmax.f32 %v5156, %v5157
      %v5159 = vrot.slane %v5158, 2
      %v5160 = vmax.f32 %v5158, %v5159
      %v5161 = vrot.slane %v5160, 1
      %v5162 = vmax.f32 %v5160, %v5161
      %v5163 = vsel %vm1259, %v5069, -inf
      %v5164 = vrot.slane %v5163, 4
      %v5165 = vmax.f32 %v5163, %v5164
      %v5166 = vrot.slane %v5165, 2
      %v5167 = vmax.f32 %v5165, %v5166
      %v5168 = vrot.slane %v5167, 1
      %v5169 = vmax.f32 %v5167, %v5168
      %v5170 = vsel %vm1259, %v5070, -inf
      %v5171 = vrot.slane %v5170, 4
      %v5172 = vmax.f32 %v5170, %v5171
      %v5173 = vrot.slane %v5172, 2
      %v5174 = vmax.f32 %v5172, %v5173
      %v5175 = vrot.slane %v5174, 1
      %v5176 = vmax.f32 %v5174, %v5175
      %v5177 = vsel %vm1259, %v5071, -inf
      %v5178 = vrot.slane %v5177, 4
      %v5179 = vmax.f32 %v5177, %v5178
      %v5180 = vrot.slane %v5179, 2
      %v5181 = vmax.f32 %v5179, %v5180
      %v5182 = vrot.slane %v5181, 1
      %v5183 = vmax.f32 %v5181, %v5182
      %5184 = vst.msk [vmem:[#allocation2 + $0xe] sm:$0x1] %vm1226, %v5078
      %5185 = vst.msk [vmem:[#allocation2 + $0x1e] sm:$0x1] %vm1226, %v5085
      %5186 = vst.msk [vmem:[#allocation2 + $0x2e] sm:$0x1] %vm1226, %v5092
      %5187 = vst.msk [vmem:[#allocation2 + $0x3e] sm:$0x1] %vm1226, %v5099
      %5188 = vst.msk [vmem:[#allocation2 + $0x4e] sm:$0x1] %vm1226, %v5106
      %5189 = vst.msk [vmem:[#allocation2 + $0x5e] sm:$0x1] %vm1226, %v5113
      %5190 = vst.msk [vmem:[#allocation2 + $0x6e] sm:$0x1] %vm1226, %v5120
      %5191 = vst.msk [vmem:[#allocation2 + $0x7e] sm:$0x1] %vm1226, %v5127
      %5192 = vst.msk [vmem:[#allocation2 + $0x8e] sm:$0x1] %vm1226, %v5134
      %5193 = vst.msk [vmem:[#allocation2 + $0x9e] sm:$0x1] %vm1226, %v5141
      %5194 = vst.msk [vmem:[#allocation2 + $0xae] sm:$0x1] %vm1226, %v5148
      %5195 = vst.msk [vmem:[#allocation2 + $0xbe] sm:$0x1] %vm1226, %v5155
      %5196 = vst.msk [vmem:[#allocation2 + $0xce] sm:$0x1] %vm1226, %v5162
      %5197 = vst.msk [vmem:[#allocation2 + $0xde] sm:$0x1] %vm1226, %v5169
      %5198 = vst.msk [vmem:[#allocation2 + $0xee] sm:$0x1] %vm1226, %v5176
      %5199 = vst.msk [vmem:[#allocation2 + $0xfe] sm:$0x1] %vm1226, %v5183
      %v5200 = vld [vmem:[#allocation3 + $0xd] sm:$0x7]
      %v5201 = vld [vmem:[#allocation3 + $0x1d] sm:$0x7]
      %v5202 = vld [vmem:[#allocation3 + $0x2d] sm:$0x7]
      %v5203 = vld [vmem:[#allocation3 + $0x3d] sm:$0x7]
      %v5204 = vld [vmem:[#allocation3 + $0x4d] sm:$0x7]
      %v5205 = vld [vmem:[#allocation3 + $0x5d] sm:$0x7]
      %v5206 = vld [vmem:[#allocation3 + $0x6d] sm:$0x7]
      %v5207 = vld [vmem:[#allocation3 + $0x7d] sm:$0x7]
      %v5208 = vld [vmem:[#allocation3 + $0x8d] sm:$0x7]
      %v5209 = vld [vmem:[#allocation3 + $0x9d] sm:$0x7]
      %v5210 = vld [vmem:[#allocation3 + $0xad] sm:$0x7]
      %v5211 = vld [vmem:[#allocation3 + $0xbd] sm:$0x7]
      %v5212 = vld [vmem:[#allocation3 + $0xcd] sm:$0x7]
      %v5213 = vld [vmem:[#allocation3 + $0xdd] sm:$0x7]
      %v5214 = vld [vmem:[#allocation3 + $0xed] sm:$0x7]
      %v5215 = vld [vmem:[#allocation3 + $0xfd] sm:$0x7]
      %v5216 = vsel %vm1113, %v5200, -inf
      %v5217 = vrot.slane %v5216, 4
      %v5218 = vmax.f32 %v5216, %v5217
      %v5219 = vrot.slane %v5218, 2
      %v5220 = vmax.f32 %v5218, %v5219
      %v5221 = vrot.slane %v5220, 1
      %v5222 = vmax.f32 %v5220, %v5221
      %v5223 = vsel %vm1113, %v5201, -inf
      %v5224 = vrot.slane %v5223, 4
      %v5225 = vmax.f32 %v5223, %v5224
      %v5226 = vrot.slane %v5225, 2
      %v5227 = vmax.f32 %v5225, %v5226
      %v5228 = vrot.slane %v5227, 1
      %v5229 = vmax.f32 %v5227, %v5228
      %v5230 = vsel %vm1113, %v5202, -inf
      %v5231 = vrot.slane %v5230, 4
      %v5232 = vmax.f32 %v5230, %v5231
      %v5233 = vrot.slane %v5232, 2
      %v5234 = vmax.f32 %v5232, %v5233
      %v5235 = vrot.slane %v5234, 1
      %v5236 = vmax.f32 %v5234, %v5235
      %v5237 = vsel %vm1113, %v5203, -inf
      %v5238 = vrot.slane %v5237, 4
      %v5239 = vmax.f32 %v5237, %v5238
      %v5240 = vrot.slane %v5239, 2
      %v5241 = vmax.f32 %v5239, %v5240
      %v5242 = vrot.slane %v5241, 1
      %v5243 = vmax.f32 %v5241, %v5242
      %v5244 = vsel %vm1113, %v5204, -inf
      %v5245 = vrot.slane %v5244, 4
      %v5246 = vmax.f32 %v5244, %v5245
      %v5247 = vrot.slane %v5246, 2
      %v5248 = vmax.f32 %v5246, %v5247
      %v5249 = vrot.slane %v5248, 1
      %v5250 = vmax.f32 %v5248, %v5249
      %v5251 = vsel %vm1113, %v5205, -inf
      %v5252 = vrot.slane %v5251, 4
      %v5253 = vmax.f32 %v5251, %v5252
      %v5254 = vrot.slane %v5253, 2
      %v5255 = vmax.f32 %v5253, %v5254
      %v5256 = vrot.slane %v5255, 1
      %v5257 = vmax.f32 %v5255, %v5256
      %v5258 = vsel %vm1113, %v5206, -inf
      %v5259 = vrot.slane %v5258, 4
      %v5260 = vmax.f32 %v5258, %v5259
      %v5261 = vrot.slane %v5260, 2
      %v5262 = vmax.f32 %v5260, %v5261
      %v5263 = vrot.slane %v5262, 1
      %v5264 = vmax.f32 %v5262, %v5263
      %v5265 = vsel %vm1113, %v5207, -inf
      %v5266 = vrot.slane %v5265, 4
      %v5267 = vmax.f32 %v5265, %v5266
      %v5268 = vrot.slane %v5267, 2
      %v5269 = vmax.f32 %v5267, %v5268
      %v5270 = vrot.slane %v5269, 1
      %v5271 = vmax.f32 %v5269, %v5270
      %v5272 = vsel %vm1113, %v5208, -inf
      %v5273 = vrot.slane %v5272, 4
      %v5274 = vmax.f32 %v5272, %v5273
      %v5275 = vrot.slane %v5274, 2
      %v5276 = vmax.f32 %v5274, %v5275
      %v5277 = vrot.slane %v5276, 1
      %v5278 = vmax.f32 %v5276, %v5277
      %v5279 = vsel %vm1113, %v5209, -inf
      %v5280 = vrot.slane %v5279, 4
      %v5281 = vmax.f32 %v5279, %v5280
      %v5282 = vrot.slane %v5281, 2
      %v5283 = vmax.f32 %v5281, %v5282
      %v5284 = vrot.slane %v5283, 1
      %v5285 = vmax.f32 %v5283, %v5284
      %v5286 = vsel %vm1113, %v5210, -inf
      %v5287 = vrot.slane %v5286, 4
      %v5288 = vmax.f32 %v5286, %v5287
      %v5289 = vrot.slane %v5288, 2
      %v5290 = vmax.f32 %v5288, %v5289
      %v5291 = vrot.slane %v5290, 1
      %v5292 = vmax.f32 %v5290, %v5291
      %v5293 = vsel %vm1113, %v5211, -inf
      %v5294 = vrot.slane %v5293, 4
      %v5295 = vmax.f32 %v5293, %v5294
      %v5296 = vrot.slane %v5295, 2
      %v5297 = vmax.f32 %v5295, %v5296
      %v5298 = vrot.slane %v5297, 1
      %v5299 = vmax.f32 %v5297, %v5298
      %v5300 = vsel %vm1113, %v5212, -inf
      %v5301 = vrot.slane %v5300, 4
      %v5302 = vmax.f32 %v5300, %v5301
      %v5303 = vrot.slane %v5302, 2
      %v5304 = vmax.f32 %v5302, %v5303
      %v5305 = vrot.slane %v5304, 1
      %v5306 = vmax.f32 %v5304, %v5305
      %v5307 = vsel %vm1113, %v5213, -inf
      %v5308 = vrot.slane %v5307, 4
      %v5309 = vmax.f32 %v5307, %v5308
      %v5310 = vrot.slane %v5309, 2
      %v5311 = vmax.f32 %v5309, %v5310
      %v5312 = vrot.slane %v5311, 1
      %v5313 = vmax.f32 %v5311, %v5312
      %v5314 = vsel %vm1113, %v5214, -inf
      %v5315 = vrot.slane %v5314, 4
      %v5316 = vmax.f32 %v5314, %v5315
      %v5317 = vrot.slane %v5316, 2
      %v5318 = vmax.f32 %v5316, %v5317
      %v5319 = vrot.slane %v5318, 1
      %v5320 = vmax.f32 %v5318, %v5319
      %v5321 = vsel %vm1113, %v5215, -inf
      %v5322 = vrot.slane %v5321, 4
      %v5323 = vmax.f32 %v5321, %v5322
      %v5324 = vrot.slane %v5323, 2
      %v5325 = vmax.f32 %v5323, %v5324
      %v5326 = vrot.slane %v5325, 1
      %v5327 = vmax.f32 %v5325, %v5326
      %5328 = vst.msk [vmem:[#allocation2 + $0xf] sm:$0x1] %vm1226, %v5222
      %5329 = vst.msk [vmem:[#allocation2 + $0x1f] sm:$0x1] %vm1226, %v5229
      %5330 = vst.msk [vmem:[#allocation2 + $0x2f] sm:$0x1] %vm1226, %v5236
      %5331 = vst.msk [vmem:[#allocation2 + $0x3f] sm:$0x1] %vm1226, %v5243
      %5332 = vst.msk [vmem:[#allocation2 + $0x4f] sm:$0x1] %vm1226, %v5250
      %5333 = vst.msk [vmem:[#allocation2 + $0x5f] sm:$0x1] %vm1226, %v5257
      %5334 = vst.msk [vmem:[#allocation2 + $0x6f] sm:$0x1] %vm1226, %v5264
      %5335 = vst.msk [vmem:[#allocation2 + $0x7f] sm:$0x1] %vm1226, %v5271
      %5336 = vst.msk [vmem:[#allocation2 + $0x8f] sm:$0x1] %vm1226, %v5278
      %5337 = vst.msk [vmem:[#allocation2 + $0x9f] sm:$0x1] %vm1226, %v5285
      %5338 = vst.msk [vmem:[#allocation2 + $0xaf] sm:$0x1] %vm1226, %v5292
      %5339 = vst.msk [vmem:[#allocation2 + $0xbf] sm:$0x1] %vm1226, %v5299
      %5340 = vst.msk [vmem:[#allocation2 + $0xcf] sm:$0x1] %vm1226, %v5306
      %5341 = vst.msk [vmem:[#allocation2 + $0xdf] sm:$0x1] %vm1226, %v5313
      %5342 = vst.msk [vmem:[#allocation2 + $0xef] sm:$0x1] %vm1226, %v5320
      %5343 = vst.msk [vmem:[#allocation2 + $0xff] sm:$0x1] %vm1226, %v5327
      %v5344 = vld [vmem:[#allocation4] sm:$0xff]
      %v5345 = vld [vmem:[#allocation4 + $0x8] sm:$0xff]
      %v5346 = vld [vmem:[#allocation4 + $0x10] sm:$0xff]
      %v5347 = vld [vmem:[#allocation4 + $0x18] sm:$0xff]
      %v5348 = vld [vmem:[#allocation4 + $0x20] sm:$0xff]
      %v5349 = vld [vmem:[#allocation4 + $0x28] sm:$0xff]
      %v5350 = vld [vmem:[#allocation4 + $0x30] sm:$0xff]
      %v5351 = vld [vmem:[#allocation4 + $0x38] sm:$0xff]
      %v5352 = vld [vmem:[#allocation4 + $0x40] sm:$0xff]
      %v5353 = vld [vmem:[#allocation4 + $0x48] sm:$0xff]
      %v5354 = vld [vmem:[#allocation4 + $0x50] sm:$0xff]
      %v5355 = vld [vmem:[#allocation4 + $0x58] sm:$0xff]
      %v5356 = vld [vmem:[#allocation4 + $0x60] sm:$0xff]
      %v5357 = vld [vmem:[#allocation4 + $0x68] sm:$0xff]
      %v5358 = vld [vmem:[#allocation4 + $0x70] sm:$0xff]
      %v5359 = vld [vmem:[#allocation4 + $0x78] sm:$0xff]
      %v5360 = vld [vmem:[#allocation4 + $0x80] sm:$0xff]
      %v5361 = vld [vmem:[#allocation4 + $0x88] sm:$0xff]
      %v5362 = vld [vmem:[#allocation4 + $0x90] sm:$0xff]
      %v5363 = vld [vmem:[#allocation4 + $0x98] sm:$0xff]
      %v5364 = vld [vmem:[#allocation4 + $0xa0] sm:$0xff]
      %v5365 = vld [vmem:[#allocation4 + $0xa8] sm:$0xff]
      %v5366 = vld [vmem:[#allocation4 + $0xb0] sm:$0xff]
      %v5367 = vld [vmem:[#allocation4 + $0xb8] sm:$0xff]
      %v5368 = vld [vmem:[#allocation4 + $0xc0] sm:$0xff]
      %v5369 = vld [vmem:[#allocation4 + $0xc8] sm:$0xff]
      %v5370 = vld [vmem:[#allocation4 + $0xd0] sm:$0xff]
      %v5371 = vld [vmem:[#allocation4 + $0xd8] sm:$0xff]
      %v5372 = vld [vmem:[#allocation4 + $0xe0] sm:$0xff]
      %v5373 = vld [vmem:[#allocation4 + $0xe8] sm:$0xff]
      %v5374 = vld [vmem:[#allocation4 + $0xf0] sm:$0xff]
      %v5375 = vld [vmem:[#allocation4 + $0xf8] sm:$0xff]
      %v5376 = vld [vmem:[#allocation2] sm:$0xff]
      %v5377 = vld [vmem:[#allocation2 + $0x8] sm:$0xff]
      %v5378 = vld [vmem:[#allocation2 + $0x10] sm:$0xff]
      %v5379 = vld [vmem:[#allocation2 + $0x18] sm:$0xff]
      %v5380 = vld [vmem:[#allocation2 + $0x20] sm:$0xff]
      %v5381 = vld [vmem:[#allocation2 + $0x28] sm:$0xff]
      %v5382 = vld [vmem:[#allocation2 + $0x30] sm:$0xff]
      %v5383 = vld [vmem:[#allocation2 + $0x38] sm:$0xff]
      %v5384 = vld [vmem:[#allocation2 + $0x40] sm:$0xff]
      %v5385 = vld [vmem:[#allocation2 + $0x48] sm:$0xff]
      %v5386 = vld [vmem:[#allocation2 + $0x50] sm:$0xff]
      %v5387 = vld [vmem:[#allocation2 + $0x58] sm:$0xff]
      %v5388 = vld [vmem:[#allocation2 + $0x60] sm:$0xff]
      %v5389 = vld [vmem:[#allocation2 + $0x68] sm:$0xff]
      %v5390 = vld [vmem:[#allocation2 + $0x70] sm:$0xff]
      %v5391 = vld [vmem:[#allocation2 + $0x78] sm:$0xff]
      %v5392 = vld [vmem:[#allocation2 + $0x80] sm:$0xff]
      %v5393 = vld [vmem:[#allocation2 + $0x88] sm:$0xff]
      %v5394 = vld [vmem:[#allocation2 + $0x90] sm:$0xff]
      %v5395 = vld [vmem:[#allocation2 + $0x98] sm:$0xff]
      %v5396 = vld [vmem:[#allocation2 + $0xa0] sm:$0xff]
      %v5397 = vld [vmem:[#allocation2 + $0xa8] sm:$0xff]
      %v5398 = vld [vmem:[#allocation2 + $0xb0] sm:$0xff]
      %v5399 = vld [vmem:[#allocation2 + $0xb8] sm:$0xff]
      %v5400 = vld [vmem:[#allocation2 + $0xc0] sm:$0xff]
      %v5401 = vld [vmem:[#allocation2 + $0xc8] sm:$0xff]
      %v5402 = vld [vmem:[#allocation2 + $0xd0] sm:$0xff]
      %v5403 = vld [vmem:[#allocation2 + $0xd8] sm:$0xff]
      %v5404 = vld [vmem:[#allocation2 + $0xe0] sm:$0xff]
      %v5405 = vld [vmem:[#allocation2 + $0xe8] sm:$0xff]
      %v5406 = vld [vmem:[#allocation2 + $0xf0] sm:$0xff]
      %v5407 = vld [vmem:[#allocation2 + $0xf8] sm:$0xff]
      %s5408 = scalar_lea.vmem %s232, 6
      %v5409 = vld [vmem:[%s5408] sm:$0x3]
      %v5411 = vsel %vm307, %v5376, 0
      %v5414 = vsel %vm307, %v5377, 0
      %v5417 = vsel %vm307, %v5378, 0
      %v5420 = vsel %vm307, %v5379, 0
      %v5423 = vsel %vm307, %v5380, 0
      %v5426 = vsel %vm307, %v5381, 0
      %v5429 = vsel %vm307, %v5382, 0
      %v5432 = vsel %vm307, %v5383, 0
      %v5435 = vsel %vm307, %v5384, 0
      %v5438 = vsel %vm307, %v5385, 0
      %v5441 = vsel %vm307, %v5386, 0
      %v5444 = vsel %vm307, %v5387, 0
      %v5447 = vsel %vm307, %v5388, 0
      %v5450 = vsel %vm307, %v5389, 0
      %v5453 = vsel %vm307, %v5390, 0
      %v5456 = vsel %vm307, %v5391, 0
      %v5459 = vsel %vm307, %v5392, 0
      %v5462 = vsel %vm307, %v5393, 0
      %v5465 = vsel %vm307, %v5394, 0
      %v5468 = vsel %vm307, %v5395, 0
      %v5471 = vsel %vm307, %v5396, 0
      %v5474 = vsel %vm307, %v5397, 0
      %v5477 = vsel %vm307, %v5398, 0
      %v5480 = vsel %vm307, %v5399, 0
      %v5483 = vsel %vm307, %v5400, 0
      %v5486 = vsel %vm307, %v5401, 0
      %v5489 = vsel %vm307, %v5402, 0
      %v5492 = vsel %vm307, %v5403, 0
      %v5495 = vsel %vm307, %v5404, 0
      %v5498 = vsel %vm307, %v5405, 0
      %v5501 = vsel %vm307, %v5406, 0
      %v5504 = vsel %vm307, %v5407, 0
      %v5507 = vsel %vm469, %v5409, 0
      %5509 = vmatprep.subr.mxu0 0.0
      %5510 = vmatpush1.msra.mxu0 0.0
      %5511 = vmatprep.subr.mxu0 0.0
      %5512 = vmatpush1.msra.mxu0 0.0
      %5513 = vmatprep.subr.mxu0 0.0
      %5514 = vmatpush1.msra.mxu0 0.0
      %5515 = vmatprep.subr.mxu0 0.0
      %5516 = vmatpush1.msra.mxu0 0.0
      %5517 = vmatprep.subr.mxu0 0.0
      %5518 = vmatpush1.msra.mxu0 0.0
      %5519 = vmatprep.subr.mxu0 0.0
      %5520 = vmatpush1.msra.mxu0 0.0
      %5521 = vmatprep.subr.mxu0 0.0
      %5522 = vmatpush1.msra.mxu0 0.0
      %5523 = vmatprep.subr.mxu0 0.0
      %5524 = vmatpush1.msra.mxu0 0.0
      %5525 = vmatprep.subr.mxu0 0.0
      %5526 = vmatpush1.msra.mxu0 0.0
      %5527 = vmatprep.subr.mxu0 0.0
      %5528 = vmatpush1.msra.mxu0 0.0
      %5529 = vmatprep.subr.mxu0 0.0
      %5530 = vmatpush1.msra.mxu0 0.0
      %5531 = vmatprep.subr.mxu0 0.0
      %5532 = vmatpush1.msra.mxu0 0.0
      %5533 = vmatprep.subr.mxu0 0.0
      %5534 = vmatpush1.msra.mxu0 0.0
      %5535 = vmatprep.subr.mxu0 0.0
      %5536 = vmatpush1.msra.mxu0 0.0
      %5537 = vmatprep.subr.mxu0 0.0
      %5538 = vmatpush1.msra.mxu0 0.0
      %5539 = vmatprep.subr.mxu0 0.0
      %5540 = vmatpush1.msra.mxu0 %v5507
      %5541 = vmatprep.subr.mxu0 0.0
      %5542 = vmatpush2.msra.mxu0 0.0
      %5543 = vmatprep.subr.mxu0 0.0
      %5544 = vmatpush2.msra.mxu0 0.0
      %5545 = vmatprep.subr.mxu0 0.0
      %5546 = vmatpush2.msra.mxu0 0.0
      %5547 = vmatprep.subr.mxu0 0.0
      %5548 = vmatpush2.msra.mxu0 0.0
      %5549 = vmatprep.subr.mxu0 0.0
      %5550 = vmatpush2.msra.mxu0 0.0
      %5551 = vmatprep.subr.mxu0 0.0
      %5552 = vmatpush2.msra.mxu0 0.0
      %5553 = vmatprep.subr.mxu0 0.0
      %5554 = vmatpush2.msra.mxu0 0.0
      %5555 = vmatprep.subr.mxu0 0.0
      %5556 = vmatpush2.msra.mxu0 0.0
      %5557 = vmatprep.subr.mxu0 0.0
      %5558 = vmatpush2.msra.mxu0 0.0
      %5559 = vmatprep.subr.mxu0 0.0
      %5560 = vmatpush2.msra.mxu0 0.0
      %5561 = vmatprep.subr.mxu0 0.0
      %5562 = vmatpush2.msra.mxu0 0.0
      %5563 = vmatprep.subr.mxu0 0.0
      %5564 = vmatpush2.msra.mxu0 0.0
      %5565 = vmatprep.subr.mxu0 0.0
      %5566 = vmatpush2.msra.mxu0 0.0
      %5567 = vmatprep.subr.mxu0 0.0
      %5568 = vmatpush2.msra.mxu0 0.0
      %5569 = vmatprep.subr.mxu0 0.0
      %5570 = vmatpush2.msra.mxu0 0.0
      %5571 = vmatprep.subr.mxu0 0.0
      %5572 = vmatpush2.msra.mxu0 0.0
      %5573 = vmatprep.mubr.f32.mxu0 0.0
      %5574 = vmatmul.mubr.f32.gmra.mxu0 %v5411
      %v5575 = vpop.f32.mrf.mxu0
      %v5576 = vadd.f32 0.0, %v5575
      %v5577 = vpop.f32.mrf.mxu0
      %5578 = vmatprep.mubr.f32.mxu0 0.0
      %5579 = vmatmul.mubr.f32.gmra.mxu0 %v5414
      %v5580 = vpop.f32.mrf.mxu0
      %v5581 = vadd.f32 0.0, %v5580
      %v5582 = vpop.f32.mrf.mxu0
      %5583 = vmatprep.mubr.f32.mxu0 0.0
      %5584 = vmatmul.mubr.f32.gmra.mxu0 %v5417
      %v5585 = vpop.f32.mrf.mxu0
      %v5586 = vadd.f32 0.0, %v5585
      %v5587 = vpop.f32.mrf.mxu0
      %5588 = vmatprep.mubr.f32.mxu0 0.0
      %5589 = vmatmul.mubr.f32.gmra.mxu0 %v5420
      %v5590 = vpop.f32.mrf.mxu0
      %v5591 = vadd.f32 0.0, %v5590
      %v5592 = vpop.f32.mrf.mxu0
      %5593 = vmatprep.mubr.f32.mxu0 0.0
      %5594 = vmatmul.mubr.f32.gmra.mxu0 %v5423
      %v5595 = vpop.f32.mrf.mxu0
      %v5596 = vadd.f32 0.0, %v5595
      %v5597 = vpop.f32.mrf.mxu0
      %5598 = vmatprep.mubr.f32.mxu0 0.0
      %5599 = vmatmul.mubr.f32.gmra.mxu0 %v5426
      %v5600 = vpop.f32.mrf.mxu0
      %v5601 = vadd.f32 0.0, %v5600
      %v5602 = vpop.f32.mrf.mxu0
      %5603 = vmatprep.mubr.f32.mxu0 0.0
      %5604 = vmatmul.mubr.f32.gmra.mxu0 %v5429
      %v5605 = vpop.f32.mrf.mxu0
      %v5606 = vadd.f32 0.0, %v5605
      %v5607 = vpop.f32.mrf.mxu0
      %5608 = vmatprep.mubr.f32.mxu0 0.0
      %5609 = vmatmul.mubr.f32.gmra.mxu0 %v5432
      %v5610 = vpop.f32.mrf.mxu0
      %v5611 = vadd.f32 0.0, %v5610
      %v5612 = vpop.f32.mrf.mxu0
      %5613 = vmatprep.mubr.f32.mxu0 0.0
      %5614 = vmatmul.mubr.f32.gmra.mxu0 %v5435
      %v5615 = vpop.f32.mrf.mxu0
      %v5616 = vadd.f32 0.0, %v5615
      %v5617 = vpop.f32.mrf.mxu0
      %5618 = vmatprep.mubr.f32.mxu0 0.0
      %5619 = vmatmul.mubr.f32.gmra.mxu0 %v5438
      %v5620 = vpop.f32.mrf.mxu0
      %v5621 = vadd.f32 0.0, %v5620
      %v5622 = vpop.f32.mrf.mxu0
      %5623 = vmatprep.mubr.f32.mxu0 0.0
      %5624 = vmatmul.mubr.f32.gmra.mxu0 %v5441
      %v5625 = vpop.f32.mrf.mxu0
      %v5626 = vadd.f32 0.0, %v5625
      %v5627 = vpop.f32.mrf.mxu0
      %5628 = vmatprep.mubr.f32.mxu0 0.0
      %5629 = vmatmul.mubr.f32.gmra.mxu0 %v5444
      %v5630 = vpop.f32.mrf.mxu0
      %v5631 = vadd.f32 0.0, %v5630
      %v5632 = vpop.f32.mrf.mxu0
      %5633 = vmatprep.mubr.f32.mxu0 0.0
      %5634 = vmatmul.mubr.f32.gmra.mxu0 %v5447
      %v5635 = vpop.f32.mrf.mxu0
      %v5636 = vadd.f32 0.0, %v5635
      %v5637 = vpop.f32.mrf.mxu0
      %5638 = vmatprep.mubr.f32.mxu0 0.0
      %5639 = vmatmul.mubr.f32.gmra.mxu0 %v5450
      %v5640 = vpop.f32.mrf.mxu0
      %v5641 = vadd.f32 0.0, %v5640
      %v5642 = vpop.f32.mrf.mxu0
      %5643 = vmatprep.mubr.f32.mxu0 0.0
      %5644 = vmatmul.mubr.f32.gmra.mxu0 %v5453
      %v5645 = vpop.f32.mrf.mxu0
      %v5646 = vadd.f32 0.0, %v5645
      %v5647 = vpop.f32.mrf.mxu0
      %5648 = vmatprep.mubr.f32.mxu0 0.0
      %5649 = vmatmul.mubr.f32.gmra.mxu0 %v5456
      %v5650 = vpop.f32.mrf.mxu0
      %v5651 = vadd.f32 0.0, %v5650
      %v5652 = vpop.f32.mrf.mxu0
      %5653 = vmatprep.mubr.f32.mxu0 0.0
      %5654 = vmatmul.mubr.f32.gmra.mxu0 %v5459
      %v5655 = vpop.f32.mrf.mxu0
      %v5656 = vadd.f32 0.0, %v5655
      %v5657 = vpop.f32.mrf.mxu0
      %5658 = vmatprep.mubr.f32.mxu0 0.0
      %5659 = vmatmul.mubr.f32.gmra.mxu0 %v5462
      %v5660 = vpop.f32.mrf.mxu0
      %v5661 = vadd.f32 0.0, %v5660
      %v5662 = vpop.f32.mrf.mxu0
      %5663 = vmatprep.mubr.f32.mxu0 0.0
      %5664 = vmatmul.mubr.f32.gmra.mxu0 %v5465
      %v5665 = vpop.f32.mrf.mxu0
      %v5666 = vadd.f32 0.0, %v5665
      %v5667 = vpop.f32.mrf.mxu0
      %5668 = vmatprep.mubr.f32.mxu0 0.0
      %5669 = vmatmul.mubr.f32.gmra.mxu0 %v5468
      %v5670 = vpop.f32.mrf.mxu0
      %v5671 = vadd.f32 0.0, %v5670
      %v5672 = vpop.f32.mrf.mxu0
      %5673 = vmatprep.mubr.f32.mxu0 0.0
      %5674 = vmatmul.mubr.f32.gmra.mxu0 %v5471
      %v5675 = vpop.f32.mrf.mxu0
      %v5676 = vadd.f32 0.0, %v5675
      %v5677 = vpop.f32.mrf.mxu0
      %5678 = vmatprep.mubr.f32.mxu0 0.0
      %5679 = vmatmul.mubr.f32.gmra.mxu0 %v5474
      %v5680 = vpop.f32.mrf.mxu0
      %v5681 = vadd.f32 0.0, %v5680
      %v5682 = vpop.f32.mrf.mxu0
      %5683 = vmatprep.mubr.f32.mxu0 0.0
      %5684 = vmatmul.mubr.f32.gmra.mxu0 %v5477
      %v5685 = vpop.f32.mrf.mxu0
      %v5686 = vadd.f32 0.0, %v5685
      %v5687 = vpop.f32.mrf.mxu0
      %5688 = vmatprep.mubr.f32.mxu0 0.0
      %5689 = vmatmul.mubr.f32.gmra.mxu0 %v5480
      %v5690 = vpop.f32.mrf.mxu0
      %v5691 = vadd.f32 0.0, %v5690
      %v5692 = vpop.f32.mrf.mxu0
      %5693 = vmatprep.mubr.f32.mxu0 0.0
      %5694 = vmatmul.mubr.f32.gmra.mxu0 %v5483
      %v5695 = vpop.f32.mrf.mxu0
      %v5696 = vadd.f32 0.0, %v5695
      %v5697 = vpop.f32.mrf.mxu0
      %5698 = vmatprep.mubr.f32.mxu0 0.0
      %5699 = vmatmul.mubr.f32.gmra.mxu0 %v5486
      %v5700 = vpop.f32.mrf.mxu0
      %v5701 = vadd.f32 0.0, %v5700
      %v5702 = vpop.f32.mrf.mxu0
      %5703 = vmatprep.mubr.f32.mxu0 0.0
      %5704 = vmatmul.mubr.f32.gmra.mxu0 %v5489
      %v5705 = vpop.f32.mrf.mxu0
      %v5706 = vadd.f32 0.0, %v5705
      %v5707 = vpop.f32.mrf.mxu0
      %5708 = vmatprep.mubr.f32.mxu0 0.0
      %5709 = vmatmul.mubr.f32.gmra.mxu0 %v5492
      %v5710 = vpop.f32.mrf.mxu0
      %v5711 = vadd.f32 0.0, %v5710
      %v5712 = vpop.f32.mrf.mxu0
      %5713 = vmatprep.mubr.f32.mxu0 0.0
      %5714 = vmatmul.mubr.f32.gmra.mxu0 %v5495
      %v5715 = vpop.f32.mrf.mxu0
      %v5716 = vadd.f32 0.0, %v5715
      %v5717 = vpop.f32.mrf.mxu0
      %5718 = vmatprep.mubr.f32.mxu0 0.0
      %5719 = vmatmul.mubr.f32.gmra.mxu0 %v5498
      %v5720 = vpop.f32.mrf.mxu0
      %v5721 = vadd.f32 0.0, %v5720
      %v5722 = vpop.f32.mrf.mxu0
      %5723 = vmatprep.mubr.f32.mxu0 0.0
      %5724 = vmatmul.mubr.f32.gmra.mxu0 %v5501
      %v5725 = vpop.f32.mrf.mxu0
      %v5726 = vadd.f32 0.0, %v5725
      %v5727 = vpop.f32.mrf.mxu0
      %5728 = vmatprep.mubr.f32.mxu0 0.0
      %5729 = vmatmul.mubr.f32.gmra.mxu0 %v5504
      %v5730 = vpop.f32.mrf.mxu0
      %v5731 = vadd.f32 0.0, %v5730
      %v5732 = vpop.f32.mrf.mxu0
      %5733 = vdwg.mxu0
      %v5734 = vadd.f32 %v5344, %v5576
      %v5735 = vadd.f32 %v5345, %v5581
      %v5736 = vadd.f32 %v5346, %v5586
      %v5737 = vadd.f32 %v5347, %v5591
      %v5738 = vadd.f32 %v5348, %v5596
      %v5739 = vadd.f32 %v5349, %v5601
      %v5740 = vadd.f32 %v5350, %v5606
      %v5741 = vadd.f32 %v5351, %v5611
      %v5742 = vadd.f32 %v5352, %v5616
      %v5743 = vadd.f32 %v5353, %v5621
      %v5744 = vadd.f32 %v5354, %v5626
      %v5745 = vadd.f32 %v5355, %v5631
      %v5746 = vadd.f32 %v5356, %v5636
      %v5747 = vadd.f32 %v5357, %v5641
      %v5748 = vadd.f32 %v5358, %v5646
      %v5749 = vadd.f32 %v5359, %v5651
      %v5750 = vadd.f32 %v5360, %v5656
      %v5751 = vadd.f32 %v5361, %v5661
      %v5752 = vadd.f32 %v5362, %v5666
      %v5753 = vadd.f32 %v5363, %v5671
      %v5754 = vadd.f32 %v5364, %v5676
      %v5755 = vadd.f32 %v5365, %v5681
      %v5756 = vadd.f32 %v5366, %v5686
      %v5757 = vadd.f32 %v5367, %v5691
      %v5758 = vadd.f32 %v5368, %v5696
      %v5759 = vadd.f32 %v5369, %v5701
      %v5760 = vadd.f32 %v5370, %v5706
      %v5761 = vadd.f32 %v5371, %v5711
      %v5762 = vadd.f32 %v5372, %v5716
      %v5763 = vadd.f32 %v5373, %v5721
      %v5764 = vadd.f32 %v5374, %v5726
      %v5765 = vadd.f32 %v5375, %v5731
      %5766 = vst.msk [vmem:[#allocation4] sm:$0xff] %vm730, %v5734
      %5767 = vst.msk [vmem:[#allocation4 + $0x8] sm:$0xff] %vm730, %v5735
      %5768 = vst.msk [vmem:[#allocation4 + $0x10] sm:$0xff] %vm730, %v5736
      %5769 = vst.msk [vmem:[#allocation4 + $0x18] sm:$0xff] %vm730, %v5737
      %5770 = vst.msk [vmem:[#allocation4 + $0x20] sm:$0xff] %vm730, %v5738
      %5771 = vst.msk [vmem:[#allocation4 + $0x28] sm:$0xff] %vm730, %v5739
      %5772 = vst.msk [vmem:[#allocation4 + $0x30] sm:$0xff] %vm730, %v5740
      %5773 = vst.msk [vmem:[#allocation4 + $0x38] sm:$0xff] %vm730, %v5741
      %5774 = vst.msk [vmem:[#allocation4 + $0x40] sm:$0xff] %vm730, %v5742
      %5775 = vst.msk [vmem:[#allocation4 + $0x48] sm:$0xff] %vm730, %v5743
      %5776 = vst.msk [vmem:[#allocation4 + $0x50] sm:$0xff] %vm730, %v5744
      %5777 = vst.msk [vmem:[#allocation4 + $0x58] sm:$0xff] %vm730, %v5745
      %5778 = vst.msk [vmem:[#allocation4 + $0x60] sm:$0xff] %vm730, %v5746
      %5779 = vst.msk [vmem:[#allocation4 + $0x68] sm:$0xff] %vm730, %v5747
      %5780 = vst.msk [vmem:[#allocation4 + $0x70] sm:$0xff] %vm730, %v5748
      %5781 = vst.msk [vmem:[#allocation4 + $0x78] sm:$0xff] %vm730, %v5749
      %5782 = vst.msk [vmem:[#allocation4 + $0x80] sm:$0xff] %vm730, %v5750
      %5783 = vst.msk [vmem:[#allocation4 + $0x88] sm:$0xff] %vm730, %v5751
      %5784 = vst.msk [vmem:[#allocation4 + $0x90] sm:$0xff] %vm730, %v5752
      %5785 = vst.msk [vmem:[#allocation4 + $0x98] sm:$0xff] %vm730, %v5753
      %5786 = vst.msk [vmem:[#allocation4 + $0xa0] sm:$0xff] %vm730, %v5754
      %5787 = vst.msk [vmem:[#allocation4 + $0xa8] sm:$0xff] %vm730, %v5755
      %5788 = vst.msk [vmem:[#allocation4 + $0xb0] sm:$0xff] %vm730, %v5756
      %5789 = vst.msk [vmem:[#allocation4 + $0xb8] sm:$0xff] %vm730, %v5757
      %5790 = vst.msk [vmem:[#allocation4 + $0xc0] sm:$0xff] %vm730, %v5758
      %5791 = vst.msk [vmem:[#allocation4 + $0xc8] sm:$0xff] %vm730, %v5759
      %5792 = vst.msk [vmem:[#allocation4 + $0xd0] sm:$0xff] %vm730, %v5760
      %5793 = vst.msk [vmem:[#allocation4 + $0xd8] sm:$0xff] %vm730, %v5761
      %5794 = vst.msk [vmem:[#allocation4 + $0xe0] sm:$0xff] %vm730, %v5762
      %5795 = vst.msk [vmem:[#allocation4 + $0xe8] sm:$0xff] %vm730, %v5763
      %5796 = vst.msk [vmem:[#allocation4 + $0xf0] sm:$0xff] %vm730, %v5764
      %5797 = vst.msk [vmem:[#allocation4 + $0xf8] sm:$0xff] %vm730, %v5765
      // Predicated region
      $region41: #{spp_bottleneck.3} parent=35 // pred_check
        %p5798 = pneg %p238
      $region42: #{spp_bottleneck.3} parent=35 // pred_check_branch
        %5800 = sbr.rel (%p5798) target = $region44
      $region43: #{spp_bottleneck.3} parent=35 // pred_region
        %v5801 = vld [vmem:[#allocation4] sm:$0xff]
        %v5802 = vld [vmem:[#allocation4 + $0x8] sm:$0xff]
        %v5803 = vld [vmem:[#allocation4 + $0x10] sm:$0xff]
        %v5804 = vld [vmem:[#allocation4 + $0x18] sm:$0xff]
        %v5805 = vld [vmem:[#allocation4 + $0x20] sm:$0xff]
        %v5806 = vld [vmem:[#allocation4 + $0x28] sm:$0xff]
        %v5807 = vld [vmem:[#allocation4 + $0x30] sm:$0xff]
        %v5808 = vld [vmem:[#allocation4 + $0x38] sm:$0xff]
        %v5809 = vld [vmem:[#allocation4 + $0x40] sm:$0xff]
        %v5810 = vld [vmem:[#allocation4 + $0x48] sm:$0xff]
        %v5811 = vld [vmem:[#allocation4 + $0x50] sm:$0xff]
        %v5812 = vld [vmem:[#allocation4 + $0x58] sm:$0xff]
        %v5813 = vld [vmem:[#allocation4 + $0x60] sm:$0xff]
        %v5814 = vld [vmem:[#allocation4 + $0x68] sm:$0xff]
        %v5815 = vld [vmem:[#allocation4 + $0x70] sm:$0xff]
        %v5816 = vld [vmem:[#allocation4 + $0x78] sm:$0xff]
        %v5817 = vld [vmem:[#allocation4 + $0x80] sm:$0xff]
        %v5818 = vld [vmem:[#allocation4 + $0x88] sm:$0xff]
        %v5819 = vld [vmem:[#allocation4 + $0x90] sm:$0xff]
        %v5820 = vld [vmem:[#allocation4 + $0x98] sm:$0xff]
        %v5821 = vld [vmem:[#allocation4 + $0xa0] sm:$0xff]
        %v5822 = vld [vmem:[#allocation4 + $0xa8] sm:$0xff]
        %v5823 = vld [vmem:[#allocation4 + $0xb0] sm:$0xff]
        %v5824 = vld [vmem:[#allocation4 + $0xb8] sm:$0xff]
        %v5825 = vld [vmem:[#allocation4 + $0xc0] sm:$0xff]
        %v5826 = vld [vmem:[#allocation4 + $0xc8] sm:$0xff]
        %v5827 = vld [vmem:[#allocation4 + $0xd0] sm:$0xff]
        %v5828 = vld [vmem:[#allocation4 + $0xd8] sm:$0xff]
        %v5829 = vld [vmem:[#allocation4 + $0xe0] sm:$0xff]
        %v5830 = vld [vmem:[#allocation4 + $0xe8] sm:$0xff]
        %v5831 = vld [vmem:[#allocation4 + $0xf0] sm:$0xff]
        %v5832 = vld [vmem:[#allocation4 + $0xf8] sm:$0xff]
        %v5833 = vld [vmem:[%s2] sm:$0x1]
        %v5835 = vlaneseq
        %v5836 = vshrl.u32 %v5835, 7
        %v5837 = vsub.s32 0, %v5836
        %v5838 = vrot.slane %v5833, %v5837
        %v5840 = vmul.f32 %v5801, %v5838
        %v5841 = vmul.f32 %v5802, %v5838
        %v5842 = vmul.f32 %v5803, %v5838
        %v5843 = vmul.f32 %v5804, %v5838
        %v5844 = vmul.f32 %v5805, %v5838
        %v5845 = vmul.f32 %v5806, %v5838
        %v5846 = vmul.f32 %v5807, %v5838
        %v5847 = vmul.f32 %v5808, %v5838
        %v5848 = vmul.f32 %v5809, %v5838
        %v5849 = vmul.f32 %v5810, %v5838
        %v5850 = vmul.f32 %v5811, %v5838
        %v5851 = vmul.f32 %v5812, %v5838
        %v5852 = vmul.f32 %v5813, %v5838
        %v5853 = vmul.f32 %v5814, %v5838
        %v5854 = vmul.f32 %v5815, %v5838
        %v5855 = vmul.f32 %v5816, %v5838
        %v5856 = vmul.f32 %v5817, %v5838
        %v5857 = vmul.f32 %v5818, %v5838
        %v5858 = vmul.f32 %v5819, %v5838
        %v5859 = vmul.f32 %v5820, %v5838
        %v5860 = vmul.f32 %v5821, %v5838
        %v5861 = vmul.f32 %v5822, %v5838
        %v5862 = vmul.f32 %v5823, %v5838
        %v5863 = vmul.f32 %v5824, %v5838
        %v5864 = vmul.f32 %v5825, %v5838
        %v5865 = vmul.f32 %v5826, %v5838
        %v5866 = vmul.f32 %v5827, %v5838
        %v5867 = vmul.f32 %v5828, %v5838
        %v5868 = vmul.f32 %v5829, %v5838
        %v5869 = vmul.f32 %v5830, %v5838
        %v5870 = vmul.f32 %v5831, %v5838
        %v5871 = vmul.f32 %v5832, %v5838
        %v5872 = vld [vmem:[%s3] sm:$0x1]
        %v5874 = vlaneseq
        %v5875 = vshrl.u32 %v5874, 7
        %v5876 = vsub.s32 0, %v5875
        %v5877 = vrot.slane %v5872, %v5876
        %v5879 = vadd.f32 %v5840, %v5877
        %v5880 = vadd.f32 %v5841, %v5877
        %v5881 = vadd.f32 %v5842, %v5877
        %v5882 = vadd.f32 %v5843, %v5877
        %v5883 = vadd.f32 %v5844, %v5877
        %v5884 = vadd.f32 %v5845, %v5877
        %v5885 = vadd.f32 %v5846, %v5877
        %v5886 = vadd.f32 %v5847, %v5877
        %v5887 = vadd.f32 %v5848, %v5877
        %v5888 = vadd.f32 %v5849, %v5877
        %v5889 = vadd.f32 %v5850, %v5877
        %v5890 = vadd.f32 %v5851, %v5877
        %v5891 = vadd.f32 %v5852, %v5877
        %v5892 = vadd.f32 %v5853, %v5877
        %v5893 = vadd.f32 %v5854, %v5877
        %v5894 = vadd.f32 %v5855, %v5877
        %v5895 = vadd.f32 %v5856, %v5877
        %v5896 = vadd.f32 %v5857, %v5877
        %v5897 = vadd.f32 %v5858, %v5877
        %v5898 = vadd.f32 %v5859, %v5877
        %v5899 = vadd.f32 %v5860, %v5877
        %v5900 = vadd.f32 %v5861, %v5877
        %v5901 = vadd.f32 %v5862, %v5877
        %v5902 = vadd.f32 %v5863, %v5877
        %v5903 = vadd.f32 %v5864, %v5877
        %v5904 = vadd.f32 %v5865, %v5877
        %v5905 = vadd.f32 %v5866, %v5877
        %v5906 = vadd.f32 %v5867, %v5877
        %v5907 = vadd.f32 %v5868, %v5877
        %v5908 = vadd.f32 %v5869, %v5877
        %v5909 = vadd.f32 %v5870, %v5877
        %v5910 = vadd.f32 %v5871, %v5877
        %v5911 = vxor.u32 %v5879, 2147483648
        %v5912 = vxor.u32 %v5880, 2147483648
        %v5913 = vxor.u32 %v5881, 2147483648
        %v5914 = vxor.u32 %v5882, 2147483648
        %v5915 = vxor.u32 %v5883, 2147483648
        %v5916 = vxor.u32 %v5884, 2147483648
        %v5917 = vxor.u32 %v5885, 2147483648
        %v5918 = vxor.u32 %v5886, 2147483648
        %v5919 = vxor.u32 %v5887, 2147483648
        %v5920 = vxor.u32 %v5888, 2147483648
        %v5921 = vxor.u32 %v5889, 2147483648
        %v5922 = vxor.u32 %v5890, 2147483648
        %v5923 = vxor.u32 %v5891, 2147483648
        %v5924 = vxor.u32 %v5892, 2147483648
        %v5925 = vxor.u32 %v5893, 2147483648
        %v5926 = vxor.u32 %v5894, 2147483648
        %v5927 = vxor.u32 %v5895, 2147483648
        %v5928 = vxor.u32 %v5896, 2147483648
        %v5929 = vxor.u32 %v5897, 2147483648
        %v5930 = vxor.u32 %v5898, 2147483648
        %v5931 = vxor.u32 %v5899, 2147483648
        %v5932 = vxor.u32 %v5900, 2147483648
        %v5933 = vxor.u32 %v5901, 2147483648
        %v5934 = vxor.u32 %v5902, 2147483648
        %v5935 = vxor.u32 %v5903, 2147483648
        %v5936 = vxor.u32 %v5904, 2147483648
        %v5937 = vxor.u32 %v5905, 2147483648
        %v5938 = vxor.u32 %v5906, 2147483648
        %v5939 = vxor.u32 %v5907, 2147483648
        %v5940 = vxor.u32 %v5908, 2147483648
        %v5941 = vxor.u32 %v5909, 2147483648
        %v5942 = vxor.u32 %v5910, 2147483648
        %v5943 = vmul.f32 %v5911, 1.442695
        %v5944 = vpow.pop %v5943
        %v5945 = vmul.f32 %v5912, 1.442695
        %v5946 = vpow.pop %v5945
        %v5947 = vmul.f32 %v5913, 1.442695
        %v5948 = vpow.pop %v5947
        %v5949 = vmul.f32 %v5914, 1.442695
        %v5950 = vpow.pop %v5949
        %v5951 = vmul.f32 %v5915, 1.442695
        %v5952 = vpow.pop %v5951
        %v5953 = vmul.f32 %v5916, 1.442695
        %v5954 = vpow.pop %v5953
        %v5955 = vmul.f32 %v5917, 1.442695
        %v5956 = vpow.pop %v5955
        %v5957 = vmul.f32 %v5918, 1.442695
        %v5958 = vpow.pop %v5957
        %v5959 = vmul.f32 %v5919, 1.442695
        %v5960 = vpow.pop %v5959
        %v5961 = vmul.f32 %v5920, 1.442695
        %v5962 = vpow.pop %v5961
        %v5963 = vmul.f32 %v5921, 1.442695
        %v5964 = vpow.pop %v5963
        %v5965 = vmul.f32 %v5922, 1.442695
        %v5966 = vpow.pop %v5965
        %v5967 = vmul.f32 %v5923, 1.442695
        %v5968 = vpow.pop %v5967
        %v5969 = vmul.f32 %v5924, 1.442695
        %v5970 = vpow.pop %v5969
        %v5971 = vmul.f32 %v5925, 1.442695
        %v5972 = vpow.pop %v5971
        %v5973 = vmul.f32 %v5926, 1.442695
        %v5974 = vpow.pop %v5973
        %v5975 = vmul.f32 %v5927, 1.442695
        %v5976 = vpow.pop %v5975
        %v5977 = vmul.f32 %v5928, 1.442695
        %v5978 = vpow.pop %v5977
        %v5979 = vmul.f32 %v5929, 1.442695
        %v5980 = vpow.pop %v5979
        %v5981 = vmul.f32 %v5930, 1.442695
        %v5982 = vpow.pop %v5981
        %v5983 = vmul.f32 %v5931, 1.442695
        %v5984 = vpow.pop %v5983
        %v5985 = vmul.f32 %v5932, 1.442695
        %v5986 = vpow.pop %v5985
        %v5987 = vmul.f32 %v5933, 1.442695
        %v5988 = vpow.pop %v5987
        %v5989 = vmul.f32 %v5934, 1.442695
        %v5990 = vpow.pop %v5989
        %v5991 = vmul.f32 %v5935, 1.442695
        %v5992 = vpow.pop %v5991
        %v5993 = vmul.f32 %v5936, 1.442695
        %v5994 = vpow.pop %v5993
        %v5995 = vmul.f32 %v5937, 1.442695
        %v5996 = vpow.pop %v5995
        %v5997 = vmul.f32 %v5938, 1.442695
        %v5998 = vpow.pop %v5997
        %v5999 = vmul.f32 %v5939, 1.442695
        %v6000 = vpow.pop %v5999
        %v6001 = vmul.f32 %v5940, 1.442695
        %v6002 = vpow.pop %v6001
        %v6003 = vmul.f32 %v5941, 1.442695
        %v6004 = vpow.pop %v6003
        %v6005 = vmul.f32 %v5942, 1.442695
        %v6006 = vpow.pop %v6005
        %v6007 = vadd.f32 %v5944, 1.0
        %v6008 = vadd.f32 %v5946, 1.0
        %v6009 = vadd.f32 %v5948, 1.0
        %v6010 = vadd.f32 %v5950, 1.0
        %v6011 = vadd.f32 %v5952, 1.0
        %v6012 = vadd.f32 %v5954, 1.0
        %v6013 = vadd.f32 %v5956, 1.0
        %v6014 = vadd.f32 %v5958, 1.0
        %v6015 = vadd.f32 %v5960, 1.0
        %v6016 = vadd.f32 %v5962, 1.0
        %v6017 = vadd.f32 %v5964, 1.0
        %v6018 = vadd.f32 %v5966, 1.0
        %v6019 = vadd.f32 %v5968, 1.0
        %v6020 = vadd.f32 %v5970, 1.0
        %v6021 = vadd.f32 %v5972, 1.0
        %v6022 = vadd.f32 %v5974, 1.0
        %v6023 = vadd.f32 %v5976, 1.0
        %v6024 = vadd.f32 %v5978, 1.0
        %v6025 = vadd.f32 %v5980, 1.0
        %v6026 = vadd.f32 %v5982, 1.0
        %v6027 = vadd.f32 %v5984, 1.0
        %v6028 = vadd.f32 %v5986, 1.0
        %v6029 = vadd.f32 %v5988, 1.0
        %v6030 = vadd.f32 %v5990, 1.0
        %v6031 = vadd.f32 %v5992, 1.0
        %v6032 = vadd.f32 %v5994, 1.0
        %v6033 = vadd.f32 %v5996, 1.0
        %v6034 = vadd.f32 %v5998, 1.0
        %v6035 = vadd.f32 %v6000, 1.0
        %v6036 = vadd.f32 %v6002, 1.0
        %v6037 = vadd.f32 %v6004, 1.0
        %v6038 = vadd.f32 %v6006, 1.0
        %v6039 = vrcp.pop %v6007
        %v6040 = vmul.f32 1.0, %v6039
        %v6041 = vrcp.pop %v6008
        %v6042 = vmul.f32 1.0, %v6041
        %v6043 = vrcp.pop %v6009
        %v6044 = vmul.f32 1.0, %v6043
        %v6045 = vrcp.pop %v6010
        %v6046 = vmul.f32 1.0, %v6045
        %v6047 = vrcp.pop %v6011
        %v6048 = vmul.f32 1.0, %v6047
        %v6049 = vrcp.pop %v6012
        %v6050 = vmul.f32 1.0, %v6049
        %v6051 = vrcp.pop %v6013
        %v6052 = vmul.f32 1.0, %v6051
        %v6053 = vrcp.pop %v6014
        %v6054 = vmul.f32 1.0, %v6053
        %v6055 = vrcp.pop %v6015
        %v6056 = vmul.f32 1.0, %v6055
        %v6057 = vrcp.pop %v6016
        %v6058 = vmul.f32 1.0, %v6057
        %v6059 = vrcp.pop %v6017
        %v6060 = vmul.f32 1.0, %v6059
        %v6061 = vrcp.pop %v6018
        %v6062 = vmul.f32 1.0, %v6061
        %v6063 = vrcp.pop %v6019
        %v6064 = vmul.f32 1.0, %v6063
        %v6065 = vrcp.pop %v6020
        %v6066 = vmul.f32 1.0, %v6065
        %v6067 = vrcp.pop %v6021
        %v6068 = vmul.f32 1.0, %v6067
        %v6069 = vrcp.pop %v6022
        %v6070 = vmul.f32 1.0, %v6069
        %v6071 = vrcp.pop %v6023
        %v6072 = vmul.f32 1.0, %v6071
        %v6073 = vrcp.pop %v6024
        %v6074 = vmul.f32 1.0, %v6073
        %v6075 = vrcp.pop %v6025
        %v6076 = vmul.f32 1.0, %v6075
        %v6077 = vrcp.pop %v6026
        %v6078 = vmul.f32 1.0, %v6077
        %v6079 = vrcp.pop %v6027
        %v6080 = vmul.f32 1.0, %v6079
        %v6081 = vrcp.pop %v6028
        %v6082 = vmul.f32 1.0, %v6081
        %v6083 = vrcp.pop %v6029
        %v6084 = vmul.f32 1.0, %v6083
        %v6085 = vrcp.pop %v6030
        %v6086 = vmul.f32 1.0, %v6085
        %v6087 = vrcp.pop %v6031
        %v6088 = vmul.f32 1.0, %v6087
        %v6089 = vrcp.pop %v6032
        %v6090 = vmul.f32 1.0, %v6089
        %v6091 = vrcp.pop %v6033
        %v6092 = vmul.f32 1.0, %v6091
        %v6093 = vrcp.pop %v6034
        %v6094 = vmul.f32 1.0, %v6093
        %v6095 = vrcp.pop %v6035
        %v6096 = vmul.f32 1.0, %v6095
        %v6097 = vrcp.pop %v6036
        %v6098 = vmul.f32 1.0, %v6097
        %v6099 = vrcp.pop %v6037
        %v6100 = vmul.f32 1.0, %v6099
        %v6101 = vrcp.pop %v6038
        %v6102 = vmul.f32 1.0, %v6101
        %v6103 = vmul.f32 %v5879, %v6040
        %v6104 = vmul.f32 %v5880, %v6042
        %v6105 = vmul.f32 %v5881, %v6044
        %v6106 = vmul.f32 %v5882, %v6046
        %v6107 = vmul.f32 %v5883, %v6048
        %v6108 = vmul.f32 %v5884, %v6050
        %v6109 = vmul.f32 %v5885, %v6052
        %v6110 = vmul.f32 %v5886, %v6054
        %v6111 = vmul.f32 %v5887, %v6056
        %v6112 = vmul.f32 %v5888, %v6058
        %v6113 = vmul.f32 %v5889, %v6060
        %v6114 = vmul.f32 %v5890, %v6062
        %v6115 = vmul.f32 %v5891, %v6064
        %v6116 = vmul.f32 %v5892, %v6066
        %v6117 = vmul.f32 %v5893, %v6068
        %v6118 = vmul.f32 %v5894, %v6070
        %v6119 = vmul.f32 %v5895, %v6072
        %v6120 = vmul.f32 %v5896, %v6074
        %v6121 = vmul.f32 %v5897, %v6076
        %v6122 = vmul.f32 %v5898, %v6078
        %v6123 = vmul.f32 %v5899, %v6080
        %v6124 = vmul.f32 %v5900, %v6082
        %v6125 = vmul.f32 %v5901, %v6084
        %v6126 = vmul.f32 %v5902, %v6086
        %v6127 = vmul.f32 %v5903, %v6088
        %v6128 = vmul.f32 %v5904, %v6090
        %v6129 = vmul.f32 %v5905, %v6092
        %v6130 = vmul.f32 %v5906, %v6094
        %v6131 = vmul.f32 %v5907, %v6096
        %v6132 = vmul.f32 %v5908, %v6098
        %v6133 = vmul.f32 %v5909, %v6100
        %v6134 = vmul.f32 %v5910, %v6102
        %6135 = vst.msk [vmem:[%s237] sm:$0xff] %vm730, %v6103
        %6136 = vst.msk [vmem:[%s237 + $0x8] sm:$0xff] %vm730, %v6104
        %6137 = vst.msk [vmem:[%s237 + $0x10] sm:$0xff] %vm730, %v6105
        %6138 = vst.msk [vmem:[%s237 + $0x18] sm:$0xff] %vm730, %v6106
        %6139 = vst.msk [vmem:[%s237 + $0x20] sm:$0xff] %vm730, %v6107
        %6140 = vst.msk [vmem:[%s237 + $0x28] sm:$0xff] %vm730, %v6108
        %6141 = vst.msk [vmem:[%s237 + $0x30] sm:$0xff] %vm730, %v6109
        %6142 = vst.msk [vmem:[%s237 + $0x38] sm:$0xff] %vm730, %v6110
        %6143 = vst.msk [vmem:[%s237 + $0x40] sm:$0xff] %vm730, %v6111
        %6144 = vst.msk [vmem:[%s237 + $0x48] sm:$0xff] %vm730, %v6112
        %6145 = vst.msk [vmem:[%s237 + $0x50] sm:$0xff] %vm730, %v6113
        %6146 = vst.msk [vmem:[%s237 + $0x58] sm:$0xff] %vm730, %v6114
        %6147 = vst.msk [vmem:[%s237 + $0x60] sm:$0xff] %vm730, %v6115
        %6148 = vst.msk [vmem:[%s237 + $0x68] sm:$0xff] %vm730, %v6116
        %6149 = vst.msk [vmem:[%s237 + $0x70] sm:$0xff] %vm730, %v6117
        %6150 = vst.msk [vmem:[%s237 + $0x78] sm:$0xff] %vm730, %v6118
        %6151 = vst.msk [vmem:[%s237 + $0x80] sm:$0xff] %vm730, %v6119
        %6152 = vst.msk [vmem:[%s237 + $0x88] sm:$0xff] %vm730, %v6120
        %6153 = vst.msk [vmem:[%s237 + $0x90] sm:$0xff] %vm730, %v6121
        %6154 = vst.msk [vmem:[%s237 + $0x98] sm:$0xff] %vm730, %v6122
        %6155 = vst.msk [vmem:[%s237 + $0xa0] sm:$0xff] %vm730, %v6123
        %6156 = vst.msk [vmem:[%s237 + $0xa8] sm:$0xff] %vm730, %v6124
        %6157 = vst.msk [vmem:[%s237 + $0xb0] sm:$0xff] %vm730, %v6125
        %6158 = vst.msk [vmem:[%s237 + $0xb8] sm:$0xff] %vm730, %v6126
        %6159 = vst.msk [vmem:[%s237 + $0xc0] sm:$0xff] %vm730, %v6127
        %6160 = vst.msk [vmem:[%s237 + $0xc8] sm:$0xff] %vm730, %v6128
        %6161 = vst.msk [vmem:[%s237 + $0xd0] sm:$0xff] %vm730, %v6129
        %6162 = vst.msk [vmem:[%s237 + $0xd8] sm:$0xff] %vm730, %v6130
        %6163 = vst.msk [vmem:[%s237 + $0xe0] sm:$0xff] %vm730, %v6131
        %6164 = vst.msk [vmem:[%s237 + $0xe8] sm:$0xff] %vm730, %v6132
        %6165 = vst.msk [vmem:[%s237 + $0xf0] sm:$0xff] %vm730, %v6133
        %6166 = vst.msk [vmem:[%s237 + $0xf8] sm:$0xff] %vm730, %v6134
      $region44: #{spp_bottleneck.3} parent=35 // pred_fallthru
        _
      %p6167 = scmp.lt.s32.totalorder %s19, 1
      %s6168 = scalar_select %p6167, %s19, 1
      %s6169 = smul.addr %s6168, 32
      %s6170 = smul.addr %s6169, 8
      %s6171 = scalar_lea.vmem %s4, %s6170
      // Predicated region
      $region45: #{spp_bottleneck.3} parent=35 // pred_check
        %p6172 = pneg %p141
      $region46: #{spp_bottleneck.3} parent=35 // pred_check_branch
        %6174 = sbr.rel (%p6172) target = $region48
      $region47: #{spp_bottleneck.3} parent=35 // pred_region
        _
      $region48: #{spp_bottleneck.3} parent=35 // pred_fallthru
        _
    $region36: #{spp_bottleneck.3} parent=5 // pred_fallthru
      _
    %p6175 = scmp.le.s32.totalorder 2, %s10
    // Predicated region
    $region49: #{spp_bottleneck.3} parent=5 // pred_check
      %p6176 = pneg %p6175
    $region50: #{spp_bottleneck.3} parent=5 // pred_check_branch
      %6178 = sbr.rel (%p6176) target = $region52
    $region51: #{spp_bottleneck.3} parent=5 // pred_region
      %s6179 = ssub.s32 %s10, 2
      // Predicated region
      $region53: #{spp_bottleneck.3} parent=51 // pred_check
        %p6180 = pneg %p147
      $region54: #{spp_bottleneck.3} parent=51 // pred_check_branch
        %6182 = sbr.rel (%p6180) target = $region56
      $region55: #{spp_bottleneck.3} parent=51 // pred_region
        %p6183 = scmp.lt.s32.totalorder %s21, 1
        %s6184 = scalar_select %p6183, %s21, 1
        %s6185 = smul.addr %s6184, 32
        %s6186 = smul.addr %s6185, 8
        %s6187 = scalar_lea.vmem %s4, %s6186
      $region56: #{spp_bottleneck.3} parent=51 // pred_fallthru
        _
    $region52: #{spp_bottleneck.3} parent=5 // pred_fallthru
      _
  $region6: #{spp_bottleneck.3} parent=0 // loop_footer
    %s14 = sadd.s32 1, %s10
  $region7: #{spp_bottleneck.3} parent=0 // loop_footer_branch
    %9 = sbr.rel target = $region3
  $region8: #{spp_bottleneck.3} parent=0 // loop_exit
    _

</llo_original>
